<compile_context>
chip_gen: v5e
topology: v5e:2x2
jax: 0.10.0
libtpu: 0.0.40
codegen_flags: <defaults>
</compile_context>

<pallas_src>
import jax
import jax.numpy as jnp
from jax.experimental import pallas as pl
from jax.experimental.pallas import tpu as pltpu


def _round_up(n, m):
    return (n + m - 1) // m * m


# ---------------------------------------------------------------------------
# Pallas kernel: the whole PathGen forward as a chain of fused matmuls
# ---------------------------------------------------------------------------
def _pathgen_kernel(x_ref,
                    e1_ref, e2_ref, e3_ref, e4_ref, e5_ref, e6_ref, e7_ref,
                    s1_ref, s2_ref, s3_ref, s4_ref, s5_ref, s6_ref, s7_ref,
                    o_ref):
    tile_m = x_ref.shape[0]

    def dense(h, e_ref, s_ref):
        # bf16 x bf16 MXU pass with f32 accumulation; epilogue stays f32.
        return (jnp.dot(h.astype(jnp.bfloat16), e_ref[...],
                        preferred_element_type=jnp.float32) + s_ref[...])

    h = x_ref[...].astype(jnp.float32)
    h = jnp.maximum(dense(h, e1_ref, s1_ref), 0.0)       # Conv_1   + BN + ReLU
    h = jnp.maximum(dense(h, e2_ref, s2_ref), 0.0)       # Conv_2   + BN + ReLU
    h = jnp.maximum(dense(h, e3_ref, s3_ref), 0.0)       # Conv_4   + BN + ReLU
    h = jnp.maximum(dense(h, e4_ref, s4_ref), 0.0)       # DeConv_1 + BN + ReLU

    e5 = e5_ref[...]                                     # resident, loaded once
    s5b = jnp.broadcast_to(s5_ref[...], (tile_m, e5.shape[1]))  # hoisted bcast
    for _ in range(10):                                  # DeConv_R2 x 10
        h = jnp.maximum(
            jnp.dot(h.astype(jnp.bfloat16), e5,
                    preferred_element_type=jnp.float32) + s5b, 0.0)

    h = jnp.maximum(dense(h, e6_ref, s6_ref), 0.0)       # DeConv_3 + BN + ReLU
    y = dense(h, e7_ref, s7_ref)                         # DeConv_4 (+bias)
    o_ref[...] = jax.nn.sigmoid(y).astype(o_ref.dtype)   # Sigmoid head


def _run_fused(x_flat, Es, Ss):
    """x_flat: (N, H*W*3) in CHW row order -> (N, H*W*1), one pallas_call."""
    N, Din = x_flat.shape
    Dout = Es[-1].shape[1]

    tile_m = min(128, _round_up(N, 8))
    n_pad = _round_up(N, tile_m)
    if n_pad != N:
        x_flat = jnp.pad(x_flat, ((0, n_pad - N), (0, 0)))

    def resident(a):
        # Constant block index: fetched once, stays VMEM-resident across the
        # whole batch grid (no per-tile weight re-DMA).
        return pl.BlockSpec(a.shape, lambda m: (0, 0))

    in_specs = ([pl.BlockSpec((tile_m, Din), lambda m: (m, 0))]
                + [resident(e) for e in Es]
                + [resident(s) for s in Ss])

    y = pl.pallas_call(
        _pathgen_kernel,
        out_shape=jax.ShapeDtypeStruct((n_pad, Dout), jnp.float32),
        grid_spec=pltpu.PrefetchScalarGridSpec(
            num_scalar_prefetch=0,
            grid=(n_pad // tile_m,),
            in_specs=in_specs,
            out_specs=pl.BlockSpec((tile_m, Dout), lambda m: (m, 0)),
        ),
        compiler_params=pltpu.CompilerParams(
            dimension_semantics=("parallel",),
            vmem_limit_bytes=28 * 1024 * 1024,
        ),
    )(x_flat, *Es, *Ss)
    return y[:N]


# ---------------------------------------------------------------------------
# One-time parameter preparation: fold each conv layer (+BN) into a dense
# operator on the flattened activation.  Pure JAX, runs once at init.
# ---------------------------------------------------------------------------
def _fold_bn(bias, bn, eps=1e-5):
    if bn is None:
        return jnp.ones_like(bias), bias
    gamma, beta, mean, var = bn
    scale = gamma * jax.lax.rsqrt(var + eps)
    shift = beta + scale * (bias - mean)
    return scale, shift


def _linear_operator(w_hwio, in_hwc, *, strides, padding, lhs_dilation):
    """Dense E such that conv(x) flattened (HWC) == x_flat_hwc @ E (no bias)."""
    H, W, Cin = in_hwc
    n_in = H * W * Cin
    basis = jnp.eye(n_in, dtype=jnp.float32).reshape(n_in, H, W, Cin)
    y = jax.lax.conv_general_dilated(
        basis, w_hwio, window_strides=strides, padding=padding,
        lhs_dilation=lhs_dilation,
        dimension_numbers=("NHWC", "HWIO", "NHWC"))
    _, OH, OW, Cout = y.shape
    return y.reshape(n_in, OH * OW * Cout), (OH, OW, Cout)


def _conv_op(w_oihw, bias, bn, in_hwc, stride, pad):
    # nn.Conv2d weight layout: (Cout, Cin, K, K)
    Cout = w_oihw.shape[0]
    scale, shift = _fold_bn(bias, bn)
    w_hwio = jnp.transpose(w_oihw * scale[:, None, None, None], (2, 3, 1, 0))
    E, out_hwc = _linear_operator(w_hwio, in_hwc, strides=(stride, stride),
                                  padding=[(pad, pad)] * 2, lhs_dilation=(1, 1))
    OH, OW, _ = out_hwc
    s_row = jnp.tile(shift, OH * OW).reshape(1, OH * OW * Cout)
    return E, s_row, out_hwc


def _convT_op(w_iokk, bias, bn, in_hwc, stride, pad):
    # nn.ConvTranspose2d weight layout: (Cin, Cout, K, K)
    _, Cout, K, _ = w_iokk.shape
    scale, shift = _fold_bn(bias, bn)
    wf = jnp.flip(w_iokk * scale[None, :, None, None], axis=(2, 3))
    w_hwio = jnp.transpose(wf, (2, 3, 0, 1))
    q = K - 1 - pad
    E, out_hwc = _linear_operator(w_hwio, in_hwc, strides=(1, 1),
                                  padding=[(q, q)] * 2,
                                  lhs_dilation=(stride, stride))
    OH, OW, _ = out_hwc
    s_row = jnp.tile(shift, OH * OW).reshape(1, OH * OW * Cout)
    return E, s_row, out_hwc


def prepare_params(params, in_hw=(16, 16)):
    H, W = in_hw
    shp = (H, W, 3)
    E1, s1, shp = _conv_op(*params["conv1"], shp, 2, 1)
    E2, s2, shp = _conv_op(*params["conv2"], shp, 2, 1)
    # Conv_R3 loop runs `range(0)` times in the reference forward -> skipped.
    E3, s3, shp = _conv_op(*params["conv4"], shp, 2, 1)
    E4, s4, shp = _convT_op(*params["deconv1"], shp, 2, 1)
    E5, s5, shp = _convT_op(*params["deconv_r2"], shp, 1, 1)
    E6, s6, shp = _convT_op(*params["deconv3"], shp, 2, 1)
    E7, s7, shp = _convT_op(*params["deconv4"], shp, 2, 1)
    assert shp == (H, W, 1), shp

    # Fold the NCHW->NHWC input permutation into E1's rows so the host-side
    # forward is a plain reshape (no transpose around the kernel).
    Dout1 = E1.shape[1]
    E1 = jnp.transpose(E1.reshape(H, W, 3, Dout1),
                       (2, 0, 1, 3)).reshape(H * W * 3, Dout1)

    # Operators streamed as bf16 (HBM traffic / VMEM halved); shifts stay f32.
    Es = tuple(e.astype(jnp.bfloat16) for e in (E1, E2, E3, E4, E5, E6, E7))
    Ss = tuple(s.astype(jnp.float32) for s in (s1, s2, s3, s4, s5, s6, s7))
    return {"E": Es, "shift": Ss}


# ---------------------------------------------------------------------------
# Forward
# ---------------------------------------------------------------------------
def pathgen_forward(prepared, x_nchw):
    N, C, H, W = x_nchw.shape
    x_flat = x_nchw.reshape(N, C * H * W)      # E1 rows are pre-permuted to CHW
    y = _run_fused(x_flat, prepared["E"], prepared["shift"])
    return y.reshape(N, 1, H, W)               # Cout == 1: just reshape


# ---------------------------------------------------------------------------
# Pure-JAX (XLA conv, f32) reference with identical inference semantics
# ---------------------------------------------------------------------------
def _reference_forward(params, x_nchw):
    def conv(x, w_oihw, bias, bn, stride, pad, act):
        scale, shift = _fold_bn(bias, bn)
        w = jnp.transpose(w_oihw * scale[:, None, None, None], (2, 3, 1, 0))
        y = jax.lax.conv_general_dilated(
            x, w, (stride, stride), [(pad, pad)] * 2,
            dimension_numbers=("NHWC", "HWIO", "NHWC")) + shift
        return jnp.maximum(y, 0.0) if act == "relu" else jax.nn.sigmoid(y)

    def convT(x, w_iokk, bias, bn, stride, pad, act):
        K = w_iokk.shape[2]
        scale, shift = _fold_bn(bias, bn)
        wf = jnp.flip(w_iokk * scale[None, :, None, None], axis=(2, 3))
        w = jnp.transpose(wf, (2, 3, 0, 1))
        q = K - 1 - pad
        y = jax.lax.conv_general_dilated(
            x, w, (1, 1), [(q, q)] * 2, lhs_dilation=(stride, stride),
            dimension_numbers=("NHWC", "HWIO", "NHWC")) + shift
        return jnp.maximum(y, 0.0) if act == "relu" else jax.nn.sigmoid(y)

    x = jnp.transpose(x_nchw, (0, 2, 3, 1))
    x = conv(x, *params["conv1"], 2, 1, "relu")
    x = conv(x, *params["conv2"], 2, 1, "relu")
    x = conv(x, *params["conv4"], 2, 1, "relu")
    x = convT(x, *params["deconv1"], 2, 1, "relu")
    for _ in range(10):
        x = convT(x, *params["deconv_r2"], 1, 1, "relu")
    x = convT(x, *params["deconv3"], 2, 1, "relu")
    o = convT(x, *params["deconv4"], 2, 1, "sigmoid")
    return jnp.transpose(o, (0, 3, 1, 2))


# ---------------------------------------------------------------------------
# Deterministic parameter initialization (synthetic; no checkpoint load)
# ---------------------------------------------------------------------------
def init_params(key):
    keys = jax.random.split(key, 14)

    def conv_p(k, cout, cin, kk):
        kw, kb = jax.random.split(k)
        w = 0.1 * jax.random.normal(kw, (cout, cin, kk, kk), jnp.float32)
        b = 0.05 * jax.random.normal(kb, (cout,), jnp.float32)
        return w, b

    def convT_p(k, cin, cout, kk):
        kw, kb = jax.random.split(k)
        w = 0.1 * jax.random.normal(kw, (cin, cout, kk, kk), jnp.float32)
        b = 0.05 * jax.random.normal(kb, (cout,), jnp.float32)
        return w, b

    def bn_p(k, c):
        k1, k2, k3, k4 = jax.random.split(k, 4)
        gamma = 1.0 + 0.1 * jax.random.normal(k1, (c,), jnp.float32)
        beta = 0.1 * jax.random.normal(k2, (c,), jnp.float32)
        mean = 0.1 * jax.random.normal(k3, (c,), jnp.float32)
        var = 1.0 + 0.1 * jnp.abs(jax.random.normal(k4, (c,), jnp.float32))
        return gamma, beta, mean, var

    return {
        "conv1":     (*conv_p(keys[0], 16, 3, 3),   bn_p(keys[1], 16)),
        "conv2":     (*conv_p(keys[2], 32, 16, 3),  bn_p(keys[3], 32)),
        "conv4":     (*conv_p(keys[4], 64, 32, 3),  bn_p(keys[5], 64)),
        "deconv1":   (*convT_p(keys[6], 64, 32, 4), bn_p(keys[7], 32)),
        "deconv_r2": (*convT_p(keys[8], 32, 32, 3), bn_p(keys[9], 32)),
        "deconv3":   (*convT_p(keys[10], 32, 16, 4), bn_p(keys[11], 16)),
        "deconv4":   (*convT_p(keys[12], 16, 1, 4), None),  # Sigmoid head, no BN
    }


if __name__ == "__main__":
    key = jax.random.PRNGKey(0)
    pkey, xkey = jax.random.split(key)
    params = init_params(pkey)
    prepared = prepare_params(params)                       # one-time folding
    x = jax.random.normal(xkey, (2, 3, 16, 16), jnp.float32)    # NCHW input

    out = jax.jit(pathgen_forward)(prepared, x)
    out = jax.block_until_ready(out)

    assert out.shape == (2, 1, 16, 16), out.shape
    assert bool(jnp.all((out >= 0.0) & (out <= 1.0)))       # sigmoid range

    ref = jax.block_until_ready(jax.jit(_reference_forward)(params, x))
    err = float(jnp.max(jnp.abs(out - ref)))
    # bf16-quantized operators with f32 accumulation/epilogue stay well inside
    # this tolerance vs. the f32 conv reference.
    assert err < 5e-2, f"max abs err vs reference = {err}"

    print("KERNEL_OK")
</pallas_src>

<mosaic_0001>
module attributes {stable_mosaic.version = 11 : i64} {
  func.func @_pathgen_kernel(%arg0: i32, %arg1: memref<8x768xf32, #tpu.memory_space<vmem>>, %arg2: memref<768x1024xbf16, #tpu.memory_space<vmem>>, %arg3: memref<1024x512xbf16, #tpu.memory_space<vmem>>, %arg4: memref<512x256xbf16, #tpu.memory_space<vmem>>, %arg5: memref<256x512xbf16, #tpu.memory_space<vmem>>, %arg6: memref<512x512xbf16, #tpu.memory_space<vmem>>, %arg7: memref<512x1024xbf16, #tpu.memory_space<vmem>>, %arg8: memref<1024x256xbf16, #tpu.memory_space<vmem>>, %arg9: memref<1x1024xf32, #tpu.memory_space<vmem>>, %arg10: memref<1x512xf32, #tpu.memory_space<vmem>>, %arg11: memref<1x256xf32, #tpu.memory_space<vmem>>, %arg12: memref<1x512xf32, #tpu.memory_space<vmem>>, %arg13: memref<1x512xf32, #tpu.memory_space<vmem>>, %arg14: memref<1x1024xf32, #tpu.memory_space<vmem>>, %arg15: memref<1x256xf32, #tpu.memory_space<vmem>>, %arg16: memref<8x256xf32, #tpu.memory_space<vmem>>) attributes {dimension_semantics = [#tpu.dimension_semantics<parallel>], iteration_bounds = array<i64: 1>, scalar_prefetch = 0 : i64, scratch_operands = 0 : i64, tpu.core_type = #tpu.core_type<tc>, window_params = [{transform_indices = @transform_0, window_bounds = array<i64: 8, 768>}, {pipeline_mode = #tpu.pipeline_mode<synchronous>, transform_indices = @transform_1, window_bounds = array<i64: 768, 1024>}, {pipeline_mode = #tpu.pipeline_mode<synchronous>, transform_indices = @transform_2, window_bounds = array<i64: 1024, 512>}, {pipeline_mode = #tpu.pipeline_mode<synchronous>, transform_indices = @transform_3, window_bounds = array<i64: 512, 256>}, {pipeline_mode = #tpu.pipeline_mode<synchronous>, transform_indices = @transform_4, window_bounds = array<i64: 256, 512>}, {pipeline_mode = #tpu.pipeline_mode<synchronous>, transform_indices = @transform_5, window_bounds = array<i64: 512, 512>}, {pipeline_mode = #tpu.pipeline_mode<synchronous>, transform_indices = @transform_6, window_bounds = array<i64: 512, 1024>}, {pipeline_mode = #tpu.pipeline_mode<synchronous>, transform_indices = @transform_7, window_bounds = array<i64: 1024, 256>}, {pipeline_mode = #tpu.pipeline_mode<synchronous>, transform_indices = @transform_8, window_bounds = array<i64: 1, 1024>}, {pipeline_mode = #tpu.pipeline_mode<synchronous>, transform_indices = @transform_9, window_bounds = array<i64: 1, 512>}, {pipeline_mode = #tpu.pipeline_mode<synchronous>, transform_indices = @transform_10, window_bounds = array<i64: 1, 256>}, {pipeline_mode = #tpu.pipeline_mode<synchronous>, transform_indices = @transform_11, window_bounds = array<i64: 1, 512>}, {pipeline_mode = #tpu.pipeline_mode<synchronous>, transform_indices = @transform_12, window_bounds = array<i64: 1, 512>}, {pipeline_mode = #tpu.pipeline_mode<synchronous>, transform_indices = @transform_13, window_bounds = array<i64: 1, 1024>}, {pipeline_mode = #tpu.pipeline_mode<synchronous>, transform_indices = @transform_14, window_bounds = array<i64: 1, 256>}, {transform_indices = @transform_15, window_bounds = array<i64: 8, 256>}]} {
    %c0 = arith.constant 0 : index
    %c0_0 = arith.constant 0 : index
    %0 = vector.load %arg1[%c0, %c0_0] : memref<8x768xf32, #tpu.memory_space<vmem>>, vector<8x768xf32>
    %1 = arith.truncf %0 : vector<8x768xf32> to vector<8x768xbf16>
    %c0_1 = arith.constant 0 : index
    %c0_2 = arith.constant 0 : index
    %2 = vector.load %arg2[%c0_1, %c0_2] : memref<768x1024xbf16, #tpu.memory_space<vmem>>, vector<768x1024xbf16>
    %cst = arith.constant dense<0.000000e+00> : vector<8x1024xf32>
    %3 = tpu.matmul %1, %2, %cst {dimension_numbers = #tpu.dot_dimension_numbers<[1], [0], [0], [1], [0, 0, 1, 1], [], []>} : vector<8x768xbf16>, vector<768x1024xbf16>, vector<8x1024xf32> -> vector<8x1024xf32>
    %c0_3 = arith.constant 0 : index
    %c0_4 = arith.constant 0 : index
    %4 = vector.load %arg9[%c0_3, %c0_4] : memref<1x1024xf32, #tpu.memory_space<vmem>>, vector<1x1024xf32>
    %5 = vector.broadcast %4 : vector<1x1024xf32> to vector<8x1024xf32>
    %6 = arith.addf %3, %5 : vector<8x1024xf32>
    %cst_5 = arith.constant 0.000000e+00 : f32
    %7 = vector.broadcast %cst_5 : f32 to vector<8x1024xf32>
    %8 = arith.maximumf %6, %7 : vector<8x1024xf32>
    %9 = arith.truncf %8 : vector<8x1024xf32> to vector<8x1024xbf16>
    %c0_6 = arith.constant 0 : index
    %c0_7 = arith.constant 0 : index
    %10 = vector.load %arg3[%c0_6, %c0_7] : memref<1024x512xbf16, #tpu.memory_space<vmem>>, vector<1024x512xbf16>
    %cst_8 = arith.constant dense<0.000000e+00> : vector<8x512xf32>
    %11 = tpu.matmul %9, %10, %cst_8 {dimension_numbers = #tpu.dot_dimension_numbers<[1], [0], [0], [1], [0, 0, 1, 1], [], []>} : vector<8x1024xbf16>, vector<1024x512xbf16>, vector<8x512xf32> -> vector<8x512xf32>
    %c0_9 = arith.constant 0 : index
    %c0_10 = arith.constant 0 : index
    %12 = vector.load %arg10[%c0_9, %c0_10] : memref<1x512xf32, #tpu.memory_space<vmem>>, vector<1x512xf32>
    %13 = vector.broadcast %12 : vector<1x512xf32> to vector<8x512xf32>
    %14 = arith.addf %11, %13 : vector<8x512xf32>
    %cst_11 = arith.constant 0.000000e+00 : f32
    %15 = vector.broadcast %cst_11 : f32 to vector<8x512xf32>
    %16 = arith.maximumf %14, %15 : vector<8x512xf32>
    %17 = arith.truncf %16 : vector<8x512xf32> to vector<8x512xbf16>
    %c0_12 = arith.constant 0 : index
    %c0_13 = arith.constant 0 : index
    %18 = vector.load %arg4[%c0_12, %c0_13] : memref<512x256xbf16, #tpu.memory_space<vmem>>, vector<512x256xbf16>
    %cst_14 = arith.constant dense<0.000000e+00> : vector<8x256xf32>
    %19 = tpu.matmul %17, %18, %cst_14 {dimension_numbers = #tpu.dot_dimension_numbers<[1], [0], [0], [1], [0, 0, 1, 1], [], []>} : vector<8x512xbf16>, vector<512x256xbf16>, vector<8x256xf32> -> vector<8x256xf32>
    %c0_15 = arith.constant 0 : index
    %c0_16 = arith.constant 0 : index
    %20 = vector.load %arg11[%c0_15, %c0_16] : memref<1x256xf32, #tpu.memory_space<vmem>>, vector<1x256xf32>
    %21 = vector.broadcast %20 : vector<1x256xf32> to vector<8x256xf32>
    %22 = arith.addf %19, %21 : vector<8x256xf32>
    %cst_17 = arith.constant 0.000000e+00 : f32
    %23 = vector.broadcast %cst_17 : f32 to vector<8x256xf32>
    %24 = arith.maximumf %22, %23 : vector<8x256xf32>
    %25 = arith.truncf %24 : vector<8x256xf32> to vector<8x256xbf16>
    %c0_18 = arith.constant 0 : index
    %c0_19 = arith.constant 0 : index
    %26 = vector.load %arg5[%c0_18, %c0_19] : memref<256x512xbf16, #tpu.memory_space<vmem>>, vector<256x512xbf16>
    %cst_20 = arith.constant dense<0.000000e+00> : vector<8x512xf32>
    %27 = tpu.matmul %25, %26, %cst_20 {dimension_numbers = #tpu.dot_dimension_numbers<[1], [0], [0], [1], [0, 0, 1, 1], [], []>} : vector<8x256xbf16>, vector<256x512xbf16>, vector<8x512xf32> -> vector<8x512xf32>
    %c0_21 = arith.constant 0 : index
    %c0_22 = arith.constant 0 : index
    %28 = vector.load %arg12[%c0_21, %c0_22] : memref<1x512xf32, #tpu.memory_space<vmem>>, vector<1x512xf32>
    %29 = vector.broadcast %28 : vector<1x512xf32> to vector<8x512xf32>
    %30 = arith.addf %27, %29 : vector<8x512xf32>
    %cst_23 = arith.constant 0.000000e+00 : f32
    %31 = vector.broadcast %cst_23 : f32 to vector<8x512xf32>
    %32 = arith.maximumf %30, %31 : vector<8x512xf32>
    %c0_24 = arith.constant 0 : index
    %c0_25 = arith.constant 0 : index
    %33 = vector.load %arg6[%c0_24, %c0_25] : memref<512x512xbf16, #tpu.memory_space<vmem>>, vector<512x512xbf16>
    %c0_26 = arith.constant 0 : index
    %c0_27 = arith.constant 0 : index
    %34 = vector.load %arg13[%c0_26, %c0_27] : memref<1x512xf32, #tpu.memory_space<vmem>>, vector<1x512xf32>
    %35 = vector.shape_cast %34 : vector<1x512xf32> to vector<1x512xf32>
    %36 = vector.broadcast %35 : vector<1x512xf32> to vector<8x512xf32>
    %37 = arith.truncf %32 : vector<8x512xf32> to vector<8x512xbf16>
    %cst_28 = arith.constant dense<0.000000e+00> : vector<8x512xf32>
    %38 = tpu.matmul %37, %33, %cst_28 {dimension_numbers = #tpu.dot_dimension_numbers<[1], [0], [0], [1], [0, 0, 1, 1], [], []>} : vector<8x512xbf16>, vector<512x512xbf16>, vector<8x512xf32> -> vector<8x512xf32>
    %39 = arith.addf %38, %36 : vector<8x512xf32>
    %cst_29 = arith.constant 0.000000e+00 : f32
    %40 = vector.broadcast %cst_29 : f32 to vector<8x512xf32>
    %41 = arith.maximumf %39, %40 : vector<8x512xf32>
    %42 = arith.truncf %41 : vector<8x512xf32> to vector<8x512xbf16>
    %cst_30 = arith.constant dense<0.000000e+00> : vector<8x512xf32>
    %43 = tpu.matmul %42, %33, %cst_30 {dimension_numbers = #tpu.dot_dimension_numbers<[1], [0], [0], [1], [0, 0, 1, 1], [], []>} : vector<8x512xbf16>, vector<512x512xbf16>, vector<8x512xf32> -> vector<8x512xf32>
    %44 = arith.addf %43, %36 : vector<8x512xf32>
    %cst_31 = arith.constant 0.000000e+00 : f32
    %45 = vector.broadcast %cst_31 : f32 to vector<8x512xf32>
    %46 = arith.maximumf %44, %45 : vector<8x512xf32>
    %47 = arith.truncf %46 : vector<8x512xf32> to vector<8x512xbf16>
    %cst_32 = arith.constant dense<0.000000e+00> : vector<8x512xf32>
    %48 = tpu.matmul %47, %33, %cst_32 {dimension_numbers = #tpu.dot_dimension_numbers<[1], [0], [0], [1], [0, 0, 1, 1], [], []>} : vector<8x512xbf16>, vector<512x512xbf16>, vector<8x512xf32> -> vector<8x512xf32>
    %49 = arith.addf %48, %36 : vector<8x512xf32>
    %cst_33 = arith.constant 0.000000e+00 : f32
    %50 = vector.broadcast %cst_33 : f32 to vector<8x512xf32>
    %51 = arith.maximumf %49, %50 : vector<8x512xf32>
    %52 = arith.truncf %51 : vector<8x512xf32> to vector<8x512xbf16>
    %cst_34 = arith.constant dense<0.000000e+00> : vector<8x512xf32>
    %53 = tpu.matmul %52, %33, %cst_34 {dimension_numbers = #tpu.dot_dimension_numbers<[1], [0], [0], [1], [0, 0, 1, 1], [], []>} : vector<8x512xbf16>, vector<512x512xbf16>, vector<8x512xf32> -> vector<8x512xf32>
    %54 = arith.addf %53, %36 : vector<8x512xf32>
    %cst_35 = arith.constant 0.000000e+00 : f32
    %55 = vector.broadcast %cst_35 : f32 to vector<8x512xf32>
    %56 = arith.maximumf %54, %55 : vector<8x512xf32>
    %57 = arith.truncf %56 : vector<8x512xf32> to vector<8x512xbf16>
    %cst_36 = arith.constant dense<0.000000e+00> : vector<8x512xf32>
    %58 = tpu.matmul %57, %33, %cst_36 {dimension_numbers = #tpu.dot_dimension_numbers<[1], [0], [0], [1], [0, 0, 1, 1], [], []>} : vector<8x512xbf16>, vector<512x512xbf16>, vector<8x512xf32> -> vector<8x512xf32>
    %59 = arith.addf %58, %36 : vector<8x512xf32>
    %cst_37 = arith.constant 0.000000e+00 : f32
    %60 = vector.broadcast %cst_37 : f32 to vector<8x512xf32>
    %61 = arith.maximumf %59, %60 : vector<8x512xf32>
    %62 = arith.truncf %61 : vector<8x512xf32> to vector<8x512xbf16>
    %cst_38 = arith.constant dense<0.000000e+00> : vector<8x512xf32>
    %63 = tpu.matmul %62, %33, %cst_38 {dimension_numbers = #tpu.dot_dimension_numbers<[1], [0], [0], [1], [0, 0, 1, 1], [], []>} : vector<8x512xbf16>, vector<512x512xbf16>, vector<8x512xf32> -> vector<8x512xf32>
    %64 = arith.addf %63, %36 : vector<8x512xf32>
    %cst_39 = arith.constant 0.000000e+00 : f32
    %65 = vector.broadcast %cst_39 : f32 to vector<8x512xf32>
    %66 = arith.maximumf %64, %65 : vector<8x512xf32>
    %67 = arith.truncf %66 : vector<8x512xf32> to vector<8x512xbf16>
    %cst_40 = arith.constant dense<0.000000e+00> : vector<8x512xf32>
    %68 = tpu.matmul %67, %33, %cst_40 {dimension_numbers = #tpu.dot_dimension_numbers<[1], [0], [0], [1], [0, 0, 1, 1], [], []>} : vector<8x512xbf16>, vector<512x512xbf16>, vector<8x512xf32> -> vector<8x512xf32>
    %69 = arith.addf %68, %36 : vector<8x512xf32>
    %cst_41 = arith.constant 0.000000e+00 : f32
    %70 = vector.broadcast %cst_41 : f32 to vector<8x512xf32>
    %71 = arith.maximumf %69, %70 : vector<8x512xf32>
    %72 = arith.truncf %71 : vector<8x512xf32> to vector<8x512xbf16>
    %cst_42 = arith.constant dense<0.000000e+00> : vector<8x512xf32>
    %73 = tpu.matmul %72, %33, %cst_42 {dimension_numbers = #tpu.dot_dimension_numbers<[1], [0], [0], [1], [0, 0, 1, 1], [], []>} : vector<8x512xbf16>, vector<512x512xbf16>, vector<8x512xf32> -> vector<8x512xf32>
    %74 = arith.addf %73, %36 : vector<8x512xf32>
    %cst_43 = arith.constant 0.000000e+00 : f32
    %75 = vector.broadcast %cst_43 : f32 to vector<8x512xf32>
    %76 = arith.maximumf %74, %75 : vector<8x512xf32>
    %77 = arith.truncf %76 : vector<8x512xf32> to vector<8x512xbf16>
    %cst_44 = arith.constant dense<0.000000e+00> : vector<8x512xf32>
    %78 = tpu.matmul %77, %33, %cst_44 {dimension_numbers = #tpu.dot_dimension_numbers<[1], [0], [0], [1], [0, 0, 1, 1], [], []>} : vector<8x512xbf16>, vector<512x512xbf16>, vector<8x512xf32> -> vector<8x512xf32>
    %79 = arith.addf %78, %36 : vector<8x512xf32>
    %cst_45 = arith.constant 0.000000e+00 : f32
    %80 = vector.broadcast %cst_45 : f32 to vector<8x512xf32>
    %81 = arith.maximumf %79, %80 : vector<8x512xf32>
    %82 = arith.truncf %81 : vector<8x512xf32> to vector<8x512xbf16>
    %cst_46 = arith.constant dense<0.000000e+00> : vector<8x512xf32>
    %83 = tpu.matmul %82, %33, %cst_46 {dimension_numbers = #tpu.dot_dimension_numbers<[1], [0], [0], [1], [0, 0, 1, 1], [], []>} : vector<8x512xbf16>, vector<512x512xbf16>, vector<8x512xf32> -> vector<8x512xf32>
    %84 = arith.addf %83, %36 : vector<8x512xf32>
    %cst_47 = arith.constant 0.000000e+00 : f32
    %85 = vector.broadcast %cst_47 : f32 to vector<8x512xf32>
    %86 = arith.maximumf %84, %85 : vector<8x512xf32>
    %87 = arith.truncf %86 : vector<8x512xf32> to vector<8x512xbf16>
    %c0_48 = arith.constant 0 : index
    %c0_49 = arith.constant 0 : index
    %88 = vector.load %arg7[%c0_48, %c0_49] : memref<512x1024xbf16, #tpu.memory_space<vmem>>, vector<512x1024xbf16>
    %cst_50 = arith.constant dense<0.000000e+00> : vector<8x1024xf32>
    %89 = tpu.matmul %87, %88, %cst_50 {dimension_numbers = #tpu.dot_dimension_numbers<[1], [0], [0], [1], [0, 0, 1, 1], [], []>} : vector<8x512xbf16>, vector<512x1024xbf16>, vector<8x1024xf32> -> vector<8x1024xf32>
    %c0_51 = arith.constant 0 : index
    %c0_52 = arith.constant 0 : index
    %90 = vector.load %arg14[%c0_51, %c0_52] : memref<1x1024xf32, #tpu.memory_space<vmem>>, vector<1x1024xf32>
    %91 = vector.broadcast %90 : vector<1x1024xf32> to vector<8x1024xf32>
    %92 = arith.addf %89, %91 : vector<8x1024xf32>
    %cst_53 = arith.constant 0.000000e+00 : f32
    %93 = vector.broadcast %cst_53 : f32 to vector<8x1024xf32>
    %94 = arith.maximumf %92, %93 : vector<8x1024xf32>
    %95 = arith.truncf %94 : vector<8x1024xf32> to vector<8x1024xbf16>
    %c0_54 = arith.constant 0 : index
    %c0_55 = arith.constant 0 : index
    %96 = vector.load %arg8[%c0_54, %c0_55] : memref<1024x256xbf16, #tpu.memory_space<vmem>>, vector<1024x256xbf16>
    %cst_56 = arith.constant dense<0.000000e+00> : vector<8x256xf32>
    %97 = tpu.matmul %95, %96, %cst_56 {dimension_numbers = #tpu.dot_dimension_numbers<[1], [0], [0], [1], [0, 0, 1, 1], [], []>} : vector<8x1024xbf16>, vector<1024x256xbf16>, vector<8x256xf32> -> vector<8x256xf32>
    %c0_57 = arith.constant 0 : index
    %c0_58 = arith.constant 0 : index
    %98 = vector.load %arg15[%c0_57, %c0_58] : memref<1x256xf32, #tpu.memory_space<vmem>>, vector<1x256xf32>
    %99 = vector.broadcast %98 : vector<1x256xf32> to vector<8x256xf32>
    %100 = arith.addf %97, %99 : vector<8x256xf32>
    %101 = arith.negf %100 : vector<8x256xf32>
    %102 = math.exp %101 : vector<8x256xf32>
    %cst_59 = arith.constant 1.000000e+00 : f32
    %103 = vector.broadcast %cst_59 : f32 to vector<8x256xf32>
    %104 = arith.addf %103, %102 : vector<8x256xf32>
    %105 = arith.divf %103, %104 : vector<8x256xf32>
    %c0_60 = arith.constant 0 : index
    %c0_61 = arith.constant 0 : index
    %106 = vector.load %arg16[%c0_60, %c0_61] : memref<8x256xf32, #tpu.memory_space<vmem>>, vector<8x256xf32>
    tpu.vector_store %arg16[%c0_60, %c0_61], %105 {strides = array<i32>} : memref<8x256xf32, #tpu.memory_space<vmem>>, vector<8x256xf32>,
    return
  }
  func.func @transform_0(%arg0: i32) -> (i32, i32) {
    %c0_i32 = arith.constant 0 : i32
    %c0_i32_0 = arith.constant 0 : i32
    return %arg0, %c0_i32 : i32, i32
  }
  func.func @transform_1(%arg0: i32) -> (i32, i32) {
    %c0_i32 = arith.constant 0 : i32
    %c0_i32_0 = arith.constant 0 : i32
    %c0_i32_1 = arith.constant 0 : i32
    return %c0_i32, %c0_i32_0 : i32, i32
  }
  func.func @transform_2(%arg0: i32) -> (i32, i32) {
    %c0_i32 = arith.constant 0 : i32
    %c0_i32_0 = arith.constant 0 : i32
    %c0_i32_1 = arith.constant 0 : i32
    return %c0_i32, %c0_i32_0 : i32, i32
  }
  func.func @transform_3(%arg0: i32) -> (i32, i32) {
    %c0_i32 = arith.constant 0 : i32
    %c0_i32_0 = arith.constant 0 : i32
    %c0_i32_1 = arith.constant 0 : i32
    return %c0_i32, %c0_i32_0 : i32, i32
  }
  func.func @transform_4(%arg0: i32) -> (i32, i32) {
    %c0_i32 = arith.constant 0 : i32
    %c0_i32_0 = arith.constant 0 : i32
    %c0_i32_1 = arith.constant 0 : i32
    return %c0_i32, %c0_i32_0 : i32, i32
  }
  func.func @transform_5(%arg0: i32) -> (i32, i32) {
    %c0_i32 = arith.constant 0 : i32
    %c0_i32_0 = arith.constant 0 : i32
    %c0_i32_1 = arith.constant 0 : i32
    return %c0_i32, %c0_i32_0 : i32, i32
  }
  func.func @transform_6(%arg0: i32) -> (i32, i32) {
    %c0_i32 = arith.constant 0 : i32
    %c0_i32_0 = arith.constant 0 : i32
    %c0_i32_1 = arith.constant 0 : i32
    return %c0_i32, %c0_i32_0 : i32, i32
  }
  func.func @transform_7(%arg0: i32) -> (i32, i32) {
    %c0_i32 = arith.constant 0 : i32
    %c0_i32_0 = arith.constant 0 : i32
    %c0_i32_1 = arith.constant 0 : i32
    return %c0_i32, %c0_i32_0 : i32, i32
  }
  func.func @transform_8(%arg0: i32) -> (i32, i32) {
    %c0_i32 = arith.constant 0 : i32
    %c0_i32_0 = arith.constant 0 : i32
    %c0_i32_1 = arith.constant 0 : i32
    return %c0_i32, %c0_i32_0 : i32, i32
  }
  func.func @transform_9(%arg0: i32) -> (i32, i32) {
    %c0_i32 = arith.constant 0 : i32
    %c0_i32_0 = arith.constant 0 : i32
    %c0_i32_1 = arith.constant 0 : i32
    return %c0_i32, %c0_i32_0 : i32, i32
  }
  func.func @transform_10(%arg0: i32) -> (i32, i32) {
    %c0_i32 = arith.constant 0 : i32
    %c0_i32_0 = arith.constant 0 : i32
    %c0_i32_1 = arith.constant 0 : i32
    return %c0_i32, %c0_i32_0 : i32, i32
  }
  func.func @transform_11(%arg0: i32) -> (i32, i32) {
    %c0_i32 = arith.constant 0 : i32
    %c0_i32_0 = arith.constant 0 : i32
    %c0_i32_1 = arith.constant 0 : i32
    return %c0_i32, %c0_i32_0 : i32, i32
  }
  func.func @transform_12(%arg0: i32) -> (i32, i32) {
    %c0_i32 = arith.constant 0 : i32
    %c0_i32_0 = arith.constant 0 : i32
    %c0_i32_1 = arith.constant 0 : i32
    return %c0_i32, %c0_i32_0 : i32, i32
  }
  func.func @transform_13(%arg0: i32) -> (i32, i32) {
    %c0_i32 = arith.constant 0 : i32
    %c0_i32_0 = arith.constant 0 : i32
    %c0_i32_1 = arith.constant 0 : i32
    return %c0_i32, %c0_i32_0 : i32, i32
  }
  func.func @transform_14(%arg0: i32) -> (i32, i32) {
    %c0_i32 = arith.constant 0 : i32
    %c0_i32_0 = arith.constant 0 : i32
    %c0_i32_1 = arith.constant 0 : i32
    return %c0_i32, %c0_i32_0 : i32, i32
  }
  func.func @transform_15(%arg0: i32) -> (i32, i32) {
    %c0_i32 = arith.constant 0 : i32
    %c0_i32_0 = arith.constant 0 : i32
    return %arg0, %c0_i32 : i32, i32
  }
}

</mosaic_0001>

<llo_original>
// kernel: pathgen_forward.1
$region0: #{pathgen_forward.1}
  #allocation0 [shape = 'u32[]', space=smem, size = 0x4, offset = 0x4, fixed_abs, tag = 'smem constant byte address 0x4 - core index']
  #allocation1 [shape = 'u32[72,128]{1,0:T(1,128)}', space=vmem, size = 0x9000, scoped, tag = 'internal scratch']
  %s0 = inlined_call_operand.vmem [shape: f32[8,768], index: 0, kind: input, shape index: {}]
  %s1 = inlined_call_operand.hbm [shape: bf16[768,1024], index: 1, kind: input, shape index: {}]
  %s2 = inlined_call_operand.hbm [shape: bf16[1024,512], index: 2, kind: input, shape index: {}]
  %s3 = inlined_call_operand.hbm [shape: bf16[512,256], index: 3, kind: input, shape index: {}]
  %s4 = inlined_call_operand.hbm [shape: bf16[256,512], index: 4, kind: input, shape index: {}]
  %s5 = inlined_call_operand.hbm [shape: bf16[512,512], index: 5, kind: input, shape index: {}]
  %s6 = inlined_call_operand.hbm [shape: bf16[512,1024], index: 6, kind: input, shape index: {}]
  %s7 = inlined_call_operand.hbm [shape: bf16[1024,256], index: 7, kind: input, shape index: {}]
  %s8 = inlined_call_operand.hbm [shape: f32[1,1024], index: 8, kind: input, shape index: {}]
  %s9 = inlined_call_operand.hbm [shape: f32[1,512], index: 9, kind: input, shape index: {}]
  %s10 = inlined_call_operand.hbm [shape: f32[1,256], index: 10, kind: input, shape index: {}]
  %s11 = inlined_call_operand.hbm [shape: f32[1,512], index: 11, kind: input, shape index: {}]
  %s12 = inlined_call_operand.hbm [shape: f32[1,512], index: 12, kind: input, shape index: {}]
  %s13 = inlined_call_operand.hbm [shape: f32[1,1024], index: 13, kind: input, shape index: {}]
  %s14 = inlined_call_operand.hbm [shape: f32[1,256], index: 14, kind: input, shape index: {}]
  %s15 = inlined_call_operand.vmem [shape: f32[8,256], index: 15, kind: output, shape index: {}]
  %s16 = sld [smem:[#allocation0]]
  $region126: #{pathgen_forward.1} parent=0
    _
  %s18 = ssub.s32 1, %s16
  %s19 = scalar_select 0, %s18, %s16
  $region1: #{pathgen_forward.1} parent=0
    #allocation2 [shape = 'u8[1572864]{0}', space=vmem, size = 0x180000, scoped, tag = 'input window, operand 1, single buffered']
    #allocation3 [shape = 's32[1]{0}', space=sflag, size = 0x4, scoped, tag = 'scoped memory for pathgen_forward.1']
    #allocation4 [shape = 'u8[1048576]{0}', space=vmem, size = 0x100000, scoped, tag = 'input window, operand 2, single buffered']
    #allocation5 [shape = 's32[1]{0}', space=sflag, size = 0x4, scoped, tag = 'scoped memory for pathgen_forward.1']
    #allocation6 [shape = 'u8[262144]{0}', space=vmem, size = 0x40000, scoped, tag = 'input window, operand 3, single buffered']
    #allocation7 [shape = 'u8[262144]{0}', space=vmem, size = 0x40000, scoped, tag = 'input window, operand 4, single buffered']
    #allocation8 [shape = 's32[1]{0}', space=sflag, size = 0x4, scoped, tag = 'scoped memory for pathgen_forward.1']
    #allocation9 [shape = 'u8[524288]{0}', space=vmem, size = 0x80000, scoped, tag = 'input window, operand 5, single buffered']
    #allocation10 [shape = 'u8[1048576]{0}', space=vmem, size = 0x100000, scoped, tag = 'input window, operand 6, single buffered']
    #allocation11 [shape = 's32[1]{0}', space=sflag, size = 0x4, scoped, tag = 'scoped memory for pathgen_forward.1']
    #allocation12 [shape = 'u8[524288]{0}', space=vmem, size = 0x80000, scoped, tag = 'input window, operand 7, single buffered']
    #allocation13 [shape = 'u8[4096]{0}', space=vmem, size = 0x1000, scoped, tag = 'input window, operand 8, single buffered']
    #allocation14 [shape = 's32[1]{0}', space=sflag, size = 0x4, scoped, tag = 'scoped memory for pathgen_forward.1']
    #allocation15 [shape = 'u8[2048]{0}', space=vmem, size = 0x800, scoped, tag = 'input window, operand 9, single buffered']
    #allocation16 [shape = 'u8[1024]{0}', space=vmem, size = 0x400, scoped, tag = 'input window, operand 10, single buffered']
    #allocation17 [shape = 's32[1]{0}', space=sflag, size = 0x4, scoped, tag = 'scoped memory for pathgen_forward.1']
    #allocation18 [shape = 'u8[2048]{0}', space=vmem, size = 0x800, scoped, tag = 'input window, operand 11, single buffered']
    #allocation19 [shape = 'u8[2048]{0}', space=vmem, size = 0x800, scoped, tag = 'input window, operand 12, single buffered']
    #allocation20 [shape = 's32[1]{0}', space=sflag, size = 0x4, scoped, tag = 'scoped memory for pathgen_forward.1']
    #allocation21 [shape = 'u8[4096]{0}', space=vmem, size = 0x1000, scoped, tag = 'input window, operand 13, single buffered']
    #allocation22 [shape = 'u8[1024]{0}', space=vmem, size = 0x400, scoped, tag = 'input window, operand 14, single buffered']
    #allocation23 [shape = 's32[1]{0}', space=sflag, size = 0x4, scoped, tag = 'scoped memory for pathgen_forward.1']
    %20 = vsyncpa [#allocation3], 0
    %21 = vsyncpa [#allocation5], 0
    %22 = vsyncpa [#allocation8], 0
    %23 = vsyncpa [#allocation11], 0
    %24 = vsyncpa [#allocation14], 0
    %25 = vsyncpa [#allocation17], 0
    %26 = vsyncpa [#allocation20], 0
    %27 = vsyncpa [#allocation23], 0
    // Predicated region
    $region2: #{pathgen_forward.1} parent=1 // pred_check
      _
    $region3: #{pathgen_forward.1} parent=1 // pred_check_branch
      %29 = sbr.rel (0) target = $region5
    $region4: #{pathgen_forward.1} parent=1 // pred_region
      _
    $region5: #{pathgen_forward.1} parent=1 // pred_fallthru
      _
    // Predicated region
    $region6: #{pathgen_forward.1} parent=1 // pred_check
      _
    $region7: #{pathgen_forward.1} parent=1 // pred_check_branch
      %31 = sbr.rel (0) target = $region9
    $region8: #{pathgen_forward.1} parent=1 // pred_region
      %33 = vsyncadd [#allocation3], 0
      %s34 = sshll.u32 %s1, 4
      %s35 = int_to_ptr.hbm [resolvable:$true] %s34
      %s36 = sshll.u32 [#allocation2], 4
      %s37 = int_to_ptr.vmem [resolvable:$true] %s36
      %42 = dma.hbm_to_vmem [thread:$0]  %s35, 49152, %s37, [#allocation3], 512, 512, 32
    $region9: #{pathgen_forward.1} parent=1 // pred_fallthru
      _
    // Predicated region
    $region10: #{pathgen_forward.1} parent=1 // pred_check
      _
    $region11: #{pathgen_forward.1} parent=1 // pred_check_branch
      %44 = sbr.rel (0) target = $region13
    $region12: #{pathgen_forward.1} parent=1 // pred_region
      %46 = vsyncadd [#allocation5], 0
      %s47 = sshll.u32 %s2, 4
      %s48 = int_to_ptr.hbm [resolvable:$true] %s47
      %s49 = sshll.u32 [#allocation4], 4
      %s50 = int_to_ptr.vmem [resolvable:$true] %s49
      %55 = dma.hbm_to_vmem [thread:$0]  %s48, 32768, %s50, [#allocation5], 256, 256, 16
    $region13: #{pathgen_forward.1} parent=1 // pred_fallthru
      _
    // Predicated region
    $region14: #{pathgen_forward.1} parent=1 // pred_check
      _
    $region15: #{pathgen_forward.1} parent=1 // pred_check_branch
      %57 = sbr.rel (0) target = $region17
    $region16: #{pathgen_forward.1} parent=1 // pred_region
      %59 = vsyncadd [#allocation5], 0
      %s60 = sshll.u32 %s3, 4
      %s61 = int_to_ptr.hbm [resolvable:$true] %s60
      %s62 = sshll.u32 [#allocation6], 4
      %s63 = int_to_ptr.vmem [resolvable:$true] %s62
      %68 = dma.hbm_to_vmem [thread:$0]  %s61, 8192, %s63, [#allocation5], 128, 128, 8
    $region17: #{pathgen_forward.1} parent=1 // pred_fallthru
      _
    // Predicated region
    $region18: #{pathgen_forward.1} parent=1 // pred_check
      _
    $region19: #{pathgen_forward.1} parent=1 // pred_check_branch
      %70 = sbr.rel (0) target = $region21
    $region20: #{pathgen_forward.1} parent=1 // pred_region
      %72 = vsyncadd [#allocation8], 0
      %s73 = sshll.u32 %s4, 4
      %s74 = int_to_ptr.hbm [resolvable:$true] %s73
      %s75 = sshll.u32 [#allocation7], 4
      %s76 = int_to_ptr.vmem [resolvable:$true] %s75
      %81 = dma.hbm_to_vmem [thread:$0]  %s74, 8192, %s76, [#allocation8], 256, 256, 16
    $region21: #{pathgen_forward.1} parent=1 // pred_fallthru
      _
    // Predicated region
    $region22: #{pathgen_forward.1} parent=1 // pred_check
      _
    $region23: #{pathgen_forward.1} parent=1 // pred_check_branch
      %83 = sbr.rel (0) target = $region25
    $region24: #{pathgen_forward.1} parent=1 // pred_region
      %85 = vsyncadd [#allocation8], 0
      %s86 = sshll.u32 %s5, 4
      %s87 = int_to_ptr.hbm [resolvable:$true] %s86
      %s88 = sshll.u32 [#allocation9], 4
      %s89 = int_to_ptr.vmem [resolvable:$true] %s88
      %94 = dma.hbm_to_vmem [thread:$0]  %s87, 16384, %s89, [#allocation8], 256, 256, 16
    $region25: #{pathgen_forward.1} parent=1 // pred_fallthru
      _
    // Predicated region
    $region26: #{pathgen_forward.1} parent=1 // pred_check
      _
    $region27: #{pathgen_forward.1} parent=1 // pred_check_branch
      %96 = sbr.rel (0) target = $region29
    $region28: #{pathgen_forward.1} parent=1 // pred_region
      %98 = vsyncadd [#allocation11], 0
      %s99 = sshll.u32 %s6, 4
      %s100 = int_to_ptr.hbm [resolvable:$true] %s99
      %s101 = sshll.u32 [#allocation10], 4
      %s102 = int_to_ptr.vmem [resolvable:$true] %s101
      %107 = dma.hbm_to_vmem [thread:$0]  %s100, 32768, %s102, [#allocation11], 512, 512, 32
    $region29: #{pathgen_forward.1} parent=1 // pred_fallthru
      _
    // Predicated region
    $region30: #{pathgen_forward.1} parent=1 // pred_check
      _
    $region31: #{pathgen_forward.1} parent=1 // pred_check_branch
      %109 = sbr.rel (0) target = $region33
    $region32: #{pathgen_forward.1} parent=1 // pred_region
      %111 = vsyncadd [#allocation11], 0
      %s112 = sshll.u32 %s7, 4
      %s113 = int_to_ptr.hbm [resolvable:$true] %s112
      %s114 = sshll.u32 [#allocation12], 4
      %s115 = int_to_ptr.vmem [resolvable:$true] %s114
      %120 = dma.hbm_to_vmem [thread:$0]  %s113, 16384, %s115, [#allocation11], 128, 128, 8
    $region33: #{pathgen_forward.1} parent=1 // pred_fallthru
      _
    // Predicated region
    $region34: #{pathgen_forward.1} parent=1 // pred_check
      _
    $region35: #{pathgen_forward.1} parent=1 // pred_check_branch
      %122 = sbr.rel (0) target = $region37
    $region36: #{pathgen_forward.1} parent=1 // pred_region
      %124 = vsyncadd [#allocation14], 0
      %s126 = sshll.u32 %s8, 4
      %s127 = int_to_ptr.hbm [resolvable:$true] %s126
      %s128 = sshll.u32 [#allocation13], 4
      %s129 = int_to_ptr.vmem [resolvable:$true] %s128
      %131 = dma.hbm_to_vmem [thread:$0]  %s127, 128, %s129, [#allocation14]
    $region37: #{pathgen_forward.1} parent=1 // pred_fallthru
      _
    // Predicated region
    $region38: #{pathgen_forward.1} parent=1 // pred_check
      _
    $region39: #{pathgen_forward.1} parent=1 // pred_check_branch
      %133 = sbr.rel (0) target = $region41
    $region40: #{pathgen_forward.1} parent=1 // pred_region
      %135 = vsyncadd [#allocation14], 0
      %s137 = sshll.u32 %s9, 4
      %s138 = int_to_ptr.hbm [resolvable:$true] %s137
      %s139 = sshll.u32 [#allocation15], 4
      %s140 = int_to_ptr.vmem [resolvable:$true] %s139
      %142 = dma.hbm_to_vmem [thread:$0]  %s138, 64, %s140, [#allocation14]
    $region41: #{pathgen_forward.1} parent=1 // pred_fallthru
      _
    // Predicated region
    $region42: #{pathgen_forward.1} parent=1 // pred_check
      _
    $region43: #{pathgen_forward.1} parent=1 // pred_check_branch
      %144 = sbr.rel (0) target = $region45
    $region44: #{pathgen_forward.1} parent=1 // pred_region
      %146 = vsyncadd [#allocation17], 0
      %s148 = sshll.u32 %s10, 4
      %s149 = int_to_ptr.hbm [resolvable:$true] %s148
      %s150 = sshll.u32 [#allocation16], 4
      %s151 = int_to_ptr.vmem [resolvable:$true] %s150
      %153 = dma.hbm_to_vmem [thread:$0]  %s149, 32, %s151, [#allocation17]
    $region45: #{pathgen_forward.1} parent=1 // pred_fallthru
      _
    // Predicated region
    $region46: #{pathgen_forward.1} parent=1 // pred_check
      _
    $region47: #{pathgen_forward.1} parent=1 // pred_check_branch
      %155 = sbr.rel (0) target = $region49
    $region48: #{pathgen_forward.1} parent=1 // pred_region
      %157 = vsyncadd [#allocation17], 0
      %s159 = sshll.u32 %s11, 4
      %s160 = int_to_ptr.hbm [resolvable:$true] %s159
      %s161 = sshll.u32 [#allocation18], 4
      %s162 = int_to_ptr.vmem [resolvable:$true] %s161
      %164 = dma.hbm_to_vmem [thread:$0]  %s160, 64, %s162, [#allocation17]
    $region49: #{pathgen_forward.1} parent=1 // pred_fallthru
      _
    // Predicated region
    $region50: #{pathgen_forward.1} parent=1 // pred_check
      _
    $region51: #{pathgen_forward.1} parent=1 // pred_check_branch
      %166 = sbr.rel (0) target = $region53
    $region52: #{pathgen_forward.1} parent=1 // pred_region
      %168 = vsyncadd [#allocation20], 0
      %s170 = sshll.u32 %s12, 4
      %s171 = int_to_ptr.hbm [resolvable:$true] %s170
      %s172 = sshll.u32 [#allocation19], 4
      %s173 = int_to_ptr.vmem [resolvable:$true] %s172
      %175 = dma.hbm_to_vmem [thread:$0]  %s171, 64, %s173, [#allocation20]
    $region53: #{pathgen_forward.1} parent=1 // pred_fallthru
      _
    // Predicated region
    $region54: #{pathgen_forward.1} parent=1 // pred_check
      _
    $region55: #{pathgen_forward.1} parent=1 // pred_check_branch
      %177 = sbr.rel (0) target = $region57
    $region56: #{pathgen_forward.1} parent=1 // pred_region
      %179 = vsyncadd [#allocation20], 0
      %s181 = sshll.u32 %s13, 4
      %s182 = int_to_ptr.hbm [resolvable:$true] %s181
      %s183 = sshll.u32 [#allocation21], 4
      %s184 = int_to_ptr.vmem [resolvable:$true] %s183
      %186 = dma.hbm_to_vmem [thread:$0]  %s182, 128, %s184, [#allocation20]
    $region57: #{pathgen_forward.1} parent=1 // pred_fallthru
      _
    // Predicated region
    $region58: #{pathgen_forward.1} parent=1 // pred_check
      _
    $region59: #{pathgen_forward.1} parent=1 // pred_check_branch
      %188 = sbr.rel (0) target = $region61
    $region60: #{pathgen_forward.1} parent=1 // pred_region
      %190 = vsyncadd [#allocation23], 0
      %s192 = sshll.u32 %s14, 4
      %s193 = int_to_ptr.hbm [resolvable:$true] %s192
      %s194 = sshll.u32 [#allocation22], 4
      %s195 = int_to_ptr.vmem [resolvable:$true] %s194
      %197 = dma.hbm_to_vmem [thread:$0]  %s193, 32, %s195, [#allocation23]
    $region61: #{pathgen_forward.1} parent=1 // pred_fallthru
      _
    // Predicated region
    $region62: #{pathgen_forward.1} parent=1 // pred_check
      _
    $region63: #{pathgen_forward.1} parent=1 // pred_check_branch
      %199 = sbr.rel (0) target = $region65
    $region64: #{pathgen_forward.1} parent=1 // pred_region
      %201 = dma.done [#allocation3], 49152
    $region65: #{pathgen_forward.1} parent=1 // pred_fallthru
      _
    // Predicated region
    $region66: #{pathgen_forward.1} parent=1 // pred_check
      _
    $region67: #{pathgen_forward.1} parent=1 // pred_check_branch
      %203 = sbr.rel (0) target = $region69
    $region68: #{pathgen_forward.1} parent=1 // pred_region
      %205 = dma.done [#allocation5], 32768
    $region69: #{pathgen_forward.1} parent=1 // pred_fallthru
      _
    // Predicated region
    $region70: #{pathgen_forward.1} parent=1 // pred_check
      _
    $region71: #{pathgen_forward.1} parent=1 // pred_check_branch
      %207 = sbr.rel (0) target = $region73
    $region72: #{pathgen_forward.1} parent=1 // pred_region
      %209 = dma.done [#allocation5], 8192
    $region73: #{pathgen_forward.1} parent=1 // pred_fallthru
      _
    // Predicated region
    $region74: #{pathgen_forward.1} parent=1 // pred_check
      _
    $region75: #{pathgen_forward.1} parent=1 // pred_check_branch
      %211 = sbr.rel (0) target = $region77
    $region76: #{pathgen_forward.1} parent=1 // pred_region
      %213 = dma.done [#allocation8], 8192
    $region77: #{pathgen_forward.1} parent=1 // pred_fallthru
      _
    // Predicated region
    $region78: #{pathgen_forward.1} parent=1 // pred_check
      _
    $region79: #{pathgen_forward.1} parent=1 // pred_check_branch
      %215 = sbr.rel (0) target = $region81
    $region80: #{pathgen_forward.1} parent=1 // pred_region
      %217 = dma.done [#allocation8], 16384
    $region81: #{pathgen_forward.1} parent=1 // pred_fallthru
      _
    // Predicated region
    $region82: #{pathgen_forward.1} parent=1 // pred_check
      _
    $region83: #{pathgen_forward.1} parent=1 // pred_check_branch
      %219 = sbr.rel (0) target = $region85
    $region84: #{pathgen_forward.1} parent=1 // pred_region
      %221 = dma.done [#allocation11], 32768
    $region85: #{pathgen_forward.1} parent=1 // pred_fallthru
      _
    // Predicated region
    $region86: #{pathgen_forward.1} parent=1 // pred_check
      _
    $region87: #{pathgen_forward.1} parent=1 // pred_check_branch
      %223 = sbr.rel (0) target = $region89
    $region88: #{pathgen_forward.1} parent=1 // pred_region
      %225 = dma.done [#allocation11], 16384
    $region89: #{pathgen_forward.1} parent=1 // pred_fallthru
      _
    // Predicated region
    $region90: #{pathgen_forward.1} parent=1 // pred_check
      _
    $region91: #{pathgen_forward.1} parent=1 // pred_check_branch
      %227 = sbr.rel (0) target = $region93
    $region92: #{pathgen_forward.1} parent=1 // pred_region
      %229 = dma.done [#allocation14], 128
    $region93: #{pathgen_forward.1} parent=1 // pred_fallthru
      _
    // Predicated region
    $region94: #{pathgen_forward.1} parent=1 // pred_check
      _
    $region95: #{pathgen_forward.1} parent=1 // pred_check_branch
      %231 = sbr.rel (0) target = $region97
    $region96: #{pathgen_forward.1} parent=1 // pred_region
      %233 = dma.done [#allocation14], 64
    $region97: #{pathgen_forward.1} parent=1 // pred_fallthru
      _
    // Predicated region
    $region98: #{pathgen_forward.1} parent=1 // pred_check
      _
    $region99: #{pathgen_forward.1} parent=1 // pred_check_branch
      %235 = sbr.rel (0) target = $region101
    $region100: #{pathgen_forward.1} parent=1 // pred_region
      %237 = dma.done [#allocation17], 32
    $region101: #{pathgen_forward.1} parent=1 // pred_fallthru
      _
    // Predicated region
    $region102: #{pathgen_forward.1} parent=1 // pred_check
      _
    $region103: #{pathgen_forward.1} parent=1 // pred_check_branch
      %239 = sbr.rel (0) target = $region105
    $region104: #{pathgen_forward.1} parent=1 // pred_region
      %241 = dma.done [#allocation17], 64
    $region105: #{pathgen_forward.1} parent=1 // pred_fallthru
      _
    // Predicated region
    $region106: #{pathgen_forward.1} parent=1 // pred_check
      _
    $region107: #{pathgen_forward.1} parent=1 // pred_check_branch
      %243 = sbr.rel (0) target = $region109
    $region108: #{pathgen_forward.1} parent=1 // pred_region
      %245 = dma.done [#allocation20], 64
    $region109: #{pathgen_forward.1} parent=1 // pred_fallthru
      _
    // Predicated region
    $region110: #{pathgen_forward.1} parent=1 // pred_check
      _
    $region111: #{pathgen_forward.1} parent=1 // pred_check_branch
      %247 = sbr.rel (0) target = $region113
    $region112: #{pathgen_forward.1} parent=1 // pred_region
      %249 = dma.done [#allocation20], 128
    $region113: #{pathgen_forward.1} parent=1 // pred_fallthru
      _
    // Predicated region
    $region114: #{pathgen_forward.1} parent=1 // pred_check
      _
    $region115: #{pathgen_forward.1} parent=1 // pred_check_branch
      %251 = sbr.rel (0) target = $region117
    $region116: #{pathgen_forward.1} parent=1 // pred_region
      %253 = dma.done [#allocation23], 32
    $region117: #{pathgen_forward.1} parent=1 // pred_fallthru
      _
    %v254 = vld [vmem:[%s0] sm:$0xff]
    %v255 = vld [vmem:[%s0 + $0x8] sm:$0xff]
    %v256 = vld [vmem:[%s0 + $0x10] sm:$0xff]
    %v257 = vld [vmem:[%s0 + $0x18] sm:$0xff]
    %v258 = vld [vmem:[%s0 + $0x20] sm:$0xff]
    %v259 = vld [vmem:[%s0 + $0x28] sm:$0xff]
    %v260 = vpack.c.bf16 %v254, %v254
    %v261 = vpack.c.bf16 %v255, %v255
    %v262 = vpack.c.bf16 %v256, %v256
    %v263 = vpack.c.bf16 %v257, %v257
    %v264 = vpack.c.bf16 %v258, %v258
    %v265 = vpack.c.bf16 %v259, %v259
    %v266 = vld [vmem:[#allocation2] sm:$0xff]
    %v267 = vld [vmem:[#allocation2 + $0x8] sm:$0xff]
    %v268 = vld [vmem:[#allocation2 + $0x10] sm:$0xff]
    %v269 = vld [vmem:[#allocation2 + $0x18] sm:$0xff]
    %v270 = vld [vmem:[#allocation2 + $0x20] sm:$0xff]
    %v271 = vld [vmem:[#allocation2 + $0x28] sm:$0xff]
    %v272 = vld [vmem:[#allocation2 + $0x30] sm:$0xff]
    %v273 = vld [vmem:[#allocation2 + $0x38] sm:$0xff]
    %v274 = vld [vmem:[#allocation2 + $0x40] sm:$0xff]
    %v275 = vld [vmem:[#allocation2 + $0x48] sm:$0xff]
    %v276 = vld [vmem:[#allocation2 + $0x50] sm:$0xff]
    %v277 = vld [vmem:[#allocation2 + $0x58] sm:$0xff]
    %v278 = vld [vmem:[#allocation2 + $0x60] sm:$0xff]
    %v279 = vld [vmem:[#allocation2 + $0x68] sm:$0xff]
    %v280 = vld [vmem:[#allocation2 + $0x70] sm:$0xff]
    %v281 = vld [vmem:[#allocation2 + $0x78] sm:$0xff]
    %v282 = vld [vmem:[#allocation2 + $0x80] sm:$0xff]
    %v283 = vld [vmem:[#allocation2 + $0x88] sm:$0xff]
    %v284 = vld [vmem:[#allocation2 + $0x90] sm:$0xff]
    %v285 = vld [vmem:[#allocation2 + $0x98] sm:$0xff]
    %v286 = vld [vmem:[#allocation2 + $0xa0] sm:$0xff]
    %v287 = vld [vmem:[#allocation2 + $0xa8] sm:$0xff]
    %v288 = vld [vmem:[#allocation2 + $0xb0] sm:$0xff]
    %v289 = vld [vmem:[#allocation2 + $0xb8] sm:$0xff]
    %v290 = vld [vmem:[#allocation2 + $0xc0] sm:$0xff]
    %v291 = vld [vmem:[#allocation2 + $0xc8] sm:$0xff]
    %v292 = vld [vmem:[#allocation2 + $0xd0] sm:$0xff]
    %v293 = vld [vmem:[#allocation2 + $0xd8] sm:$0xff]
    %v294 = vld [vmem:[#allocation2 + $0xe0] sm:$0xff]
    %v295 = vld [vmem:[#allocation2 + $0xe8] sm:$0xff]
    %v296 = vld [vmem:[#allocation2 + $0xf0] sm:$0xff]
    %v297 = vld [vmem:[#allocation2 + $0xf8] sm:$0xff]
    %v298 = vld [vmem:[#allocation2 + $0x100] sm:$0xff]
    %v299 = vld [vmem:[#allocation2 + $0x108] sm:$0xff]
    %v300 = vld [vmem:[#allocation2 + $0x110] sm:$0xff]
    %v301 = vld [vmem:[#allocation2 + $0x118] sm:$0xff]
    %v302 = vld [vmem:[#allocation2 + $0x120] sm:$0xff]
    %v303 = vld [vmem:[#allocation2 + $0x128] sm:$0xff]
    %v304 = vld [vmem:[#allocation2 + $0x130] sm:$0xff]
    %v305 = vld [vmem:[#allocation2 + $0x138] sm:$0xff]
    %v306 = vld [vmem:[#allocation2 + $0x140] sm:$0xff]
    %v307 = vld [vmem:[#allocation2 + $0x148] sm:$0xff]
    %v308 = vld [vmem:[#allocation2 + $0x150] sm:$0xff]
    %v309 = vld [vmem:[#allocation2 + $0x158] sm:$0xff]
    %v310 = vld [vmem:[#allocation2 + $0x160] sm:$0xff]
    %v311 = vld [vmem:[#allocation2 + $0x168] sm:$0xff]
    %v312 = vld [vmem:[#allocation2 + $0x170] sm:$0xff]
    %v313 = vld [vmem:[#allocation2 + $0x178] sm:$0xff]
    %v314 = vld [vmem:[#allocation2 + $0x180] sm:$0xff]
    %v315 = vld [vmem:[#allocation2 + $0x188] sm:$0xff]
    %v316 = vld [vmem:[#allocation2 + $0x190] sm:$0xff]
    %v317 = vld [vmem:[#allocation2 + $0x198] sm:$0xff]
    %v318 = vld [vmem:[#allocation2 + $0x1a0] sm:$0xff]
    %v319 = vld [vmem:[#allocation2 + $0x1a8] sm:$0xff]
    %v320 = vld [vmem:[#allocation2 + $0x1b0] sm:$0xff]
    %v321 = vld [vmem:[#allocation2 + $0x1b8] sm:$0xff]
    %v322 = vld [vmem:[#allocation2 + $0x1c0] sm:$0xff]
    %v323 = vld [vmem:[#allocation2 + $0x1c8] sm:$0xff]
    %v324 = vld [vmem:[#allocation2 + $0x1d0] sm:$0xff]
    %v325 = vld [vmem:[#allocation2 + $0x1d8] sm:$0xff]
    %v326 = vld [vmem:[#allocation2 + $0x1e0] sm:$0xff]
    %v327 = vld [vmem:[#allocation2 + $0x1e8] sm:$0xff]
    %v328 = vld [vmem:[#allocation2 + $0x1f0] sm:$0xff]
    %v329 = vld [vmem:[#allocation2 + $0x1f8] sm:$0xff]
    %v330 = vld [vmem:[#allocation2 + $0x200] sm:$0xff]
    %v331 = vld [vmem:[#allocation2 + $0x208] sm:$0xff]
    %v332 = vld [vmem:[#allocation2 + $0x210] sm:$0xff]
    %v333 = vld [vmem:[#allocation2 + $0x218] sm:$0xff]
    %v334 = vld [vmem:[#allocation2 + $0x220] sm:$0xff]
    %v335 = vld [vmem:[#allocation2 + $0x228] sm:$0xff]
    %v336 = vld [vmem:[#allocation2 + $0x230] sm:$0xff]
    %v337 = vld [vmem:[#allocation2 + $0x238] sm:$0xff]
    %v338 = vld [vmem:[#allocation2 + $0x240] sm:$0xff]
    %v339 = vld [vmem:[#allocation2 + $0x248] sm:$0xff]
    %v340 = vld [vmem:[#allocation2 + $0x250] sm:$0xff]
    %v341 = vld [vmem:[#allocation2 + $0x258] sm:$0xff]
    %v342 = vld [vmem:[#allocation2 + $0x260] sm:$0xff]
    %v343 = vld [vmem:[#allocation2 + $0x268] sm:$0xff]
    %v344 = vld [vmem:[#allocation2 + $0x270] sm:$0xff]
    %v345 = vld [vmem:[#allocation2 + $0x278] sm:$0xff]
    %v346 = vld [vmem:[#allocation2 + $0x280] sm:$0xff]
    %v347 = vld [vmem:[#allocation2 + $0x288] sm:$0xff]
    %v348 = vld [vmem:[#allocation2 + $0x290] sm:$0xff]
    %v349 = vld [vmem:[#allocation2 + $0x298] sm:$0xff]
    %v350 = vld [vmem:[#allocation2 + $0x2a0] sm:$0xff]
    %v351 = vld [vmem:[#allocation2 + $0x2a8] sm:$0xff]
    %v352 = vld [vmem:[#allocation2 + $0x2b0] sm:$0xff]
    %v353 = vld [vmem:[#allocation2 + $0x2b8] sm:$0xff]
    %v354 = vld [vmem:[#allocation2 + $0x2c0] sm:$0xff]
    %v355 = vld [vmem:[#allocation2 + $0x2c8] sm:$0xff]
    %v356 = vld [vmem:[#allocation2 + $0x2d0] sm:$0xff]
    %v357 = vld [vmem:[#allocation2 + $0x2d8] sm:$0xff]
    %v358 = vld [vmem:[#allocation2 + $0x2e0] sm:$0xff]
    %v359 = vld [vmem:[#allocation2 + $0x2e8] sm:$0xff]
    %v360 = vld [vmem:[#allocation2 + $0x2f0] sm:$0xff]
    %v361 = vld [vmem:[#allocation2 + $0x2f8] sm:$0xff]
    %v362 = vld [vmem:[#allocation2 + $0x300] sm:$0xff]
    %v363 = vld [vmem:[#allocation2 + $0x308] sm:$0xff]
    %v364 = vld [vmem:[#allocation2 + $0x310] sm:$0xff]
    %v365 = vld [vmem:[#allocation2 + $0x318] sm:$0xff]
    %v366 = vld [vmem:[#allocation2 + $0x320] sm:$0xff]
    %v367 = vld [vmem:[#allocation2 + $0x328] sm:$0xff]
    %v368 = vld [vmem:[#allocation2 + $0x330] sm:$0xff]
    %v369 = vld [vmem:[#allocation2 + $0x338] sm:$0xff]
    %v370 = vld [vmem:[#allocation2 + $0x340] sm:$0xff]
    %v371 = vld [vmem:[#allocation2 + $0x348] sm:$0xff]
    %v372 = vld [vmem:[#allocation2 + $0x350] sm:$0xff]
    %v373 = vld [vmem:[#allocation2 + $0x358] sm:$0xff]
    %v374 = vld [vmem:[#allocation2 + $0x360] sm:$0xff]
    %v375 = vld [vmem:[#allocation2 + $0x368] sm:$0xff]
    %v376 = vld [vmem:[#allocation2 + $0x370] sm:$0xff]
    %v377 = vld [vmem:[#allocation2 + $0x378] sm:$0xff]
    %v378 = vld [vmem:[#allocation2 + $0x380] sm:$0xff]
    %v379 = vld [vmem:[#allocation2 + $0x388] sm:$0xff]
    %v380 = vld [vmem:[#allocation2 + $0x390] sm:$0xff]
    %v381 = vld [vmem:[#allocation2 + $0x398] sm:$0xff]
    %v382 = vld [vmem:[#allocation2 + $0x3a0] sm:$0xff]
    %v383 = vld [vmem:[#allocation2 + $0x3a8] sm:$0xff]
    %v384 = vld [vmem:[#allocation2 + $0x3b0] sm:$0xff]
    %v385 = vld [vmem:[#allocation2 + $0x3b8] sm:$0xff]
    %v386 = vld [vmem:[#allocation2 + $0x3c0] sm:$0xff]
    %v387 = vld [vmem:[#allocation2 + $0x3c8] sm:$0xff]
    %v388 = vld [vmem:[#allocation2 + $0x3d0] sm:$0xff]
    %v389 = vld [vmem:[#allocation2 + $0x3d8] sm:$0xff]
    %v390 = vld [vmem:[#allocation2 + $0x3e0] sm:$0xff]
    %v391 = vld [vmem:[#allocation2 + $0x3e8] sm:$0xff]
    %v392 = vld [vmem:[#allocation2 + $0x3f0] sm:$0xff]
    %v393 = vld [vmem:[#allocation2 + $0x3f8] sm:$0xff]
    %v394 = vld [vmem:[#allocation2 + $0x400] sm:$0xff]
    %v395 = vld [vmem:[#allocation2 + $0x408] sm:$0xff]
    %v396 = vld [vmem:[#allocation2 + $0x410] sm:$0xff]
    %v397 = vld [vmem:[#allocation2 + $0x418] sm:$0xff]
    %v398 = vld [vmem:[#allocation2 + $0x420] sm:$0xff]
    %v399 = vld [vmem:[#allocation2 + $0x428] sm:$0xff]
    %v400 = vld [vmem:[#allocation2 + $0x430] sm:$0xff]
    %v401 = vld [vmem:[#allocation2 + $0x438] sm:$0xff]
    %v402 = vld [vmem:[#allocation2 + $0x440] sm:$0xff]
    %v403 = vld [vmem:[#allocation2 + $0x448] sm:$0xff]
    %v404 = vld [vmem:[#allocation2 + $0x450] sm:$0xff]
    %v405 = vld [vmem:[#allocation2 + $0x458] sm:$0xff]
    %v406 = vld [vmem:[#allocation2 + $0x460] sm:$0xff]
    %v407 = vld [vmem:[#allocation2 + $0x468] sm:$0xff]
    %v408 = vld [vmem:[#allocation2 + $0x470] sm:$0xff]
    %v409 = vld [vmem:[#allocation2 + $0x478] sm:$0xff]
    %v410 = vld [vmem:[#allocation2 + $0x480] sm:$0xff]
    %v411 = vld [vmem:[#allocation2 + $0x488] sm:$0xff]
    %v412 = vld [vmem:[#allocation2 + $0x490] sm:$0xff]
    %v413 = vld [vmem:[#allocation2 + $0x498] sm:$0xff]
    %v414 = vld [vmem:[#allocation2 + $0x4a0] sm:$0xff]
    %v415 = vld [vmem:[#allocation2 + $0x4a8] sm:$0xff]
    %v416 = vld [vmem:[#allocation2 + $0x4b0] sm:$0xff]
    %v417 = vld [vmem:[#allocation2 + $0x4b8] sm:$0xff]
    %v418 = vld [vmem:[#allocation2 + $0x4c0] sm:$0xff]
    %v419 = vld [vmem:[#allocation2 + $0x4c8] sm:$0xff]
    %v420 = vld [vmem:[#allocation2 + $0x4d0] sm:$0xff]
    %v421 = vld [vmem:[#allocation2 + $0x4d8] sm:$0xff]
    %v422 = vld [vmem:[#allocation2 + $0x4e0] sm:$0xff]
    %v423 = vld [vmem:[#allocation2 + $0x4e8] sm:$0xff]
    %v424 = vld [vmem:[#allocation2 + $0x4f0] sm:$0xff]
    %v425 = vld [vmem:[#allocation2 + $0x4f8] sm:$0xff]
    %v426 = vld [vmem:[#allocation2 + $0x500] sm:$0xff]
    %v427 = vld [vmem:[#allocation2 + $0x508] sm:$0xff]
    %v428 = vld [vmem:[#allocation2 + $0x510] sm:$0xff]
    %v429 = vld [vmem:[#allocation2 + $0x518] sm:$0xff]
    %v430 = vld [vmem:[#allocation2 + $0x520] sm:$0xff]
    %v431 = vld [vmem:[#allocation2 + $0x528] sm:$0xff]
    %v432 = vld [vmem:[#allocation2 + $0x530] sm:$0xff]
    %v433 = vld [vmem:[#allocation2 + $0x538] sm:$0xff]
    %v434 = vld [vmem:[#allocation2 + $0x540] sm:$0xff]
    %v435 = vld [vmem:[#allocation2 + $0x548] sm:$0xff]
    %v436 = vld [vmem:[#allocation2 + $0x550] sm:$0xff]
    %v437 = vld [vmem:[#allocation2 + $0x558] sm:$0xff]
    %v438 = vld [vmem:[#allocation2 + $0x560] sm:$0xff]
    %v439 = vld [vmem:[#allocation2 + $0x568] sm:$0xff]
    %v440 = vld [vmem:[#allocation2 + $0x570] sm:$0xff]
    %v441 = vld [vmem:[#allocation2 + $0x578] sm:$0xff]
    %v442 = vld [vmem:[#allocation2 + $0x580] sm:$0xff]
    %v443 = vld [vmem:[#allocation2 + $0x588] sm:$0xff]
    %v444 = vld [vmem:[#allocation2 + $0x590] sm:$0xff]
    %v445 = vld [vmem:[#allocation2 + $0x598] sm:$0xff]
    %v446 = vld [vmem:[#allocation2 + $0x5a0] sm:$0xff]
    %v447 = vld [vmem:[#allocation2 + $0x5a8] sm:$0xff]
    %v448 = vld [vmem:[#allocation2 + $0x5b0] sm:$0xff]
    %v449 = vld [vmem:[#allocation2 + $0x5b8] sm:$0xff]
    %v450 = vld [vmem:[#allocation2 + $0x5c0] sm:$0xff]
    %v451 = vld [vmem:[#allocation2 + $0x5c8] sm:$0xff]
    %v452 = vld [vmem:[#allocation2 + $0x5d0] sm:$0xff]
    %v453 = vld [vmem:[#allocation2 + $0x5d8] sm:$0xff]
    %v454 = vld [vmem:[#allocation2 + $0x5e0] sm:$0xff]
    %v455 = vld [vmem:[#allocation2 + $0x5e8] sm:$0xff]
    %v456 = vld [vmem:[#allocation2 + $0x5f0] sm:$0xff]
    %v457 = vld [vmem:[#allocation2 + $0x5f8] sm:$0xff]
    %v458 = vld [vmem:[#allocation2 + $0x600] sm:$0xff]
    %v459 = vld [vmem:[#allocation2 + $0x608] sm:$0xff]
    %v460 = vld [vmem:[#allocation2 + $0x610] sm:$0xff]
    %v461 = vld [vmem:[#allocation2 + $0x618] sm:$0xff]
    %v462 = vld [vmem:[#allocation2 + $0x620] sm:$0xff]
    %v463 = vld [vmem:[#allocation2 + $0x628] sm:$0xff]
    %v464 = vld [vmem:[#allocation2 + $0x630] sm:$0xff]
    %v465 = vld [vmem:[#allocation2 + $0x638] sm:$0xff]
    %v466 = vld [vmem:[#allocation2 + $0x640] sm:$0xff]
    %v467 = vld [vmem:[#allocation2 + $0x648] sm:$0xff]
    %v468 = vld [vmem:[#allocation2 + $0x650] sm:$0xff]
    %v469 = vld [vmem:[#allocation2 + $0x658] sm:$0xff]
    %v470 = vld [vmem:[#allocation2 + $0x660] sm:$0xff]
    %v471 = vld [vmem:[#allocation2 + $0x668] sm:$0xff]
    %v472 = vld [vmem:[#allocation2 + $0x670] sm:$0xff]
    %v473 = vld [vmem:[#allocation2 + $0x678] sm:$0xff]
    %v474 = vld [vmem:[#allocation2 + $0x680] sm:$0xff]
    %v475 = vld [vmem:[#allocation2 + $0x688] sm:$0xff]
    %v476 = vld [vmem:[#allocation2 + $0x690] sm:$0xff]
    %v477 = vld [vmem:[#allocation2 + $0x698] sm:$0xff]
    %v478 = vld [vmem:[#allocation2 + $0x6a0] sm:$0xff]
    %v479 = vld [vmem:[#allocation2 + $0x6a8] sm:$0xff]
    %v480 = vld [vmem:[#allocation2 + $0x6b0] sm:$0xff]
    %v481 = vld [vmem:[#allocation2 + $0x6b8] sm:$0xff]
    %v482 = vld [vmem:[#allocation2 + $0x6c0] sm:$0xff]
    %v483 = vld [vmem:[#allocation2 + $0x6c8] sm:$0xff]
    %v484 = vld [vmem:[#allocation2 + $0x6d0] sm:$0xff]
    %v485 = vld [vmem:[#allocation2 + $0x6d8] sm:$0xff]
    %v486 = vld [vmem:[#allocation2 + $0x6e0] sm:$0xff]
    %v487 = vld [vmem:[#allocation2 + $0x6e8] sm:$0xff]
    %v488 = vld [vmem:[#allocation2 + $0x6f0] sm:$0xff]
    %v489 = vld [vmem:[#allocation2 + $0x6f8] sm:$0xff]
    %v490 = vld [vmem:[#allocation2 + $0x700] sm:$0xff]
    %v491 = vld [vmem:[#allocation2 + $0x708] sm:$0xff]
    %v492 = vld [vmem:[#allocation2 + $0x710] sm:$0xff]
    %v493 = vld [vmem:[#allocation2 + $0x718] sm:$0xff]
    %v494 = vld [vmem:[#allocation2 + $0x720] sm:$0xff]
    %v495 = vld [vmem:[#allocation2 + $0x728] sm:$0xff]
    %v496 = vld [vmem:[#allocation2 + $0x730] sm:$0xff]
    %v497 = vld [vmem:[#allocation2 + $0x738] sm:$0xff]
    %v498 = vld [vmem:[#allocation2 + $0x740] sm:$0xff]
    %v499 = vld [vmem:[#allocation2 + $0x748] sm:$0xff]
    %v500 = vld [vmem:[#allocation2 + $0x750] sm:$0xff]
    %v501 = vld [vmem:[#allocation2 + $0x758] sm:$0xff]
    %v502 = vld [vmem:[#allocation2 + $0x760] sm:$0xff]
    %v503 = vld [vmem:[#allocation2 + $0x768] sm:$0xff]
    %v504 = vld [vmem:[#allocation2 + $0x770] sm:$0xff]
    %v505 = vld [vmem:[#allocation2 + $0x778] sm:$0xff]
    %v506 = vld [vmem:[#allocation2 + $0x780] sm:$0xff]
    %v507 = vld [vmem:[#allocation2 + $0x788] sm:$0xff]
    %v508 = vld [vmem:[#allocation2 + $0x790] sm:$0xff]
    %v509 = vld [vmem:[#allocation2 + $0x798] sm:$0xff]
    %v510 = vld [vmem:[#allocation2 + $0x7a0] sm:$0xff]
    %v511 = vld [vmem:[#allocation2 + $0x7a8] sm:$0xff]
    %v512 = vld [vmem:[#allocation2 + $0x7b0] sm:$0xff]
    %v513 = vld [vmem:[#allocation2 + $0x7b8] sm:$0xff]
    %v514 = vld [vmem:[#allocation2 + $0x7c0] sm:$0xff]
    %v515 = vld [vmem:[#allocation2 + $0x7c8] sm:$0xff]
    %v516 = vld [vmem:[#allocation2 + $0x7d0] sm:$0xff]
    %v517 = vld [vmem:[#allocation2 + $0x7d8] sm:$0xff]
    %v518 = vld [vmem:[#allocation2 + $0x7e0] sm:$0xff]
    %v519 = vld [vmem:[#allocation2 + $0x7e8] sm:$0xff]
    %v520 = vld [vmem:[#allocation2 + $0x7f0] sm:$0xff]
    %v521 = vld [vmem:[#allocation2 + $0x7f8] sm:$0xff]
    %v522 = vld [vmem:[#allocation2 + $0x800] sm:$0xff]
    %v523 = vld [vmem:[#allocation2 + $0x808] sm:$0xff]
    %v524 = vld [vmem:[#allocation2 + $0x810] sm:$0xff]
    %v525 = vld [vmem:[#allocation2 + $0x818] sm:$0xff]
    %v526 = vld [vmem:[#allocation2 + $0x820] sm:$0xff]
    %v527 = vld [vmem:[#allocation2 + $0x828] sm:$0xff]
    %v528 = vld [vmem:[#allocation2 + $0x830] sm:$0xff]
    %v529 = vld [vmem:[#allocation2 + $0x838] sm:$0xff]
    %v530 = vld [vmem:[#allocation2 + $0x840] sm:$0xff]
    %v531 = vld [vmem:[#allocation2 + $0x848] sm:$0xff]
    %v532 = vld [vmem:[#allocation2 + $0x850] sm:$0xff]
    %v533 = vld [vmem:[#allocation2 + $0x858] sm:$0xff]
    %v534 = vld [vmem:[#allocation2 + $0x860] sm:$0xff]
    %v535 = vld [vmem:[#allocation2 + $0x868] sm:$0xff]
    %v536 = vld [vmem:[#allocation2 + $0x870] sm:$0xff]
    %v537 = vld [vmem:[#allocation2 + $0x878] sm:$0xff]
    %v538 = vld [vmem:[#allocation2 + $0x880] sm:$0xff]
    %v539 = vld [vmem:[#allocation2 + $0x888] sm:$0xff]
    %v540 = vld [vmem:[#allocation2 + $0x890] sm:$0xff]
    %v541 = vld [vmem:[#allocation2 + $0x898] sm:$0xff]
    %v542 = vld [vmem:[#allocation2 + $0x8a0] sm:$0xff]
    %v543 = vld [vmem:[#allocation2 + $0x8a8] sm:$0xff]
    %v544 = vld [vmem:[#allocation2 + $0x8b0] sm:$0xff]
    %v545 = vld [vmem:[#allocation2 + $0x8b8] sm:$0xff]
    %v546 = vld [vmem:[#allocation2 + $0x8c0] sm:$0xff]
    %v547 = vld [vmem:[#allocation2 + $0x8c8] sm:$0xff]
    %v548 = vld [vmem:[#allocation2 + $0x8d0] sm:$0xff]
    %v549 = vld [vmem:[#allocation2 + $0x8d8] sm:$0xff]
    %v550 = vld [vmem:[#allocation2 + $0x8e0] sm:$0xff]
    %v551 = vld [vmem:[#allocation2 + $0x8e8] sm:$0xff]
    %v552 = vld [vmem:[#allocation2 + $0x8f0] sm:$0xff]
    %v553 = vld [vmem:[#allocation2 + $0x8f8] sm:$0xff]
    %v554 = vld [vmem:[#allocation2 + $0x900] sm:$0xff]
    %v555 = vld [vmem:[#allocation2 + $0x908] sm:$0xff]
    %v556 = vld [vmem:[#allocation2 + $0x910] sm:$0xff]
    %v557 = vld [vmem:[#allocation2 + $0x918] sm:$0xff]
    %v558 = vld [vmem:[#allocation2 + $0x920] sm:$0xff]
    %v559 = vld [vmem:[#allocation2 + $0x928] sm:$0xff]
    %v560 = vld [vmem:[#allocation2 + $0x930] sm:$0xff]
    %v561 = vld [vmem:[#allocation2 + $0x938] sm:$0xff]
    %v562 = vld [vmem:[#allocation2 + $0x940] sm:$0xff]
    %v563 = vld [vmem:[#allocation2 + $0x948] sm:$0xff]
    %v564 = vld [vmem:[#allocation2 + $0x950] sm:$0xff]
    %v565 = vld [vmem:[#allocation2 + $0x958] sm:$0xff]
    %v566 = vld [vmem:[#allocation2 + $0x960] sm:$0xff]
    %v567 = vld [vmem:[#allocation2 + $0x968] sm:$0xff]
    %v568 = vld [vmem:[#allocation2 + $0x970] sm:$0xff]
    %v569 = vld [vmem:[#allocation2 + $0x978] sm:$0xff]
    %v570 = vld [vmem:[#allocation2 + $0x980] sm:$0xff]
    %v571 = vld [vmem:[#allocation2 + $0x988] sm:$0xff]
    %v572 = vld [vmem:[#allocation2 + $0x990] sm:$0xff]
    %v573 = vld [vmem:[#allocation2 + $0x998] sm:$0xff]
    %v574 = vld [vmem:[#allocation2 + $0x9a0] sm:$0xff]
    %v575 = vld [vmem:[#allocation2 + $0x9a8] sm:$0xff]
    %v576 = vld [vmem:[#allocation2 + $0x9b0] sm:$0xff]
    %v577 = vld [vmem:[#allocation2 + $0x9b8] sm:$0xff]
    %v578 = vld [vmem:[#allocation2 + $0x9c0] sm:$0xff]
    %v579 = vld [vmem:[#allocation2 + $0x9c8] sm:$0xff]
    %v580 = vld [vmem:[#allocation2 + $0x9d0] sm:$0xff]
    %v581 = vld [vmem:[#allocation2 + $0x9d8] sm:$0xff]
    %v582 = vld [vmem:[#allocation2 + $0x9e0] sm:$0xff]
    %v583 = vld [vmem:[#allocation2 + $0x9e8] sm:$0xff]
    %v584 = vld [vmem:[#allocation2 + $0x9f0] sm:$0xff]
    %v585 = vld [vmem:[#allocation2 + $0x9f8] sm:$0xff]
    %v586 = vld [vmem:[#allocation2 + $0xa00] sm:$0xff]
    %v587 = vld [vmem:[#allocation2 + $0xa08] sm:$0xff]
    %v588 = vld [vmem:[#allocation2 + $0xa10] sm:$0xff]
    %v589 = vld [vmem:[#allocation2 + $0xa18] sm:$0xff]
    %v590 = vld [vmem:[#allocation2 + $0xa20] sm:$0xff]
    %v591 = vld [vmem:[#allocation2 + $0xa28] sm:$0xff]
    %v592 = vld [vmem:[#allocation2 + $0xa30] sm:$0xff]
    %v593 = vld [vmem:[#allocation2 + $0xa38] sm:$0xff]
    %v594 = vld [vmem:[#allocation2 + $0xa40] sm:$0xff]
    %v595 = vld [vmem:[#allocation2 + $0xa48] sm:$0xff]
    %v596 = vld [vmem:[#allocation2 + $0xa50] sm:$0xff]
    %v597 = vld [vmem:[#allocation2 + $0xa58] sm:$0xff]
    %v598 = vld [vmem:[#allocation2 + $0xa60] sm:$0xff]
    %v599 = vld [vmem:[#allocation2 + $0xa68] sm:$0xff]
    %v600 = vld [vmem:[#allocation2 + $0xa70] sm:$0xff]
    %v601 = vld [vmem:[#allocation2 + $0xa78] sm:$0xff]
    %v602 = vld [vmem:[#allocation2 + $0xa80] sm:$0xff]
    %v603 = vld [vmem:[#allocation2 + $0xa88] sm:$0xff]
    %v604 = vld [vmem:[#allocation2 + $0xa90] sm:$0xff]
    %v605 = vld [vmem:[#allocation2 + $0xa98] sm:$0xff]
    %v606 = vld [vmem:[#allocation2 + $0xaa0] sm:$0xff]
    %v607 = vld [vmem:[#allocation2 + $0xaa8] sm:$0xff]
    %v608 = vld [vmem:[#allocation2 + $0xab0] sm:$0xff]
    %v609 = vld [vmem:[#allocation2 + $0xab8] sm:$0xff]
    %v610 = vld [vmem:[#allocation2 + $0xac0] sm:$0xff]
    %v611 = vld [vmem:[#allocation2 + $0xac8] sm:$0xff]
    %v612 = vld [vmem:[#allocation2 + $0xad0] sm:$0xff]
    %v613 = vld [vmem:[#allocation2 + $0xad8] sm:$0xff]
    %v614 = vld [vmem:[#allocation2 + $0xae0] sm:$0xff]
    %v615 = vld [vmem:[#allocation2 + $0xae8] sm:$0xff]
    %v616 = vld [vmem:[#allocation2 + $0xaf0] sm:$0xff]
    %v617 = vld [vmem:[#allocation2 + $0xaf8] sm:$0xff]
    %v618 = vld [vmem:[#allocation2 + $0xb00] sm:$0xff]
    %v619 = vld [vmem:[#allocation2 + $0xb08] sm:$0xff]
    %v620 = vld [vmem:[#allocation2 + $0xb10] sm:$0xff]
    %v621 = vld [vmem:[#allocation2 + $0xb18] sm:$0xff]
    %v622 = vld [vmem:[#allocation2 + $0xb20] sm:$0xff]
    %v623 = vld [vmem:[#allocation2 + $0xb28] sm:$0xff]
    %v624 = vld [vmem:[#allocation2 + $0xb30] sm:$0xff]
    %v625 = vld [vmem:[#allocation2 + $0xb38] sm:$0xff]
    %v626 = vld [vmem:[#allocation2 + $0xb40] sm:$0xff]
    %v627 = vld [vmem:[#allocation2 + $0xb48] sm:$0xff]
    %v628 = vld [vmem:[#allocation2 + $0xb50] sm:$0xff]
    %v629 = vld [vmem:[#allocation2 + $0xb58] sm:$0xff]
    %v630 = vld [vmem:[#allocation2 + $0xb60] sm:$0xff]
    %v631 = vld [vmem:[#allocation2 + $0xb68] sm:$0xff]
    %v632 = vld [vmem:[#allocation2 + $0xb70] sm:$0xff]
    %v633 = vld [vmem:[#allocation2 + $0xb78] sm:$0xff]
    %v634 = vld [vmem:[#allocation2 + $0xb80] sm:$0xff]
    %v635 = vld [vmem:[#allocation2 + $0xb88] sm:$0xff]
    %v636 = vld [vmem:[#allocation2 + $0xb90] sm:$0xff]
    %v637 = vld [vmem:[#allocation2 + $0xb98] sm:$0xff]
    %v638 = vld [vmem:[#allocation2 + $0xba0] sm:$0xff]
    %v639 = vld [vmem:[#allocation2 + $0xba8] sm:$0xff]
    %v640 = vld [vmem:[#allocation2 + $0xbb0] sm:$0xff]
    %v641 = vld [vmem:[#allocation2 + $0xbb8] sm:$0xff]
    %v642 = vld [vmem:[#allocation2 + $0xbc0] sm:$0xff]
    %v643 = vld [vmem:[#allocation2 + $0xbc8] sm:$0xff]
    %v644 = vld [vmem:[#allocation2 + $0xbd0] sm:$0xff]
    %v645 = vld [vmem:[#allocation2 + $0xbd8] sm:$0xff]
    %v646 = vld [vmem:[#allocation2 + $0xbe0] sm:$0xff]
    %v647 = vld [vmem:[#allocation2 + $0xbe8] sm:$0xff]
    %v648 = vld [vmem:[#allocation2 + $0xbf0] sm:$0xff]
    %v649 = vld [vmem:[#allocation2 + $0xbf8] sm:$0xff]
    %v650 = vld [vmem:[#allocation13] sm:$0xff]
    %v652 = vperm.slane %v650, 0
    %v653 = vperm.slane %v650, 1
    %v654 = vperm.slane %v650, 2
    %v655 = vperm.slane %v650, 3
    %v656 = vperm.slane %v650, 4
    %v657 = vperm.slane %v650, 5
    %v658 = vperm.slane %v650, 6
    %v659 = vperm.slane %v650, 7
    %v1052 = vunpack.c.l.b16 %v266
    %v1053 = vunpack.c.h.b16 %v266
    %v1054 = vunpack.c.l.b16 %v267
    %v1055 = vunpack.c.h.b16 %v267
    %v1056 = vunpack.c.l.b16 %v268
    %v1057 = vunpack.c.h.b16 %v268
    %v1058 = vunpack.c.l.b16 %v269
    %v1059 = vunpack.c.h.b16 %v269
    %v1060 = vunpack.c.l.b16 %v270
    %v1061 = vunpack.c.h.b16 %v270
    %v1062 = vunpack.c.l.b16 %v271
    %v1063 = vunpack.c.h.b16 %v271
    %v1064 = vunpack.c.l.b16 %v272
    %v1065 = vunpack.c.h.b16 %v272
    %v1066 = vunpack.c.l.b16 %v273
    %v1067 = vunpack.c.h.b16 %v273
    %v1068 = vunpack.c.l.b16 %v274
    %v1069 = vunpack.c.h.b16 %v274
    %v1070 = vunpack.c.l.b16 %v275
    %v1071 = vunpack.c.h.b16 %v275
    %v1072 = vunpack.c.l.b16 %v276
    %v1073 = vunpack.c.h.b16 %v276
    %v1074 = vunpack.c.l.b16 %v277
    %v1075 = vunpack.c.h.b16 %v277
    %v1076 = vunpack.c.l.b16 %v278
    %v1077 = vunpack.c.h.b16 %v278
    %v1078 = vunpack.c.l.b16 %v279
    %v1079 = vunpack.c.h.b16 %v279
    %v1080 = vunpack.c.l.b16 %v280
    %v1081 = vunpack.c.h.b16 %v280
    %v1082 = vunpack.c.l.b16 %v281
    %v1083 = vunpack.c.h.b16 %v281
    %v1084 = vunpack.c.l.b16 %v282
    %v1085 = vunpack.c.h.b16 %v282
    %v1086 = vunpack.c.l.b16 %v283
    %v1087 = vunpack.c.h.b16 %v283
    %v1088 = vunpack.c.l.b16 %v284
    %v1089 = vunpack.c.h.b16 %v284
    %v1090 = vunpack.c.l.b16 %v285
    %v1091 = vunpack.c.h.b16 %v285
    %v1092 = vunpack.c.l.b16 %v286
    %v1093 = vunpack.c.h.b16 %v286
    %v1094 = vunpack.c.l.b16 %v287
    %v1095 = vunpack.c.h.b16 %v287
    %v1096 = vunpack.c.l.b16 %v288
    %v1097 = vunpack.c.h.b16 %v288
    %v1098 = vunpack.c.l.b16 %v289
    %v1099 = vunpack.c.h.b16 %v289
    %v1100 = vunpack.c.l.b16 %v290
    %v1101 = vunpack.c.h.b16 %v290
    %v1102 = vunpack.c.l.b16 %v291
    %v1103 = vunpack.c.h.b16 %v291
    %v1104 = vunpack.c.l.b16 %v292
    %v1105 = vunpack.c.h.b16 %v292
    %v1106 = vunpack.c.l.b16 %v293
    %v1107 = vunpack.c.h.b16 %v293
    %v1108 = vunpack.c.l.b16 %v294
    %v1109 = vunpack.c.h.b16 %v294
    %v1110 = vunpack.c.l.b16 %v295
    %v1111 = vunpack.c.h.b16 %v295
    %v1112 = vunpack.c.l.b16 %v296
    %v1113 = vunpack.c.h.b16 %v296
    %v1114 = vunpack.c.l.b16 %v297
    %v1115 = vunpack.c.h.b16 %v297
    %v1116 = vunpack.c.l.b16 %v298
    %v1117 = vunpack.c.h.b16 %v298
    %v1118 = vunpack.c.l.b16 %v299
    %v1119 = vunpack.c.h.b16 %v299
    %v1120 = vunpack.c.l.b16 %v300
    %v1121 = vunpack.c.h.b16 %v300
    %v1122 = vunpack.c.l.b16 %v301
    %v1123 = vunpack.c.h.b16 %v301
    %v1124 = vunpack.c.l.b16 %v302
    %v1125 = vunpack.c.h.b16 %v302
    %v1126 = vunpack.c.l.b16 %v303
    %v1127 = vunpack.c.h.b16 %v303
    %v1128 = vunpack.c.l.b16 %v304
    %v1129 = vunpack.c.h.b16 %v304
    %v1130 = vunpack.c.l.b16 %v305
    %v1131 = vunpack.c.h.b16 %v305
    %v1132 = vunpack.c.l.b16 %v306
    %v1133 = vunpack.c.h.b16 %v306
    %v1134 = vunpack.c.l.b16 %v307
    %v1135 = vunpack.c.h.b16 %v307
    %v1136 = vunpack.c.l.b16 %v308
    %v1137 = vunpack.c.h.b16 %v308
    %v1138 = vunpack.c.l.b16 %v309
    %v1139 = vunpack.c.h.b16 %v309
    %v1140 = vunpack.c.l.b16 %v310
    %v1141 = vunpack.c.h.b16 %v310
    %v1142 = vunpack.c.l.b16 %v311
    %v1143 = vunpack.c.h.b16 %v311
    %v1144 = vunpack.c.l.b16 %v312
    %v1145 = vunpack.c.h.b16 %v312
    %v1146 = vunpack.c.l.b16 %v313
    %v1147 = vunpack.c.h.b16 %v313
    %v1148 = vunpack.c.l.b16 %v314
    %v1149 = vunpack.c.h.b16 %v314
    %v1150 = vunpack.c.l.b16 %v315
    %v1151 = vunpack.c.h.b16 %v315
    %v1152 = vunpack.c.l.b16 %v316
    %v1153 = vunpack.c.h.b16 %v316
    %v1154 = vunpack.c.l.b16 %v317
    %v1155 = vunpack.c.h.b16 %v317
    %v1156 = vunpack.c.l.b16 %v318
    %v1157 = vunpack.c.h.b16 %v318
    %v1158 = vunpack.c.l.b16 %v319
    %v1159 = vunpack.c.h.b16 %v319
    %v1160 = vunpack.c.l.b16 %v320
    %v1161 = vunpack.c.h.b16 %v320
    %v1162 = vunpack.c.l.b16 %v321
    %v1163 = vunpack.c.h.b16 %v321
    %v1164 = vunpack.c.l.b16 %v322
    %v1165 = vunpack.c.h.b16 %v322
    %v1166 = vunpack.c.l.b16 %v323
    %v1167 = vunpack.c.h.b16 %v323
    %v1168 = vunpack.c.l.b16 %v324
    %v1169 = vunpack.c.h.b16 %v324
    %v1170 = vunpack.c.l.b16 %v325
    %v1171 = vunpack.c.h.b16 %v325
    %v1172 = vunpack.c.l.b16 %v326
    %v1173 = vunpack.c.h.b16 %v326
    %v1174 = vunpack.c.l.b16 %v327
    %v1175 = vunpack.c.h.b16 %v327
    %v1176 = vunpack.c.l.b16 %v328
    %v1177 = vunpack.c.h.b16 %v328
    %v1178 = vunpack.c.l.b16 %v329
    %v1179 = vunpack.c.h.b16 %v329
    %v1180 = vunpack.c.l.b16 %v330
    %v1181 = vunpack.c.h.b16 %v330
    %v1182 = vunpack.c.l.b16 %v331
    %v1183 = vunpack.c.h.b16 %v331
    %v1184 = vunpack.c.l.b16 %v332
    %v1185 = vunpack.c.h.b16 %v332
    %v1186 = vunpack.c.l.b16 %v333
    %v1187 = vunpack.c.h.b16 %v333
    %v1188 = vunpack.c.l.b16 %v334
    %v1189 = vunpack.c.h.b16 %v334
    %v1190 = vunpack.c.l.b16 %v335
    %v1191 = vunpack.c.h.b16 %v335
    %v1192 = vunpack.c.l.b16 %v336
    %v1193 = vunpack.c.h.b16 %v336
    %v1194 = vunpack.c.l.b16 %v337
    %v1195 = vunpack.c.h.b16 %v337
    %v1196 = vunpack.c.l.b16 %v338
    %v1197 = vunpack.c.h.b16 %v338
    %v1198 = vunpack.c.l.b16 %v339
    %v1199 = vunpack.c.h.b16 %v339
    %v1200 = vunpack.c.l.b16 %v340
    %v1201 = vunpack.c.h.b16 %v340
    %v1202 = vunpack.c.l.b16 %v341
    %v1203 = vunpack.c.h.b16 %v341
    %v1204 = vunpack.c.l.b16 %v342
    %v1205 = vunpack.c.h.b16 %v342
    %v1206 = vunpack.c.l.b16 %v343
    %v1207 = vunpack.c.h.b16 %v343
    %v1208 = vunpack.c.l.b16 %v344
    %v1209 = vunpack.c.h.b16 %v344
    %v1210 = vunpack.c.l.b16 %v345
    %v1211 = vunpack.c.h.b16 %v345
    %v1212 = vunpack.c.l.b16 %v346
    %v1213 = vunpack.c.h.b16 %v346
    %v1214 = vunpack.c.l.b16 %v347
    %v1215 = vunpack.c.h.b16 %v347
    %v1216 = vunpack.c.l.b16 %v348
    %v1217 = vunpack.c.h.b16 %v348
    %v1218 = vunpack.c.l.b16 %v349
    %v1219 = vunpack.c.h.b16 %v349
    %v1220 = vunpack.c.l.b16 %v350
    %v1221 = vunpack.c.h.b16 %v350
    %v1222 = vunpack.c.l.b16 %v351
    %v1223 = vunpack.c.h.b16 %v351
    %v1224 = vunpack.c.l.b16 %v352
    %v1225 = vunpack.c.h.b16 %v352
    %v1226 = vunpack.c.l.b16 %v353
    %v1227 = vunpack.c.h.b16 %v353
    %v1228 = vunpack.c.l.b16 %v354
    %v1229 = vunpack.c.h.b16 %v354
    %v1230 = vunpack.c.l.b16 %v355
    %v1231 = vunpack.c.h.b16 %v355
    %v1232 = vunpack.c.l.b16 %v356
    %v1233 = vunpack.c.h.b16 %v356
    %v1234 = vunpack.c.l.b16 %v357
    %v1235 = vunpack.c.h.b16 %v357
    %v1236 = vunpack.c.l.b16 %v358
    %v1237 = vunpack.c.h.b16 %v358
    %v1238 = vunpack.c.l.b16 %v359
    %v1239 = vunpack.c.h.b16 %v359
    %v1240 = vunpack.c.l.b16 %v360
    %v1241 = vunpack.c.h.b16 %v360
    %v1242 = vunpack.c.l.b16 %v361
    %v1243 = vunpack.c.h.b16 %v361
    %v1244 = vunpack.c.l.b16 %v362
    %v1245 = vunpack.c.h.b16 %v362
    %v1246 = vunpack.c.l.b16 %v363
    %v1247 = vunpack.c.h.b16 %v363
    %v1248 = vunpack.c.l.b16 %v364
    %v1249 = vunpack.c.h.b16 %v364
    %v1250 = vunpack.c.l.b16 %v365
    %v1251 = vunpack.c.h.b16 %v365
    %v1252 = vunpack.c.l.b16 %v366
    %v1253 = vunpack.c.h.b16 %v366
    %v1254 = vunpack.c.l.b16 %v367
    %v1255 = vunpack.c.h.b16 %v367
    %v1256 = vunpack.c.l.b16 %v368
    %v1257 = vunpack.c.h.b16 %v368
    %v1258 = vunpack.c.l.b16 %v369
    %v1259 = vunpack.c.h.b16 %v369
    %v1260 = vunpack.c.l.b16 %v370
    %v1261 = vunpack.c.h.b16 %v370
    %v1262 = vunpack.c.l.b16 %v371
    %v1263 = vunpack.c.h.b16 %v371
    %v1264 = vunpack.c.l.b16 %v372
    %v1265 = vunpack.c.h.b16 %v372
    %v1266 = vunpack.c.l.b16 %v373
    %v1267 = vunpack.c.h.b16 %v373
    %v1268 = vunpack.c.l.b16 %v374
    %v1269 = vunpack.c.h.b16 %v374
    %v1270 = vunpack.c.l.b16 %v375
    %v1271 = vunpack.c.h.b16 %v375
    %v1272 = vunpack.c.l.b16 %v376
    %v1273 = vunpack.c.h.b16 %v376
    %v1274 = vunpack.c.l.b16 %v377
    %v1275 = vunpack.c.h.b16 %v377
    %v1276 = vunpack.c.l.b16 %v378
    %v1277 = vunpack.c.h.b16 %v378
    %v1278 = vunpack.c.l.b16 %v379
    %v1279 = vunpack.c.h.b16 %v379
    %v1280 = vunpack.c.l.b16 %v380
    %v1281 = vunpack.c.h.b16 %v380
    %v1282 = vunpack.c.l.b16 %v381
    %v1283 = vunpack.c.h.b16 %v381
    %v1284 = vunpack.c.l.b16 %v382
    %v1285 = vunpack.c.h.b16 %v382
    %v1286 = vunpack.c.l.b16 %v383
    %v1287 = vunpack.c.h.b16 %v383
    %v1288 = vunpack.c.l.b16 %v384
    %v1289 = vunpack.c.h.b16 %v384
    %v1290 = vunpack.c.l.b16 %v385
    %v1291 = vunpack.c.h.b16 %v385
    %v1292 = vunpack.c.l.b16 %v386
    %v1293 = vunpack.c.h.b16 %v386
    %v1294 = vunpack.c.l.b16 %v387
    %v1295 = vunpack.c.h.b16 %v387
    %v1296 = vunpack.c.l.b16 %v388
    %v1297 = vunpack.c.h.b16 %v388
    %v1298 = vunpack.c.l.b16 %v389
    %v1299 = vunpack.c.h.b16 %v389
    %v1300 = vunpack.c.l.b16 %v390
    %v1301 = vunpack.c.h.b16 %v390
    %v1302 = vunpack.c.l.b16 %v391
    %v1303 = vunpack.c.h.b16 %v391
    %v1304 = vunpack.c.l.b16 %v392
    %v1305 = vunpack.c.h.b16 %v392
    %v1306 = vunpack.c.l.b16 %v393
    %v1307 = vunpack.c.h.b16 %v393
    %v1308 = vunpack.c.l.b16 %v394
    %v1309 = vunpack.c.h.b16 %v394
    %v1310 = vunpack.c.l.b16 %v395
    %v1311 = vunpack.c.h.b16 %v395
    %v1312 = vunpack.c.l.b16 %v396
    %v1313 = vunpack.c.h.b16 %v396
    %v1314 = vunpack.c.l.b16 %v397
    %v1315 = vunpack.c.h.b16 %v397
    %v1316 = vunpack.c.l.b16 %v398
    %v1317 = vunpack.c.h.b16 %v398
    %v1318 = vunpack.c.l.b16 %v399
    %v1319 = vunpack.c.h.b16 %v399
    %v1320 = vunpack.c.l.b16 %v400
    %v1321 = vunpack.c.h.b16 %v400
    %v1322 = vunpack.c.l.b16 %v401
    %v1323 = vunpack.c.h.b16 %v401
    %v1324 = vunpack.c.l.b16 %v402
    %v1325 = vunpack.c.h.b16 %v402
    %v1326 = vunpack.c.l.b16 %v403
    %v1327 = vunpack.c.h.b16 %v403
    %v1328 = vunpack.c.l.b16 %v404
    %v1329 = vunpack.c.h.b16 %v404
    %v1330 = vunpack.c.l.b16 %v405
    %v1331 = vunpack.c.h.b16 %v405
    %v1332 = vunpack.c.l.b16 %v406
    %v1333 = vunpack.c.h.b16 %v406
    %v1334 = vunpack.c.l.b16 %v407
    %v1335 = vunpack.c.h.b16 %v407
    %v1336 = vunpack.c.l.b16 %v408
    %v1337 = vunpack.c.h.b16 %v408
    %v1338 = vunpack.c.l.b16 %v409
    %v1339 = vunpack.c.h.b16 %v409
    %v1340 = vunpack.c.l.b16 %v410
    %v1341 = vunpack.c.h.b16 %v410
    %v1342 = vunpack.c.l.b16 %v411
    %v1343 = vunpack.c.h.b16 %v411
    %v1344 = vunpack.c.l.b16 %v412
    %v1345 = vunpack.c.h.b16 %v412
    %v1346 = vunpack.c.l.b16 %v413
    %v1347 = vunpack.c.h.b16 %v413
    %v1348 = vunpack.c.l.b16 %v414
    %v1349 = vunpack.c.h.b16 %v414
    %v1350 = vunpack.c.l.b16 %v415
    %v1351 = vunpack.c.h.b16 %v415
    %v1352 = vunpack.c.l.b16 %v416
    %v1353 = vunpack.c.h.b16 %v416
    %v1354 = vunpack.c.l.b16 %v417
    %v1355 = vunpack.c.h.b16 %v417
    %v1356 = vunpack.c.l.b16 %v418
    %v1357 = vunpack.c.h.b16 %v418
    %v1358 = vunpack.c.l.b16 %v419
    %v1359 = vunpack.c.h.b16 %v419
    %v1360 = vunpack.c.l.b16 %v420
    %v1361 = vunpack.c.h.b16 %v420
    %v1362 = vunpack.c.l.b16 %v421
    %v1363 = vunpack.c.h.b16 %v421
    %v1364 = vunpack.c.l.b16 %v422
    %v1365 = vunpack.c.h.b16 %v422
    %v1366 = vunpack.c.l.b16 %v423
    %v1367 = vunpack.c.h.b16 %v423
    %v1368 = vunpack.c.l.b16 %v424
    %v1369 = vunpack.c.h.b16 %v424
    %v1370 = vunpack.c.l.b16 %v425
    %v1371 = vunpack.c.h.b16 %v425
    %v1372 = vunpack.c.l.b16 %v426
    %v1373 = vunpack.c.h.b16 %v426
    %v1374 = vunpack.c.l.b16 %v427
    %v1375 = vunpack.c.h.b16 %v427
    %v1376 = vunpack.c.l.b16 %v428
    %v1377 = vunpack.c.h.b16 %v428
    %v1378 = vunpack.c.l.b16 %v429
    %v1379 = vunpack.c.h.b16 %v429
    %v1380 = vunpack.c.l.b16 %v430
    %v1381 = vunpack.c.h.b16 %v430
    %v1382 = vunpack.c.l.b16 %v431
    %v1383 = vunpack.c.h.b16 %v431
    %v1384 = vunpack.c.l.b16 %v432
    %v1385 = vunpack.c.h.b16 %v432
    %v1386 = vunpack.c.l.b16 %v433
    %v1387 = vunpack.c.h.b16 %v433
    %v1388 = vunpack.c.l.b16 %v434
    %v1389 = vunpack.c.h.b16 %v434
    %v1390 = vunpack.c.l.b16 %v435
    %v1391 = vunpack.c.h.b16 %v435
    %v1392 = vunpack.c.l.b16 %v436
    %v1393 = vunpack.c.h.b16 %v436
    %v1394 = vunpack.c.l.b16 %v437
    %v1395 = vunpack.c.h.b16 %v437
    %v1396 = vunpack.c.l.b16 %v438
    %v1397 = vunpack.c.h.b16 %v438
    %v1398 = vunpack.c.l.b16 %v439
    %v1399 = vunpack.c.h.b16 %v439
    %v1400 = vunpack.c.l.b16 %v440
    %v1401 = vunpack.c.h.b16 %v440
    %v1402 = vunpack.c.l.b16 %v441
    %v1403 = vunpack.c.h.b16 %v441
    %v1404 = vunpack.c.l.b16 %v442
    %v1405 = vunpack.c.h.b16 %v442
    %v1406 = vunpack.c.l.b16 %v443
    %v1407 = vunpack.c.h.b16 %v443
    %v1408 = vunpack.c.l.b16 %v444
    %v1409 = vunpack.c.h.b16 %v444
    %v1410 = vunpack.c.l.b16 %v445
    %v1411 = vunpack.c.h.b16 %v445
    %v1412 = vunpack.c.l.b16 %v446
    %v1413 = vunpack.c.h.b16 %v446
    %v1414 = vunpack.c.l.b16 %v447
    %v1415 = vunpack.c.h.b16 %v447
    %v1416 = vunpack.c.l.b16 %v448
    %v1417 = vunpack.c.h.b16 %v448
    %v1418 = vunpack.c.l.b16 %v449
    %v1419 = vunpack.c.h.b16 %v449
    %v1420 = vunpack.c.l.b16 %v450
    %v1421 = vunpack.c.h.b16 %v450
    %v1422 = vunpack.c.l.b16 %v451
    %v1423 = vunpack.c.h.b16 %v451
    %v1424 = vunpack.c.l.b16 %v452
    %v1425 = vunpack.c.h.b16 %v452
    %v1426 = vunpack.c.l.b16 %v453
    %v1427 = vunpack.c.h.b16 %v453
    %v1428 = vunpack.c.l.b16 %v454
    %v1429 = vunpack.c.h.b16 %v454
    %v1430 = vunpack.c.l.b16 %v455
    %v1431 = vunpack.c.h.b16 %v455
    %v1432 = vunpack.c.l.b16 %v456
    %v1433 = vunpack.c.h.b16 %v456
    %v1434 = vunpack.c.l.b16 %v457
    %v1435 = vunpack.c.h.b16 %v457
    %v1436 = vunpack.c.l.b16 %v458
    %v1437 = vunpack.c.h.b16 %v458
    %v1438 = vunpack.c.l.b16 %v459
    %v1439 = vunpack.c.h.b16 %v459
    %v1440 = vunpack.c.l.b16 %v460
    %v1441 = vunpack.c.h.b16 %v460
    %v1442 = vunpack.c.l.b16 %v461
    %v1443 = vunpack.c.h.b16 %v461
    %v1444 = vunpack.c.l.b16 %v462
    %v1445 = vunpack.c.h.b16 %v462
    %v1446 = vunpack.c.l.b16 %v463
    %v1447 = vunpack.c.h.b16 %v463
    %v1448 = vunpack.c.l.b16 %v464
    %v1449 = vunpack.c.h.b16 %v464
    %v1450 = vunpack.c.l.b16 %v465
    %v1451 = vunpack.c.h.b16 %v465
    %v1452 = vunpack.c.l.b16 %v466
    %v1453 = vunpack.c.h.b16 %v466
    %v1454 = vunpack.c.l.b16 %v467
    %v1455 = vunpack.c.h.b16 %v467
    %v1456 = vunpack.c.l.b16 %v468
    %v1457 = vunpack.c.h.b16 %v468
    %v1458 = vunpack.c.l.b16 %v469
    %v1459 = vunpack.c.h.b16 %v469
    %v1460 = vunpack.c.l.b16 %v470
    %v1461 = vunpack.c.h.b16 %v470
    %v1462 = vunpack.c.l.b16 %v471
    %v1463 = vunpack.c.h.b16 %v471
    %v1464 = vunpack.c.l.b16 %v472
    %v1465 = vunpack.c.h.b16 %v472
    %v1466 = vunpack.c.l.b16 %v473
    %v1467 = vunpack.c.h.b16 %v473
    %v1468 = vunpack.c.l.b16 %v474
    %v1469 = vunpack.c.h.b16 %v474
    %v1470 = vunpack.c.l.b16 %v475
    %v1471 = vunpack.c.h.b16 %v475
    %v1472 = vunpack.c.l.b16 %v476
    %v1473 = vunpack.c.h.b16 %v476
    %v1474 = vunpack.c.l.b16 %v477
    %v1475 = vunpack.c.h.b16 %v477
    %v1476 = vunpack.c.l.b16 %v478
    %v1477 = vunpack.c.h.b16 %v478
    %v1478 = vunpack.c.l.b16 %v479
    %v1479 = vunpack.c.h.b16 %v479
    %v1480 = vunpack.c.l.b16 %v480
    %v1481 = vunpack.c.h.b16 %v480
    %v1482 = vunpack.c.l.b16 %v481
    %v1483 = vunpack.c.h.b16 %v481
    %v1484 = vunpack.c.l.b16 %v482
    %v1485 = vunpack.c.h.b16 %v482
    %v1486 = vunpack.c.l.b16 %v483
    %v1487 = vunpack.c.h.b16 %v483
    %v1488 = vunpack.c.l.b16 %v484
    %v1489 = vunpack.c.h.b16 %v484
    %v1490 = vunpack.c.l.b16 %v485
    %v1491 = vunpack.c.h.b16 %v485
    %v1492 = vunpack.c.l.b16 %v486
    %v1493 = vunpack.c.h.b16 %v486
    %v1494 = vunpack.c.l.b16 %v487
    %v1495 = vunpack.c.h.b16 %v487
    %v1496 = vunpack.c.l.b16 %v488
    %v1497 = vunpack.c.h.b16 %v488
    %v1498 = vunpack.c.l.b16 %v489
    %v1499 = vunpack.c.h.b16 %v489
    %v1500 = vunpack.c.l.b16 %v490
    %v1501 = vunpack.c.h.b16 %v490
    %v1502 = vunpack.c.l.b16 %v491
    %v1503 = vunpack.c.h.b16 %v491
    %v1504 = vunpack.c.l.b16 %v492
    %v1505 = vunpack.c.h.b16 %v492
    %v1506 = vunpack.c.l.b16 %v493
    %v1507 = vunpack.c.h.b16 %v493
    %v1508 = vunpack.c.l.b16 %v494
    %v1509 = vunpack.c.h.b16 %v494
    %v1510 = vunpack.c.l.b16 %v495
    %v1511 = vunpack.c.h.b16 %v495
    %v1512 = vunpack.c.l.b16 %v496
    %v1513 = vunpack.c.h.b16 %v496
    %v1514 = vunpack.c.l.b16 %v497
    %v1515 = vunpack.c.h.b16 %v497
    %v1516 = vunpack.c.l.b16 %v498
    %v1517 = vunpack.c.h.b16 %v498
    %v1518 = vunpack.c.l.b16 %v499
    %v1519 = vunpack.c.h.b16 %v499
    %v1520 = vunpack.c.l.b16 %v500
    %v1521 = vunpack.c.h.b16 %v500
    %v1522 = vunpack.c.l.b16 %v501
    %v1523 = vunpack.c.h.b16 %v501
    %v1524 = vunpack.c.l.b16 %v502
    %v1525 = vunpack.c.h.b16 %v502
    %v1526 = vunpack.c.l.b16 %v503
    %v1527 = vunpack.c.h.b16 %v503
    %v1528 = vunpack.c.l.b16 %v504
    %v1529 = vunpack.c.h.b16 %v504
    %v1530 = vunpack.c.l.b16 %v505
    %v1531 = vunpack.c.h.b16 %v505
    %v1532 = vunpack.c.l.b16 %v506
    %v1533 = vunpack.c.h.b16 %v506
    %v1534 = vunpack.c.l.b16 %v507
    %v1535 = vunpack.c.h.b16 %v507
    %v1536 = vunpack.c.l.b16 %v508
    %v1537 = vunpack.c.h.b16 %v508
    %v1538 = vunpack.c.l.b16 %v509
    %v1539 = vunpack.c.h.b16 %v509
    %v1540 = vunpack.c.l.b16 %v510
    %v1541 = vunpack.c.h.b16 %v510
    %v1542 = vunpack.c.l.b16 %v511
    %v1543 = vunpack.c.h.b16 %v511
    %v1544 = vunpack.c.l.b16 %v512
    %v1545 = vunpack.c.h.b16 %v512
    %v1546 = vunpack.c.l.b16 %v513
    %v1547 = vunpack.c.h.b16 %v513
    %v1548 = vunpack.c.l.b16 %v514
    %v1549 = vunpack.c.h.b16 %v514
    %v1550 = vunpack.c.l.b16 %v515
    %v1551 = vunpack.c.h.b16 %v515
    %v1552 = vunpack.c.l.b16 %v516
    %v1553 = vunpack.c.h.b16 %v516
    %v1554 = vunpack.c.l.b16 %v517
    %v1555 = vunpack.c.h.b16 %v517
    %v1556 = vunpack.c.l.b16 %v518
    %v1557 = vunpack.c.h.b16 %v518
    %v1558 = vunpack.c.l.b16 %v519
    %v1559 = vunpack.c.h.b16 %v519
    %v1560 = vunpack.c.l.b16 %v520
    %v1561 = vunpack.c.h.b16 %v520
    %v1562 = vunpack.c.l.b16 %v521
    %v1563 = vunpack.c.h.b16 %v521
    %v1564 = vunpack.c.l.b16 %v522
    %v1565 = vunpack.c.h.b16 %v522
    %v1566 = vunpack.c.l.b16 %v523
    %v1567 = vunpack.c.h.b16 %v523
    %v1568 = vunpack.c.l.b16 %v524
    %v1569 = vunpack.c.h.b16 %v524
    %v1570 = vunpack.c.l.b16 %v525
    %v1571 = vunpack.c.h.b16 %v525
    %v1572 = vunpack.c.l.b16 %v526
    %v1573 = vunpack.c.h.b16 %v526
    %v1574 = vunpack.c.l.b16 %v527
    %v1575 = vunpack.c.h.b16 %v527
    %v1576 = vunpack.c.l.b16 %v528
    %v1577 = vunpack.c.h.b16 %v528
    %v1578 = vunpack.c.l.b16 %v529
    %v1579 = vunpack.c.h.b16 %v529
    %v1580 = vunpack.c.l.b16 %v530
    %v1581 = vunpack.c.h.b16 %v530
    %v1582 = vunpack.c.l.b16 %v531
    %v1583 = vunpack.c.h.b16 %v531
    %v1584 = vunpack.c.l.b16 %v532
    %v1585 = vunpack.c.h.b16 %v532
    %v1586 = vunpack.c.l.b16 %v533
    %v1587 = vunpack.c.h.b16 %v533
    %v1588 = vunpack.c.l.b16 %v534
    %v1589 = vunpack.c.h.b16 %v534
    %v1590 = vunpack.c.l.b16 %v535
    %v1591 = vunpack.c.h.b16 %v535
    %v1592 = vunpack.c.l.b16 %v536
    %v1593 = vunpack.c.h.b16 %v536
    %v1594 = vunpack.c.l.b16 %v537
    %v1595 = vunpack.c.h.b16 %v537
    %v1596 = vunpack.c.l.b16 %v538
    %v1597 = vunpack.c.h.b16 %v538
    %v1598 = vunpack.c.l.b16 %v539
    %v1599 = vunpack.c.h.b16 %v539
    %v1600 = vunpack.c.l.b16 %v540
    %v1601 = vunpack.c.h.b16 %v540
    %v1602 = vunpack.c.l.b16 %v541
    %v1603 = vunpack.c.h.b16 %v541
    %v1604 = vunpack.c.l.b16 %v542
    %v1605 = vunpack.c.h.b16 %v542
    %v1606 = vunpack.c.l.b16 %v543
    %v1607 = vunpack.c.h.b16 %v543
    %v1608 = vunpack.c.l.b16 %v544
    %v1609 = vunpack.c.h.b16 %v544
    %v1610 = vunpack.c.l.b16 %v545
    %v1611 = vunpack.c.h.b16 %v545
    %v1612 = vunpack.c.l.b16 %v546
    %v1613 = vunpack.c.h.b16 %v546
    %v1614 = vunpack.c.l.b16 %v547
    %v1615 = vunpack.c.h.b16 %v547
    %v1616 = vunpack.c.l.b16 %v548
    %v1617 = vunpack.c.h.b16 %v548
    %v1618 = vunpack.c.l.b16 %v549
    %v1619 = vunpack.c.h.b16 %v549
    %v1620 = vunpack.c.l.b16 %v550
    %v1621 = vunpack.c.h.b16 %v550
    %v1622 = vunpack.c.l.b16 %v551
    %v1623 = vunpack.c.h.b16 %v551
    %v1624 = vunpack.c.l.b16 %v552
    %v1625 = vunpack.c.h.b16 %v552
    %v1626 = vunpack.c.l.b16 %v553
    %v1627 = vunpack.c.h.b16 %v553
    %v1628 = vunpack.c.l.b16 %v554
    %v1629 = vunpack.c.h.b16 %v554
    %v1630 = vunpack.c.l.b16 %v555
    %v1631 = vunpack.c.h.b16 %v555
    %v1632 = vunpack.c.l.b16 %v556
    %v1633 = vunpack.c.h.b16 %v556
    %v1634 = vunpack.c.l.b16 %v557
    %v1635 = vunpack.c.h.b16 %v557
    %v1636 = vunpack.c.l.b16 %v558
    %v1637 = vunpack.c.h.b16 %v558
    %v1638 = vunpack.c.l.b16 %v559
    %v1639 = vunpack.c.h.b16 %v559
    %v1640 = vunpack.c.l.b16 %v560
    %v1641 = vunpack.c.h.b16 %v560
    %v1642 = vunpack.c.l.b16 %v561
    %v1643 = vunpack.c.h.b16 %v561
    %v1644 = vunpack.c.l.b16 %v562
    %v1645 = vunpack.c.h.b16 %v562
    %v1646 = vunpack.c.l.b16 %v563
    %v1647 = vunpack.c.h.b16 %v563
    %v1648 = vunpack.c.l.b16 %v564
    %v1649 = vunpack.c.h.b16 %v564
    %v1650 = vunpack.c.l.b16 %v565
    %v1651 = vunpack.c.h.b16 %v565
    %v1652 = vunpack.c.l.b16 %v566
    %v1653 = vunpack.c.h.b16 %v566
    %v1654 = vunpack.c.l.b16 %v567
    %v1655 = vunpack.c.h.b16 %v567
    %v1656 = vunpack.c.l.b16 %v568
    %v1657 = vunpack.c.h.b16 %v568
    %v1658 = vunpack.c.l.b16 %v569
    %v1659 = vunpack.c.h.b16 %v569
    %v1660 = vunpack.c.l.b16 %v570
    %v1661 = vunpack.c.h.b16 %v570
    %v1662 = vunpack.c.l.b16 %v571
    %v1663 = vunpack.c.h.b16 %v571
    %v1664 = vunpack.c.l.b16 %v572
    %v1665 = vunpack.c.h.b16 %v572
    %v1666 = vunpack.c.l.b16 %v573
    %v1667 = vunpack.c.h.b16 %v573
    %v1668 = vunpack.c.l.b16 %v574
    %v1669 = vunpack.c.h.b16 %v574
    %v1670 = vunpack.c.l.b16 %v575
    %v1671 = vunpack.c.h.b16 %v575
    %v1672 = vunpack.c.l.b16 %v576
    %v1673 = vunpack.c.h.b16 %v576
    %v1674 = vunpack.c.l.b16 %v577
    %v1675 = vunpack.c.h.b16 %v577
    %v1676 = vunpack.c.l.b16 %v578
    %v1677 = vunpack.c.h.b16 %v578
    %v1678 = vunpack.c.l.b16 %v579
    %v1679 = vunpack.c.h.b16 %v579
    %v1680 = vunpack.c.l.b16 %v580
    %v1681 = vunpack.c.h.b16 %v580
    %v1682 = vunpack.c.l.b16 %v581
    %v1683 = vunpack.c.h.b16 %v581
    %v1684 = vunpack.c.l.b16 %v582
    %v1685 = vunpack.c.h.b16 %v582
    %v1686 = vunpack.c.l.b16 %v583
    %v1687 = vunpack.c.h.b16 %v583
    %v1688 = vunpack.c.l.b16 %v584
    %v1689 = vunpack.c.h.b16 %v584
    %v1690 = vunpack.c.l.b16 %v585
    %v1691 = vunpack.c.h.b16 %v585
    %v1692 = vunpack.c.l.b16 %v586
    %v1693 = vunpack.c.h.b16 %v586
    %v1694 = vunpack.c.l.b16 %v587
    %v1695 = vunpack.c.h.b16 %v587
    %v1696 = vunpack.c.l.b16 %v588
    %v1697 = vunpack.c.h.b16 %v588
    %v1698 = vunpack.c.l.b16 %v589
    %v1699 = vunpack.c.h.b16 %v589
    %v1700 = vunpack.c.l.b16 %v590
    %v1701 = vunpack.c.h.b16 %v590
    %v1702 = vunpack.c.l.b16 %v591
    %v1703 = vunpack.c.h.b16 %v591
    %v1704 = vunpack.c.l.b16 %v592
    %v1705 = vunpack.c.h.b16 %v592
    %v1706 = vunpack.c.l.b16 %v593
    %v1707 = vunpack.c.h.b16 %v593
    %v1708 = vunpack.c.l.b16 %v594
    %v1709 = vunpack.c.h.b16 %v594
    %v1710 = vunpack.c.l.b16 %v595
    %v1711 = vunpack.c.h.b16 %v595
    %v1712 = vunpack.c.l.b16 %v596
    %v1713 = vunpack.c.h.b16 %v596
    %v1714 = vunpack.c.l.b16 %v597
    %v1715 = vunpack.c.h.b16 %v597
    %v1716 = vunpack.c.l.b16 %v598
    %v1717 = vunpack.c.h.b16 %v598
    %v1718 = vunpack.c.l.b16 %v599
    %v1719 = vunpack.c.h.b16 %v599
    %v1720 = vunpack.c.l.b16 %v600
    %v1721 = vunpack.c.h.b16 %v600
    %v1722 = vunpack.c.l.b16 %v601
    %v1723 = vunpack.c.h.b16 %v601
    %v1724 = vunpack.c.l.b16 %v602
    %v1725 = vunpack.c.h.b16 %v602
    %v1726 = vunpack.c.l.b16 %v603
    %v1727 = vunpack.c.h.b16 %v603
    %v1728 = vunpack.c.l.b16 %v604
    %v1729 = vunpack.c.h.b16 %v604
    %v1730 = vunpack.c.l.b16 %v605
    %v1731 = vunpack.c.h.b16 %v605
    %v1732 = vunpack.c.l.b16 %v606
    %v1733 = vunpack.c.h.b16 %v606
    %v1734 = vunpack.c.l.b16 %v607
    %v1735 = vunpack.c.h.b16 %v607
    %v1736 = vunpack.c.l.b16 %v608
    %v1737 = vunpack.c.h.b16 %v608
    %v1738 = vunpack.c.l.b16 %v609
    %v1739 = vunpack.c.h.b16 %v609
    %v1740 = vunpack.c.l.b16 %v610
    %v1741 = vunpack.c.h.b16 %v610
    %v1742 = vunpack.c.l.b16 %v611
    %v1743 = vunpack.c.h.b16 %v611
    %v1744 = vunpack.c.l.b16 %v612
    %v1745 = vunpack.c.h.b16 %v612
    %v1746 = vunpack.c.l.b16 %v613
    %v1747 = vunpack.c.h.b16 %v613
    %v1748 = vunpack.c.l.b16 %v614
    %v1749 = vunpack.c.h.b16 %v614
    %v1750 = vunpack.c.l.b16 %v615
    %v1751 = vunpack.c.h.b16 %v615
    %v1752 = vunpack.c.l.b16 %v616
    %v1753 = vunpack.c.h.b16 %v616
    %v1754 = vunpack.c.l.b16 %v617
    %v1755 = vunpack.c.h.b16 %v617
    %v1756 = vunpack.c.l.b16 %v618
    %v1757 = vunpack.c.h.b16 %v618
    %v1758 = vunpack.c.l.b16 %v619
    %v1759 = vunpack.c.h.b16 %v619
    %v1760 = vunpack.c.l.b16 %v620
    %v1761 = vunpack.c.h.b16 %v620
    %v1762 = vunpack.c.l.b16 %v621
    %v1763 = vunpack.c.h.b16 %v621
    %v1764 = vunpack.c.l.b16 %v622
    %v1765 = vunpack.c.h.b16 %v622
    %v1766 = vunpack.c.l.b16 %v623
    %v1767 = vunpack.c.h.b16 %v623
    %v1768 = vunpack.c.l.b16 %v624
    %v1769 = vunpack.c.h.b16 %v624
    %v1770 = vunpack.c.l.b16 %v625
    %v1771 = vunpack.c.h.b16 %v625
    %v1772 = vunpack.c.l.b16 %v626
    %v1773 = vunpack.c.h.b16 %v626
    %v1774 = vunpack.c.l.b16 %v627
    %v1775 = vunpack.c.h.b16 %v627
    %v1776 = vunpack.c.l.b16 %v628
    %v1777 = vunpack.c.h.b16 %v628
    %v1778 = vunpack.c.l.b16 %v629
    %v1779 = vunpack.c.h.b16 %v629
    %v1780 = vunpack.c.l.b16 %v630
    %v1781 = vunpack.c.h.b16 %v630
    %v1782 = vunpack.c.l.b16 %v631
    %v1783 = vunpack.c.h.b16 %v631
    %v1784 = vunpack.c.l.b16 %v632
    %v1785 = vunpack.c.h.b16 %v632
    %v1786 = vunpack.c.l.b16 %v633
    %v1787 = vunpack.c.h.b16 %v633
    %v1788 = vunpack.c.l.b16 %v634
    %v1789 = vunpack.c.h.b16 %v634
    %v1790 = vunpack.c.l.b16 %v635
    %v1791 = vunpack.c.h.b16 %v635
    %v1792 = vunpack.c.l.b16 %v636
    %v1793 = vunpack.c.h.b16 %v636
    %v1794 = vunpack.c.l.b16 %v637
    %v1795 = vunpack.c.h.b16 %v637
    %v1796 = vunpack.c.l.b16 %v638
    %v1797 = vunpack.c.h.b16 %v638
    %v1798 = vunpack.c.l.b16 %v639
    %v1799 = vunpack.c.h.b16 %v639
    %v1800 = vunpack.c.l.b16 %v640
    %v1801 = vunpack.c.h.b16 %v640
    %v1802 = vunpack.c.l.b16 %v641
    %v1803 = vunpack.c.h.b16 %v641
    %v1804 = vunpack.c.l.b16 %v642
    %v1805 = vunpack.c.h.b16 %v642
    %v1806 = vunpack.c.l.b16 %v643
    %v1807 = vunpack.c.h.b16 %v643
    %v1808 = vunpack.c.l.b16 %v644
    %v1809 = vunpack.c.h.b16 %v644
    %v1810 = vunpack.c.l.b16 %v645
    %v1811 = vunpack.c.h.b16 %v645
    %v1812 = vunpack.c.l.b16 %v646
    %v1813 = vunpack.c.h.b16 %v646
    %v1814 = vunpack.c.l.b16 %v647
    %v1815 = vunpack.c.h.b16 %v647
    %v1816 = vunpack.c.l.b16 %v648
    %v1817 = vunpack.c.h.b16 %v648
    %v1818 = vunpack.c.l.b16 %v649
    %v1819 = vunpack.c.h.b16 %v649
    %v1820 = vpack.c.b16 %v1060, %v1052
    %v1821 = vpack.c.b16 %v1061, %v1053
    %v1822 = vpack.c.b16 %v1062, %v1054
    %v1823 = vpack.c.b16 %v1063, %v1055
    %v1824 = vpack.c.b16 %v1064, %v1056
    %v1825 = vpack.c.b16 %v1065, %v1057
    %v1826 = vpack.c.b16 %v1066, %v1058
    %v1827 = vpack.c.b16 %v1067, %v1059
    %v1828 = vpack.c.b16 %v1076, %v1068
    %v1829 = vpack.c.b16 %v1077, %v1069
    %v1830 = vpack.c.b16 %v1078, %v1070
    %v1831 = vpack.c.b16 %v1079, %v1071
    %v1832 = vpack.c.b16 %v1080, %v1072
    %v1833 = vpack.c.b16 %v1081, %v1073
    %v1834 = vpack.c.b16 %v1082, %v1074
    %v1835 = vpack.c.b16 %v1083, %v1075
    %v1836 = vpack.c.b16 %v1092, %v1084
    %v1837 = vpack.c.b16 %v1093, %v1085
    %v1838 = vpack.c.b16 %v1094, %v1086
    %v1839 = vpack.c.b16 %v1095, %v1087
    %v1840 = vpack.c.b16 %v1096, %v1088
    %v1841 = vpack.c.b16 %v1097, %v1089
    %v1842 = vpack.c.b16 %v1098, %v1090
    %v1843 = vpack.c.b16 %v1099, %v1091
    %v1844 = vpack.c.b16 %v1108, %v1100
    %v1845 = vpack.c.b16 %v1109, %v1101
    %v1846 = vpack.c.b16 %v1110, %v1102
    %v1847 = vpack.c.b16 %v1111, %v1103
    %v1848 = vpack.c.b16 %v1112, %v1104
    %v1849 = vpack.c.b16 %v1113, %v1105
    %v1850 = vpack.c.b16 %v1114, %v1106
    %v1851 = vpack.c.b16 %v1115, %v1107
    %v1852 = vpack.c.b16 %v1124, %v1116
    %v1853 = vpack.c.b16 %v1125, %v1117
    %v1854 = vpack.c.b16 %v1126, %v1118
    %v1855 = vpack.c.b16 %v1127, %v1119
    %v1856 = vpack.c.b16 %v1128, %v1120
    %v1857 = vpack.c.b16 %v1129, %v1121
    %v1858 = vpack.c.b16 %v1130, %v1122
    %v1859 = vpack.c.b16 %v1131, %v1123
    %v1860 = vpack.c.b16 %v1140, %v1132
    %v1861 = vpack.c.b16 %v1141, %v1133
    %v1862 = vpack.c.b16 %v1142, %v1134
    %v1863 = vpack.c.b16 %v1143, %v1135
    %v1864 = vpack.c.b16 %v1144, %v1136
    %v1865 = vpack.c.b16 %v1145, %v1137
    %v1866 = vpack.c.b16 %v1146, %v1138
    %v1867 = vpack.c.b16 %v1147, %v1139
    %v1868 = vpack.c.b16 %v1156, %v1148
    %v1869 = vpack.c.b16 %v1157, %v1149
    %v1870 = vpack.c.b16 %v1158, %v1150
    %v1871 = vpack.c.b16 %v1159, %v1151
    %v1872 = vpack.c.b16 %v1160, %v1152
    %v1873 = vpack.c.b16 %v1161, %v1153
    %v1874 = vpack.c.b16 %v1162, %v1154
    %v1875 = vpack.c.b16 %v1163, %v1155
    %v1876 = vpack.c.b16 %v1172, %v1164
    %v1877 = vpack.c.b16 %v1173, %v1165
    %v1878 = vpack.c.b16 %v1174, %v1166
    %v1879 = vpack.c.b16 %v1175, %v1167
    %v1880 = vpack.c.b16 %v1176, %v1168
    %v1881 = vpack.c.b16 %v1177, %v1169
    %v1882 = vpack.c.b16 %v1178, %v1170
    %v1883 = vpack.c.b16 %v1179, %v1171
    %v1884 = vpack.c.b16 %v1188, %v1180
    %v1885 = vpack.c.b16 %v1189, %v1181
    %v1886 = vpack.c.b16 %v1190, %v1182
    %v1887 = vpack.c.b16 %v1191, %v1183
    %v1888 = vpack.c.b16 %v1192, %v1184
    %v1889 = vpack.c.b16 %v1193, %v1185
    %v1890 = vpack.c.b16 %v1194, %v1186
    %v1891 = vpack.c.b16 %v1195, %v1187
    %v1892 = vpack.c.b16 %v1204, %v1196
    %v1893 = vpack.c.b16 %v1205, %v1197
    %v1894 = vpack.c.b16 %v1206, %v1198
    %v1895 = vpack.c.b16 %v1207, %v1199
    %v1896 = vpack.c.b16 %v1208, %v1200
    %v1897 = vpack.c.b16 %v1209, %v1201
    %v1898 = vpack.c.b16 %v1210, %v1202
    %v1899 = vpack.c.b16 %v1211, %v1203
    %v1900 = vpack.c.b16 %v1220, %v1212
    %v1901 = vpack.c.b16 %v1221, %v1213
    %v1902 = vpack.c.b16 %v1222, %v1214
    %v1903 = vpack.c.b16 %v1223, %v1215
    %v1904 = vpack.c.b16 %v1224, %v1216
    %v1905 = vpack.c.b16 %v1225, %v1217
    %v1906 = vpack.c.b16 %v1226, %v1218
    %v1907 = vpack.c.b16 %v1227, %v1219
    %v1908 = vpack.c.b16 %v1236, %v1228
    %v1909 = vpack.c.b16 %v1237, %v1229
    %v1910 = vpack.c.b16 %v1238, %v1230
    %v1911 = vpack.c.b16 %v1239, %v1231
    %v1912 = vpack.c.b16 %v1240, %v1232
    %v1913 = vpack.c.b16 %v1241, %v1233
    %v1914 = vpack.c.b16 %v1242, %v1234
    %v1915 = vpack.c.b16 %v1243, %v1235
    %v1916 = vpack.c.b16 %v1252, %v1244
    %v1917 = vpack.c.b16 %v1253, %v1245
    %v1918 = vpack.c.b16 %v1254, %v1246
    %v1919 = vpack.c.b16 %v1255, %v1247
    %v1920 = vpack.c.b16 %v1256, %v1248
    %v1921 = vpack.c.b16 %v1257, %v1249
    %v1922 = vpack.c.b16 %v1258, %v1250
    %v1923 = vpack.c.b16 %v1259, %v1251
    %v1924 = vpack.c.b16 %v1268, %v1260
    %v1925 = vpack.c.b16 %v1269, %v1261
    %v1926 = vpack.c.b16 %v1270, %v1262
    %v1927 = vpack.c.b16 %v1271, %v1263
    %v1928 = vpack.c.b16 %v1272, %v1264
    %v1929 = vpack.c.b16 %v1273, %v1265
    %v1930 = vpack.c.b16 %v1274, %v1266
    %v1931 = vpack.c.b16 %v1275, %v1267
    %v1932 = vpack.c.b16 %v1284, %v1276
    %v1933 = vpack.c.b16 %v1285, %v1277
    %v1934 = vpack.c.b16 %v1286, %v1278
    %v1935 = vpack.c.b16 %v1287, %v1279
    %v1936 = vpack.c.b16 %v1288, %v1280
    %v1937 = vpack.c.b16 %v1289, %v1281
    %v1938 = vpack.c.b16 %v1290, %v1282
    %v1939 = vpack.c.b16 %v1291, %v1283
    %v1940 = vpack.c.b16 %v1300, %v1292
    %v1941 = vpack.c.b16 %v1301, %v1293
    %v1942 = vpack.c.b16 %v1302, %v1294
    %v1943 = vpack.c.b16 %v1303, %v1295
    %v1944 = vpack.c.b16 %v1304, %v1296
    %v1945 = vpack.c.b16 %v1305, %v1297
    %v1946 = vpack.c.b16 %v1306, %v1298
    %v1947 = vpack.c.b16 %v1307, %v1299
    %v1948 = vpack.c.b16 %v1316, %v1308
    %v1949 = vpack.c.b16 %v1317, %v1309
    %v1950 = vpack.c.b16 %v1318, %v1310
    %v1951 = vpack.c.b16 %v1319, %v1311
    %v1952 = vpack.c.b16 %v1320, %v1312
    %v1953 = vpack.c.b16 %v1321, %v1313
    %v1954 = vpack.c.b16 %v1322, %v1314
    %v1955 = vpack.c.b16 %v1323, %v1315
    %v1956 = vpack.c.b16 %v1332, %v1324
    %v1957 = vpack.c.b16 %v1333, %v1325
    %v1958 = vpack.c.b16 %v1334, %v1326
    %v1959 = vpack.c.b16 %v1335, %v1327
    %v1960 = vpack.c.b16 %v1336, %v1328
    %v1961 = vpack.c.b16 %v1337, %v1329
    %v1962 = vpack.c.b16 %v1338, %v1330
    %v1963 = vpack.c.b16 %v1339, %v1331
    %v1964 = vpack.c.b16 %v1348, %v1340
    %v1965 = vpack.c.b16 %v1349, %v1341
    %v1966 = vpack.c.b16 %v1350, %v1342
    %v1967 = vpack.c.b16 %v1351, %v1343
    %v1968 = vpack.c.b16 %v1352, %v1344
    %v1969 = vpack.c.b16 %v1353, %v1345
    %v1970 = vpack.c.b16 %v1354, %v1346
    %v1971 = vpack.c.b16 %v1355, %v1347
    %v1972 = vpack.c.b16 %v1364, %v1356
    %v1973 = vpack.c.b16 %v1365, %v1357
    %v1974 = vpack.c.b16 %v1366, %v1358
    %v1975 = vpack.c.b16 %v1367, %v1359
    %v1976 = vpack.c.b16 %v1368, %v1360
    %v1977 = vpack.c.b16 %v1369, %v1361
    %v1978 = vpack.c.b16 %v1370, %v1362
    %v1979 = vpack.c.b16 %v1371, %v1363
    %v1980 = vpack.c.b16 %v1380, %v1372
    %v1981 = vpack.c.b16 %v1381, %v1373
    %v1982 = vpack.c.b16 %v1382, %v1374
    %v1983 = vpack.c.b16 %v1383, %v1375
    %v1984 = vpack.c.b16 %v1384, %v1376
    %v1985 = vpack.c.b16 %v1385, %v1377
    %v1986 = vpack.c.b16 %v1386, %v1378
    %v1987 = vpack.c.b16 %v1387, %v1379
    %v1988 = vpack.c.b16 %v1396, %v1388
    %v1989 = vpack.c.b16 %v1397, %v1389
    %v1990 = vpack.c.b16 %v1398, %v1390
    %v1991 = vpack.c.b16 %v1399, %v1391
    %v1992 = vpack.c.b16 %v1400, %v1392
    %v1993 = vpack.c.b16 %v1401, %v1393
    %v1994 = vpack.c.b16 %v1402, %v1394
    %v1995 = vpack.c.b16 %v1403, %v1395
    %v1996 = vpack.c.b16 %v1412, %v1404
    %v1997 = vpack.c.b16 %v1413, %v1405
    %v1998 = vpack.c.b16 %v1414, %v1406
    %v1999 = vpack.c.b16 %v1415, %v1407
    %v2000 = vpack.c.b16 %v1416, %v1408
    %v2001 = vpack.c.b16 %v1417, %v1409
    %v2002 = vpack.c.b16 %v1418, %v1410
    %v2003 = vpack.c.b16 %v1419, %v1411
    %v2004 = vpack.c.b16 %v1428, %v1420
    %v2005 = vpack.c.b16 %v1429, %v1421
    %v2006 = vpack.c.b16 %v1430, %v1422
    %v2007 = vpack.c.b16 %v1431, %v1423
    %v2008 = vpack.c.b16 %v1432, %v1424
    %v2009 = vpack.c.b16 %v1433, %v1425
    %v2010 = vpack.c.b16 %v1434, %v1426
    %v2011 = vpack.c.b16 %v1435, %v1427
    %v2012 = vpack.c.b16 %v1444, %v1436
    %v2013 = vpack.c.b16 %v1445, %v1437
    %v2014 = vpack.c.b16 %v1446, %v1438
    %v2015 = vpack.c.b16 %v1447, %v1439
    %v2016 = vpack.c.b16 %v1448, %v1440
    %v2017 = vpack.c.b16 %v1449, %v1441
    %v2018 = vpack.c.b16 %v1450, %v1442
    %v2019 = vpack.c.b16 %v1451, %v1443
    %v2020 = vpack.c.b16 %v1460, %v1452
    %v2021 = vpack.c.b16 %v1461, %v1453
    %v2022 = vpack.c.b16 %v1462, %v1454
    %v2023 = vpack.c.b16 %v1463, %v1455
    %v2024 = vpack.c.b16 %v1464, %v1456
    %v2025 = vpack.c.b16 %v1465, %v1457
    %v2026 = vpack.c.b16 %v1466, %v1458
    %v2027 = vpack.c.b16 %v1467, %v1459
    %v2028 = vpack.c.b16 %v1476, %v1468
    %v2029 = vpack.c.b16 %v1477, %v1469
    %v2030 = vpack.c.b16 %v1478, %v1470
    %v2031 = vpack.c.b16 %v1479, %v1471
    %v2032 = vpack.c.b16 %v1480, %v1472
    %v2033 = vpack.c.b16 %v1481, %v1473
    %v2034 = vpack.c.b16 %v1482, %v1474
    %v2035 = vpack.c.b16 %v1483, %v1475
    %v2036 = vpack.c.b16 %v1492, %v1484
    %v2037 = vpack.c.b16 %v1493, %v1485
    %v2038 = vpack.c.b16 %v1494, %v1486
    %v2039 = vpack.c.b16 %v1495, %v1487
    %v2040 = vpack.c.b16 %v1496, %v1488
    %v2041 = vpack.c.b16 %v1497, %v1489
    %v2042 = vpack.c.b16 %v1498, %v1490
    %v2043 = vpack.c.b16 %v1499, %v1491
    %v2044 = vpack.c.b16 %v1508, %v1500
    %v2045 = vpack.c.b16 %v1509, %v1501
    %v2046 = vpack.c.b16 %v1510, %v1502
    %v2047 = vpack.c.b16 %v1511, %v1503
    %v2048 = vpack.c.b16 %v1512, %v1504
    %v2049 = vpack.c.b16 %v1513, %v1505
    %v2050 = vpack.c.b16 %v1514, %v1506
    %v2051 = vpack.c.b16 %v1515, %v1507
    %v2052 = vpack.c.b16 %v1524, %v1516
    %v2053 = vpack.c.b16 %v1525, %v1517
    %v2054 = vpack.c.b16 %v1526, %v1518
    %v2055 = vpack.c.b16 %v1527, %v1519
    %v2056 = vpack.c.b16 %v1528, %v1520
    %v2057 = vpack.c.b16 %v1529, %v1521
    %v2058 = vpack.c.b16 %v1530, %v1522
    %v2059 = vpack.c.b16 %v1531, %v1523
    %v2060 = vpack.c.b16 %v1540, %v1532
    %v2061 = vpack.c.b16 %v1541, %v1533
    %v2062 = vpack.c.b16 %v1542, %v1534
    %v2063 = vpack.c.b16 %v1543, %v1535
    %v2064 = vpack.c.b16 %v1544, %v1536
    %v2065 = vpack.c.b16 %v1545, %v1537
    %v2066 = vpack.c.b16 %v1546, %v1538
    %v2067 = vpack.c.b16 %v1547, %v1539
    %v2068 = vpack.c.b16 %v1556, %v1548
    %v2069 = vpack.c.b16 %v1557, %v1549
    %v2070 = vpack.c.b16 %v1558, %v1550
    %v2071 = vpack.c.b16 %v1559, %v1551
    %v2072 = vpack.c.b16 %v1560, %v1552
    %v2073 = vpack.c.b16 %v1561, %v1553
    %v2074 = vpack.c.b16 %v1562, %v1554
    %v2075 = vpack.c.b16 %v1563, %v1555
    %v2076 = vpack.c.b16 %v1572, %v1564
    %v2077 = vpack.c.b16 %v1573, %v1565
    %v2078 = vpack.c.b16 %v1574, %v1566
    %v2079 = vpack.c.b16 %v1575, %v1567
    %v2080 = vpack.c.b16 %v1576, %v1568
    %v2081 = vpack.c.b16 %v1577, %v1569
    %v2082 = vpack.c.b16 %v1578, %v1570
    %v2083 = vpack.c.b16 %v1579, %v1571
    %v2084 = vpack.c.b16 %v1588, %v1580
    %v2085 = vpack.c.b16 %v1589, %v1581
    %v2086 = vpack.c.b16 %v1590, %v1582
    %v2087 = vpack.c.b16 %v1591, %v1583
    %v2088 = vpack.c.b16 %v1592, %v1584
    %v2089 = vpack.c.b16 %v1593, %v1585
    %v2090 = vpack.c.b16 %v1594, %v1586
    %v2091 = vpack.c.b16 %v1595, %v1587
    %v2092 = vpack.c.b16 %v1604, %v1596
    %v2093 = vpack.c.b16 %v1605, %v1597
    %v2094 = vpack.c.b16 %v1606, %v1598
    %v2095 = vpack.c.b16 %v1607, %v1599
    %v2096 = vpack.c.b16 %v1608, %v1600
    %v2097 = vpack.c.b16 %v1609, %v1601
    %v2098 = vpack.c.b16 %v1610, %v1602
    %v2099 = vpack.c.b16 %v1611, %v1603
    %v2100 = vpack.c.b16 %v1620, %v1612
    %v2101 = vpack.c.b16 %v1621, %v1613
    %v2102 = vpack.c.b16 %v1622, %v1614
    %v2103 = vpack.c.b16 %v1623, %v1615
    %v2104 = vpack.c.b16 %v1624, %v1616
    %v2105 = vpack.c.b16 %v1625, %v1617
    %v2106 = vpack.c.b16 %v1626, %v1618
    %v2107 = vpack.c.b16 %v1627, %v1619
    %v2108 = vpack.c.b16 %v1636, %v1628
    %v2109 = vpack.c.b16 %v1637, %v1629
    %v2110 = vpack.c.b16 %v1638, %v1630
    %v2111 = vpack.c.b16 %v1639, %v1631
    %v2112 = vpack.c.b16 %v1640, %v1632
    %v2113 = vpack.c.b16 %v1641, %v1633
    %v2114 = vpack.c.b16 %v1642, %v1634
    %v2115 = vpack.c.b16 %v1643, %v1635
    %v2116 = vpack.c.b16 %v1652, %v1644
    %v2117 = vpack.c.b16 %v1653, %v1645
    %v2118 = vpack.c.b16 %v1654, %v1646
    %v2119 = vpack.c.b16 %v1655, %v1647
    %v2120 = vpack.c.b16 %v1656, %v1648
    %v2121 = vpack.c.b16 %v1657, %v1649
    %v2122 = vpack.c.b16 %v1658, %v1650
    %v2123 = vpack.c.b16 %v1659, %v1651
    %v2124 = vpack.c.b16 %v1668, %v1660
    %v2125 = vpack.c.b16 %v1669, %v1661
    %v2126 = vpack.c.b16 %v1670, %v1662
    %v2127 = vpack.c.b16 %v1671, %v1663
    %v2128 = vpack.c.b16 %v1672, %v1664
    %v2129 = vpack.c.b16 %v1673, %v1665
    %v2130 = vpack.c.b16 %v1674, %v1666
    %v2131 = vpack.c.b16 %v1675, %v1667
    %v2132 = vpack.c.b16 %v1684, %v1676
    %v2133 = vpack.c.b16 %v1685, %v1677
    %v2134 = vpack.c.b16 %v1686, %v1678
    %v2135 = vpack.c.b16 %v1687, %v1679
    %v2136 = vpack.c.b16 %v1688, %v1680
    %v2137 = vpack.c.b16 %v1689, %v1681
    %v2138 = vpack.c.b16 %v1690, %v1682
    %v2139 = vpack.c.b16 %v1691, %v1683
    %v2140 = vpack.c.b16 %v1700, %v1692
    %v2141 = vpack.c.b16 %v1701, %v1693
    %v2142 = vpack.c.b16 %v1702, %v1694
    %v2143 = vpack.c.b16 %v1703, %v1695
    %v2144 = vpack.c.b16 %v1704, %v1696
    %v2145 = vpack.c.b16 %v1705, %v1697
    %v2146 = vpack.c.b16 %v1706, %v1698
    %v2147 = vpack.c.b16 %v1707, %v1699
    %v2148 = vpack.c.b16 %v1716, %v1708
    %v2149 = vpack.c.b16 %v1717, %v1709
    %v2150 = vpack.c.b16 %v1718, %v1710
    %v2151 = vpack.c.b16 %v1719, %v1711
    %v2152 = vpack.c.b16 %v1720, %v1712
    %v2153 = vpack.c.b16 %v1721, %v1713
    %v2154 = vpack.c.b16 %v1722, %v1714
    %v2155 = vpack.c.b16 %v1723, %v1715
    %v2156 = vpack.c.b16 %v1732, %v1724
    %v2157 = vpack.c.b16 %v1733, %v1725
    %v2158 = vpack.c.b16 %v1734, %v1726
    %v2159 = vpack.c.b16 %v1735, %v1727
    %v2160 = vpack.c.b16 %v1736, %v1728
    %v2161 = vpack.c.b16 %v1737, %v1729
    %v2162 = vpack.c.b16 %v1738, %v1730
    %v2163 = vpack.c.b16 %v1739, %v1731
    %v2164 = vpack.c.b16 %v1748, %v1740
    %v2165 = vpack.c.b16 %v1749, %v1741
    %v2166 = vpack.c.b16 %v1750, %v1742
    %v2167 = vpack.c.b16 %v1751, %v1743
    %v2168 = vpack.c.b16 %v1752, %v1744
    %v2169 = vpack.c.b16 %v1753, %v1745
    %v2170 = vpack.c.b16 %v1754, %v1746
    %v2171 = vpack.c.b16 %v1755, %v1747
    %v2172 = vpack.c.b16 %v1764, %v1756
    %v2173 = vpack.c.b16 %v1765, %v1757
    %v2174 = vpack.c.b16 %v1766, %v1758
    %v2175 = vpack.c.b16 %v1767, %v1759
    %v2176 = vpack.c.b16 %v1768, %v1760
    %v2177 = vpack.c.b16 %v1769, %v1761
    %v2178 = vpack.c.b16 %v1770, %v1762
    %v2179 = vpack.c.b16 %v1771, %v1763
    %v2180 = vpack.c.b16 %v1780, %v1772
    %v2181 = vpack.c.b16 %v1781, %v1773
    %v2182 = vpack.c.b16 %v1782, %v1774
    %v2183 = vpack.c.b16 %v1783, %v1775
    %v2184 = vpack.c.b16 %v1784, %v1776
    %v2185 = vpack.c.b16 %v1785, %v1777
    %v2186 = vpack.c.b16 %v1786, %v1778
    %v2187 = vpack.c.b16 %v1787, %v1779
    %v2188 = vpack.c.b16 %v1796, %v1788
    %v2189 = vpack.c.b16 %v1797, %v1789
    %v2190 = vpack.c.b16 %v1798, %v1790
    %v2191 = vpack.c.b16 %v1799, %v1791
    %v2192 = vpack.c.b16 %v1800, %v1792
    %v2193 = vpack.c.b16 %v1801, %v1793
    %v2194 = vpack.c.b16 %v1802, %v1794
    %v2195 = vpack.c.b16 %v1803, %v1795
    %v2196 = vpack.c.b16 %v1812, %v1804
    %v2197 = vpack.c.b16 %v1813, %v1805
    %v2198 = vpack.c.b16 %v1814, %v1806
    %v2199 = vpack.c.b16 %v1815, %v1807
    %v2200 = vpack.c.b16 %v1816, %v1808
    %v2201 = vpack.c.b16 %v1817, %v1809
    %v2202 = vpack.c.b16 %v1818, %v1810
    %v2203 = vpack.c.b16 %v1819, %v1811
    %2588 = vmatpush.bf16.msra.mxu0 %v1876
    %2589 = vmatpush.bf16.msra.mxu0 %v1868
    %2590 = vmatpush.bf16.msra.mxu0 %v1860
    %2591 = vmatpush.bf16.msra.mxu0 %v1852
    %2592 = vmatpush.bf16.msra.mxu0 %v1844
    %2593 = vmatpush.bf16.msra.mxu0 %v1836
    %2594 = vmatpush.bf16.msra.mxu0 %v1828
    %2595 = vmatpush.bf16.msra.mxu0 %v1820
    %2596 = vmatmul.bf16.gmra.mxu0 %v260
    %v2597 = vpop.f32.mrf.mxu0
    %v2598 = vadd.f32 %v652, %v2597
    %v2599 = vpop.f32.mrf.mxu0
    %2600 = vdwg.mxu0
    %2601 = vmatpush.bf16.msra.mxu0 %v1940
    %2602 = vmatpush.bf16.msra.mxu0 %v1932
    %2603 = vmatpush.bf16.msra.mxu0 %v1924
    %2604 = vmatpush.bf16.msra.mxu0 %v1916
    %2605 = vmatpush.bf16.msra.mxu0 %v1908
    %2606 = vmatpush.bf16.msra.mxu0 %v1900
    %2607 = vmatpush.bf16.msra.mxu0 %v1892
    %2608 = vmatpush.bf16.msra.mxu0 %v1884
    %2609 = vmatmul.bf16.gmra.mxu0 %v261
    %v2610 = vpop.f32.mrf.mxu0
    %v2611 = vadd.f32 %v2598, %v2610
    %v2612 = vpop.f32.mrf.mxu0
    %2613 = vdwg.mxu0
    %2614 = vmatpush.bf16.msra.mxu0 %v2004
    %2615 = vmatpush.bf16.msra.mxu0 %v1996
    %2616 = vmatpush.bf16.msra.mxu0 %v1988
    %2617 = vmatpush.bf16.msra.mxu0 %v1980
    %2618 = vmatpush.bf16.msra.mxu0 %v1972
    %2619 = vmatpush.bf16.msra.mxu0 %v1964
    %2620 = vmatpush.bf16.msra.mxu0 %v1956
    %2621 = vmatpush.bf16.msra.mxu0 %v1948
    %2622 = vmatmul.bf16.gmra.mxu0 %v262
    %v2623 = vpop.f32.mrf.mxu0
    %v2624 = vadd.f32 %v2611, %v2623
    %v2625 = vpop.f32.mrf.mxu0
    %2626 = vdwg.mxu0
    %2627 = vmatpush.bf16.msra.mxu0 %v2068
    %2628 = vmatpush.bf16.msra.mxu0 %v2060
    %2629 = vmatpush.bf16.msra.mxu0 %v2052
    %2630 = vmatpush.bf16.msra.mxu0 %v2044
    %2631 = vmatpush.bf16.msra.mxu0 %v2036
    %2632 = vmatpush.bf16.msra.mxu0 %v2028
    %2633 = vmatpush.bf16.msra.mxu0 %v2020
    %2634 = vmatpush.bf16.msra.mxu0 %v2012
    %2635 = vmatmul.bf16.gmra.mxu0 %v263
    %v2636 = vpop.f32.mrf.mxu0
    %v2637 = vadd.f32 %v2624, %v2636
    %v2638 = vpop.f32.mrf.mxu0
    %2639 = vdwg.mxu0
    %2640 = vmatpush.bf16.msra.mxu0 %v2132
    %2641 = vmatpush.bf16.msra.mxu0 %v2124
    %2642 = vmatpush.bf16.msra.mxu0 %v2116
    %2643 = vmatpush.bf16.msra.mxu0 %v2108
    %2644 = vmatpush.bf16.msra.mxu0 %v2100
    %2645 = vmatpush.bf16.msra.mxu0 %v2092
    %2646 = vmatpush.bf16.msra.mxu0 %v2084
    %2647 = vmatpush.bf16.msra.mxu0 %v2076
    %2648 = vmatmul.bf16.gmra.mxu0 %v264
    %v2649 = vpop.f32.mrf.mxu0
    %v2650 = vadd.f32 %v2637, %v2649
    %v2651 = vpop.f32.mrf.mxu0
    %2652 = vdwg.mxu0
    %2653 = vmatpush.bf16.msra.mxu0 %v2196
    %2654 = vmatpush.bf16.msra.mxu0 %v2188
    %2655 = vmatpush.bf16.msra.mxu0 %v2180
    %2656 = vmatpush.bf16.msra.mxu0 %v2172
    %2657 = vmatpush.bf16.msra.mxu0 %v2164
    %2658 = vmatpush.bf16.msra.mxu0 %v2156
    %2659 = vmatpush.bf16.msra.mxu0 %v2148
    %2660 = vmatpush.bf16.msra.mxu0 %v2140
    %2661 = vmatmul.bf16.gmra.mxu0 %v265
    %v2662 = vpop.f32.mrf.mxu0
    %v2663 = vadd.f32 %v2650, %v2662
    %v2664 = vpop.f32.mrf.mxu0
    %2665 = vdwg.mxu0
    %2666 = vmatpush.bf16.msra.mxu0 %v1877
    %2667 = vmatpush.bf16.msra.mxu0 %v1869
    %2668 = vmatpush.bf16.msra.mxu0 %v1861
    %2669 = vmatpush.bf16.msra.mxu0 %v1853
    %2670 = vmatpush.bf16.msra.mxu0 %v1845
    %2671 = vmatpush.bf16.msra.mxu0 %v1837
    %2672 = vmatpush.bf16.msra.mxu0 %v1829
    %2673 = vmatpush.bf16.msra.mxu0 %v1821
    %2674 = vmatmul.bf16.gmra.mxu0 %v260
    %v2675 = vpop.f32.mrf.mxu0
    %v2676 = vadd.f32 %v653, %v2675
    %v2677 = vpop.f32.mrf.mxu0
    %2678 = vdwg.mxu0
    %2679 = vmatpush.bf16.msra.mxu0 %v1941
    %2680 = vmatpush.bf16.msra.mxu0 %v1933
    %2681 = vmatpush.bf16.msra.mxu0 %v1925
    %2682 = vmatpush.bf16.msra.mxu0 %v1917
    %2683 = vmatpush.bf16.msra.mxu0 %v1909
    %2684 = vmatpush.bf16.msra.mxu0 %v1901
    %2685 = vmatpush.bf16.msra.mxu0 %v1893
    %2686 = vmatpush.bf16.msra.mxu0 %v1885
    %2687 = vmatmul.bf16.gmra.mxu0 %v261
    %v2688 = vpop.f32.mrf.mxu0
    %v2689 = vadd.f32 %v2676, %v2688
    %v2690 = vpop.f32.mrf.mxu0
    %2691 = vdwg.mxu0
    %2692 = vmatpush.bf16.msra.mxu0 %v2005
    %2693 = vmatpush.bf16.msra.mxu0 %v1997
    %2694 = vmatpush.bf16.msra.mxu0 %v1989
    %2695 = vmatpush.bf16.msra.mxu0 %v1981
    %2696 = vmatpush.bf16.msra.mxu0 %v1973
    %2697 = vmatpush.bf16.msra.mxu0 %v1965
    %2698 = vmatpush.bf16.msra.mxu0 %v1957
    %2699 = vmatpush.bf16.msra.mxu0 %v1949
    %2700 = vmatmul.bf16.gmra.mxu0 %v262
    %v2701 = vpop.f32.mrf.mxu0
    %v2702 = vadd.f32 %v2689, %v2701
    %v2703 = vpop.f32.mrf.mxu0
    %2704 = vdwg.mxu0
    %2705 = vmatpush.bf16.msra.mxu0 %v2069
    %2706 = vmatpush.bf16.msra.mxu0 %v2061
    %2707 = vmatpush.bf16.msra.mxu0 %v2053
    %2708 = vmatpush.bf16.msra.mxu0 %v2045
    %2709 = vmatpush.bf16.msra.mxu0 %v2037
    %2710 = vmatpush.bf16.msra.mxu0 %v2029
    %2711 = vmatpush.bf16.msra.mxu0 %v2021
    %2712 = vmatpush.bf16.msra.mxu0 %v2013
    %2713 = vmatmul.bf16.gmra.mxu0 %v263
    %v2714 = vpop.f32.mrf.mxu0
    %v2715 = vadd.f32 %v2702, %v2714
    %v2716 = vpop.f32.mrf.mxu0
    %2717 = vdwg.mxu0
    %2718 = vmatpush.bf16.msra.mxu0 %v2133
    %2719 = vmatpush.bf16.msra.mxu0 %v2125
    %2720 = vmatpush.bf16.msra.mxu0 %v2117
    %2721 = vmatpush.bf16.msra.mxu0 %v2109
    %2722 = vmatpush.bf16.msra.mxu0 %v2101
    %2723 = vmatpush.bf16.msra.mxu0 %v2093
    %2724 = vmatpush.bf16.msra.mxu0 %v2085
    %2725 = vmatpush.bf16.msra.mxu0 %v2077
    %2726 = vmatmul.bf16.gmra.mxu0 %v264
    %v2727 = vpop.f32.mrf.mxu0
    %v2728 = vadd.f32 %v2715, %v2727
    %v2729 = vpop.f32.mrf.mxu0
    %2730 = vdwg.mxu0
    %2731 = vmatpush.bf16.msra.mxu0 %v2197
    %2732 = vmatpush.bf16.msra.mxu0 %v2189
    %2733 = vmatpush.bf16.msra.mxu0 %v2181
    %2734 = vmatpush.bf16.msra.mxu0 %v2173
    %2735 = vmatpush.bf16.msra.mxu0 %v2165
    %2736 = vmatpush.bf16.msra.mxu0 %v2157
    %2737 = vmatpush.bf16.msra.mxu0 %v2149
    %2738 = vmatpush.bf16.msra.mxu0 %v2141
    %2739 = vmatmul.bf16.gmra.mxu0 %v265
    %v2740 = vpop.f32.mrf.mxu0
    %v2741 = vadd.f32 %v2728, %v2740
    %v2742 = vpop.f32.mrf.mxu0
    %2743 = vdwg.mxu0
    %2744 = vmatpush.bf16.msra.mxu0 %v1878
    %2745 = vmatpush.bf16.msra.mxu0 %v1870
    %2746 = vmatpush.bf16.msra.mxu0 %v1862
    %2747 = vmatpush.bf16.msra.mxu0 %v1854
    %2748 = vmatpush.bf16.msra.mxu0 %v1846
    %2749 = vmatpush.bf16.msra.mxu0 %v1838
    %2750 = vmatpush.bf16.msra.mxu0 %v1830
    %2751 = vmatpush.bf16.msra.mxu0 %v1822
    %2752 = vmatmul.bf16.gmra.mxu0 %v260
    %v2753 = vpop.f32.mrf.mxu0
    %v2754 = vadd.f32 %v654, %v2753
    %v2755 = vpop.f32.mrf.mxu0
    %2756 = vdwg.mxu0
    %2757 = vmatpush.bf16.msra.mxu0 %v1942
    %2758 = vmatpush.bf16.msra.mxu0 %v1934
    %2759 = vmatpush.bf16.msra.mxu0 %v1926
    %2760 = vmatpush.bf16.msra.mxu0 %v1918
    %2761 = vmatpush.bf16.msra.mxu0 %v1910
    %2762 = vmatpush.bf16.msra.mxu0 %v1902
    %2763 = vmatpush.bf16.msra.mxu0 %v1894
    %2764 = vmatpush.bf16.msra.mxu0 %v1886
    %2765 = vmatmul.bf16.gmra.mxu0 %v261
    %v2766 = vpop.f32.mrf.mxu0
    %v2767 = vadd.f32 %v2754, %v2766
    %v2768 = vpop.f32.mrf.mxu0
    %2769 = vdwg.mxu0
    %2770 = vmatpush.bf16.msra.mxu0 %v2006
    %2771 = vmatpush.bf16.msra.mxu0 %v1998
    %2772 = vmatpush.bf16.msra.mxu0 %v1990
    %2773 = vmatpush.bf16.msra.mxu0 %v1982
    %2774 = vmatpush.bf16.msra.mxu0 %v1974
    %2775 = vmatpush.bf16.msra.mxu0 %v1966
    %2776 = vmatpush.bf16.msra.mxu0 %v1958
    %2777 = vmatpush.bf16.msra.mxu0 %v1950
    %2778 = vmatmul.bf16.gmra.mxu0 %v262
    %v2779 = vpop.f32.mrf.mxu0
    %v2780 = vadd.f32 %v2767, %v2779
    %v2781 = vpop.f32.mrf.mxu0
    %2782 = vdwg.mxu0
    %2783 = vmatpush.bf16.msra.mxu0 %v2070
    %2784 = vmatpush.bf16.msra.mxu0 %v2062
    %2785 = vmatpush.bf16.msra.mxu0 %v2054
    %2786 = vmatpush.bf16.msra.mxu0 %v2046
    %2787 = vmatpush.bf16.msra.mxu0 %v2038
    %2788 = vmatpush.bf16.msra.mxu0 %v2030
    %2789 = vmatpush.bf16.msra.mxu0 %v2022
    %2790 = vmatpush.bf16.msra.mxu0 %v2014
    %2791 = vmatmul.bf16.gmra.mxu0 %v263
    %v2792 = vpop.f32.mrf.mxu0
    %v2793 = vadd.f32 %v2780, %v2792
    %v2794 = vpop.f32.mrf.mxu0
    %2795 = vdwg.mxu0
    %2796 = vmatpush.bf16.msra.mxu0 %v2134
    %2797 = vmatpush.bf16.msra.mxu0 %v2126
    %2798 = vmatpush.bf16.msra.mxu0 %v2118
    %2799 = vmatpush.bf16.msra.mxu0 %v2110
    %2800 = vmatpush.bf16.msra.mxu0 %v2102
    %2801 = vmatpush.bf16.msra.mxu0 %v2094
    %2802 = vmatpush.bf16.msra.mxu0 %v2086
    %2803 = vmatpush.bf16.msra.mxu0 %v2078
    %2804 = vmatmul.bf16.gmra.mxu0 %v264
    %v2805 = vpop.f32.mrf.mxu0
    %v2806 = vadd.f32 %v2793, %v2805
    %v2807 = vpop.f32.mrf.mxu0
    %2808 = vdwg.mxu0
    %2809 = vmatpush.bf16.msra.mxu0 %v2198
    %2810 = vmatpush.bf16.msra.mxu0 %v2190
    %2811 = vmatpush.bf16.msra.mxu0 %v2182
    %2812 = vmatpush.bf16.msra.mxu0 %v2174
    %2813 = vmatpush.bf16.msra.mxu0 %v2166
    %2814 = vmatpush.bf16.msra.mxu0 %v2158
    %2815 = vmatpush.bf16.msra.mxu0 %v2150
    %2816 = vmatpush.bf16.msra.mxu0 %v2142
    %2817 = vmatmul.bf16.gmra.mxu0 %v265
    %v2818 = vpop.f32.mrf.mxu0
    %v2819 = vadd.f32 %v2806, %v2818
    %v2820 = vpop.f32.mrf.mxu0
    %2821 = vdwg.mxu0
    %2822 = vmatpush.bf16.msra.mxu0 %v1879
    %2823 = vmatpush.bf16.msra.mxu0 %v1871
    %2824 = vmatpush.bf16.msra.mxu0 %v1863
    %2825 = vmatpush.bf16.msra.mxu0 %v1855
    %2826 = vmatpush.bf16.msra.mxu0 %v1847
    %2827 = vmatpush.bf16.msra.mxu0 %v1839
    %2828 = vmatpush.bf16.msra.mxu0 %v1831
    %2829 = vmatpush.bf16.msra.mxu0 %v1823
    %2830 = vmatmul.bf16.gmra.mxu0 %v260
    %v2831 = vpop.f32.mrf.mxu0
    %v2832 = vadd.f32 %v655, %v2831
    %v2833 = vpop.f32.mrf.mxu0
    %2834 = vdwg.mxu0
    %2835 = vmatpush.bf16.msra.mxu0 %v1943
    %2836 = vmatpush.bf16.msra.mxu0 %v1935
    %2837 = vmatpush.bf16.msra.mxu0 %v1927
    %2838 = vmatpush.bf16.msra.mxu0 %v1919
    %2839 = vmatpush.bf16.msra.mxu0 %v1911
    %2840 = vmatpush.bf16.msra.mxu0 %v1903
    %2841 = vmatpush.bf16.msra.mxu0 %v1895
    %2842 = vmatpush.bf16.msra.mxu0 %v1887
    %2843 = vmatmul.bf16.gmra.mxu0 %v261
    %v2844 = vpop.f32.mrf.mxu0
    %v2845 = vadd.f32 %v2832, %v2844
    %v2846 = vpop.f32.mrf.mxu0
    %2847 = vdwg.mxu0
    %2848 = vmatpush.bf16.msra.mxu0 %v2007
    %2849 = vmatpush.bf16.msra.mxu0 %v1999
    %2850 = vmatpush.bf16.msra.mxu0 %v1991
    %2851 = vmatpush.bf16.msra.mxu0 %v1983
    %2852 = vmatpush.bf16.msra.mxu0 %v1975
    %2853 = vmatpush.bf16.msra.mxu0 %v1967
    %2854 = vmatpush.bf16.msra.mxu0 %v1959
    %2855 = vmatpush.bf16.msra.mxu0 %v1951
    %2856 = vmatmul.bf16.gmra.mxu0 %v262
    %v2857 = vpop.f32.mrf.mxu0
    %v2858 = vadd.f32 %v2845, %v2857
    %v2859 = vpop.f32.mrf.mxu0
    %2860 = vdwg.mxu0
    %2861 = vmatpush.bf16.msra.mxu0 %v2071
    %2862 = vmatpush.bf16.msra.mxu0 %v2063
    %2863 = vmatpush.bf16.msra.mxu0 %v2055
    %2864 = vmatpush.bf16.msra.mxu0 %v2047
    %2865 = vmatpush.bf16.msra.mxu0 %v2039
    %2866 = vmatpush.bf16.msra.mxu0 %v2031
    %2867 = vmatpush.bf16.msra.mxu0 %v2023
    %2868 = vmatpush.bf16.msra.mxu0 %v2015
    %2869 = vmatmul.bf16.gmra.mxu0 %v263
    %v2870 = vpop.f32.mrf.mxu0
    %v2871 = vadd.f32 %v2858, %v2870
    %v2872 = vpop.f32.mrf.mxu0
    %2873 = vdwg.mxu0
    %2874 = vmatpush.bf16.msra.mxu0 %v2135
    %2875 = vmatpush.bf16.msra.mxu0 %v2127
    %2876 = vmatpush.bf16.msra.mxu0 %v2119
    %2877 = vmatpush.bf16.msra.mxu0 %v2111
    %2878 = vmatpush.bf16.msra.mxu0 %v2103
    %2879 = vmatpush.bf16.msra.mxu0 %v2095
    %2880 = vmatpush.bf16.msra.mxu0 %v2087
    %2881 = vmatpush.bf16.msra.mxu0 %v2079
    %2882 = vmatmul.bf16.gmra.mxu0 %v264
    %v2883 = vpop.f32.mrf.mxu0
    %v2884 = vadd.f32 %v2871, %v2883
    %v2885 = vpop.f32.mrf.mxu0
    %2886 = vdwg.mxu0
    %2887 = vmatpush.bf16.msra.mxu0 %v2199
    %2888 = vmatpush.bf16.msra.mxu0 %v2191
    %2889 = vmatpush.bf16.msra.mxu0 %v2183
    %2890 = vmatpush.bf16.msra.mxu0 %v2175
    %2891 = vmatpush.bf16.msra.mxu0 %v2167
    %2892 = vmatpush.bf16.msra.mxu0 %v2159
    %2893 = vmatpush.bf16.msra.mxu0 %v2151
    %2894 = vmatpush.bf16.msra.mxu0 %v2143
    %2895 = vmatmul.bf16.gmra.mxu0 %v265
    %v2896 = vpop.f32.mrf.mxu0
    %v2897 = vadd.f32 %v2884, %v2896
    %v2898 = vpop.f32.mrf.mxu0
    %2899 = vdwg.mxu0
    %2900 = vmatpush.bf16.msra.mxu0 %v1880
    %2901 = vmatpush.bf16.msra.mxu0 %v1872
    %2902 = vmatpush.bf16.msra.mxu0 %v1864
    %2903 = vmatpush.bf16.msra.mxu0 %v1856
    %2904 = vmatpush.bf16.msra.mxu0 %v1848
    %2905 = vmatpush.bf16.msra.mxu0 %v1840
    %2906 = vmatpush.bf16.msra.mxu0 %v1832
    %2907 = vmatpush.bf16.msra.mxu0 %v1824
    %2908 = vmatmul.bf16.gmra.mxu0 %v260
    %v2909 = vpop.f32.mrf.mxu0
    %v2910 = vadd.f32 %v656, %v2909
    %v2911 = vpop.f32.mrf.mxu0
    %2912 = vdwg.mxu0
    %2913 = vmatpush.bf16.msra.mxu0 %v1944
    %2914 = vmatpush.bf16.msra.mxu0 %v1936
    %2915 = vmatpush.bf16.msra.mxu0 %v1928
    %2916 = vmatpush.bf16.msra.mxu0 %v1920
    %2917 = vmatpush.bf16.msra.mxu0 %v1912
    %2918 = vmatpush.bf16.msra.mxu0 %v1904
    %2919 = vmatpush.bf16.msra.mxu0 %v1896
    %2920 = vmatpush.bf16.msra.mxu0 %v1888
    %2921 = vmatmul.bf16.gmra.mxu0 %v261
    %v2922 = vpop.f32.mrf.mxu0
    %v2923 = vadd.f32 %v2910, %v2922
    %v2924 = vpop.f32.mrf.mxu0
    %2925 = vdwg.mxu0
    %2926 = vmatpush.bf16.msra.mxu0 %v2008
    %2927 = vmatpush.bf16.msra.mxu0 %v2000
    %2928 = vmatpush.bf16.msra.mxu0 %v1992
    %2929 = vmatpush.bf16.msra.mxu0 %v1984
    %2930 = vmatpush.bf16.msra.mxu0 %v1976
    %2931 = vmatpush.bf16.msra.mxu0 %v1968
    %2932 = vmatpush.bf16.msra.mxu0 %v1960
    %2933 = vmatpush.bf16.msra.mxu0 %v1952
    %2934 = vmatmul.bf16.gmra.mxu0 %v262
    %v2935 = vpop.f32.mrf.mxu0
    %v2936 = vadd.f32 %v2923, %v2935
    %v2937 = vpop.f32.mrf.mxu0
    %2938 = vdwg.mxu0
    %2939 = vmatpush.bf16.msra.mxu0 %v2072
    %2940 = vmatpush.bf16.msra.mxu0 %v2064
    %2941 = vmatpush.bf16.msra.mxu0 %v2056
    %2942 = vmatpush.bf16.msra.mxu0 %v2048
    %2943 = vmatpush.bf16.msra.mxu0 %v2040
    %2944 = vmatpush.bf16.msra.mxu0 %v2032
    %2945 = vmatpush.bf16.msra.mxu0 %v2024
    %2946 = vmatpush.bf16.msra.mxu0 %v2016
    %2947 = vmatmul.bf16.gmra.mxu0 %v263
    %v2948 = vpop.f32.mrf.mxu0
    %v2949 = vadd.f32 %v2936, %v2948
    %v2950 = vpop.f32.mrf.mxu0
    %2951 = vdwg.mxu0
    %2952 = vmatpush.bf16.msra.mxu0 %v2136
    %2953 = vmatpush.bf16.msra.mxu0 %v2128
    %2954 = vmatpush.bf16.msra.mxu0 %v2120
    %2955 = vmatpush.bf16.msra.mxu0 %v2112
    %2956 = vmatpush.bf16.msra.mxu0 %v2104
    %2957 = vmatpush.bf16.msra.mxu0 %v2096
    %2958 = vmatpush.bf16.msra.mxu0 %v2088
    %2959 = vmatpush.bf16.msra.mxu0 %v2080
    %2960 = vmatmul.bf16.gmra.mxu0 %v264
    %v2961 = vpop.f32.mrf.mxu0
    %v2962 = vadd.f32 %v2949, %v2961
    %v2963 = vpop.f32.mrf.mxu0
    %2964 = vdwg.mxu0
    %2965 = vmatpush.bf16.msra.mxu0 %v2200
    %2966 = vmatpush.bf16.msra.mxu0 %v2192
    %2967 = vmatpush.bf16.msra.mxu0 %v2184
    %2968 = vmatpush.bf16.msra.mxu0 %v2176
    %2969 = vmatpush.bf16.msra.mxu0 %v2168
    %2970 = vmatpush.bf16.msra.mxu0 %v2160
    %2971 = vmatpush.bf16.msra.mxu0 %v2152
    %2972 = vmatpush.bf16.msra.mxu0 %v2144
    %2973 = vmatmul.bf16.gmra.mxu0 %v265
    %v2974 = vpop.f32.mrf.mxu0
    %v2975 = vadd.f32 %v2962, %v2974
    %v2976 = vpop.f32.mrf.mxu0
    %2977 = vdwg.mxu0
    %2978 = vmatpush.bf16.msra.mxu0 %v1881
    %2979 = vmatpush.bf16.msra.mxu0 %v1873
    %2980 = vmatpush.bf16.msra.mxu0 %v1865
    %2981 = vmatpush.bf16.msra.mxu0 %v1857
    %2982 = vmatpush.bf16.msra.mxu0 %v1849
    %2983 = vmatpush.bf16.msra.mxu0 %v1841
    %2984 = vmatpush.bf16.msra.mxu0 %v1833
    %2985 = vmatpush.bf16.msra.mxu0 %v1825
    %2986 = vmatmul.bf16.gmra.mxu0 %v260
    %v2987 = vpop.f32.mrf.mxu0
    %v2988 = vadd.f32 %v657, %v2987
    %v2989 = vpop.f32.mrf.mxu0
    %2990 = vdwg.mxu0
    %2991 = vmatpush.bf16.msra.mxu0 %v1945
    %2992 = vmatpush.bf16.msra.mxu0 %v1937
    %2993 = vmatpush.bf16.msra.mxu0 %v1929
    %2994 = vmatpush.bf16.msra.mxu0 %v1921
    %2995 = vmatpush.bf16.msra.mxu0 %v1913
    %2996 = vmatpush.bf16.msra.mxu0 %v1905
    %2997 = vmatpush.bf16.msra.mxu0 %v1897
    %2998 = vmatpush.bf16.msra.mxu0 %v1889
    %2999 = vmatmul.bf16.gmra.mxu0 %v261
    %v3000 = vpop.f32.mrf.mxu0
    %v3001 = vadd.f32 %v2988, %v3000
    %v3002 = vpop.f32.mrf.mxu0
    %3003 = vdwg.mxu0
    %3004 = vmatpush.bf16.msra.mxu0 %v2009
    %3005 = vmatpush.bf16.msra.mxu0 %v2001
    %3006 = vmatpush.bf16.msra.mxu0 %v1993
    %3007 = vmatpush.bf16.msra.mxu0 %v1985
    %3008 = vmatpush.bf16.msra.mxu0 %v1977
    %3009 = vmatpush.bf16.msra.mxu0 %v1969
    %3010 = vmatpush.bf16.msra.mxu0 %v1961
    %3011 = vmatpush.bf16.msra.mxu0 %v1953
    %3012 = vmatmul.bf16.gmra.mxu0 %v262
    %v3013 = vpop.f32.mrf.mxu0
    %v3014 = vadd.f32 %v3001, %v3013
    %v3015 = vpop.f32.mrf.mxu0
    %3016 = vdwg.mxu0
    %3017 = vmatpush.bf16.msra.mxu0 %v2073
    %3018 = vmatpush.bf16.msra.mxu0 %v2065
    %3019 = vmatpush.bf16.msra.mxu0 %v2057
    %3020 = vmatpush.bf16.msra.mxu0 %v2049
    %3021 = vmatpush.bf16.msra.mxu0 %v2041
    %3022 = vmatpush.bf16.msra.mxu0 %v2033
    %3023 = vmatpush.bf16.msra.mxu0 %v2025
    %3024 = vmatpush.bf16.msra.mxu0 %v2017
    %3025 = vmatmul.bf16.gmra.mxu0 %v263
    %v3026 = vpop.f32.mrf.mxu0
    %v3027 = vadd.f32 %v3014, %v3026
    %v3028 = vpop.f32.mrf.mxu0
    %3029 = vdwg.mxu0
    %3030 = vmatpush.bf16.msra.mxu0 %v2137
    %3031 = vmatpush.bf16.msra.mxu0 %v2129
    %3032 = vmatpush.bf16.msra.mxu0 %v2121
    %3033 = vmatpush.bf16.msra.mxu0 %v2113
    %3034 = vmatpush.bf16.msra.mxu0 %v2105
    %3035 = vmatpush.bf16.msra.mxu0 %v2097
    %3036 = vmatpush.bf16.msra.mxu0 %v2089
    %3037 = vmatpush.bf16.msra.mxu0 %v2081
    %3038 = vmatmul.bf16.gmra.mxu0 %v264
    %v3039 = vpop.f32.mrf.mxu0
    %v3040 = vadd.f32 %v3027, %v3039
    %v3041 = vpop.f32.mrf.mxu0
    %3042 = vdwg.mxu0
    %3043 = vmatpush.bf16.msra.mxu0 %v2201
    %3044 = vmatpush.bf16.msra.mxu0 %v2193
    %3045 = vmatpush.bf16.msra.mxu0 %v2185
    %3046 = vmatpush.bf16.msra.mxu0 %v2177
    %3047 = vmatpush.bf16.msra.mxu0 %v2169
    %3048 = vmatpush.bf16.msra.mxu0 %v2161
    %3049 = vmatpush.bf16.msra.mxu0 %v2153
    %3050 = vmatpush.bf16.msra.mxu0 %v2145
    %3051 = vmatmul.bf16.gmra.mxu0 %v265
    %v3052 = vpop.f32.mrf.mxu0
    %v3053 = vadd.f32 %v3040, %v3052
    %v3054 = vpop.f32.mrf.mxu0
    %3055 = vdwg.mxu0
    %3056 = vmatpush.bf16.msra.mxu0 %v1882
    %3057 = vmatpush.bf16.msra.mxu0 %v1874
    %3058 = vmatpush.bf16.msra.mxu0 %v1866
    %3059 = vmatpush.bf16.msra.mxu0 %v1858
    %3060 = vmatpush.bf16.msra.mxu0 %v1850
    %3061 = vmatpush.bf16.msra.mxu0 %v1842
    %3062 = vmatpush.bf16.msra.mxu0 %v1834
    %3063 = vmatpush.bf16.msra.mxu0 %v1826
    %3064 = vmatmul.bf16.gmra.mxu0 %v260
    %v3065 = vpop.f32.mrf.mxu0
    %v3066 = vadd.f32 %v658, %v3065
    %v3067 = vpop.f32.mrf.mxu0
    %3068 = vdwg.mxu0
    %3069 = vmatpush.bf16.msra.mxu0 %v1946
    %3070 = vmatpush.bf16.msra.mxu0 %v1938
    %3071 = vmatpush.bf16.msra.mxu0 %v1930
    %3072 = vmatpush.bf16.msra.mxu0 %v1922
    %3073 = vmatpush.bf16.msra.mxu0 %v1914
    %3074 = vmatpush.bf16.msra.mxu0 %v1906
    %3075 = vmatpush.bf16.msra.mxu0 %v1898
    %3076 = vmatpush.bf16.msra.mxu0 %v1890
    %3077 = vmatmul.bf16.gmra.mxu0 %v261
    %v3078 = vpop.f32.mrf.mxu0
    %v3079 = vadd.f32 %v3066, %v3078
    %v3080 = vpop.f32.mrf.mxu0
    %3081 = vdwg.mxu0
    %3082 = vmatpush.bf16.msra.mxu0 %v2010
    %3083 = vmatpush.bf16.msra.mxu0 %v2002
    %3084 = vmatpush.bf16.msra.mxu0 %v1994
    %3085 = vmatpush.bf16.msra.mxu0 %v1986
    %3086 = vmatpush.bf16.msra.mxu0 %v1978
    %3087 = vmatpush.bf16.msra.mxu0 %v1970
    %3088 = vmatpush.bf16.msra.mxu0 %v1962
    %3089 = vmatpush.bf16.msra.mxu0 %v1954
    %3090 = vmatmul.bf16.gmra.mxu0 %v262
    %v3091 = vpop.f32.mrf.mxu0
    %v3092 = vadd.f32 %v3079, %v3091
    %v3093 = vpop.f32.mrf.mxu0
    %3094 = vdwg.mxu0
    %3095 = vmatpush.bf16.msra.mxu0 %v2074
    %3096 = vmatpush.bf16.msra.mxu0 %v2066
    %3097 = vmatpush.bf16.msra.mxu0 %v2058
    %3098 = vmatpush.bf16.msra.mxu0 %v2050
    %3099 = vmatpush.bf16.msra.mxu0 %v2042
    %3100 = vmatpush.bf16.msra.mxu0 %v2034
    %3101 = vmatpush.bf16.msra.mxu0 %v2026
    %3102 = vmatpush.bf16.msra.mxu0 %v2018
    %3103 = vmatmul.bf16.gmra.mxu0 %v263
    %v3104 = vpop.f32.mrf.mxu0
    %v3105 = vadd.f32 %v3092, %v3104
    %v3106 = vpop.f32.mrf.mxu0
    %3107 = vdwg.mxu0
    %3108 = vmatpush.bf16.msra.mxu0 %v2138
    %3109 = vmatpush.bf16.msra.mxu0 %v2130
    %3110 = vmatpush.bf16.msra.mxu0 %v2122
    %3111 = vmatpush.bf16.msra.mxu0 %v2114
    %3112 = vmatpush.bf16.msra.mxu0 %v2106
    %3113 = vmatpush.bf16.msra.mxu0 %v2098
    %3114 = vmatpush.bf16.msra.mxu0 %v2090
    %3115 = vmatpush.bf16.msra.mxu0 %v2082
    %3116 = vmatmul.bf16.gmra.mxu0 %v264
    %v3117 = vpop.f32.mrf.mxu0
    %v3118 = vadd.f32 %v3105, %v3117
    %v3119 = vpop.f32.mrf.mxu0
    %3120 = vdwg.mxu0
    %3121 = vmatpush.bf16.msra.mxu0 %v2202
    %3122 = vmatpush.bf16.msra.mxu0 %v2194
    %3123 = vmatpush.bf16.msra.mxu0 %v2186
    %3124 = vmatpush.bf16.msra.mxu0 %v2178
    %3125 = vmatpush.bf16.msra.mxu0 %v2170
    %3126 = vmatpush.bf16.msra.mxu0 %v2162
    %3127 = vmatpush.bf16.msra.mxu0 %v2154
    %3128 = vmatpush.bf16.msra.mxu0 %v2146
    %3129 = vmatmul.bf16.gmra.mxu0 %v265
    %v3130 = vpop.f32.mrf.mxu0
    %v3131 = vadd.f32 %v3118, %v3130
    %v3132 = vpop.f32.mrf.mxu0
    %3133 = vdwg.mxu0
    %3134 = vmatpush.bf16.msra.mxu0 %v1883
    %3135 = vmatpush.bf16.msra.mxu0 %v1875
    %3136 = vmatpush.bf16.msra.mxu0 %v1867
    %3137 = vmatpush.bf16.msra.mxu0 %v1859
    %3138 = vmatpush.bf16.msra.mxu0 %v1851
    %3139 = vmatpush.bf16.msra.mxu0 %v1843
    %3140 = vmatpush.bf16.msra.mxu0 %v1835
    %3141 = vmatpush.bf16.msra.mxu0 %v1827
    %3142 = vmatmul.bf16.gmra.mxu0 %v260
    %v3143 = vpop.f32.mrf.mxu0
    %v3144 = vadd.f32 %v659, %v3143
    %v3145 = vpop.f32.mrf.mxu0
    %3146 = vdwg.mxu0
    %3147 = vmatpush.bf16.msra.mxu0 %v1947
    %3148 = vmatpush.bf16.msra.mxu0 %v1939
    %3149 = vmatpush.bf16.msra.mxu0 %v1931
    %3150 = vmatpush.bf16.msra.mxu0 %v1923
    %3151 = vmatpush.bf16.msra.mxu0 %v1915
    %3152 = vmatpush.bf16.msra.mxu0 %v1907
    %3153 = vmatpush.bf16.msra.mxu0 %v1899
    %3154 = vmatpush.bf16.msra.mxu0 %v1891
    %3155 = vmatmul.bf16.gmra.mxu0 %v261
    %v3156 = vpop.f32.mrf.mxu0
    %v3157 = vadd.f32 %v3144, %v3156
    %v3158 = vpop.f32.mrf.mxu0
    %3159 = vdwg.mxu0
    %3160 = vmatpush.bf16.msra.mxu0 %v2011
    %3161 = vmatpush.bf16.msra.mxu0 %v2003
    %3162 = vmatpush.bf16.msra.mxu0 %v1995
    %3163 = vmatpush.bf16.msra.mxu0 %v1987
    %3164 = vmatpush.bf16.msra.mxu0 %v1979
    %3165 = vmatpush.bf16.msra.mxu0 %v1971
    %3166 = vmatpush.bf16.msra.mxu0 %v1963
    %3167 = vmatpush.bf16.msra.mxu0 %v1955
    %3168 = vmatmul.bf16.gmra.mxu0 %v262
    %v3169 = vpop.f32.mrf.mxu0
    %v3170 = vadd.f32 %v3157, %v3169
    %v3171 = vpop.f32.mrf.mxu0
    %3172 = vdwg.mxu0
    %3173 = vmatpush.bf16.msra.mxu0 %v2075
    %3174 = vmatpush.bf16.msra.mxu0 %v2067
    %3175 = vmatpush.bf16.msra.mxu0 %v2059
    %3176 = vmatpush.bf16.msra.mxu0 %v2051
    %3177 = vmatpush.bf16.msra.mxu0 %v2043
    %3178 = vmatpush.bf16.msra.mxu0 %v2035
    %3179 = vmatpush.bf16.msra.mxu0 %v2027
    %3180 = vmatpush.bf16.msra.mxu0 %v2019
    %3181 = vmatmul.bf16.gmra.mxu0 %v263
    %v3182 = vpop.f32.mrf.mxu0
    %v3183 = vadd.f32 %v3170, %v3182
    %v3184 = vpop.f32.mrf.mxu0
    %3185 = vdwg.mxu0
    %3186 = vmatpush.bf16.msra.mxu0 %v2139
    %3187 = vmatpush.bf16.msra.mxu0 %v2131
    %3188 = vmatpush.bf16.msra.mxu0 %v2123
    %3189 = vmatpush.bf16.msra.mxu0 %v2115
    %3190 = vmatpush.bf16.msra.mxu0 %v2107
    %3191 = vmatpush.bf16.msra.mxu0 %v2099
    %3192 = vmatpush.bf16.msra.mxu0 %v2091
    %3193 = vmatpush.bf16.msra.mxu0 %v2083
    %3194 = vmatmul.bf16.gmra.mxu0 %v264
    %v3195 = vpop.f32.mrf.mxu0
    %v3196 = vadd.f32 %v3183, %v3195
    %v3197 = vpop.f32.mrf.mxu0
    %3198 = vdwg.mxu0
    %3199 = vmatpush.bf16.msra.mxu0 %v2203
    %3200 = vmatpush.bf16.msra.mxu0 %v2195
    %3201 = vmatpush.bf16.msra.mxu0 %v2187
    %3202 = vmatpush.bf16.msra.mxu0 %v2179
    %3203 = vmatpush.bf16.msra.mxu0 %v2171
    %3204 = vmatpush.bf16.msra.mxu0 %v2163
    %3205 = vmatpush.bf16.msra.mxu0 %v2155
    %3206 = vmatpush.bf16.msra.mxu0 %v2147
    %3207 = vmatmul.bf16.gmra.mxu0 %v265
    %v3208 = vpop.f32.mrf.mxu0
    %v3209 = vadd.f32 %v3196, %v3208
    %v3210 = vpop.f32.mrf.mxu0
    %3211 = vdwg.mxu0
    %v3212 = vmax.f32 %v2663, 0.0
    %v3213 = vmax.f32 %v2741, 0.0
    %v3214 = vmax.f32 %v2819, 0.0
    %v3215 = vmax.f32 %v2897, 0.0
    %v3216 = vmax.f32 %v2975, 0.0
    %v3217 = vmax.f32 %v3053, 0.0
    %v3218 = vmax.f32 %v3131, 0.0
    %v3219 = vmax.f32 %v3209, 0.0
    %v3220 = vpack.c.bf16 %v3212, %v3212
    %v3221 = vpack.c.bf16 %v3213, %v3213
    %v3222 = vpack.c.bf16 %v3214, %v3214
    %v3223 = vpack.c.bf16 %v3215, %v3215
    %v3224 = vpack.c.bf16 %v3216, %v3216
    %v3225 = vpack.c.bf16 %v3217, %v3217
    %v3226 = vpack.c.bf16 %v3218, %v3218
    %v3227 = vpack.c.bf16 %v3219, %v3219
    %v3228 = vld [vmem:[#allocation4] sm:$0xff]
    %v3229 = vld [vmem:[#allocation4 + $0x8] sm:$0xff]
    %v3230 = vld [vmem:[#allocation4 + $0x10] sm:$0xff]
    %v3231 = vld [vmem:[#allocation4 + $0x18] sm:$0xff]
    %v3232 = vld [vmem:[#allocation4 + $0x20] sm:$0xff]
    %v3233 = vld [vmem:[#allocation4 + $0x28] sm:$0xff]
    %v3234 = vld [vmem:[#allocation4 + $0x30] sm:$0xff]
    %v3235 = vld [vmem:[#allocation4 + $0x38] sm:$0xff]
    %v3236 = vld [vmem:[#allocation4 + $0x40] sm:$0xff]
    %v3237 = vld [vmem:[#allocation4 + $0x48] sm:$0xff]
    %v3238 = vld [vmem:[#allocation4 + $0x50] sm:$0xff]
    %v3239 = vld [vmem:[#allocation4 + $0x58] sm:$0xff]
    %v3240 = vld [vmem:[#allocation4 + $0x60] sm:$0xff]
    %v3241 = vld [vmem:[#allocation4 + $0x68] sm:$0xff]
    %v3242 = vld [vmem:[#allocation4 + $0x70] sm:$0xff]
    %v3243 = vld [vmem:[#allocation4 + $0x78] sm:$0xff]
    %v3244 = vld [vmem:[#allocation4 + $0x80] sm:$0xff]
    %v3245 = vld [vmem:[#allocation4 + $0x88] sm:$0xff]
    %v3246 = vld [vmem:[#allocation4 + $0x90] sm:$0xff]
    %v3247 = vld [vmem:[#allocation4 + $0x98] sm:$0xff]
    %v3248 = vld [vmem:[#allocation4 + $0xa0] sm:$0xff]
    %v3249 = vld [vmem:[#allocation4 + $0xa8] sm:$0xff]
    %v3250 = vld [vmem:[#allocation4 + $0xb0] sm:$0xff]
    %v3251 = vld [vmem:[#allocation4 + $0xb8] sm:$0xff]
    %v3252 = vld [vmem:[#allocation4 + $0xc0] sm:$0xff]
    %v3253 = vld [vmem:[#allocation4 + $0xc8] sm:$0xff]
    %v3254 = vld [vmem:[#allocation4 + $0xd0] sm:$0xff]
    %v3255 = vld [vmem:[#allocation4 + $0xd8] sm:$0xff]
    %v3256 = vld [vmem:[#allocation4 + $0xe0] sm:$0xff]
    %v3257 = vld [vmem:[#allocation4 + $0xe8] sm:$0xff]
    %v3258 = vld [vmem:[#allocation4 + $0xf0] sm:$0xff]
    %v3259 = vld [vmem:[#allocation4 + $0xf8] sm:$0xff]
    %v3260 = vld [vmem:[#allocation4 + $0x100] sm:$0xff]
    %v3261 = vld [vmem:[#allocation4 + $0x108] sm:$0xff]
    %v3262 = vld [vmem:[#allocation4 + $0x110] sm:$0xff]
    %v3263 = vld [vmem:[#allocation4 + $0x118] sm:$0xff]
    %v3264 = vld [vmem:[#allocation4 + $0x120] sm:$0xff]
    %v3265 = vld [vmem:[#allocation4 + $0x128] sm:$0xff]
    %v3266 = vld [vmem:[#allocation4 + $0x130] sm:$0xff]
    %v3267 = vld [vmem:[#allocation4 + $0x138] sm:$0xff]
    %v3268 = vld [vmem:[#allocation4 + $0x140] sm:$0xff]
    %v3269 = vld [vmem:[#allocation4 + $0x148] sm:$0xff]
    %v3270 = vld [vmem:[#allocation4 + $0x150] sm:$0xff]
    %v3271 = vld [vmem:[#allocation4 + $0x158] sm:$0xff]
    %v3272 = vld [vmem:[#allocation4 + $0x160] sm:$0xff]
    %v3273 = vld [vmem:[#allocation4 + $0x168] sm:$0xff]
    %v3274 = vld [vmem:[#allocation4 + $0x170] sm:$0xff]
    %v3275 = vld [vmem:[#allocation4 + $0x178] sm:$0xff]
    %v3276 = vld [vmem:[#allocation4 + $0x180] sm:$0xff]
    %v3277 = vld [vmem:[#allocation4 + $0x188] sm:$0xff]
    %v3278 = vld [vmem:[#allocation4 + $0x190] sm:$0xff]
    %v3279 = vld [vmem:[#allocation4 + $0x198] sm:$0xff]
    %v3280 = vld [vmem:[#allocation4 + $0x1a0] sm:$0xff]
    %v3281 = vld [vmem:[#allocation4 + $0x1a8] sm:$0xff]
    %v3282 = vld [vmem:[#allocation4 + $0x1b0] sm:$0xff]
    %v3283 = vld [vmem:[#allocation4 + $0x1b8] sm:$0xff]
    %v3284 = vld [vmem:[#allocation4 + $0x1c0] sm:$0xff]
    %v3285 = vld [vmem:[#allocation4 + $0x1c8] sm:$0xff]
    %v3286 = vld [vmem:[#allocation4 + $0x1d0] sm:$0xff]
    %v3287 = vld [vmem:[#allocation4 + $0x1d8] sm:$0xff]
    %v3288 = vld [vmem:[#allocation4 + $0x1e0] sm:$0xff]
    %v3289 = vld [vmem:[#allocation4 + $0x1e8] sm:$0xff]
    %v3290 = vld [vmem:[#allocation4 + $0x1f0] sm:$0xff]
    %v3291 = vld [vmem:[#allocation4 + $0x1f8] sm:$0xff]
    %v3292 = vld [vmem:[#allocation4 + $0x200] sm:$0xff]
    %v3293 = vld [vmem:[#allocation4 + $0x208] sm:$0xff]
    %v3294 = vld [vmem:[#allocation4 + $0x210] sm:$0xff]
    %v3295 = vld [vmem:[#allocation4 + $0x218] sm:$0xff]
    %v3296 = vld [vmem:[#allocation4 + $0x220] sm:$0xff]
    %v3297 = vld [vmem:[#allocation4 + $0x228] sm:$0xff]
    %v3298 = vld [vmem:[#allocation4 + $0x230] sm:$0xff]
    %v3299 = vld [vmem:[#allocation4 + $0x238] sm:$0xff]
    %v3300 = vld [vmem:[#allocation4 + $0x240] sm:$0xff]
    %v3301 = vld [vmem:[#allocation4 + $0x248] sm:$0xff]
    %v3302 = vld [vmem:[#allocation4 + $0x250] sm:$0xff]
    %v3303 = vld [vmem:[#allocation4 + $0x258] sm:$0xff]
    %v3304 = vld [vmem:[#allocation4 + $0x260] sm:$0xff]
    %v3305 = vld [vmem:[#allocation4 + $0x268] sm:$0xff]
    %v3306 = vld [vmem:[#allocation4 + $0x270] sm:$0xff]
    %v3307 = vld [vmem:[#allocation4 + $0x278] sm:$0xff]
    %v3308 = vld [vmem:[#allocation4 + $0x280] sm:$0xff]
    %v3309 = vld [vmem:[#allocation4 + $0x288] sm:$0xff]
    %v3310 = vld [vmem:[#allocation4 + $0x290] sm:$0xff]
    %v3311 = vld [vmem:[#allocation4 + $0x298] sm:$0xff]
    %v3312 = vld [vmem:[#allocation4 + $0x2a0] sm:$0xff]
    %v3313 = vld [vmem:[#allocation4 + $0x2a8] sm:$0xff]
    %v3314 = vld [vmem:[#allocation4 + $0x2b0] sm:$0xff]
    %v3315 = vld [vmem:[#allocation4 + $0x2b8] sm:$0xff]
    %v3316 = vld [vmem:[#allocation4 + $0x2c0] sm:$0xff]
    %v3317 = vld [vmem:[#allocation4 + $0x2c8] sm:$0xff]
    %v3318 = vld [vmem:[#allocation4 + $0x2d0] sm:$0xff]
    %v3319 = vld [vmem:[#allocation4 + $0x2d8] sm:$0xff]
    %v3320 = vld [vmem:[#allocation4 + $0x2e0] sm:$0xff]
    %v3321 = vld [vmem:[#allocation4 + $0x2e8] sm:$0xff]
    %v3322 = vld [vmem:[#allocation4 + $0x2f0] sm:$0xff]
    %v3323 = vld [vmem:[#allocation4 + $0x2f8] sm:$0xff]
    %v3324 = vld [vmem:[#allocation4 + $0x300] sm:$0xff]
    %v3325 = vld [vmem:[#allocation4 + $0x308] sm:$0xff]
    %v3326 = vld [vmem:[#allocation4 + $0x310] sm:$0xff]
    %v3327 = vld [vmem:[#allocation4 + $0x318] sm:$0xff]
    %v3328 = vld [vmem:[#allocation4 + $0x320] sm:$0xff]
    %v3329 = vld [vmem:[#allocation4 + $0x328] sm:$0xff]
    %v3330 = vld [vmem:[#allocation4 + $0x330] sm:$0xff]
    %v3331 = vld [vmem:[#allocation4 + $0x338] sm:$0xff]
    %v3332 = vld [vmem:[#allocation4 + $0x340] sm:$0xff]
    %v3333 = vld [vmem:[#allocation4 + $0x348] sm:$0xff]
    %v3334 = vld [vmem:[#allocation4 + $0x350] sm:$0xff]
    %v3335 = vld [vmem:[#allocation4 + $0x358] sm:$0xff]
    %v3336 = vld [vmem:[#allocation4 + $0x360] sm:$0xff]
    %v3337 = vld [vmem:[#allocation4 + $0x368] sm:$0xff]
    %v3338 = vld [vmem:[#allocation4 + $0x370] sm:$0xff]
    %v3339 = vld [vmem:[#allocation4 + $0x378] sm:$0xff]
    %v3340 = vld [vmem:[#allocation4 + $0x380] sm:$0xff]
    %v3341 = vld [vmem:[#allocation4 + $0x388] sm:$0xff]
    %v3342 = vld [vmem:[#allocation4 + $0x390] sm:$0xff]
    %v3343 = vld [vmem:[#allocation4 + $0x398] sm:$0xff]
    %v3344 = vld [vmem:[#allocation4 + $0x3a0] sm:$0xff]
    %v3345 = vld [vmem:[#allocation4 + $0x3a8] sm:$0xff]
    %v3346 = vld [vmem:[#allocation4 + $0x3b0] sm:$0xff]
    %v3347 = vld [vmem:[#allocation4 + $0x3b8] sm:$0xff]
    %v3348 = vld [vmem:[#allocation4 + $0x3c0] sm:$0xff]
    %v3349 = vld [vmem:[#allocation4 + $0x3c8] sm:$0xff]
    %v3350 = vld [vmem:[#allocation4 + $0x3d0] sm:$0xff]
    %v3351 = vld [vmem:[#allocation4 + $0x3d8] sm:$0xff]
    %v3352 = vld [vmem:[#allocation4 + $0x3e0] sm:$0xff]
    %v3353 = vld [vmem:[#allocation4 + $0x3e8] sm:$0xff]
    %v3354 = vld [vmem:[#allocation4 + $0x3f0] sm:$0xff]
    %v3355 = vld [vmem:[#allocation4 + $0x3f8] sm:$0xff]
    %v3356 = vld [vmem:[#allocation4 + $0x400] sm:$0xff]
    %v3357 = vld [vmem:[#allocation4 + $0x408] sm:$0xff]
    %v3358 = vld [vmem:[#allocation4 + $0x410] sm:$0xff]
    %v3359 = vld [vmem:[#allocation4 + $0x418] sm:$0xff]
    %v3360 = vld [vmem:[#allocation4 + $0x420] sm:$0xff]
    %v3361 = vld [vmem:[#allocation4 + $0x428] sm:$0xff]
    %v3362 = vld [vmem:[#allocation4 + $0x430] sm:$0xff]
    %v3363 = vld [vmem:[#allocation4 + $0x438] sm:$0xff]
    %v3364 = vld [vmem:[#allocation4 + $0x440] sm:$0xff]
    %v3365 = vld [vmem:[#allocation4 + $0x448] sm:$0xff]
    %v3366 = vld [vmem:[#allocation4 + $0x450] sm:$0xff]
    %v3367 = vld [vmem:[#allocation4 + $0x458] sm:$0xff]
    %v3368 = vld [vmem:[#allocation4 + $0x460] sm:$0xff]
    %v3369 = vld [vmem:[#allocation4 + $0x468] sm:$0xff]
    %v3370 = vld [vmem:[#allocation4 + $0x470] sm:$0xff]
    %v3371 = vld [vmem:[#allocation4 + $0x478] sm:$0xff]
    %v3372 = vld [vmem:[#allocation4 + $0x480] sm:$0xff]
    %v3373 = vld [vmem:[#allocation4 + $0x488] sm:$0xff]
    %v3374 = vld [vmem:[#allocation4 + $0x490] sm:$0xff]
    %v3375 = vld [vmem:[#allocation4 + $0x498] sm:$0xff]
    %v3376 = vld [vmem:[#allocation4 + $0x4a0] sm:$0xff]
    %v3377 = vld [vmem:[#allocation4 + $0x4a8] sm:$0xff]
    %v3378 = vld [vmem:[#allocation4 + $0x4b0] sm:$0xff]
    %v3379 = vld [vmem:[#allocation4 + $0x4b8] sm:$0xff]
    %v3380 = vld [vmem:[#allocation4 + $0x4c0] sm:$0xff]
    %v3381 = vld [vmem:[#allocation4 + $0x4c8] sm:$0xff]
    %v3382 = vld [vmem:[#allocation4 + $0x4d0] sm:$0xff]
    %v3383 = vld [vmem:[#allocation4 + $0x4d8] sm:$0xff]
    %v3384 = vld [vmem:[#allocation4 + $0x4e0] sm:$0xff]
    %v3385 = vld [vmem:[#allocation4 + $0x4e8] sm:$0xff]
    %v3386 = vld [vmem:[#allocation4 + $0x4f0] sm:$0xff]
    %v3387 = vld [vmem:[#allocation4 + $0x4f8] sm:$0xff]
    %v3388 = vld [vmem:[#allocation4 + $0x500] sm:$0xff]
    %v3389 = vld [vmem:[#allocation4 + $0x508] sm:$0xff]
    %v3390 = vld [vmem:[#allocation4 + $0x510] sm:$0xff]
    %v3391 = vld [vmem:[#allocation4 + $0x518] sm:$0xff]
    %v3392 = vld [vmem:[#allocation4 + $0x520] sm:$0xff]
    %v3393 = vld [vmem:[#allocation4 + $0x528] sm:$0xff]
    %v3394 = vld [vmem:[#allocation4 + $0x530] sm:$0xff]
    %v3395 = vld [vmem:[#allocation4 + $0x538] sm:$0xff]
    %v3396 = vld [vmem:[#allocation4 + $0x540] sm:$0xff]
    %v3397 = vld [vmem:[#allocation4 + $0x548] sm:$0xff]
    %v3398 = vld [vmem:[#allocation4 + $0x550] sm:$0xff]
    %v3399 = vld [vmem:[#allocation4 + $0x558] sm:$0xff]
    %v3400 = vld [vmem:[#allocation4 + $0x560] sm:$0xff]
    %v3401 = vld [vmem:[#allocation4 + $0x568] sm:$0xff]
    %v3402 = vld [vmem:[#allocation4 + $0x570] sm:$0xff]
    %v3403 = vld [vmem:[#allocation4 + $0x578] sm:$0xff]
    %v3404 = vld [vmem:[#allocation4 + $0x580] sm:$0xff]
    %v3405 = vld [vmem:[#allocation4 + $0x588] sm:$0xff]
    %v3406 = vld [vmem:[#allocation4 + $0x590] sm:$0xff]
    %v3407 = vld [vmem:[#allocation4 + $0x598] sm:$0xff]
    %v3408 = vld [vmem:[#allocation4 + $0x5a0] sm:$0xff]
    %v3409 = vld [vmem:[#allocation4 + $0x5a8] sm:$0xff]
    %v3410 = vld [vmem:[#allocation4 + $0x5b0] sm:$0xff]
    %v3411 = vld [vmem:[#allocation4 + $0x5b8] sm:$0xff]
    %v3412 = vld [vmem:[#allocation4 + $0x5c0] sm:$0xff]
    %v3413 = vld [vmem:[#allocation4 + $0x5c8] sm:$0xff]
    %v3414 = vld [vmem:[#allocation4 + $0x5d0] sm:$0xff]
    %v3415 = vld [vmem:[#allocation4 + $0x5d8] sm:$0xff]
    %v3416 = vld [vmem:[#allocation4 + $0x5e0] sm:$0xff]
    %v3417 = vld [vmem:[#allocation4 + $0x5e8] sm:$0xff]
    %v3418 = vld [vmem:[#allocation4 + $0x5f0] sm:$0xff]
    %v3419 = vld [vmem:[#allocation4 + $0x5f8] sm:$0xff]
    %v3420 = vld [vmem:[#allocation4 + $0x600] sm:$0xff]
    %v3421 = vld [vmem:[#allocation4 + $0x608] sm:$0xff]
    %v3422 = vld [vmem:[#allocation4 + $0x610] sm:$0xff]
    %v3423 = vld [vmem:[#allocation4 + $0x618] sm:$0xff]
    %v3424 = vld [vmem:[#allocation4 + $0x620] sm:$0xff]
    %v3425 = vld [vmem:[#allocation4 + $0x628] sm:$0xff]
    %v3426 = vld [vmem:[#allocation4 + $0x630] sm:$0xff]
    %v3427 = vld [vmem:[#allocation4 + $0x638] sm:$0xff]
    %v3428 = vld [vmem:[#allocation4 + $0x640] sm:$0xff]
    %v3429 = vld [vmem:[#allocation4 + $0x648] sm:$0xff]
    %v3430 = vld [vmem:[#allocation4 + $0x650] sm:$0xff]
    %v3431 = vld [vmem:[#allocation4 + $0x658] sm:$0xff]
    %v3432 = vld [vmem:[#allocation4 + $0x660] sm:$0xff]
    %v3433 = vld [vmem:[#allocation4 + $0x668] sm:$0xff]
    %v3434 = vld [vmem:[#allocation4 + $0x670] sm:$0xff]
    %v3435 = vld [vmem:[#allocation4 + $0x678] sm:$0xff]
    %v3436 = vld [vmem:[#allocation4 + $0x680] sm:$0xff]
    %v3437 = vld [vmem:[#allocation4 + $0x688] sm:$0xff]
    %v3438 = vld [vmem:[#allocation4 + $0x690] sm:$0xff]
    %v3439 = vld [vmem:[#allocation4 + $0x698] sm:$0xff]
    %v3440 = vld [vmem:[#allocation4 + $0x6a0] sm:$0xff]
    %v3441 = vld [vmem:[#allocation4 + $0x6a8] sm:$0xff]
    %v3442 = vld [vmem:[#allocation4 + $0x6b0] sm:$0xff]
    %v3443 = vld [vmem:[#allocation4 + $0x6b8] sm:$0xff]
    %v3444 = vld [vmem:[#allocation4 + $0x6c0] sm:$0xff]
    %v3445 = vld [vmem:[#allocation4 + $0x6c8] sm:$0xff]
    %v3446 = vld [vmem:[#allocation4 + $0x6d0] sm:$0xff]
    %v3447 = vld [vmem:[#allocation4 + $0x6d8] sm:$0xff]
    %v3448 = vld [vmem:[#allocation4 + $0x6e0] sm:$0xff]
    %v3449 = vld [vmem:[#allocation4 + $0x6e8] sm:$0xff]
    %v3450 = vld [vmem:[#allocation4 + $0x6f0] sm:$0xff]
    %v3451 = vld [vmem:[#allocation4 + $0x6f8] sm:$0xff]
    %v3452 = vld [vmem:[#allocation4 + $0x700] sm:$0xff]
    %v3453 = vld [vmem:[#allocation4 + $0x708] sm:$0xff]
    %v3454 = vld [vmem:[#allocation4 + $0x710] sm:$0xff]
    %v3455 = vld [vmem:[#allocation4 + $0x718] sm:$0xff]
    %v3456 = vld [vmem:[#allocation4 + $0x720] sm:$0xff]
    %v3457 = vld [vmem:[#allocation4 + $0x728] sm:$0xff]
    %v3458 = vld [vmem:[#allocation4 + $0x730] sm:$0xff]
    %v3459 = vld [vmem:[#allocation4 + $0x738] sm:$0xff]
    %v3460 = vld [vmem:[#allocation4 + $0x740] sm:$0xff]
    %v3461 = vld [vmem:[#allocation4 + $0x748] sm:$0xff]
    %v3462 = vld [vmem:[#allocation4 + $0x750] sm:$0xff]
    %v3463 = vld [vmem:[#allocation4 + $0x758] sm:$0xff]
    %v3464 = vld [vmem:[#allocation4 + $0x760] sm:$0xff]
    %v3465 = vld [vmem:[#allocation4 + $0x768] sm:$0xff]
    %v3466 = vld [vmem:[#allocation4 + $0x770] sm:$0xff]
    %v3467 = vld [vmem:[#allocation4 + $0x778] sm:$0xff]
    %v3468 = vld [vmem:[#allocation4 + $0x780] sm:$0xff]
    %v3469 = vld [vmem:[#allocation4 + $0x788] sm:$0xff]
    %v3470 = vld [vmem:[#allocation4 + $0x790] sm:$0xff]
    %v3471 = vld [vmem:[#allocation4 + $0x798] sm:$0xff]
    %v3472 = vld [vmem:[#allocation4 + $0x7a0] sm:$0xff]
    %v3473 = vld [vmem:[#allocation4 + $0x7a8] sm:$0xff]
    %v3474 = vld [vmem:[#allocation4 + $0x7b0] sm:$0xff]
    %v3475 = vld [vmem:[#allocation4 + $0x7b8] sm:$0xff]
    %v3476 = vld [vmem:[#allocation4 + $0x7c0] sm:$0xff]
    %v3477 = vld [vmem:[#allocation4 + $0x7c8] sm:$0xff]
    %v3478 = vld [vmem:[#allocation4 + $0x7d0] sm:$0xff]
    %v3479 = vld [vmem:[#allocation4 + $0x7d8] sm:$0xff]
    %v3480 = vld [vmem:[#allocation4 + $0x7e0] sm:$0xff]
    %v3481 = vld [vmem:[#allocation4 + $0x7e8] sm:$0xff]
    %v3482 = vld [vmem:[#allocation4 + $0x7f0] sm:$0xff]
    %v3483 = vld [vmem:[#allocation4 + $0x7f8] sm:$0xff]
    %v3484 = vld [vmem:[#allocation15] sm:$0xf]
    %v3486 = vperm.slane %v3484, 0
    %v3487 = vperm.slane %v3484, 1
    %v3488 = vperm.slane %v3484, 2
    %v3489 = vperm.slane %v3484, 3
    %v3750 = vunpack.c.l.b16 %v3228
    %v3751 = vunpack.c.h.b16 %v3228
    %v3752 = vunpack.c.l.b16 %v3229
    %v3753 = vunpack.c.h.b16 %v3229
    %v3754 = vunpack.c.l.b16 %v3230
    %v3755 = vunpack.c.h.b16 %v3230
    %v3756 = vunpack.c.l.b16 %v3231
    %v3757 = vunpack.c.h.b16 %v3231
    %v3758 = vunpack.c.l.b16 %v3232
    %v3759 = vunpack.c.h.b16 %v3232
    %v3760 = vunpack.c.l.b16 %v3233
    %v3761 = vunpack.c.h.b16 %v3233
    %v3762 = vunpack.c.l.b16 %v3234
    %v3763 = vunpack.c.h.b16 %v3234
    %v3764 = vunpack.c.l.b16 %v3235
    %v3765 = vunpack.c.h.b16 %v3235
    %v3766 = vunpack.c.l.b16 %v3236
    %v3767 = vunpack.c.h.b16 %v3236
    %v3768 = vunpack.c.l.b16 %v3237
    %v3769 = vunpack.c.h.b16 %v3237
    %v3770 = vunpack.c.l.b16 %v3238
    %v3771 = vunpack.c.h.b16 %v3238
    %v3772 = vunpack.c.l.b16 %v3239
    %v3773 = vunpack.c.h.b16 %v3239
    %v3774 = vunpack.c.l.b16 %v3240
    %v3775 = vunpack.c.h.b16 %v3240
    %v3776 = vunpack.c.l.b16 %v3241
    %v3777 = vunpack.c.h.b16 %v3241
    %v3778 = vunpack.c.l.b16 %v3242
    %v3779 = vunpack.c.h.b16 %v3242
    %v3780 = vunpack.c.l.b16 %v3243
    %v3781 = vunpack.c.h.b16 %v3243
    %v3782 = vunpack.c.l.b16 %v3244
    %v3783 = vunpack.c.h.b16 %v3244
    %v3784 = vunpack.c.l.b16 %v3245
    %v3785 = vunpack.c.h.b16 %v3245
    %v3786 = vunpack.c.l.b16 %v3246
    %v3787 = vunpack.c.h.b16 %v3246
    %v3788 = vunpack.c.l.b16 %v3247
    %v3789 = vunpack.c.h.b16 %v3247
    %v3790 = vunpack.c.l.b16 %v3248
    %v3791 = vunpack.c.h.b16 %v3248
    %v3792 = vunpack.c.l.b16 %v3249
    %v3793 = vunpack.c.h.b16 %v3249
    %v3794 = vunpack.c.l.b16 %v3250
    %v3795 = vunpack.c.h.b16 %v3250
    %v3796 = vunpack.c.l.b16 %v3251
    %v3797 = vunpack.c.h.b16 %v3251
    %v3798 = vunpack.c.l.b16 %v3252
    %v3799 = vunpack.c.h.b16 %v3252
    %v3800 = vunpack.c.l.b16 %v3253
    %v3801 = vunpack.c.h.b16 %v3253
    %v3802 = vunpack.c.l.b16 %v3254
    %v3803 = vunpack.c.h.b16 %v3254
    %v3804 = vunpack.c.l.b16 %v3255
    %v3805 = vunpack.c.h.b16 %v3255
    %v3806 = vunpack.c.l.b16 %v3256
    %v3807 = vunpack.c.h.b16 %v3256
    %v3808 = vunpack.c.l.b16 %v3257
    %v3809 = vunpack.c.h.b16 %v3257
    %v3810 = vunpack.c.l.b16 %v3258
    %v3811 = vunpack.c.h.b16 %v3258
    %v3812 = vunpack.c.l.b16 %v3259
    %v3813 = vunpack.c.h.b16 %v3259
    %v3814 = vunpack.c.l.b16 %v3260
    %v3815 = vunpack.c.h.b16 %v3260
    %v3816 = vunpack.c.l.b16 %v3261
    %v3817 = vunpack.c.h.b16 %v3261
    %v3818 = vunpack.c.l.b16 %v3262
    %v3819 = vunpack.c.h.b16 %v3262
    %v3820 = vunpack.c.l.b16 %v3263
    %v3821 = vunpack.c.h.b16 %v3263
    %v3822 = vunpack.c.l.b16 %v3264
    %v3823 = vunpack.c.h.b16 %v3264
    %v3824 = vunpack.c.l.b16 %v3265
    %v3825 = vunpack.c.h.b16 %v3265
    %v3826 = vunpack.c.l.b16 %v3266
    %v3827 = vunpack.c.h.b16 %v3266
    %v3828 = vunpack.c.l.b16 %v3267
    %v3829 = vunpack.c.h.b16 %v3267
    %v3830 = vunpack.c.l.b16 %v3268
    %v3831 = vunpack.c.h.b16 %v3268
    %v3832 = vunpack.c.l.b16 %v3269
    %v3833 = vunpack.c.h.b16 %v3269
    %v3834 = vunpack.c.l.b16 %v3270
    %v3835 = vunpack.c.h.b16 %v3270
    %v3836 = vunpack.c.l.b16 %v3271
    %v3837 = vunpack.c.h.b16 %v3271
    %v3838 = vunpack.c.l.b16 %v3272
    %v3839 = vunpack.c.h.b16 %v3272
    %v3840 = vunpack.c.l.b16 %v3273
    %v3841 = vunpack.c.h.b16 %v3273
    %v3842 = vunpack.c.l.b16 %v3274
    %v3843 = vunpack.c.h.b16 %v3274
    %v3844 = vunpack.c.l.b16 %v3275
    %v3845 = vunpack.c.h.b16 %v3275
    %v3846 = vunpack.c.l.b16 %v3276
    %v3847 = vunpack.c.h.b16 %v3276
    %v3848 = vunpack.c.l.b16 %v3277
    %v3849 = vunpack.c.h.b16 %v3277
    %v3850 = vunpack.c.l.b16 %v3278
    %v3851 = vunpack.c.h.b16 %v3278
    %v3852 = vunpack.c.l.b16 %v3279
    %v3853 = vunpack.c.h.b16 %v3279
    %v3854 = vunpack.c.l.b16 %v3280
    %v3855 = vunpack.c.h.b16 %v3280
    %v3856 = vunpack.c.l.b16 %v3281
    %v3857 = vunpack.c.h.b16 %v3281
    %v3858 = vunpack.c.l.b16 %v3282
    %v3859 = vunpack.c.h.b16 %v3282
    %v3860 = vunpack.c.l.b16 %v3283
    %v3861 = vunpack.c.h.b16 %v3283
    %v3862 = vunpack.c.l.b16 %v3284
    %v3863 = vunpack.c.h.b16 %v3284
    %v3864 = vunpack.c.l.b16 %v3285
    %v3865 = vunpack.c.h.b16 %v3285
    %v3866 = vunpack.c.l.b16 %v3286
    %v3867 = vunpack.c.h.b16 %v3286
    %v3868 = vunpack.c.l.b16 %v3287
    %v3869 = vunpack.c.h.b16 %v3287
    %v3870 = vunpack.c.l.b16 %v3288
    %v3871 = vunpack.c.h.b16 %v3288
    %v3872 = vunpack.c.l.b16 %v3289
    %v3873 = vunpack.c.h.b16 %v3289
    %v3874 = vunpack.c.l.b16 %v3290
    %v3875 = vunpack.c.h.b16 %v3290
    %v3876 = vunpack.c.l.b16 %v3291
    %v3877 = vunpack.c.h.b16 %v3291
    %v3878 = vunpack.c.l.b16 %v3292
    %v3879 = vunpack.c.h.b16 %v3292
    %v3880 = vunpack.c.l.b16 %v3293
    %v3881 = vunpack.c.h.b16 %v3293
    %v3882 = vunpack.c.l.b16 %v3294
    %v3883 = vunpack.c.h.b16 %v3294
    %v3884 = vunpack.c.l.b16 %v3295
    %v3885 = vunpack.c.h.b16 %v3295
    %v3886 = vunpack.c.l.b16 %v3296
    %v3887 = vunpack.c.h.b16 %v3296
    %v3888 = vunpack.c.l.b16 %v3297
    %v3889 = vunpack.c.h.b16 %v3297
    %v3890 = vunpack.c.l.b16 %v3298
    %v3891 = vunpack.c.h.b16 %v3298
    %v3892 = vunpack.c.l.b16 %v3299
    %v3893 = vunpack.c.h.b16 %v3299
    %v3894 = vunpack.c.l.b16 %v3300
    %v3895 = vunpack.c.h.b16 %v3300
    %v3896 = vunpack.c.l.b16 %v3301
    %v3897 = vunpack.c.h.b16 %v3301
    %v3898 = vunpack.c.l.b16 %v3302
    %v3899 = vunpack.c.h.b16 %v3302
    %v3900 = vunpack.c.l.b16 %v3303
    %v3901 = vunpack.c.h.b16 %v3303
    %v3902 = vunpack.c.l.b16 %v3304
    %v3903 = vunpack.c.h.b16 %v3304
    %v3904 = vunpack.c.l.b16 %v3305
    %v3905 = vunpack.c.h.b16 %v3305
    %v3906 = vunpack.c.l.b16 %v3306
    %v3907 = vunpack.c.h.b16 %v3306
    %v3908 = vunpack.c.l.b16 %v3307
    %v3909 = vunpack.c.h.b16 %v3307
    %v3910 = vunpack.c.l.b16 %v3308
    %v3911 = vunpack.c.h.b16 %v3308
    %v3912 = vunpack.c.l.b16 %v3309
    %v3913 = vunpack.c.h.b16 %v3309
    %v3914 = vunpack.c.l.b16 %v3310
    %v3915 = vunpack.c.h.b16 %v3310
    %v3916 = vunpack.c.l.b16 %v3311
    %v3917 = vunpack.c.h.b16 %v3311
    %v3918 = vunpack.c.l.b16 %v3312
    %v3919 = vunpack.c.h.b16 %v3312
    %v3920 = vunpack.c.l.b16 %v3313
    %v3921 = vunpack.c.h.b16 %v3313
    %v3922 = vunpack.c.l.b16 %v3314
    %v3923 = vunpack.c.h.b16 %v3314
    %v3924 = vunpack.c.l.b16 %v3315
    %v3925 = vunpack.c.h.b16 %v3315
    %v3926 = vunpack.c.l.b16 %v3316
    %v3927 = vunpack.c.h.b16 %v3316
    %v3928 = vunpack.c.l.b16 %v3317
    %v3929 = vunpack.c.h.b16 %v3317
    %v3930 = vunpack.c.l.b16 %v3318
    %v3931 = vunpack.c.h.b16 %v3318
    %v3932 = vunpack.c.l.b16 %v3319
    %v3933 = vunpack.c.h.b16 %v3319
    %v3934 = vunpack.c.l.b16 %v3320
    %v3935 = vunpack.c.h.b16 %v3320
    %v3936 = vunpack.c.l.b16 %v3321
    %v3937 = vunpack.c.h.b16 %v3321
    %v3938 = vunpack.c.l.b16 %v3322
    %v3939 = vunpack.c.h.b16 %v3322
    %v3940 = vunpack.c.l.b16 %v3323
    %v3941 = vunpack.c.h.b16 %v3323
    %v3942 = vunpack.c.l.b16 %v3324
    %v3943 = vunpack.c.h.b16 %v3324
    %v3944 = vunpack.c.l.b16 %v3325
    %v3945 = vunpack.c.h.b16 %v3325
    %v3946 = vunpack.c.l.b16 %v3326
    %v3947 = vunpack.c.h.b16 %v3326
    %v3948 = vunpack.c.l.b16 %v3327
    %v3949 = vunpack.c.h.b16 %v3327
    %v3950 = vunpack.c.l.b16 %v3328
    %v3951 = vunpack.c.h.b16 %v3328
    %v3952 = vunpack.c.l.b16 %v3329
    %v3953 = vunpack.c.h.b16 %v3329
    %v3954 = vunpack.c.l.b16 %v3330
    %v3955 = vunpack.c.h.b16 %v3330
    %v3956 = vunpack.c.l.b16 %v3331
    %v3957 = vunpack.c.h.b16 %v3331
    %v3958 = vunpack.c.l.b16 %v3332
    %v3959 = vunpack.c.h.b16 %v3332
    %v3960 = vunpack.c.l.b16 %v3333
    %v3961 = vunpack.c.h.b16 %v3333
    %v3962 = vunpack.c.l.b16 %v3334
    %v3963 = vunpack.c.h.b16 %v3334
    %v3964 = vunpack.c.l.b16 %v3335
    %v3965 = vunpack.c.h.b16 %v3335
    %v3966 = vunpack.c.l.b16 %v3336
    %v3967 = vunpack.c.h.b16 %v3336
    %v3968 = vunpack.c.l.b16 %v3337
    %v3969 = vunpack.c.h.b16 %v3337
    %v3970 = vunpack.c.l.b16 %v3338
    %v3971 = vunpack.c.h.b16 %v3338
    %v3972 = vunpack.c.l.b16 %v3339
    %v3973 = vunpack.c.h.b16 %v3339
    %v3974 = vunpack.c.l.b16 %v3340
    %v3975 = vunpack.c.h.b16 %v3340
    %v3976 = vunpack.c.l.b16 %v3341
    %v3977 = vunpack.c.h.b16 %v3341
    %v3978 = vunpack.c.l.b16 %v3342
    %v3979 = vunpack.c.h.b16 %v3342
    %v3980 = vunpack.c.l.b16 %v3343
    %v3981 = vunpack.c.h.b16 %v3343
    %v3982 = vunpack.c.l.b16 %v3344
    %v3983 = vunpack.c.h.b16 %v3344
    %v3984 = vunpack.c.l.b16 %v3345
    %v3985 = vunpack.c.h.b16 %v3345
    %v3986 = vunpack.c.l.b16 %v3346
    %v3987 = vunpack.c.h.b16 %v3346
    %v3988 = vunpack.c.l.b16 %v3347
    %v3989 = vunpack.c.h.b16 %v3347
    %v3990 = vunpack.c.l.b16 %v3348
    %v3991 = vunpack.c.h.b16 %v3348
    %v3992 = vunpack.c.l.b16 %v3349
    %v3993 = vunpack.c.h.b16 %v3349
    %v3994 = vunpack.c.l.b16 %v3350
    %v3995 = vunpack.c.h.b16 %v3350
    %v3996 = vunpack.c.l.b16 %v3351
    %v3997 = vunpack.c.h.b16 %v3351
    %v3998 = vunpack.c.l.b16 %v3352
    %v3999 = vunpack.c.h.b16 %v3352
    %v4000 = vunpack.c.l.b16 %v3353
    %v4001 = vunpack.c.h.b16 %v3353
    %v4002 = vunpack.c.l.b16 %v3354
    %v4003 = vunpack.c.h.b16 %v3354
    %v4004 = vunpack.c.l.b16 %v3355
    %v4005 = vunpack.c.h.b16 %v3355
    %v4006 = vunpack.c.l.b16 %v3356
    %v4007 = vunpack.c.h.b16 %v3356
    %v4008 = vunpack.c.l.b16 %v3357
    %v4009 = vunpack.c.h.b16 %v3357
    %v4010 = vunpack.c.l.b16 %v3358
    %v4011 = vunpack.c.h.b16 %v3358
    %v4012 = vunpack.c.l.b16 %v3359
    %v4013 = vunpack.c.h.b16 %v3359
    %v4014 = vunpack.c.l.b16 %v3360
    %v4015 = vunpack.c.h.b16 %v3360
    %v4016 = vunpack.c.l.b16 %v3361
    %v4017 = vunpack.c.h.b16 %v3361
    %v4018 = vunpack.c.l.b16 %v3362
    %v4019 = vunpack.c.h.b16 %v3362
    %v4020 = vunpack.c.l.b16 %v3363
    %v4021 = vunpack.c.h.b16 %v3363
    %v4022 = vunpack.c.l.b16 %v3364
    %v4023 = vunpack.c.h.b16 %v3364
    %v4024 = vunpack.c.l.b16 %v3365
    %v4025 = vunpack.c.h.b16 %v3365
    %v4026 = vunpack.c.l.b16 %v3366
    %v4027 = vunpack.c.h.b16 %v3366
    %v4028 = vunpack.c.l.b16 %v3367
    %v4029 = vunpack.c.h.b16 %v3367
    %v4030 = vunpack.c.l.b16 %v3368
    %v4031 = vunpack.c.h.b16 %v3368
    %v4032 = vunpack.c.l.b16 %v3369
    %v4033 = vunpack.c.h.b16 %v3369
    %v4034 = vunpack.c.l.b16 %v3370
    %v4035 = vunpack.c.h.b16 %v3370
    %v4036 = vunpack.c.l.b16 %v3371
    %v4037 = vunpack.c.h.b16 %v3371
    %v4038 = vunpack.c.l.b16 %v3372
    %v4039 = vunpack.c.h.b16 %v3372
    %v4040 = vunpack.c.l.b16 %v3373
    %v4041 = vunpack.c.h.b16 %v3373
    %v4042 = vunpack.c.l.b16 %v3374
    %v4043 = vunpack.c.h.b16 %v3374
    %v4044 = vunpack.c.l.b16 %v3375
    %v4045 = vunpack.c.h.b16 %v3375
    %v4046 = vunpack.c.l.b16 %v3376
    %v4047 = vunpack.c.h.b16 %v3376
    %v4048 = vunpack.c.l.b16 %v3377
    %v4049 = vunpack.c.h.b16 %v3377
    %v4050 = vunpack.c.l.b16 %v3378
    %v4051 = vunpack.c.h.b16 %v3378
    %v4052 = vunpack.c.l.b16 %v3379
    %v4053 = vunpack.c.h.b16 %v3379
    %v4054 = vunpack.c.l.b16 %v3380
    %v4055 = vunpack.c.h.b16 %v3380
    %v4056 = vunpack.c.l.b16 %v3381
    %v4057 = vunpack.c.h.b16 %v3381
    %v4058 = vunpack.c.l.b16 %v3382
    %v4059 = vunpack.c.h.b16 %v3382
    %v4060 = vunpack.c.l.b16 %v3383
    %v4061 = vunpack.c.h.b16 %v3383
    %v4062 = vunpack.c.l.b16 %v3384
    %v4063 = vunpack.c.h.b16 %v3384
    %v4064 = vunpack.c.l.b16 %v3385
    %v4065 = vunpack.c.h.b16 %v3385
    %v4066 = vunpack.c.l.b16 %v3386
    %v4067 = vunpack.c.h.b16 %v3386
    %v4068 = vunpack.c.l.b16 %v3387
    %v4069 = vunpack.c.h.b16 %v3387
    %v4070 = vunpack.c.l.b16 %v3388
    %v4071 = vunpack.c.h.b16 %v3388
    %v4072 = vunpack.c.l.b16 %v3389
    %v4073 = vunpack.c.h.b16 %v3389
    %v4074 = vunpack.c.l.b16 %v3390
    %v4075 = vunpack.c.h.b16 %v3390
    %v4076 = vunpack.c.l.b16 %v3391
    %v4077 = vunpack.c.h.b16 %v3391
    %v4078 = vunpack.c.l.b16 %v3392
    %v4079 = vunpack.c.h.b16 %v3392
    %v4080 = vunpack.c.l.b16 %v3393
    %v4081 = vunpack.c.h.b16 %v3393
    %v4082 = vunpack.c.l.b16 %v3394
    %v4083 = vunpack.c.h.b16 %v3394
    %v4084 = vunpack.c.l.b16 %v3395
    %v4085 = vunpack.c.h.b16 %v3395
    %v4086 = vunpack.c.l.b16 %v3396
    %v4087 = vunpack.c.h.b16 %v3396
    %v4088 = vunpack.c.l.b16 %v3397
    %v4089 = vunpack.c.h.b16 %v3397
    %v4090 = vunpack.c.l.b16 %v3398
    %v4091 = vunpack.c.h.b16 %v3398
    %v4092 = vunpack.c.l.b16 %v3399
    %v4093 = vunpack.c.h.b16 %v3399
    %v4094 = vunpack.c.l.b16 %v3400
    %v4095 = vunpack.c.h.b16 %v3400
    %v4096 = vunpack.c.l.b16 %v3401
    %v4097 = vunpack.c.h.b16 %v3401
    %v4098 = vunpack.c.l.b16 %v3402
    %v4099 = vunpack.c.h.b16 %v3402
    %v4100 = vunpack.c.l.b16 %v3403
    %v4101 = vunpack.c.h.b16 %v3403
    %v4102 = vunpack.c.l.b16 %v3404
    %v4103 = vunpack.c.h.b16 %v3404
    %v4104 = vunpack.c.l.b16 %v3405
    %v4105 = vunpack.c.h.b16 %v3405
    %v4106 = vunpack.c.l.b16 %v3406
    %v4107 = vunpack.c.h.b16 %v3406
    %v4108 = vunpack.c.l.b16 %v3407
    %v4109 = vunpack.c.h.b16 %v3407
    %v4110 = vunpack.c.l.b16 %v3408
    %v4111 = vunpack.c.h.b16 %v3408
    %v4112 = vunpack.c.l.b16 %v3409
    %v4113 = vunpack.c.h.b16 %v3409
    %v4114 = vunpack.c.l.b16 %v3410
    %v4115 = vunpack.c.h.b16 %v3410
    %v4116 = vunpack.c.l.b16 %v3411
    %v4117 = vunpack.c.h.b16 %v3411
    %v4118 = vunpack.c.l.b16 %v3412
    %v4119 = vunpack.c.h.b16 %v3412
    %v4120 = vunpack.c.l.b16 %v3413
    %v4121 = vunpack.c.h.b16 %v3413
    %v4122 = vunpack.c.l.b16 %v3414
    %v4123 = vunpack.c.h.b16 %v3414
    %v4124 = vunpack.c.l.b16 %v3415
    %v4125 = vunpack.c.h.b16 %v3415
    %v4126 = vunpack.c.l.b16 %v3416
    %v4127 = vunpack.c.h.b16 %v3416
    %v4128 = vunpack.c.l.b16 %v3417
    %v4129 = vunpack.c.h.b16 %v3417
    %v4130 = vunpack.c.l.b16 %v3418
    %v4131 = vunpack.c.h.b16 %v3418
    %v4132 = vunpack.c.l.b16 %v3419
    %v4133 = vunpack.c.h.b16 %v3419
    %v4134 = vunpack.c.l.b16 %v3420
    %v4135 = vunpack.c.h.b16 %v3420
    %v4136 = vunpack.c.l.b16 %v3421
    %v4137 = vunpack.c.h.b16 %v3421
    %v4138 = vunpack.c.l.b16 %v3422
    %v4139 = vunpack.c.h.b16 %v3422
    %v4140 = vunpack.c.l.b16 %v3423
    %v4141 = vunpack.c.h.b16 %v3423
    %v4142 = vunpack.c.l.b16 %v3424
    %v4143 = vunpack.c.h.b16 %v3424
    %v4144 = vunpack.c.l.b16 %v3425
    %v4145 = vunpack.c.h.b16 %v3425
    %v4146 = vunpack.c.l.b16 %v3426
    %v4147 = vunpack.c.h.b16 %v3426
    %v4148 = vunpack.c.l.b16 %v3427
    %v4149 = vunpack.c.h.b16 %v3427
    %v4150 = vunpack.c.l.b16 %v3428
    %v4151 = vunpack.c.h.b16 %v3428
    %v4152 = vunpack.c.l.b16 %v3429
    %v4153 = vunpack.c.h.b16 %v3429
    %v4154 = vunpack.c.l.b16 %v3430
    %v4155 = vunpack.c.h.b16 %v3430
    %v4156 = vunpack.c.l.b16 %v3431
    %v4157 = vunpack.c.h.b16 %v3431
    %v4158 = vunpack.c.l.b16 %v3432
    %v4159 = vunpack.c.h.b16 %v3432
    %v4160 = vunpack.c.l.b16 %v3433
    %v4161 = vunpack.c.h.b16 %v3433
    %v4162 = vunpack.c.l.b16 %v3434
    %v4163 = vunpack.c.h.b16 %v3434
    %v4164 = vunpack.c.l.b16 %v3435
    %v4165 = vunpack.c.h.b16 %v3435
    %v4166 = vunpack.c.l.b16 %v3436
    %v4167 = vunpack.c.h.b16 %v3436
    %v4168 = vunpack.c.l.b16 %v3437
    %v4169 = vunpack.c.h.b16 %v3437
    %v4170 = vunpack.c.l.b16 %v3438
    %v4171 = vunpack.c.h.b16 %v3438
    %v4172 = vunpack.c.l.b16 %v3439
    %v4173 = vunpack.c.h.b16 %v3439
    %v4174 = vunpack.c.l.b16 %v3440
    %v4175 = vunpack.c.h.b16 %v3440
    %v4176 = vunpack.c.l.b16 %v3441
    %v4177 = vunpack.c.h.b16 %v3441
    %v4178 = vunpack.c.l.b16 %v3442
    %v4179 = vunpack.c.h.b16 %v3442
    %v4180 = vunpack.c.l.b16 %v3443
    %v4181 = vunpack.c.h.b16 %v3443
    %v4182 = vunpack.c.l.b16 %v3444
    %v4183 = vunpack.c.h.b16 %v3444
    %v4184 = vunpack.c.l.b16 %v3445
    %v4185 = vunpack.c.h.b16 %v3445
    %v4186 = vunpack.c.l.b16 %v3446
    %v4187 = vunpack.c.h.b16 %v3446
    %v4188 = vunpack.c.l.b16 %v3447
    %v4189 = vunpack.c.h.b16 %v3447
    %v4190 = vunpack.c.l.b16 %v3448
    %v4191 = vunpack.c.h.b16 %v3448
    %v4192 = vunpack.c.l.b16 %v3449
    %v4193 = vunpack.c.h.b16 %v3449
    %v4194 = vunpack.c.l.b16 %v3450
    %v4195 = vunpack.c.h.b16 %v3450
    %v4196 = vunpack.c.l.b16 %v3451
    %v4197 = vunpack.c.h.b16 %v3451
    %v4198 = vunpack.c.l.b16 %v3452
    %v4199 = vunpack.c.h.b16 %v3452
    %v4200 = vunpack.c.l.b16 %v3453
    %v4201 = vunpack.c.h.b16 %v3453
    %v4202 = vunpack.c.l.b16 %v3454
    %v4203 = vunpack.c.h.b16 %v3454
    %v4204 = vunpack.c.l.b16 %v3455
    %v4205 = vunpack.c.h.b16 %v3455
    %v4206 = vunpack.c.l.b16 %v3456
    %v4207 = vunpack.c.h.b16 %v3456
    %v4208 = vunpack.c.l.b16 %v3457
    %v4209 = vunpack.c.h.b16 %v3457
    %v4210 = vunpack.c.l.b16 %v3458
    %v4211 = vunpack.c.h.b16 %v3458
    %v4212 = vunpack.c.l.b16 %v3459
    %v4213 = vunpack.c.h.b16 %v3459
    %v4214 = vunpack.c.l.b16 %v3460
    %v4215 = vunpack.c.h.b16 %v3460
    %v4216 = vunpack.c.l.b16 %v3461
    %v4217 = vunpack.c.h.b16 %v3461
    %v4218 = vunpack.c.l.b16 %v3462
    %v4219 = vunpack.c.h.b16 %v3462
    %v4220 = vunpack.c.l.b16 %v3463
    %v4221 = vunpack.c.h.b16 %v3463
    %v4222 = vunpack.c.l.b16 %v3464
    %v4223 = vunpack.c.h.b16 %v3464
    %v4224 = vunpack.c.l.b16 %v3465
    %v4225 = vunpack.c.h.b16 %v3465
    %v4226 = vunpack.c.l.b16 %v3466
    %v4227 = vunpack.c.h.b16 %v3466
    %v4228 = vunpack.c.l.b16 %v3467
    %v4229 = vunpack.c.h.b16 %v3467
    %v4230 = vunpack.c.l.b16 %v3468
    %v4231 = vunpack.c.h.b16 %v3468
    %v4232 = vunpack.c.l.b16 %v3469
    %v4233 = vunpack.c.h.b16 %v3469
    %v4234 = vunpack.c.l.b16 %v3470
    %v4235 = vunpack.c.h.b16 %v3470
    %v4236 = vunpack.c.l.b16 %v3471
    %v4237 = vunpack.c.h.b16 %v3471
    %v4238 = vunpack.c.l.b16 %v3472
    %v4239 = vunpack.c.h.b16 %v3472
    %v4240 = vunpack.c.l.b16 %v3473
    %v4241 = vunpack.c.h.b16 %v3473
    %v4242 = vunpack.c.l.b16 %v3474
    %v4243 = vunpack.c.h.b16 %v3474
    %v4244 = vunpack.c.l.b16 %v3475
    %v4245 = vunpack.c.h.b16 %v3475
    %v4246 = vunpack.c.l.b16 %v3476
    %v4247 = vunpack.c.h.b16 %v3476
    %v4248 = vunpack.c.l.b16 %v3477
    %v4249 = vunpack.c.h.b16 %v3477
    %v4250 = vunpack.c.l.b16 %v3478
    %v4251 = vunpack.c.h.b16 %v3478
    %v4252 = vunpack.c.l.b16 %v3479
    %v4253 = vunpack.c.h.b16 %v3479
    %v4254 = vunpack.c.l.b16 %v3480
    %v4255 = vunpack.c.h.b16 %v3480
    %v4256 = vunpack.c.l.b16 %v3481
    %v4257 = vunpack.c.h.b16 %v3481
    %v4258 = vunpack.c.l.b16 %v3482
    %v4259 = vunpack.c.h.b16 %v3482
    %v4260 = vunpack.c.l.b16 %v3483
    %v4261 = vunpack.c.h.b16 %v3483
    %v4262 = vpack.c.b16 %v3754, %v3750
    %v4263 = vpack.c.b16 %v3755, %v3751
    %v4264 = vpack.c.b16 %v3756, %v3752
    %v4265 = vpack.c.b16 %v3757, %v3753
    %v4266 = vpack.c.b16 %v3762, %v3758
    %v4267 = vpack.c.b16 %v3763, %v3759
    %v4268 = vpack.c.b16 %v3764, %v3760
    %v4269 = vpack.c.b16 %v3765, %v3761
    %v4270 = vpack.c.b16 %v3770, %v3766
    %v4271 = vpack.c.b16 %v3771, %v3767
    %v4272 = vpack.c.b16 %v3772, %v3768
    %v4273 = vpack.c.b16 %v3773, %v3769
    %v4274 = vpack.c.b16 %v3778, %v3774
    %v4275 = vpack.c.b16 %v3779, %v3775
    %v4276 = vpack.c.b16 %v3780, %v3776
    %v4277 = vpack.c.b16 %v3781, %v3777
    %v4278 = vpack.c.b16 %v3786, %v3782
    %v4279 = vpack.c.b16 %v3787, %v3783
    %v4280 = vpack.c.b16 %v3788, %v3784
    %v4281 = vpack.c.b16 %v3789, %v3785
    %v4282 = vpack.c.b16 %v3794, %v3790
    %v4283 = vpack.c.b16 %v3795, %v3791
    %v4284 = vpack.c.b16 %v3796, %v3792
    %v4285 = vpack.c.b16 %v3797, %v3793
    %v4286 = vpack.c.b16 %v3802, %v3798
    %v4287 = vpack.c.b16 %v3803, %v3799
    %v4288 = vpack.c.b16 %v3804, %v3800
    %v4289 = vpack.c.b16 %v3805, %v3801
    %v4290 = vpack.c.b16 %v3810, %v3806
    %v4291 = vpack.c.b16 %v3811, %v3807
    %v4292 = vpack.c.b16 %v3812, %v3808
    %v4293 = vpack.c.b16 %v3813, %v3809
    %v4294 = vpack.c.b16 %v3818, %v3814
    %v4295 = vpack.c.b16 %v3819, %v3815
    %v4296 = vpack.c.b16 %v3820, %v3816
    %v4297 = vpack.c.b16 %v3821, %v3817
    %v4298 = vpack.c.b16 %v3826, %v3822
    %v4299 = vpack.c.b16 %v3827, %v3823
    %v4300 = vpack.c.b16 %v3828, %v3824
    %v4301 = vpack.c.b16 %v3829, %v3825
    %v4302 = vpack.c.b16 %v3834, %v3830
    %v4303 = vpack.c.b16 %v3835, %v3831
    %v4304 = vpack.c.b16 %v3836, %v3832
    %v4305 = vpack.c.b16 %v3837, %v3833
    %v4306 = vpack.c.b16 %v3842, %v3838
    %v4307 = vpack.c.b16 %v3843, %v3839
    %v4308 = vpack.c.b16 %v3844, %v3840
    %v4309 = vpack.c.b16 %v3845, %v3841
    %v4310 = vpack.c.b16 %v3850, %v3846
    %v4311 = vpack.c.b16 %v3851, %v3847
    %v4312 = vpack.c.b16 %v3852, %v3848
    %v4313 = vpack.c.b16 %v3853, %v3849
    %v4314 = vpack.c.b16 %v3858, %v3854
    %v4315 = vpack.c.b16 %v3859, %v3855
    %v4316 = vpack.c.b16 %v3860, %v3856
    %v4317 = vpack.c.b16 %v3861, %v3857
    %v4318 = vpack.c.b16 %v3866, %v3862
    %v4319 = vpack.c.b16 %v3867, %v3863
    %v4320 = vpack.c.b16 %v3868, %v3864
    %v4321 = vpack.c.b16 %v3869, %v3865
    %v4322 = vpack.c.b16 %v3874, %v3870
    %v4323 = vpack.c.b16 %v3875, %v3871
    %v4324 = vpack.c.b16 %v3876, %v3872
    %v4325 = vpack.c.b16 %v3877, %v3873
    %v4326 = vpack.c.b16 %v3882, %v3878
    %v4327 = vpack.c.b16 %v3883, %v3879
    %v4328 = vpack.c.b16 %v3884, %v3880
    %v4329 = vpack.c.b16 %v3885, %v3881
    %v4330 = vpack.c.b16 %v3890, %v3886
    %v4331 = vpack.c.b16 %v3891, %v3887
    %v4332 = vpack.c.b16 %v3892, %v3888
    %v4333 = vpack.c.b16 %v3893, %v3889
    %v4334 = vpack.c.b16 %v3898, %v3894
    %v4335 = vpack.c.b16 %v3899, %v3895
    %v4336 = vpack.c.b16 %v3900, %v3896
    %v4337 = vpack.c.b16 %v3901, %v3897
    %v4338 = vpack.c.b16 %v3906, %v3902
    %v4339 = vpack.c.b16 %v3907, %v3903
    %v4340 = vpack.c.b16 %v3908, %v3904
    %v4341 = vpack.c.b16 %v3909, %v3905
    %v4342 = vpack.c.b16 %v3914, %v3910
    %v4343 = vpack.c.b16 %v3915, %v3911
    %v4344 = vpack.c.b16 %v3916, %v3912
    %v4345 = vpack.c.b16 %v3917, %v3913
    %v4346 = vpack.c.b16 %v3922, %v3918
    %v4347 = vpack.c.b16 %v3923, %v3919
    %v4348 = vpack.c.b16 %v3924, %v3920
    %v4349 = vpack.c.b16 %v3925, %v3921
    %v4350 = vpack.c.b16 %v3930, %v3926
    %v4351 = vpack.c.b16 %v3931, %v3927
    %v4352 = vpack.c.b16 %v3932, %v3928
    %v4353 = vpack.c.b16 %v3933, %v3929
    %v4354 = vpack.c.b16 %v3938, %v3934
    %v4355 = vpack.c.b16 %v3939, %v3935
    %v4356 = vpack.c.b16 %v3940, %v3936
    %v4357 = vpack.c.b16 %v3941, %v3937
    %v4358 = vpack.c.b16 %v3946, %v3942
    %v4359 = vpack.c.b16 %v3947, %v3943
    %v4360 = vpack.c.b16 %v3948, %v3944
    %v4361 = vpack.c.b16 %v3949, %v3945
    %v4362 = vpack.c.b16 %v3954, %v3950
    %v4363 = vpack.c.b16 %v3955, %v3951
    %v4364 = vpack.c.b16 %v3956, %v3952
    %v4365 = vpack.c.b16 %v3957, %v3953
    %v4366 = vpack.c.b16 %v3962, %v3958
    %v4367 = vpack.c.b16 %v3963, %v3959
    %v4368 = vpack.c.b16 %v3964, %v3960
    %v4369 = vpack.c.b16 %v3965, %v3961
    %v4370 = vpack.c.b16 %v3970, %v3966
    %v4371 = vpack.c.b16 %v3971, %v3967
    %v4372 = vpack.c.b16 %v3972, %v3968
    %v4373 = vpack.c.b16 %v3973, %v3969
    %v4374 = vpack.c.b16 %v3978, %v3974
    %v4375 = vpack.c.b16 %v3979, %v3975
    %v4376 = vpack.c.b16 %v3980, %v3976
    %v4377 = vpack.c.b16 %v3981, %v3977
    %v4378 = vpack.c.b16 %v3986, %v3982
    %v4379 = vpack.c.b16 %v3987, %v3983
    %v4380 = vpack.c.b16 %v3988, %v3984
    %v4381 = vpack.c.b16 %v3989, %v3985
    %v4382 = vpack.c.b16 %v3994, %v3990
    %v4383 = vpack.c.b16 %v3995, %v3991
    %v4384 = vpack.c.b16 %v3996, %v3992
    %v4385 = vpack.c.b16 %v3997, %v3993
    %v4386 = vpack.c.b16 %v4002, %v3998
    %v4387 = vpack.c.b16 %v4003, %v3999
    %v4388 = vpack.c.b16 %v4004, %v4000
    %v4389 = vpack.c.b16 %v4005, %v4001
    %v4390 = vpack.c.b16 %v4010, %v4006
    %v4391 = vpack.c.b16 %v4011, %v4007
    %v4392 = vpack.c.b16 %v4012, %v4008
    %v4393 = vpack.c.b16 %v4013, %v4009
    %v4394 = vpack.c.b16 %v4018, %v4014
    %v4395 = vpack.c.b16 %v4019, %v4015
    %v4396 = vpack.c.b16 %v4020, %v4016
    %v4397 = vpack.c.b16 %v4021, %v4017
    %v4398 = vpack.c.b16 %v4026, %v4022
    %v4399 = vpack.c.b16 %v4027, %v4023
    %v4400 = vpack.c.b16 %v4028, %v4024
    %v4401 = vpack.c.b16 %v4029, %v4025
    %v4402 = vpack.c.b16 %v4034, %v4030
    %v4403 = vpack.c.b16 %v4035, %v4031
    %v4404 = vpack.c.b16 %v4036, %v4032
    %v4405 = vpack.c.b16 %v4037, %v4033
    %v4406 = vpack.c.b16 %v4042, %v4038
    %v4407 = vpack.c.b16 %v4043, %v4039
    %v4408 = vpack.c.b16 %v4044, %v4040
    %v4409 = vpack.c.b16 %v4045, %v4041
    %v4410 = vpack.c.b16 %v4050, %v4046
    %v4411 = vpack.c.b16 %v4051, %v4047
    %v4412 = vpack.c.b16 %v4052, %v4048
    %v4413 = vpack.c.b16 %v4053, %v4049
    %v4414 = vpack.c.b16 %v4058, %v4054
    %v4415 = vpack.c.b16 %v4059, %v4055
    %v4416 = vpack.c.b16 %v4060, %v4056
    %v4417 = vpack.c.b16 %v4061, %v4057
    %v4418 = vpack.c.b16 %v4066, %v4062
    %v4419 = vpack.c.b16 %v4067, %v4063
    %v4420 = vpack.c.b16 %v4068, %v4064
    %v4421 = vpack.c.b16 %v4069, %v4065
    %v4422 = vpack.c.b16 %v4074, %v4070
    %v4423 = vpack.c.b16 %v4075, %v4071
    %v4424 = vpack.c.b16 %v4076, %v4072
    %v4425 = vpack.c.b16 %v4077, %v4073
    %v4426 = vpack.c.b16 %v4082, %v4078
    %v4427 = vpack.c.b16 %v4083, %v4079
    %v4428 = vpack.c.b16 %v4084, %v4080
    %v4429 = vpack.c.b16 %v4085, %v4081
    %v4430 = vpack.c.b16 %v4090, %v4086
    %v4431 = vpack.c.b16 %v4091, %v4087
    %v4432 = vpack.c.b16 %v4092, %v4088
    %v4433 = vpack.c.b16 %v4093, %v4089
    %v4434 = vpack.c.b16 %v4098, %v4094
    %v4435 = vpack.c.b16 %v4099, %v4095
    %v4436 = vpack.c.b16 %v4100, %v4096
    %v4437 = vpack.c.b16 %v4101, %v4097
    %v4438 = vpack.c.b16 %v4106, %v4102
    %v4439 = vpack.c.b16 %v4107, %v4103
    %v4440 = vpack.c.b16 %v4108, %v4104
    %v4441 = vpack.c.b16 %v4109, %v4105
    %v4442 = vpack.c.b16 %v4114, %v4110
    %v4443 = vpack.c.b16 %v4115, %v4111
    %v4444 = vpack.c.b16 %v4116, %v4112
    %v4445 = vpack.c.b16 %v4117, %v4113
    %v4446 = vpack.c.b16 %v4122, %v4118
    %v4447 = vpack.c.b16 %v4123, %v4119
    %v4448 = vpack.c.b16 %v4124, %v4120
    %v4449 = vpack.c.b16 %v4125, %v4121
    %v4450 = vpack.c.b16 %v4130, %v4126
    %v4451 = vpack.c.b16 %v4131, %v4127
    %v4452 = vpack.c.b16 %v4132, %v4128
    %v4453 = vpack.c.b16 %v4133, %v4129
    %v4454 = vpack.c.b16 %v4138, %v4134
    %v4455 = vpack.c.b16 %v4139, %v4135
    %v4456 = vpack.c.b16 %v4140, %v4136
    %v4457 = vpack.c.b16 %v4141, %v4137
    %v4458 = vpack.c.b16 %v4146, %v4142
    %v4459 = vpack.c.b16 %v4147, %v4143
    %v4460 = vpack.c.b16 %v4148, %v4144
    %v4461 = vpack.c.b16 %v4149, %v4145
    %v4462 = vpack.c.b16 %v4154, %v4150
    %v4463 = vpack.c.b16 %v4155, %v4151
    %v4464 = vpack.c.b16 %v4156, %v4152
    %v4465 = vpack.c.b16 %v4157, %v4153
    %v4466 = vpack.c.b16 %v4162, %v4158
    %v4467 = vpack.c.b16 %v4163, %v4159
    %v4468 = vpack.c.b16 %v4164, %v4160
    %v4469 = vpack.c.b16 %v4165, %v4161
    %v4470 = vpack.c.b16 %v4170, %v4166
    %v4471 = vpack.c.b16 %v4171, %v4167
    %v4472 = vpack.c.b16 %v4172, %v4168
    %v4473 = vpack.c.b16 %v4173, %v4169
    %v4474 = vpack.c.b16 %v4178, %v4174
    %v4475 = vpack.c.b16 %v4179, %v4175
    %v4476 = vpack.c.b16 %v4180, %v4176
    %v4477 = vpack.c.b16 %v4181, %v4177
    %v4478 = vpack.c.b16 %v4186, %v4182
    %v4479 = vpack.c.b16 %v4187, %v4183
    %v4480 = vpack.c.b16 %v4188, %v4184
    %v4481 = vpack.c.b16 %v4189, %v4185
    %v4482 = vpack.c.b16 %v4194, %v4190
    %v4483 = vpack.c.b16 %v4195, %v4191
    %v4484 = vpack.c.b16 %v4196, %v4192
    %v4485 = vpack.c.b16 %v4197, %v4193
    %v4486 = vpack.c.b16 %v4202, %v4198
    %v4487 = vpack.c.b16 %v4203, %v4199
    %v4488 = vpack.c.b16 %v4204, %v4200
    %v4489 = vpack.c.b16 %v4205, %v4201
    %v4490 = vpack.c.b16 %v4210, %v4206
    %v4491 = vpack.c.b16 %v4211, %v4207
    %v4492 = vpack.c.b16 %v4212, %v4208
    %v4493 = vpack.c.b16 %v4213, %v4209
    %v4494 = vpack.c.b16 %v4218, %v4214
    %v4495 = vpack.c.b16 %v4219, %v4215
    %v4496 = vpack.c.b16 %v4220, %v4216
    %v4497 = vpack.c.b16 %v4221, %v4217
    %v4498 = vpack.c.b16 %v4226, %v4222
    %v4499 = vpack.c.b16 %v4227, %v4223
    %v4500 = vpack.c.b16 %v4228, %v4224
    %v4501 = vpack.c.b16 %v4229, %v4225
    %v4502 = vpack.c.b16 %v4234, %v4230
    %v4503 = vpack.c.b16 %v4235, %v4231
    %v4504 = vpack.c.b16 %v4236, %v4232
    %v4505 = vpack.c.b16 %v4237, %v4233
    %v4506 = vpack.c.b16 %v4242, %v4238
    %v4507 = vpack.c.b16 %v4243, %v4239
    %v4508 = vpack.c.b16 %v4244, %v4240
    %v4509 = vpack.c.b16 %v4245, %v4241
    %v4510 = vpack.c.b16 %v4250, %v4246
    %v4511 = vpack.c.b16 %v4251, %v4247
    %v4512 = vpack.c.b16 %v4252, %v4248
    %v4513 = vpack.c.b16 %v4253, %v4249
    %v4514 = vpack.c.b16 %v4258, %v4254
    %v4515 = vpack.c.b16 %v4259, %v4255
    %v4516 = vpack.c.b16 %v4260, %v4256
    %v4517 = vpack.c.b16 %v4261, %v4257
    %4774 = vmatpush.bf16.msra.mxu0 %v4290
    %4775 = vmatpush.bf16.msra.mxu0 %v4286
    %4776 = vmatpush.bf16.msra.mxu0 %v4282
    %4777 = vmatpush.bf16.msra.mxu0 %v4278
    %4778 = vmatpush.bf16.msra.mxu0 %v4274
    %4779 = vmatpush.bf16.msra.mxu0 %v4270
    %4780 = vmatpush.bf16.msra.mxu0 %v4266
    %4781 = vmatpush.bf16.msra.mxu0 %v4262
    %4782 = vmatmul.bf16.gmra.mxu0 %v3220
    %v4783 = vpop.f32.mrf.mxu0
    %v4784 = vadd.f32 %v3486, %v4783
    %v4785 = vpop.f32.mrf.mxu0
    %4786 = vdwg.mxu0
    %4787 = vmatpush.bf16.msra.mxu0 %v4322
    %4788 = vmatpush.bf16.msra.mxu0 %v4318
    %4789 = vmatpush.bf16.msra.mxu0 %v4314
    %4790 = vmatpush.bf16.msra.mxu0 %v4310
    %4791 = vmatpush.bf16.msra.mxu0 %v4306
    %4792 = vmatpush.bf16.msra.mxu0 %v4302
    %4793 = vmatpush.bf16.msra.mxu0 %v4298
    %4794 = vmatpush.bf16.msra.mxu0 %v4294
    %4795 = vmatmul.bf16.gmra.mxu0 %v3221
    %v4796 = vpop.f32.mrf.mxu0
    %v4797 = vadd.f32 %v4784, %v4796
    %v4798 = vpop.f32.mrf.mxu0
    %4799 = vdwg.mxu0
    %4800 = vmatpush.bf16.msra.mxu0 %v4354
    %4801 = vmatpush.bf16.msra.mxu0 %v4350
    %4802 = vmatpush.bf16.msra.mxu0 %v4346
    %4803 = vmatpush.bf16.msra.mxu0 %v4342
    %4804 = vmatpush.bf16.msra.mxu0 %v4338
    %4805 = vmatpush.bf16.msra.mxu0 %v4334
    %4806 = vmatpush.bf16.msra.mxu0 %v4330
    %4807 = vmatpush.bf16.msra.mxu0 %v4326
    %4808 = vmatmul.bf16.gmra.mxu0 %v3222
    %v4809 = vpop.f32.mrf.mxu0
    %v4810 = vadd.f32 %v4797, %v4809
    %v4811 = vpop.f32.mrf.mxu0
    %4812 = vdwg.mxu0
    %4813 = vmatpush.bf16.msra.mxu0 %v4386
    %4814 = vmatpush.bf16.msra.mxu0 %v4382
    %4815 = vmatpush.bf16.msra.mxu0 %v4378
    %4816 = vmatpush.bf16.msra.mxu0 %v4374
    %4817 = vmatpush.bf16.msra.mxu0 %v4370
    %4818 = vmatpush.bf16.msra.mxu0 %v4366
    %4819 = vmatpush.bf16.msra.mxu0 %v4362
    %4820 = vmatpush.bf16.msra.mxu0 %v4358
    %4821 = vmatmul.bf16.gmra.mxu0 %v3223
    %v4822 = vpop.f32.mrf.mxu0
    %v4823 = vadd.f32 %v4810, %v4822
    %v4824 = vpop.f32.mrf.mxu0
    %4825 = vdwg.mxu0
    %4826 = vmatpush.bf16.msra.mxu0 %v4418
    %4827 = vmatpush.bf16.msra.mxu0 %v4414
    %4828 = vmatpush.bf16.msra.mxu0 %v4410
    %4829 = vmatpush.bf16.msra.mxu0 %v4406
    %4830 = vmatpush.bf16.msra.mxu0 %v4402
    %4831 = vmatpush.bf16.msra.mxu0 %v4398
    %4832 = vmatpush.bf16.msra.mxu0 %v4394
    %4833 = vmatpush.bf16.msra.mxu0 %v4390
    %4834 = vmatmul.bf16.gmra.mxu0 %v3224
    %v4835 = vpop.f32.mrf.mxu0
    %v4836 = vadd.f32 %v4823, %v4835
    %v4837 = vpop.f32.mrf.mxu0
    %4838 = vdwg.mxu0
    %4839 = vmatpush.bf16.msra.mxu0 %v4450
    %4840 = vmatpush.bf16.msra.mxu0 %v4446
    %4841 = vmatpush.bf16.msra.mxu0 %v4442
    %4842 = vmatpush.bf16.msra.mxu0 %v4438
    %4843 = vmatpush.bf16.msra.mxu0 %v4434
    %4844 = vmatpush.bf16.msra.mxu0 %v4430
    %4845 = vmatpush.bf16.msra.mxu0 %v4426
    %4846 = vmatpush.bf16.msra.mxu0 %v4422
    %4847 = vmatmul.bf16.gmra.mxu0 %v3225
    %v4848 = vpop.f32.mrf.mxu0
    %v4849 = vadd.f32 %v4836, %v4848
    %v4850 = vpop.f32.mrf.mxu0
    %4851 = vdwg.mxu0
    %4852 = vmatpush.bf16.msra.mxu0 %v4482
    %4853 = vmatpush.bf16.msra.mxu0 %v4478
    %4854 = vmatpush.bf16.msra.mxu0 %v4474
    %4855 = vmatpush.bf16.msra.mxu0 %v4470
    %4856 = vmatpush.bf16.msra.mxu0 %v4466
    %4857 = vmatpush.bf16.msra.mxu0 %v4462
    %4858 = vmatpush.bf16.msra.mxu0 %v4458
    %4859 = vmatpush.bf16.msra.mxu0 %v4454
    %4860 = vmatmul.bf16.gmra.mxu0 %v3226
    %v4861 = vpop.f32.mrf.mxu0
    %v4862 = vadd.f32 %v4849, %v4861
    %v4863 = vpop.f32.mrf.mxu0
    %4864 = vdwg.mxu0
    %4865 = vmatpush.bf16.msra.mxu0 %v4514
    %4866 = vmatpush.bf16.msra.mxu0 %v4510
    %4867 = vmatpush.bf16.msra.mxu0 %v4506
    %4868 = vmatpush.bf16.msra.mxu0 %v4502
    %4869 = vmatpush.bf16.msra.mxu0 %v4498
    %4870 = vmatpush.bf16.msra.mxu0 %v4494
    %4871 = vmatpush.bf16.msra.mxu0 %v4490
    %4872 = vmatpush.bf16.msra.mxu0 %v4486
    %4873 = vmatmul.bf16.gmra.mxu0 %v3227
    %v4874 = vpop.f32.mrf.mxu0
    %v4875 = vadd.f32 %v4862, %v4874
    %v4876 = vpop.f32.mrf.mxu0
    %4877 = vdwg.mxu0
    %4878 = vmatpush.bf16.msra.mxu0 %v4291
    %4879 = vmatpush.bf16.msra.mxu0 %v4287
    %4880 = vmatpush.bf16.msra.mxu0 %v4283
    %4881 = vmatpush.bf16.msra.mxu0 %v4279
    %4882 = vmatpush.bf16.msra.mxu0 %v4275
    %4883 = vmatpush.bf16.msra.mxu0 %v4271
    %4884 = vmatpush.bf16.msra.mxu0 %v4267
    %4885 = vmatpush.bf16.msra.mxu0 %v4263
    %4886 = vmatmul.bf16.gmra.mxu0 %v3220
    %v4887 = vpop.f32.mrf.mxu0
    %v4888 = vadd.f32 %v3487, %v4887
    %v4889 = vpop.f32.mrf.mxu0
    %4890 = vdwg.mxu0
    %4891 = vmatpush.bf16.msra.mxu0 %v4323
    %4892 = vmatpush.bf16.msra.mxu0 %v4319
    %4893 = vmatpush.bf16.msra.mxu0 %v4315
    %4894 = vmatpush.bf16.msra.mxu0 %v4311
    %4895 = vmatpush.bf16.msra.mxu0 %v4307
    %4896 = vmatpush.bf16.msra.mxu0 %v4303
    %4897 = vmatpush.bf16.msra.mxu0 %v4299
    %4898 = vmatpush.bf16.msra.mxu0 %v4295
    %4899 = vmatmul.bf16.gmra.mxu0 %v3221
    %v4900 = vpop.f32.mrf.mxu0
    %v4901 = vadd.f32 %v4888, %v4900
    %v4902 = vpop.f32.mrf.mxu0
    %4903 = vdwg.mxu0
    %4904 = vmatpush.bf16.msra.mxu0 %v4355
    %4905 = vmatpush.bf16.msra.mxu0 %v4351
    %4906 = vmatpush.bf16.msra.mxu0 %v4347
    %4907 = vmatpush.bf16.msra.mxu0 %v4343
    %4908 = vmatpush.bf16.msra.mxu0 %v4339
    %4909 = vmatpush.bf16.msra.mxu0 %v4335
    %4910 = vmatpush.bf16.msra.mxu0 %v4331
    %4911 = vmatpush.bf16.msra.mxu0 %v4327
    %4912 = vmatmul.bf16.gmra.mxu0 %v3222
    %v4913 = vpop.f32.mrf.mxu0
    %v4914 = vadd.f32 %v4901, %v4913
    %v4915 = vpop.f32.mrf.mxu0
    %4916 = vdwg.mxu0
    %4917 = vmatpush.bf16.msra.mxu0 %v4387
    %4918 = vmatpush.bf16.msra.mxu0 %v4383
    %4919 = vmatpush.bf16.msra.mxu0 %v4379
    %4920 = vmatpush.bf16.msra.mxu0 %v4375
    %4921 = vmatpush.bf16.msra.mxu0 %v4371
    %4922 = vmatpush.bf16.msra.mxu0 %v4367
    %4923 = vmatpush.bf16.msra.mxu0 %v4363
    %4924 = vmatpush.bf16.msra.mxu0 %v4359
    %4925 = vmatmul.bf16.gmra.mxu0 %v3223
    %v4926 = vpop.f32.mrf.mxu0
    %v4927 = vadd.f32 %v4914, %v4926
    %v4928 = vpop.f32.mrf.mxu0
    %4929 = vdwg.mxu0
    %4930 = vmatpush.bf16.msra.mxu0 %v4419
    %4931 = vmatpush.bf16.msra.mxu0 %v4415
    %4932 = vmatpush.bf16.msra.mxu0 %v4411
    %4933 = vmatpush.bf16.msra.mxu0 %v4407
    %4934 = vmatpush.bf16.msra.mxu0 %v4403
    %4935 = vmatpush.bf16.msra.mxu0 %v4399
    %4936 = vmatpush.bf16.msra.mxu0 %v4395
    %4937 = vmatpush.bf16.msra.mxu0 %v4391
    %4938 = vmatmul.bf16.gmra.mxu0 %v3224
    %v4939 = vpop.f32.mrf.mxu0
    %v4940 = vadd.f32 %v4927, %v4939
    %v4941 = vpop.f32.mrf.mxu0
    %4942 = vdwg.mxu0
    %4943 = vmatpush.bf16.msra.mxu0 %v4451
    %4944 = vmatpush.bf16.msra.mxu0 %v4447
    %4945 = vmatpush.bf16.msra.mxu0 %v4443
    %4946 = vmatpush.bf16.msra.mxu0 %v4439
    %4947 = vmatpush.bf16.msra.mxu0 %v4435
    %4948 = vmatpush.bf16.msra.mxu0 %v4431
    %4949 = vmatpush.bf16.msra.mxu0 %v4427
    %4950 = vmatpush.bf16.msra.mxu0 %v4423
    %4951 = vmatmul.bf16.gmra.mxu0 %v3225
    %v4952 = vpop.f32.mrf.mxu0
    %v4953 = vadd.f32 %v4940, %v4952
    %v4954 = vpop.f32.mrf.mxu0
    %4955 = vdwg.mxu0
    %4956 = vmatpush.bf16.msra.mxu0 %v4483
    %4957 = vmatpush.bf16.msra.mxu0 %v4479
    %4958 = vmatpush.bf16.msra.mxu0 %v4475
    %4959 = vmatpush.bf16.msra.mxu0 %v4471
    %4960 = vmatpush.bf16.msra.mxu0 %v4467
    %4961 = vmatpush.bf16.msra.mxu0 %v4463
    %4962 = vmatpush.bf16.msra.mxu0 %v4459
    %4963 = vmatpush.bf16.msra.mxu0 %v4455
    %4964 = vmatmul.bf16.gmra.mxu0 %v3226
    %v4965 = vpop.f32.mrf.mxu0
    %v4966 = vadd.f32 %v4953, %v4965
    %v4967 = vpop.f32.mrf.mxu0
    %4968 = vdwg.mxu0
    %4969 = vmatpush.bf16.msra.mxu0 %v4515
    %4970 = vmatpush.bf16.msra.mxu0 %v4511
    %4971 = vmatpush.bf16.msra.mxu0 %v4507
    %4972 = vmatpush.bf16.msra.mxu0 %v4503
    %4973 = vmatpush.bf16.msra.mxu0 %v4499
    %4974 = vmatpush.bf16.msra.mxu0 %v4495
    %4975 = vmatpush.bf16.msra.mxu0 %v4491
    %4976 = vmatpush.bf16.msra.mxu0 %v4487
    %4977 = vmatmul.bf16.gmra.mxu0 %v3227
    %v4978 = vpop.f32.mrf.mxu0
    %v4979 = vadd.f32 %v4966, %v4978
    %v4980 = vpop.f32.mrf.mxu0
    %4981 = vdwg.mxu0
    %4982 = vmatpush.bf16.msra.mxu0 %v4292
    %4983 = vmatpush.bf16.msra.mxu0 %v4288
    %4984 = vmatpush.bf16.msra.mxu0 %v4284
    %4985 = vmatpush.bf16.msra.mxu0 %v4280
    %4986 = vmatpush.bf16.msra.mxu0 %v4276
    %4987 = vmatpush.bf16.msra.mxu0 %v4272
    %4988 = vmatpush.bf16.msra.mxu0 %v4268
    %4989 = vmatpush.bf16.msra.mxu0 %v4264
    %4990 = vmatmul.bf16.gmra.mxu0 %v3220
    %v4991 = vpop.f32.mrf.mxu0
    %v4992 = vadd.f32 %v3488, %v4991
    %v4993 = vpop.f32.mrf.mxu0
    %4994 = vdwg.mxu0
    %4995 = vmatpush.bf16.msra.mxu0 %v4324
    %4996 = vmatpush.bf16.msra.mxu0 %v4320
    %4997 = vmatpush.bf16.msra.mxu0 %v4316
    %4998 = vmatpush.bf16.msra.mxu0 %v4312
    %4999 = vmatpush.bf16.msra.mxu0 %v4308
    %5000 = vmatpush.bf16.msra.mxu0 %v4304
    %5001 = vmatpush.bf16.msra.mxu0 %v4300
    %5002 = vmatpush.bf16.msra.mxu0 %v4296
    %5003 = vmatmul.bf16.gmra.mxu0 %v3221
    %v5004 = vpop.f32.mrf.mxu0
    %v5005 = vadd.f32 %v4992, %v5004
    %v5006 = vpop.f32.mrf.mxu0
    %5007 = vdwg.mxu0
    %5008 = vmatpush.bf16.msra.mxu0 %v4356
    %5009 = vmatpush.bf16.msra.mxu0 %v4352
    %5010 = vmatpush.bf16.msra.mxu0 %v4348
    %5011 = vmatpush.bf16.msra.mxu0 %v4344
    %5012 = vmatpush.bf16.msra.mxu0 %v4340
    %5013 = vmatpush.bf16.msra.mxu0 %v4336
    %5014 = vmatpush.bf16.msra.mxu0 %v4332
    %5015 = vmatpush.bf16.msra.mxu0 %v4328
    %5016 = vmatmul.bf16.gmra.mxu0 %v3222
    %v5017 = vpop.f32.mrf.mxu0
    %v5018 = vadd.f32 %v5005, %v5017
    %v5019 = vpop.f32.mrf.mxu0
    %5020 = vdwg.mxu0
    %5021 = vmatpush.bf16.msra.mxu0 %v4388
    %5022 = vmatpush.bf16.msra.mxu0 %v4384
    %5023 = vmatpush.bf16.msra.mxu0 %v4380
    %5024 = vmatpush.bf16.msra.mxu0 %v4376
    %5025 = vmatpush.bf16.msra.mxu0 %v4372
    %5026 = vmatpush.bf16.msra.mxu0 %v4368
    %5027 = vmatpush.bf16.msra.mxu0 %v4364
    %5028 = vmatpush.bf16.msra.mxu0 %v4360
    %5029 = vmatmul.bf16.gmra.mxu0 %v3223
    %v5030 = vpop.f32.mrf.mxu0
    %v5031 = vadd.f32 %v5018, %v5030
    %v5032 = vpop.f32.mrf.mxu0
    %5033 = vdwg.mxu0
    %5034 = vmatpush.bf16.msra.mxu0 %v4420
    %5035 = vmatpush.bf16.msra.mxu0 %v4416
    %5036 = vmatpush.bf16.msra.mxu0 %v4412
    %5037 = vmatpush.bf16.msra.mxu0 %v4408
    %5038 = vmatpush.bf16.msra.mxu0 %v4404
    %5039 = vmatpush.bf16.msra.mxu0 %v4400
    %5040 = vmatpush.bf16.msra.mxu0 %v4396
    %5041 = vmatpush.bf16.msra.mxu0 %v4392
    %5042 = vmatmul.bf16.gmra.mxu0 %v3224
    %v5043 = vpop.f32.mrf.mxu0
    %v5044 = vadd.f32 %v5031, %v5043
    %v5045 = vpop.f32.mrf.mxu0
    %5046 = vdwg.mxu0
    %5047 = vmatpush.bf16.msra.mxu0 %v4452
    %5048 = vmatpush.bf16.msra.mxu0 %v4448
    %5049 = vmatpush.bf16.msra.mxu0 %v4444
    %5050 = vmatpush.bf16.msra.mxu0 %v4440
    %5051 = vmatpush.bf16.msra.mxu0 %v4436
    %5052 = vmatpush.bf16.msra.mxu0 %v4432
    %5053 = vmatpush.bf16.msra.mxu0 %v4428
    %5054 = vmatpush.bf16.msra.mxu0 %v4424
    %5055 = vmatmul.bf16.gmra.mxu0 %v3225
    %v5056 = vpop.f32.mrf.mxu0
    %v5057 = vadd.f32 %v5044, %v5056
    %v5058 = vpop.f32.mrf.mxu0
    %5059 = vdwg.mxu0
    %5060 = vmatpush.bf16.msra.mxu0 %v4484
    %5061 = vmatpush.bf16.msra.mxu0 %v4480
    %5062 = vmatpush.bf16.msra.mxu0 %v4476
    %5063 = vmatpush.bf16.msra.mxu0 %v4472
    %5064 = vmatpush.bf16.msra.mxu0 %v4468
    %5065 = vmatpush.bf16.msra.mxu0 %v4464
    %5066 = vmatpush.bf16.msra.mxu0 %v4460
    %5067 = vmatpush.bf16.msra.mxu0 %v4456
    %5068 = vmatmul.bf16.gmra.mxu0 %v3226
    %v5069 = vpop.f32.mrf.mxu0
    %v5070 = vadd.f32 %v5057, %v5069
    %v5071 = vpop.f32.mrf.mxu0
    %5072 = vdwg.mxu0
    %5073 = vmatpush.bf16.msra.mxu0 %v4516
    %5074 = vmatpush.bf16.msra.mxu0 %v4512
    %5075 = vmatpush.bf16.msra.mxu0 %v4508
    %5076 = vmatpush.bf16.msra.mxu0 %v4504
    %5077 = vmatpush.bf16.msra.mxu0 %v4500
    %5078 = vmatpush.bf16.msra.mxu0 %v4496
    %5079 = vmatpush.bf16.msra.mxu0 %v4492
    %5080 = vmatpush.bf16.msra.mxu0 %v4488
    %5081 = vmatmul.bf16.gmra.mxu0 %v3227
    %v5082 = vpop.f32.mrf.mxu0
    %v5083 = vadd.f32 %v5070, %v5082
    %v5084 = vpop.f32.mrf.mxu0
    %5085 = vdwg.mxu0
    %5086 = vmatpush.bf16.msra.mxu0 %v4293
    %5087 = vmatpush.bf16.msra.mxu0 %v4289
    %5088 = vmatpush.bf16.msra.mxu0 %v4285
    %5089 = vmatpush.bf16.msra.mxu0 %v4281
    %5090 = vmatpush.bf16.msra.mxu0 %v4277
    %5091 = vmatpush.bf16.msra.mxu0 %v4273
    %5092 = vmatpush.bf16.msra.mxu0 %v4269
    %5093 = vmatpush.bf16.msra.mxu0 %v4265
    %5094 = vmatmul.bf16.gmra.mxu0 %v3220
    %v5095 = vpop.f32.mrf.mxu0
    %v5096 = vadd.f32 %v3489, %v5095
    %v5097 = vpop.f32.mrf.mxu0
    %5098 = vdwg.mxu0
    %5099 = vmatpush.bf16.msra.mxu0 %v4325
    %5100 = vmatpush.bf16.msra.mxu0 %v4321
    %5101 = vmatpush.bf16.msra.mxu0 %v4317
    %5102 = vmatpush.bf16.msra.mxu0 %v4313
    %5103 = vmatpush.bf16.msra.mxu0 %v4309
    %5104 = vmatpush.bf16.msra.mxu0 %v4305
    %5105 = vmatpush.bf16.msra.mxu0 %v4301
    %5106 = vmatpush.bf16.msra.mxu0 %v4297
    %5107 = vmatmul.bf16.gmra.mxu0 %v3221
    %v5108 = vpop.f32.mrf.mxu0
    %v5109 = vadd.f32 %v5096, %v5108
    %v5110 = vpop.f32.mrf.mxu0
    %5111 = vdwg.mxu0
    %5112 = vmatpush.bf16.msra.mxu0 %v4357
    %5113 = vmatpush.bf16.msra.mxu0 %v4353
    %5114 = vmatpush.bf16.msra.mxu0 %v4349
    %5115 = vmatpush.bf16.msra.mxu0 %v4345
    %5116 = vmatpush.bf16.msra.mxu0 %v4341
    %5117 = vmatpush.bf16.msra.mxu0 %v4337
    %5118 = vmatpush.bf16.msra.mxu0 %v4333
    %5119 = vmatpush.bf16.msra.mxu0 %v4329
    %5120 = vmatmul.bf16.gmra.mxu0 %v3222
    %v5121 = vpop.f32.mrf.mxu0
    %v5122 = vadd.f32 %v5109, %v5121
    %v5123 = vpop.f32.mrf.mxu0
    %5124 = vdwg.mxu0
    %5125 = vmatpush.bf16.msra.mxu0 %v4389
    %5126 = vmatpush.bf16.msra.mxu0 %v4385
    %5127 = vmatpush.bf16.msra.mxu0 %v4381
    %5128 = vmatpush.bf16.msra.mxu0 %v4377
    %5129 = vmatpush.bf16.msra.mxu0 %v4373
    %5130 = vmatpush.bf16.msra.mxu0 %v4369
    %5131 = vmatpush.bf16.msra.mxu0 %v4365
    %5132 = vmatpush.bf16.msra.mxu0 %v4361
    %5133 = vmatmul.bf16.gmra.mxu0 %v3223
    %v5134 = vpop.f32.mrf.mxu0
    %v5135 = vadd.f32 %v5122, %v5134
    %v5136 = vpop.f32.mrf.mxu0
    %5137 = vdwg.mxu0
    %5138 = vmatpush.bf16.msra.mxu0 %v4421
    %5139 = vmatpush.bf16.msra.mxu0 %v4417
    %5140 = vmatpush.bf16.msra.mxu0 %v4413
    %5141 = vmatpush.bf16.msra.mxu0 %v4409
    %5142 = vmatpush.bf16.msra.mxu0 %v4405
    %5143 = vmatpush.bf16.msra.mxu0 %v4401
    %5144 = vmatpush.bf16.msra.mxu0 %v4397
    %5145 = vmatpush.bf16.msra.mxu0 %v4393
    %5146 = vmatmul.bf16.gmra.mxu0 %v3224
    %v5147 = vpop.f32.mrf.mxu0
    %v5148 = vadd.f32 %v5135, %v5147
    %v5149 = vpop.f32.mrf.mxu0
    %5150 = vdwg.mxu0
    %5151 = vmatpush.bf16.msra.mxu0 %v4453
    %5152 = vmatpush.bf16.msra.mxu0 %v4449
    %5153 = vmatpush.bf16.msra.mxu0 %v4445
    %5154 = vmatpush.bf16.msra.mxu0 %v4441
    %5155 = vmatpush.bf16.msra.mxu0 %v4437
    %5156 = vmatpush.bf16.msra.mxu0 %v4433
    %5157 = vmatpush.bf16.msra.mxu0 %v4429
    %5158 = vmatpush.bf16.msra.mxu0 %v4425
    %5159 = vmatmul.bf16.gmra.mxu0 %v3225
    %v5160 = vpop.f32.mrf.mxu0
    %v5161 = vadd.f32 %v5148, %v5160
    %v5162 = vpop.f32.mrf.mxu0
    %5163 = vdwg.mxu0
    %5164 = vmatpush.bf16.msra.mxu0 %v4485
    %5165 = vmatpush.bf16.msra.mxu0 %v4481
    %5166 = vmatpush.bf16.msra.mxu0 %v4477
    %5167 = vmatpush.bf16.msra.mxu0 %v4473
    %5168 = vmatpush.bf16.msra.mxu0 %v4469
    %5169 = vmatpush.bf16.msra.mxu0 %v4465
    %5170 = vmatpush.bf16.msra.mxu0 %v4461
    %5171 = vmatpush.bf16.msra.mxu0 %v4457
    %5172 = vmatmul.bf16.gmra.mxu0 %v3226
    %v5173 = vpop.f32.mrf.mxu0
    %v5174 = vadd.f32 %v5161, %v5173
    %v5175 = vpop.f32.mrf.mxu0
    %5176 = vdwg.mxu0
    %5177 = vmatpush.bf16.msra.mxu0 %v4517
    %5178 = vmatpush.bf16.msra.mxu0 %v4513
    %5179 = vmatpush.bf16.msra.mxu0 %v4509
    %5180 = vmatpush.bf16.msra.mxu0 %v4505
    %5181 = vmatpush.bf16.msra.mxu0 %v4501
    %5182 = vmatpush.bf16.msra.mxu0 %v4497
    %5183 = vmatpush.bf16.msra.mxu0 %v4493
    %5184 = vmatpush.bf16.msra.mxu0 %v4489
    %5185 = vmatmul.bf16.gmra.mxu0 %v3227
    %v5186 = vpop.f32.mrf.mxu0
    %v5187 = vadd.f32 %v5174, %v5186
    %v5188 = vpop.f32.mrf.mxu0
    %5189 = vdwg.mxu0
    %v5190 = vmax.f32 %v4875, 0.0
    %v5191 = vmax.f32 %v4979, 0.0
    %v5192 = vmax.f32 %v5083, 0.0
    %v5193 = vmax.f32 %v5187, 0.0
    %v5194 = vpack.c.bf16 %v5190, %v5190
    %v5195 = vpack.c.bf16 %v5191, %v5191
    %v5196 = vpack.c.bf16 %v5192, %v5192
    %v5197 = vpack.c.bf16 %v5193, %v5193
    %v5198 = vld [vmem:[#allocation6] sm:$0xff]
    %v5199 = vld [vmem:[#allocation6 + $0x8] sm:$0xff]
    %v5200 = vld [vmem:[#allocation6 + $0x10] sm:$0xff]
    %v5201 = vld [vmem:[#allocation6 + $0x18] sm:$0xff]
    %v5202 = vld [vmem:[#allocation6 + $0x20] sm:$0xff]
    %v5203 = vld [vmem:[#allocation6 + $0x28] sm:$0xff]
    %v5204 = vld [vmem:[#allocation6 + $0x30] sm:$0xff]
    %v5205 = vld [vmem:[#allocation6 + $0x38] sm:$0xff]
    %v5206 = vld [vmem:[#allocation6 + $0x40] sm:$0xff]
    %v5207 = vld [vmem:[#allocation6 + $0x48] sm:$0xff]
    %v5208 = vld [vmem:[#allocation6 + $0x50] sm:$0xff]
    %v5209 = vld [vmem:[#allocation6 + $0x58] sm:$0xff]
    %v5210 = vld [vmem:[#allocation6 + $0x60] sm:$0xff]
    %v5211 = vld [vmem:[#allocation6 + $0x68] sm:$0xff]
    %v5212 = vld [vmem:[#allocation6 + $0x70] sm:$0xff]
    %v5213 = vld [vmem:[#allocation6 + $0x78] sm:$0xff]
    %v5214 = vld [vmem:[#allocation6 + $0x80] sm:$0xff]
    %v5215 = vld [vmem:[#allocation6 + $0x88] sm:$0xff]
    %v5216 = vld [vmem:[#allocation6 + $0x90] sm:$0xff]
    %v5217 = vld [vmem:[#allocation6 + $0x98] sm:$0xff]
    %v5218 = vld [vmem:[#allocation6 + $0xa0] sm:$0xff]
    %v5219 = vld [vmem:[#allocation6 + $0xa8] sm:$0xff]
    %v5220 = vld [vmem:[#allocation6 + $0xb0] sm:$0xff]
    %v5221 = vld [vmem:[#allocation6 + $0xb8] sm:$0xff]
    %v5222 = vld [vmem:[#allocation6 + $0xc0] sm:$0xff]
    %v5223 = vld [vmem:[#allocation6 + $0xc8] sm:$0xff]
    %v5224 = vld [vmem:[#allocation6 + $0xd0] sm:$0xff]
    %v5225 = vld [vmem:[#allocation6 + $0xd8] sm:$0xff]
    %v5226 = vld [vmem:[#allocation6 + $0xe0] sm:$0xff]
    %v5227 = vld [vmem:[#allocation6 + $0xe8] sm:$0xff]
    %v5228 = vld [vmem:[#allocation6 + $0xf0] sm:$0xff]
    %v5229 = vld [vmem:[#allocation6 + $0xf8] sm:$0xff]
    %v5230 = vld [vmem:[#allocation6 + $0x100] sm:$0xff]
    %v5231 = vld [vmem:[#allocation6 + $0x108] sm:$0xff]
    %v5232 = vld [vmem:[#allocation6 + $0x110] sm:$0xff]
    %v5233 = vld [vmem:[#allocation6 + $0x118] sm:$0xff]
    %v5234 = vld [vmem:[#allocation6 + $0x120] sm:$0xff]
    %v5235 = vld [vmem:[#allocation6 + $0x128] sm:$0xff]
    %v5236 = vld [vmem:[#allocation6 + $0x130] sm:$0xff]
    %v5237 = vld [vmem:[#allocation6 + $0x138] sm:$0xff]
    %v5238 = vld [vmem:[#allocation6 + $0x140] sm:$0xff]
    %v5239 = vld [vmem:[#allocation6 + $0x148] sm:$0xff]
    %v5240 = vld [vmem:[#allocation6 + $0x150] sm:$0xff]
    %v5241 = vld [vmem:[#allocation6 + $0x158] sm:$0xff]
    %v5242 = vld [vmem:[#allocation6 + $0x160] sm:$0xff]
    %v5243 = vld [vmem:[#allocation6 + $0x168] sm:$0xff]
    %v5244 = vld [vmem:[#allocation6 + $0x170] sm:$0xff]
    %v5245 = vld [vmem:[#allocation6 + $0x178] sm:$0xff]
    %v5246 = vld [vmem:[#allocation6 + $0x180] sm:$0xff]
    %v5247 = vld [vmem:[#allocation6 + $0x188] sm:$0xff]
    %v5248 = vld [vmem:[#allocation6 + $0x190] sm:$0xff]
    %v5249 = vld [vmem:[#allocation6 + $0x198] sm:$0xff]
    %v5250 = vld [vmem:[#allocation6 + $0x1a0] sm:$0xff]
    %v5251 = vld [vmem:[#allocation6 + $0x1a8] sm:$0xff]
    %v5252 = vld [vmem:[#allocation6 + $0x1b0] sm:$0xff]
    %v5253 = vld [vmem:[#allocation6 + $0x1b8] sm:$0xff]
    %v5254 = vld [vmem:[#allocation6 + $0x1c0] sm:$0xff]
    %v5255 = vld [vmem:[#allocation6 + $0x1c8] sm:$0xff]
    %v5256 = vld [vmem:[#allocation6 + $0x1d0] sm:$0xff]
    %v5257 = vld [vmem:[#allocation6 + $0x1d8] sm:$0xff]
    %v5258 = vld [vmem:[#allocation6 + $0x1e0] sm:$0xff]
    %v5259 = vld [vmem:[#allocation6 + $0x1e8] sm:$0xff]
    %v5260 = vld [vmem:[#allocation6 + $0x1f0] sm:$0xff]
    %v5261 = vld [vmem:[#allocation6 + $0x1f8] sm:$0xff]
    %v5262 = vld [vmem:[#allocation16] sm:$0x3]
    %v5264 = vperm.slane %v5262, 0
    %v5265 = vperm.slane %v5262, 1
    %v5332 = vunpack.c.l.b16 %v5198
    %v5333 = vunpack.c.h.b16 %v5198
    %v5334 = vunpack.c.l.b16 %v5199
    %v5335 = vunpack.c.h.b16 %v5199
    %v5336 = vunpack.c.l.b16 %v5200
    %v5337 = vunpack.c.h.b16 %v5200
    %v5338 = vunpack.c.l.b16 %v5201
    %v5339 = vunpack.c.h.b16 %v5201
    %v5340 = vunpack.c.l.b16 %v5202
    %v5341 = vunpack.c.h.b16 %v5202
    %v5342 = vunpack.c.l.b16 %v5203
    %v5343 = vunpack.c.h.b16 %v5203
    %v5344 = vunpack.c.l.b16 %v5204
    %v5345 = vunpack.c.h.b16 %v5204
    %v5346 = vunpack.c.l.b16 %v5205
    %v5347 = vunpack.c.h.b16 %v5205
    %v5348 = vunpack.c.l.b16 %v5206
    %v5349 = vunpack.c.h.b16 %v5206
    %v5350 = vunpack.c.l.b16 %v5207
    %v5351 = vunpack.c.h.b16 %v5207
    %v5352 = vunpack.c.l.b16 %v5208
    %v5353 = vunpack.c.h.b16 %v5208
    %v5354 = vunpack.c.l.b16 %v5209
    %v5355 = vunpack.c.h.b16 %v5209
    %v5356 = vunpack.c.l.b16 %v5210
    %v5357 = vunpack.c.h.b16 %v5210
    %v5358 = vunpack.c.l.b16 %v5211
    %v5359 = vunpack.c.h.b16 %v5211
    %v5360 = vunpack.c.l.b16 %v5212
    %v5361 = vunpack.c.h.b16 %v5212
    %v5362 = vunpack.c.l.b16 %v5213
    %v5363 = vunpack.c.h.b16 %v5213
    %v5364 = vunpack.c.l.b16 %v5214
    %v5365 = vunpack.c.h.b16 %v5214
    %v5366 = vunpack.c.l.b16 %v5215
    %v5367 = vunpack.c.h.b16 %v5215
    %v5368 = vunpack.c.l.b16 %v5216
    %v5369 = vunpack.c.h.b16 %v5216
    %v5370 = vunpack.c.l.b16 %v5217
    %v5371 = vunpack.c.h.b16 %v5217
    %v5372 = vunpack.c.l.b16 %v5218
    %v5373 = vunpack.c.h.b16 %v5218
    %v5374 = vunpack.c.l.b16 %v5219
    %v5375 = vunpack.c.h.b16 %v5219
    %v5376 = vunpack.c.l.b16 %v5220
    %v5377 = vunpack.c.h.b16 %v5220
    %v5378 = vunpack.c.l.b16 %v5221
    %v5379 = vunpack.c.h.b16 %v5221
    %v5380 = vunpack.c.l.b16 %v5222
    %v5381 = vunpack.c.h.b16 %v5222
    %v5382 = vunpack.c.l.b16 %v5223
    %v5383 = vunpack.c.h.b16 %v5223
    %v5384 = vunpack.c.l.b16 %v5224
    %v5385 = vunpack.c.h.b16 %v5224
    %v5386 = vunpack.c.l.b16 %v5225
    %v5387 = vunpack.c.h.b16 %v5225
    %v5388 = vunpack.c.l.b16 %v5226
    %v5389 = vunpack.c.h.b16 %v5226
    %v5390 = vunpack.c.l.b16 %v5227
    %v5391 = vunpack.c.h.b16 %v5227
    %v5392 = vunpack.c.l.b16 %v5228
    %v5393 = vunpack.c.h.b16 %v5228
    %v5394 = vunpack.c.l.b16 %v5229
    %v5395 = vunpack.c.h.b16 %v5229
    %v5396 = vunpack.c.l.b16 %v5230
    %v5397 = vunpack.c.h.b16 %v5230
    %v5398 = vunpack.c.l.b16 %v5231
    %v5399 = vunpack.c.h.b16 %v5231
    %v5400 = vunpack.c.l.b16 %v5232
    %v5401 = vunpack.c.h.b16 %v5232
    %v5402 = vunpack.c.l.b16 %v5233
    %v5403 = vunpack.c.h.b16 %v5233
    %v5404 = vunpack.c.l.b16 %v5234
    %v5405 = vunpack.c.h.b16 %v5234
    %v5406 = vunpack.c.l.b16 %v5235
    %v5407 = vunpack.c.h.b16 %v5235
    %v5408 = vunpack.c.l.b16 %v5236
    %v5409 = vunpack.c.h.b16 %v5236
    %v5410 = vunpack.c.l.b16 %v5237
    %v5411 = vunpack.c.h.b16 %v5237
    %v5412 = vunpack.c.l.b16 %v5238
    %v5413 = vunpack.c.h.b16 %v5238
    %v5414 = vunpack.c.l.b16 %v5239
    %v5415 = vunpack.c.h.b16 %v5239
    %v5416 = vunpack.c.l.b16 %v5240
    %v5417 = vunpack.c.h.b16 %v5240
    %v5418 = vunpack.c.l.b16 %v5241
    %v5419 = vunpack.c.h.b16 %v5241
    %v5420 = vunpack.c.l.b16 %v5242
    %v5421 = vunpack.c.h.b16 %v5242
    %v5422 = vunpack.c.l.b16 %v5243
    %v5423 = vunpack.c.h.b16 %v5243
    %v5424 = vunpack.c.l.b16 %v5244
    %v5425 = vunpack.c.h.b16 %v5244
    %v5426 = vunpack.c.l.b16 %v5245
    %v5427 = vunpack.c.h.b16 %v5245
    %v5428 = vunpack.c.l.b16 %v5246
    %v5429 = vunpack.c.h.b16 %v5246
    %v5430 = vunpack.c.l.b16 %v5247
    %v5431 = vunpack.c.h.b16 %v5247
    %v5432 = vunpack.c.l.b16 %v5248
    %v5433 = vunpack.c.h.b16 %v5248
    %v5434 = vunpack.c.l.b16 %v5249
    %v5435 = vunpack.c.h.b16 %v5249
    %v5436 = vunpack.c.l.b16 %v5250
    %v5437 = vunpack.c.h.b16 %v5250
    %v5438 = vunpack.c.l.b16 %v5251
    %v5439 = vunpack.c.h.b16 %v5251
    %v5440 = vunpack.c.l.b16 %v5252
    %v5441 = vunpack.c.h.b16 %v5252
    %v5442 = vunpack.c.l.b16 %v5253
    %v5443 = vunpack.c.h.b16 %v5253
    %v5444 = vunpack.c.l.b16 %v5254
    %v5445 = vunpack.c.h.b16 %v5254
    %v5446 = vunpack.c.l.b16 %v5255
    %v5447 = vunpack.c.h.b16 %v5255
    %v5448 = vunpack.c.l.b16 %v5256
    %v5449 = vunpack.c.h.b16 %v5256
    %v5450 = vunpack.c.l.b16 %v5257
    %v5451 = vunpack.c.h.b16 %v5257
    %v5452 = vunpack.c.l.b16 %v5258
    %v5453 = vunpack.c.h.b16 %v5258
    %v5454 = vunpack.c.l.b16 %v5259
    %v5455 = vunpack.c.h.b16 %v5259
    %v5456 = vunpack.c.l.b16 %v5260
    %v5457 = vunpack.c.h.b16 %v5260
    %v5458 = vunpack.c.l.b16 %v5261
    %v5459 = vunpack.c.h.b16 %v5261
    %v5460 = vpack.c.b16 %v5334, %v5332
    %v5461 = vpack.c.b16 %v5335, %v5333
    %v5462 = vpack.c.b16 %v5338, %v5336
    %v5463 = vpack.c.b16 %v5339, %v5337
    %v5464 = vpack.c.b16 %v5342, %v5340
    %v5465 = vpack.c.b16 %v5343, %v5341
    %v5466 = vpack.c.b16 %v5346, %v5344
    %v5467 = vpack.c.b16 %v5347, %v5345
    %v5468 = vpack.c.b16 %v5350, %v5348
    %v5469 = vpack.c.b16 %v5351, %v5349
    %v5470 = vpack.c.b16 %v5354, %v5352
    %v5471 = vpack.c.b16 %v5355, %v5353
    %v5472 = vpack.c.b16 %v5358, %v5356
    %v5473 = vpack.c.b16 %v5359, %v5357
    %v5474 = vpack.c.b16 %v5362, %v5360
    %v5475 = vpack.c.b16 %v5363, %v5361
    %v5476 = vpack.c.b16 %v5366, %v5364
    %v5477 = vpack.c.b16 %v5367, %v5365
    %v5478 = vpack.c.b16 %v5370, %v5368
    %v5479 = vpack.c.b16 %v5371, %v5369
    %v5480 = vpack.c.b16 %v5374, %v5372
    %v5481 = vpack.c.b16 %v5375, %v5373
    %v5482 = vpack.c.b16 %v5378, %v5376
    %v5483 = vpack.c.b16 %v5379, %v5377
    %v5484 = vpack.c.b16 %v5382, %v5380
    %v5485 = vpack.c.b16 %v5383, %v5381
    %v5486 = vpack.c.b16 %v5386, %v5384
    %v5487 = vpack.c.b16 %v5387, %v5385
    %v5488 = vpack.c.b16 %v5390, %v5388
    %v5489 = vpack.c.b16 %v5391, %v5389
    %v5490 = vpack.c.b16 %v5394, %v5392
    %v5491 = vpack.c.b16 %v5395, %v5393
    %v5492 = vpack.c.b16 %v5398, %v5396
    %v5493 = vpack.c.b16 %v5399, %v5397
    %v5494 = vpack.c.b16 %v5402, %v5400
    %v5495 = vpack.c.b16 %v5403, %v5401
    %v5496 = vpack.c.b16 %v5406, %v5404
    %v5497 = vpack.c.b16 %v5407, %v5405
    %v5498 = vpack.c.b16 %v5410, %v5408
    %v5499 = vpack.c.b16 %v5411, %v5409
    %v5500 = vpack.c.b16 %v5414, %v5412
    %v5501 = vpack.c.b16 %v5415, %v5413
    %v5502 = vpack.c.b16 %v5418, %v5416
    %v5503 = vpack.c.b16 %v5419, %v5417
    %v5504 = vpack.c.b16 %v5422, %v5420
    %v5505 = vpack.c.b16 %v5423, %v5421
    %v5506 = vpack.c.b16 %v5426, %v5424
    %v5507 = vpack.c.b16 %v5427, %v5425
    %v5508 = vpack.c.b16 %v5430, %v5428
    %v5509 = vpack.c.b16 %v5431, %v5429
    %v5510 = vpack.c.b16 %v5434, %v5432
    %v5511 = vpack.c.b16 %v5435, %v5433
    %v5512 = vpack.c.b16 %v5438, %v5436
    %v5513 = vpack.c.b16 %v5439, %v5437
    %v5514 = vpack.c.b16 %v5442, %v5440
    %v5515 = vpack.c.b16 %v5443, %v5441
    %v5516 = vpack.c.b16 %v5446, %v5444
    %v5517 = vpack.c.b16 %v5447, %v5445
    %v5518 = vpack.c.b16 %v5450, %v5448
    %v5519 = vpack.c.b16 %v5451, %v5449
    %v5520 = vpack.c.b16 %v5454, %v5452
    %v5521 = vpack.c.b16 %v5455, %v5453
    %v5522 = vpack.c.b16 %v5458, %v5456
    %v5523 = vpack.c.b16 %v5459, %v5457
    %5588 = vmatpush.bf16.msra.mxu0 %v5474
    %5589 = vmatpush.bf16.msra.mxu0 %v5472
    %5590 = vmatpush.bf16.msra.mxu0 %v5470
    %5591 = vmatpush.bf16.msra.mxu0 %v5468
    %5592 = vmatpush.bf16.msra.mxu0 %v5466
    %5593 = vmatpush.bf16.msra.mxu0 %v5464
    %5594 = vmatpush.bf16.msra.mxu0 %v5462
    %5595 = vmatpush.bf16.msra.mxu0 %v5460
    %5596 = vmatmul.bf16.gmra.mxu0 %v5194
    %v5597 = vpop.f32.mrf.mxu0
    %v5598 = vadd.f32 %v5264, %v5597
    %v5599 = vpop.f32.mrf.mxu0
    %5600 = vdwg.mxu0
    %5601 = vmatpush.bf16.msra.mxu0 %v5490
    %5602 = vmatpush.bf16.msra.mxu0 %v5488
    %5603 = vmatpush.bf16.msra.mxu0 %v5486
    %5604 = vmatpush.bf16.msra.mxu0 %v5484
    %5605 = vmatpush.bf16.msra.mxu0 %v5482
    %5606 = vmatpush.bf16.msra.mxu0 %v5480
    %5607 = vmatpush.bf16.msra.mxu0 %v5478
    %5608 = vmatpush.bf16.msra.mxu0 %v5476
    %5609 = vmatmul.bf16.gmra.mxu0 %v5195
    %v5610 = vpop.f32.mrf.mxu0
    %v5611 = vadd.f32 %v5598, %v5610
    %v5612 = vpop.f32.mrf.mxu0
    %5613 = vdwg.mxu0
    %5614 = vmatpush.bf16.msra.mxu0 %v5506
    %5615 = vmatpush.bf16.msra.mxu0 %v5504
    %5616 = vmatpush.bf16.msra.mxu0 %v5502
    %5617 = vmatpush.bf16.msra.mxu0 %v5500
    %5618 = vmatpush.bf16.msra.mxu0 %v5498
    %5619 = vmatpush.bf16.msra.mxu0 %v5496
    %5620 = vmatpush.bf16.msra.mxu0 %v5494
    %5621 = vmatpush.bf16.msra.mxu0 %v5492
    %5622 = vmatmul.bf16.gmra.mxu0 %v5196
    %v5623 = vpop.f32.mrf.mxu0
    %v5624 = vadd.f32 %v5611, %v5623
    %v5625 = vpop.f32.mrf.mxu0
    %5626 = vdwg.mxu0
    %5627 = vmatpush.bf16.msra.mxu0 %v5522
    %5628 = vmatpush.bf16.msra.mxu0 %v5520
    %5629 = vmatpush.bf16.msra.mxu0 %v5518
    %5630 = vmatpush.bf16.msra.mxu0 %v5516
    %5631 = vmatpush.bf16.msra.mxu0 %v5514
    %5632 = vmatpush.bf16.msra.mxu0 %v5512
    %5633 = vmatpush.bf16.msra.mxu0 %v5510
    %5634 = vmatpush.bf16.msra.mxu0 %v5508
    %5635 = vmatmul.bf16.gmra.mxu0 %v5197
    %v5636 = vpop.f32.mrf.mxu0
    %v5637 = vadd.f32 %v5624, %v5636
    %v5638 = vpop.f32.mrf.mxu0
    %5639 = vdwg.mxu0
    %5640 = vmatpush.bf16.msra.mxu0 %v5475
    %5641 = vmatpush.bf16.msra.mxu0 %v5473
    %5642 = vmatpush.bf16.msra.mxu0 %v5471
    %5643 = vmatpush.bf16.msra.mxu0 %v5469
    %5644 = vmatpush.bf16.msra.mxu0 %v5467
    %5645 = vmatpush.bf16.msra.mxu0 %v5465
    %5646 = vmatpush.bf16.msra.mxu0 %v5463
    %5647 = vmatpush.bf16.msra.mxu0 %v5461
    %5648 = vmatmul.bf16.gmra.mxu0 %v5194
    %v5649 = vpop.f32.mrf.mxu0
    %v5650 = vadd.f32 %v5265, %v5649
    %v5651 = vpop.f32.mrf.mxu0
    %5652 = vdwg.mxu0
    %5653 = vmatpush.bf16.msra.mxu0 %v5491
    %5654 = vmatpush.bf16.msra.mxu0 %v5489
    %5655 = vmatpush.bf16.msra.mxu0 %v5487
    %5656 = vmatpush.bf16.msra.mxu0 %v5485
    %5657 = vmatpush.bf16.msra.mxu0 %v5483
    %5658 = vmatpush.bf16.msra.mxu0 %v5481
    %5659 = vmatpush.bf16.msra.mxu0 %v5479
    %5660 = vmatpush.bf16.msra.mxu0 %v5477
    %5661 = vmatmul.bf16.gmra.mxu0 %v5195
    %v5662 = vpop.f32.mrf.mxu0
    %v5663 = vadd.f32 %v5650, %v5662
    %v5664 = vpop.f32.mrf.mxu0
    %5665 = vdwg.mxu0
    %5666 = vmatpush.bf16.msra.mxu0 %v5507
    %5667 = vmatpush.bf16.msra.mxu0 %v5505
    %5668 = vmatpush.bf16.msra.mxu0 %v5503
    %5669 = vmatpush.bf16.msra.mxu0 %v5501
    %5670 = vmatpush.bf16.msra.mxu0 %v5499
    %5671 = vmatpush.bf16.msra.mxu0 %v5497
    %5672 = vmatpush.bf16.msra.mxu0 %v5495
    %5673 = vmatpush.bf16.msra.mxu0 %v5493
    %5674 = vmatmul.bf16.gmra.mxu0 %v5196
    %v5675 = vpop.f32.mrf.mxu0
    %v5676 = vadd.f32 %v5663, %v5675
    %v5677 = vpop.f32.mrf.mxu0
    %5678 = vdwg.mxu0
    %5679 = vmatpush.bf16.msra.mxu0 %v5523
    %5680 = vmatpush.bf16.msra.mxu0 %v5521
    %5681 = vmatpush.bf16.msra.mxu0 %v5519
    %5682 = vmatpush.bf16.msra.mxu0 %v5517
    %5683 = vmatpush.bf16.msra.mxu0 %v5515
    %5684 = vmatpush.bf16.msra.mxu0 %v5513
    %5685 = vmatpush.bf16.msra.mxu0 %v5511
    %5686 = vmatpush.bf16.msra.mxu0 %v5509
    %5687 = vmatmul.bf16.gmra.mxu0 %v5197
    %v5688 = vpop.f32.mrf.mxu0
    %v5689 = vadd.f32 %v5676, %v5688
    %v5690 = vpop.f32.mrf.mxu0
    %5691 = vdwg.mxu0
    %v5692 = vmax.f32 %v5637, 0.0
    %v5693 = vmax.f32 %v5689, 0.0
    %v5694 = vpack.c.bf16 %v5692, %v5692
    %v5695 = vpack.c.bf16 %v5693, %v5693
    %v5696 = vld [vmem:[#allocation7] sm:$0xff]
    %v5697 = vld [vmem:[#allocation7 + $0x8] sm:$0xff]
    %v5698 = vld [vmem:[#allocation7 + $0x10] sm:$0xff]
    %v5699 = vld [vmem:[#allocation7 + $0x18] sm:$0xff]
    %v5700 = vld [vmem:[#allocation7 + $0x20] sm:$0xff]
    %v5701 = vld [vmem:[#allocation7 + $0x28] sm:$0xff]
    %v5702 = vld [vmem:[#allocation7 + $0x30] sm:$0xff]
    %v5703 = vld [vmem:[#allocation7 + $0x38] sm:$0xff]
    %v5704 = vld [vmem:[#allocation7 + $0x40] sm:$0xff]
    %v5705 = vld [vmem:[#allocation7 + $0x48] sm:$0xff]
    %v5706 = vld [vmem:[#allocation7 + $0x50] sm:$0xff]
    %v5707 = vld [vmem:[#allocation7 + $0x58] sm:$0xff]
    %v5708 = vld [vmem:[#allocation7 + $0x60] sm:$0xff]
    %v5709 = vld [vmem:[#allocation7 + $0x68] sm:$0xff]
    %v5710 = vld [vmem:[#allocation7 + $0x70] sm:$0xff]
    %v5711 = vld [vmem:[#allocation7 + $0x78] sm:$0xff]
    %v5712 = vld [vmem:[#allocation7 + $0x80] sm:$0xff]
    %v5713 = vld [vmem:[#allocation7 + $0x88] sm:$0xff]
    %v5714 = vld [vmem:[#allocation7 + $0x90] sm:$0xff]
    %v5715 = vld [vmem:[#allocation7 + $0x98] sm:$0xff]
    %v5716 = vld [vmem:[#allocation7 + $0xa0] sm:$0xff]
    %v5717 = vld [vmem:[#allocation7 + $0xa8] sm:$0xff]
    %v5718 = vld [vmem:[#allocation7 + $0xb0] sm:$0xff]
    %v5719 = vld [vmem:[#allocation7 + $0xb8] sm:$0xff]
    %v5720 = vld [vmem:[#allocation7 + $0xc0] sm:$0xff]
    %v5721 = vld [vmem:[#allocation7 + $0xc8] sm:$0xff]
    %v5722 = vld [vmem:[#allocation7 + $0xd0] sm:$0xff]
    %v5723 = vld [vmem:[#allocation7 + $0xd8] sm:$0xff]
    %v5724 = vld [vmem:[#allocation7 + $0xe0] sm:$0xff]
    %v5725 = vld [vmem:[#allocation7 + $0xe8] sm:$0xff]
    %v5726 = vld [vmem:[#allocation7 + $0xf0] sm:$0xff]
    %v5727 = vld [vmem:[#allocation7 + $0xf8] sm:$0xff]
    %v5728 = vld [vmem:[#allocation7 + $0x100] sm:$0xff]
    %v5729 = vld [vmem:[#allocation7 + $0x108] sm:$0xff]
    %v5730 = vld [vmem:[#allocation7 + $0x110] sm:$0xff]
    %v5731 = vld [vmem:[#allocation7 + $0x118] sm:$0xff]
    %v5732 = vld [vmem:[#allocation7 + $0x120] sm:$0xff]
    %v5733 = vld [vmem:[#allocation7 + $0x128] sm:$0xff]
    %v5734 = vld [vmem:[#allocation7 + $0x130] sm:$0xff]
    %v5735 = vld [vmem:[#allocation7 + $0x138] sm:$0xff]
    %v5736 = vld [vmem:[#allocation7 + $0x140] sm:$0xff]
    %v5737 = vld [vmem:[#allocation7 + $0x148] sm:$0xff]
    %v5738 = vld [vmem:[#allocation7 + $0x150] sm:$0xff]
    %v5739 = vld [vmem:[#allocation7 + $0x158] sm:$0xff]
    %v5740 = vld [vmem:[#allocation7 + $0x160] sm:$0xff]
    %v5741 = vld [vmem:[#allocation7 + $0x168] sm:$0xff]
    %v5742 = vld [vmem:[#allocation7 + $0x170] sm:$0xff]
    %v5743 = vld [vmem:[#allocation7 + $0x178] sm:$0xff]
    %v5744 = vld [vmem:[#allocation7 + $0x180] sm:$0xff]
    %v5745 = vld [vmem:[#allocation7 + $0x188] sm:$0xff]
    %v5746 = vld [vmem:[#allocation7 + $0x190] sm:$0xff]
    %v5747 = vld [vmem:[#allocation7 + $0x198] sm:$0xff]
    %v5748 = vld [vmem:[#allocation7 + $0x1a0] sm:$0xff]
    %v5749 = vld [vmem:[#allocation7 + $0x1a8] sm:$0xff]
    %v5750 = vld [vmem:[#allocation7 + $0x1b0] sm:$0xff]
    %v5751 = vld [vmem:[#allocation7 + $0x1b8] sm:$0xff]
    %v5752 = vld [vmem:[#allocation7 + $0x1c0] sm:$0xff]
    %v5753 = vld [vmem:[#allocation7 + $0x1c8] sm:$0xff]
    %v5754 = vld [vmem:[#allocation7 + $0x1d0] sm:$0xff]
    %v5755 = vld [vmem:[#allocation7 + $0x1d8] sm:$0xff]
    %v5756 = vld [vmem:[#allocation7 + $0x1e0] sm:$0xff]
    %v5757 = vld [vmem:[#allocation7 + $0x1e8] sm:$0xff]
    %v5758 = vld [vmem:[#allocation7 + $0x1f0] sm:$0xff]
    %v5759 = vld [vmem:[#allocation7 + $0x1f8] sm:$0xff]
    %v5760 = vld [vmem:[#allocation18] sm:$0xf]
    %v5762 = vperm.slane %v5760, 0
    %v5763 = vperm.slane %v5760, 1
    %v5764 = vperm.slane %v5760, 2
    %v5765 = vperm.slane %v5760, 3
    %v5834 = vunpack.c.l.b16 %v5696
    %v5835 = vunpack.c.h.b16 %v5696
    %v5836 = vunpack.c.l.b16 %v5697
    %v5837 = vunpack.c.h.b16 %v5697
    %v5838 = vunpack.c.l.b16 %v5698
    %v5839 = vunpack.c.h.b16 %v5698
    %v5840 = vunpack.c.l.b16 %v5699
    %v5841 = vunpack.c.h.b16 %v5699
    %v5842 = vunpack.c.l.b16 %v5700
    %v5843 = vunpack.c.h.b16 %v5700
    %v5844 = vunpack.c.l.b16 %v5701
    %v5845 = vunpack.c.h.b16 %v5701
    %v5846 = vunpack.c.l.b16 %v5702
    %v5847 = vunpack.c.h.b16 %v5702
    %v5848 = vunpack.c.l.b16 %v5703
    %v5849 = vunpack.c.h.b16 %v5703
    %v5850 = vunpack.c.l.b16 %v5704
    %v5851 = vunpack.c.h.b16 %v5704
    %v5852 = vunpack.c.l.b16 %v5705
    %v5853 = vunpack.c.h.b16 %v5705
    %v5854 = vunpack.c.l.b16 %v5706
    %v5855 = vunpack.c.h.b16 %v5706
    %v5856 = vunpack.c.l.b16 %v5707
    %v5857 = vunpack.c.h.b16 %v5707
    %v5858 = vunpack.c.l.b16 %v5708
    %v5859 = vunpack.c.h.b16 %v5708
    %v5860 = vunpack.c.l.b16 %v5709
    %v5861 = vunpack.c.h.b16 %v5709
    %v5862 = vunpack.c.l.b16 %v5710
    %v5863 = vunpack.c.h.b16 %v5710
    %v5864 = vunpack.c.l.b16 %v5711
    %v5865 = vunpack.c.h.b16 %v5711
    %v5866 = vunpack.c.l.b16 %v5712
    %v5867 = vunpack.c.h.b16 %v5712
    %v5868 = vunpack.c.l.b16 %v5713
    %v5869 = vunpack.c.h.b16 %v5713
    %v5870 = vunpack.c.l.b16 %v5714
    %v5871 = vunpack.c.h.b16 %v5714
    %v5872 = vunpack.c.l.b16 %v5715
    %v5873 = vunpack.c.h.b16 %v5715
    %v5874 = vunpack.c.l.b16 %v5716
    %v5875 = vunpack.c.h.b16 %v5716
    %v5876 = vunpack.c.l.b16 %v5717
    %v5877 = vunpack.c.h.b16 %v5717
    %v5878 = vunpack.c.l.b16 %v5718
    %v5879 = vunpack.c.h.b16 %v5718
    %v5880 = vunpack.c.l.b16 %v5719
    %v5881 = vunpack.c.h.b16 %v5719
    %v5882 = vunpack.c.l.b16 %v5720
    %v5883 = vunpack.c.h.b16 %v5720
    %v5884 = vunpack.c.l.b16 %v5721
    %v5885 = vunpack.c.h.b16 %v5721
    %v5886 = vunpack.c.l.b16 %v5722
    %v5887 = vunpack.c.h.b16 %v5722
    %v5888 = vunpack.c.l.b16 %v5723
    %v5889 = vunpack.c.h.b16 %v5723
    %v5890 = vunpack.c.l.b16 %v5724
    %v5891 = vunpack.c.h.b16 %v5724
    %v5892 = vunpack.c.l.b16 %v5725
    %v5893 = vunpack.c.h.b16 %v5725
    %v5894 = vunpack.c.l.b16 %v5726
    %v5895 = vunpack.c.h.b16 %v5726
    %v5896 = vunpack.c.l.b16 %v5727
    %v5897 = vunpack.c.h.b16 %v5727
    %v5898 = vunpack.c.l.b16 %v5728
    %v5899 = vunpack.c.h.b16 %v5728
    %v5900 = vunpack.c.l.b16 %v5729
    %v5901 = vunpack.c.h.b16 %v5729
    %v5902 = vunpack.c.l.b16 %v5730
    %v5903 = vunpack.c.h.b16 %v5730
    %v5904 = vunpack.c.l.b16 %v5731
    %v5905 = vunpack.c.h.b16 %v5731
    %v5906 = vunpack.c.l.b16 %v5732
    %v5907 = vunpack.c.h.b16 %v5732
    %v5908 = vunpack.c.l.b16 %v5733
    %v5909 = vunpack.c.h.b16 %v5733
    %v5910 = vunpack.c.l.b16 %v5734
    %v5911 = vunpack.c.h.b16 %v5734
    %v5912 = vunpack.c.l.b16 %v5735
    %v5913 = vunpack.c.h.b16 %v5735
    %v5914 = vunpack.c.l.b16 %v5736
    %v5915 = vunpack.c.h.b16 %v5736
    %v5916 = vunpack.c.l.b16 %v5737
    %v5917 = vunpack.c.h.b16 %v5737
    %v5918 = vunpack.c.l.b16 %v5738
    %v5919 = vunpack.c.h.b16 %v5738
    %v5920 = vunpack.c.l.b16 %v5739
    %v5921 = vunpack.c.h.b16 %v5739
    %v5922 = vunpack.c.l.b16 %v5740
    %v5923 = vunpack.c.h.b16 %v5740
    %v5924 = vunpack.c.l.b16 %v5741
    %v5925 = vunpack.c.h.b16 %v5741
    %v5926 = vunpack.c.l.b16 %v5742
    %v5927 = vunpack.c.h.b16 %v5742
    %v5928 = vunpack.c.l.b16 %v5743
    %v5929 = vunpack.c.h.b16 %v5743
    %v5930 = vunpack.c.l.b16 %v5744
    %v5931 = vunpack.c.h.b16 %v5744
    %v5932 = vunpack.c.l.b16 %v5745
    %v5933 = vunpack.c.h.b16 %v5745
    %v5934 = vunpack.c.l.b16 %v5746
    %v5935 = vunpack.c.h.b16 %v5746
    %v5936 = vunpack.c.l.b16 %v5747
    %v5937 = vunpack.c.h.b16 %v5747
    %v5938 = vunpack.c.l.b16 %v5748
    %v5939 = vunpack.c.h.b16 %v5748
    %v5940 = vunpack.c.l.b16 %v5749
    %v5941 = vunpack.c.h.b16 %v5749
    %v5942 = vunpack.c.l.b16 %v5750
    %v5943 = vunpack.c.h.b16 %v5750
    %v5944 = vunpack.c.l.b16 %v5751
    %v5945 = vunpack.c.h.b16 %v5751
    %v5946 = vunpack.c.l.b16 %v5752
    %v5947 = vunpack.c.h.b16 %v5752
    %v5948 = vunpack.c.l.b16 %v5753
    %v5949 = vunpack.c.h.b16 %v5753
    %v5950 = vunpack.c.l.b16 %v5754
    %v5951 = vunpack.c.h.b16 %v5754
    %v5952 = vunpack.c.l.b16 %v5755
    %v5953 = vunpack.c.h.b16 %v5755
    %v5954 = vunpack.c.l.b16 %v5756
    %v5955 = vunpack.c.h.b16 %v5756
    %v5956 = vunpack.c.l.b16 %v5757
    %v5957 = vunpack.c.h.b16 %v5757
    %v5958 = vunpack.c.l.b16 %v5758
    %v5959 = vunpack.c.h.b16 %v5758
    %v5960 = vunpack.c.l.b16 %v5759
    %v5961 = vunpack.c.h.b16 %v5759
    %v5962 = vpack.c.b16 %v5838, %v5834
    %v5963 = vpack.c.b16 %v5839, %v5835
    %v5964 = vpack.c.b16 %v5840, %v5836
    %v5965 = vpack.c.b16 %v5841, %v5837
    %v5966 = vpack.c.b16 %v5846, %v5842
    %v5967 = vpack.c.b16 %v5847, %v5843
    %v5968 = vpack.c.b16 %v5848, %v5844
    %v5969 = vpack.c.b16 %v5849, %v5845
    %v5970 = vpack.c.b16 %v5854, %v5850
    %v5971 = vpack.c.b16 %v5855, %v5851
    %v5972 = vpack.c.b16 %v5856, %v5852
    %v5973 = vpack.c.b16 %v5857, %v5853
    %v5974 = vpack.c.b16 %v5862, %v5858
    %v5975 = vpack.c.b16 %v5863, %v5859
    %v5976 = vpack.c.b16 %v5864, %v5860
    %v5977 = vpack.c.b16 %v5865, %v5861
    %v5978 = vpack.c.b16 %v5870, %v5866
    %v5979 = vpack.c.b16 %v5871, %v5867
    %v5980 = vpack.c.b16 %v5872, %v5868
    %v5981 = vpack.c.b16 %v5873, %v5869
    %v5982 = vpack.c.b16 %v5878, %v5874
    %v5983 = vpack.c.b16 %v5879, %v5875
    %v5984 = vpack.c.b16 %v5880, %v5876
    %v5985 = vpack.c.b16 %v5881, %v5877
    %v5986 = vpack.c.b16 %v5886, %v5882
    %v5987 = vpack.c.b16 %v5887, %v5883
    %v5988 = vpack.c.b16 %v5888, %v5884
    %v5989 = vpack.c.b16 %v5889, %v5885
    %v5990 = vpack.c.b16 %v5894, %v5890
    %v5991 = vpack.c.b16 %v5895, %v5891
    %v5992 = vpack.c.b16 %v5896, %v5892
    %v5993 = vpack.c.b16 %v5897, %v5893
    %v5994 = vpack.c.b16 %v5902, %v5898
    %v5995 = vpack.c.b16 %v5903, %v5899
    %v5996 = vpack.c.b16 %v5904, %v5900
    %v5997 = vpack.c.b16 %v5905, %v5901
    %v5998 = vpack.c.b16 %v5910, %v5906
    %v5999 = vpack.c.b16 %v5911, %v5907
    %v6000 = vpack.c.b16 %v5912, %v5908
    %v6001 = vpack.c.b16 %v5913, %v5909
    %v6002 = vpack.c.b16 %v5918, %v5914
    %v6003 = vpack.c.b16 %v5919, %v5915
    %v6004 = vpack.c.b16 %v5920, %v5916
    %v6005 = vpack.c.b16 %v5921, %v5917
    %v6006 = vpack.c.b16 %v5926, %v5922
    %v6007 = vpack.c.b16 %v5927, %v5923
    %v6008 = vpack.c.b16 %v5928, %v5924
    %v6009 = vpack.c.b16 %v5929, %v5925
    %v6010 = vpack.c.b16 %v5934, %v5930
    %v6011 = vpack.c.b16 %v5935, %v5931
    %v6012 = vpack.c.b16 %v5936, %v5932
    %v6013 = vpack.c.b16 %v5937, %v5933
    %v6014 = vpack.c.b16 %v5942, %v5938
    %v6015 = vpack.c.b16 %v5943, %v5939
    %v6016 = vpack.c.b16 %v5944, %v5940
    %v6017 = vpack.c.b16 %v5945, %v5941
    %v6018 = vpack.c.b16 %v5950, %v5946
    %v6019 = vpack.c.b16 %v5951, %v5947
    %v6020 = vpack.c.b16 %v5952, %v5948
    %v6021 = vpack.c.b16 %v5953, %v5949
    %v6022 = vpack.c.b16 %v5958, %v5954
    %v6023 = vpack.c.b16 %v5959, %v5955
    %v6024 = vpack.c.b16 %v5960, %v5956
    %v6025 = vpack.c.b16 %v5961, %v5957
    %6090 = vmatpush.bf16.msra.mxu0 %v5990
    %6091 = vmatpush.bf16.msra.mxu0 %v5986
    %6092 = vmatpush.bf16.msra.mxu0 %v5982
    %6093 = vmatpush.bf16.msra.mxu0 %v5978
    %6094 = vmatpush.bf16.msra.mxu0 %v5974
    %6095 = vmatpush.bf16.msra.mxu0 %v5970
    %6096 = vmatpush.bf16.msra.mxu0 %v5966
    %6097 = vmatpush.bf16.msra.mxu0 %v5962
    %6098 = vmatmul.bf16.gmra.mxu0 %v5694
    %v6099 = vpop.f32.mrf.mxu0
    %v6100 = vadd.f32 %v5762, %v6099
    %v6101 = vpop.f32.mrf.mxu0
    %6102 = vdwg.mxu0
    %6103 = vmatpush.bf16.msra.mxu0 %v6022
    %6104 = vmatpush.bf16.msra.mxu0 %v6018
    %6105 = vmatpush.bf16.msra.mxu0 %v6014
    %6106 = vmatpush.bf16.msra.mxu0 %v6010
    %6107 = vmatpush.bf16.msra.mxu0 %v6006
    %6108 = vmatpush.bf16.msra.mxu0 %v6002
    %6109 = vmatpush.bf16.msra.mxu0 %v5998
    %6110 = vmatpush.bf16.msra.mxu0 %v5994
    %6111 = vmatmul.bf16.gmra.mxu0 %v5695
    %v6112 = vpop.f32.mrf.mxu0
    %v6113 = vadd.f32 %v6100, %v6112
    %v6114 = vpop.f32.mrf.mxu0
    %6115 = vdwg.mxu0
    %6116 = vmatpush.bf16.msra.mxu0 %v5991
    %6117 = vmatpush.bf16.msra.mxu0 %v5987
    %6118 = vmatpush.bf16.msra.mxu0 %v5983
    %6119 = vmatpush.bf16.msra.mxu0 %v5979
    %6120 = vmatpush.bf16.msra.mxu0 %v5975
    %6121 = vmatpush.bf16.msra.mxu0 %v5971
    %6122 = vmatpush.bf16.msra.mxu0 %v5967
    %6123 = vmatpush.bf16.msra.mxu0 %v5963
    %6124 = vmatmul.bf16.gmra.mxu0 %v5694
    %v6125 = vpop.f32.mrf.mxu0
    %v6126 = vadd.f32 %v5763, %v6125
    %v6127 = vpop.f32.mrf.mxu0
    %6128 = vdwg.mxu0
    %6129 = vmatpush.bf16.msra.mxu0 %v6023
    %6130 = vmatpush.bf16.msra.mxu0 %v6019
    %6131 = vmatpush.bf16.msra.mxu0 %v6015
    %6132 = vmatpush.bf16.msra.mxu0 %v6011
    %6133 = vmatpush.bf16.msra.mxu0 %v6007
    %6134 = vmatpush.bf16.msra.mxu0 %v6003
    %6135 = vmatpush.bf16.msra.mxu0 %v5999
    %6136 = vmatpush.bf16.msra.mxu0 %v5995
    %6137 = vmatmul.bf16.gmra.mxu0 %v5695
    %v6138 = vpop.f32.mrf.mxu0
    %v6139 = vadd.f32 %v6126, %v6138
    %v6140 = vpop.f32.mrf.mxu0
    %6141 = vdwg.mxu0
    %6142 = vmatpush.bf16.msra.mxu0 %v5992
    %6143 = vmatpush.bf16.msra.mxu0 %v5988
    %6144 = vmatpush.bf16.msra.mxu0 %v5984
    %6145 = vmatpush.bf16.msra.mxu0 %v5980
    %6146 = vmatpush.bf16.msra.mxu0 %v5976
    %6147 = vmatpush.bf16.msra.mxu0 %v5972
    %6148 = vmatpush.bf16.msra.mxu0 %v5968
    %6149 = vmatpush.bf16.msra.mxu0 %v5964
    %6150 = vmatmul.bf16.gmra.mxu0 %v5694
    %v6151 = vpop.f32.mrf.mxu0
    %v6152 = vadd.f32 %v5764, %v6151
    %v6153 = vpop.f32.mrf.mxu0
    %6154 = vdwg.mxu0
    %6155 = vmatpush.bf16.msra.mxu0 %v6024
    %6156 = vmatpush.bf16.msra.mxu0 %v6020
    %6157 = vmatpush.bf16.msra.mxu0 %v6016
    %6158 = vmatpush.bf16.msra.mxu0 %v6012
    %6159 = vmatpush.bf16.msra.mxu0 %v6008
    %6160 = vmatpush.bf16.msra.mxu0 %v6004
    %6161 = vmatpush.bf16.msra.mxu0 %v6000
    %6162 = vmatpush.bf16.msra.mxu0 %v5996
    %6163 = vmatmul.bf16.gmra.mxu0 %v5695
    %v6164 = vpop.f32.mrf.mxu0
    %v6165 = vadd.f32 %v6152, %v6164
    %v6166 = vpop.f32.mrf.mxu0
    %6167 = vdwg.mxu0
    %6168 = vmatpush.bf16.msra.mxu0 %v5993
    %6169 = vmatpush.bf16.msra.mxu0 %v5989
    %6170 = vmatpush.bf16.msra.mxu0 %v5985
    %6171 = vmatpush.bf16.msra.mxu0 %v5981
    %6172 = vmatpush.bf16.msra.mxu0 %v5977
    %6173 = vmatpush.bf16.msra.mxu0 %v5973
    %6174 = vmatpush.bf16.msra.mxu0 %v5969
    %6175 = vmatpush.bf16.msra.mxu0 %v5965
    %6176 = vmatmul.bf16.gmra.mxu0 %v5694
    %v6177 = vpop.f32.mrf.mxu0
    %v6178 = vadd.f32 %v5765, %v6177
    %v6179 = vpop.f32.mrf.mxu0
    %6180 = vdwg.mxu0
    %6181 = vmatpush.bf16.msra.mxu0 %v6025
    %6182 = vmatpush.bf16.msra.mxu0 %v6021
    %6183 = vmatpush.bf16.msra.mxu0 %v6017
    %6184 = vmatpush.bf16.msra.mxu0 %v6013
    %6185 = vmatpush.bf16.msra.mxu0 %v6009
    %6186 = vmatpush.bf16.msra.mxu0 %v6005
    %6187 = vmatpush.bf16.msra.mxu0 %v6001
    %6188 = vmatpush.bf16.msra.mxu0 %v5997
    %6189 = vmatmul.bf16.gmra.mxu0 %v5695
    %v6190 = vpop.f32.mrf.mxu0
    %v6191 = vadd.f32 %v6178, %v6190
    %v6192 = vpop.f32.mrf.mxu0
    %6193 = vdwg.mxu0
    %v6194 = vmax.f32 %v6113, 0.0
    %v6195 = vmax.f32 %v6139, 0.0
    %v6196 = vmax.f32 %v6165, 0.0
    %v6197 = vmax.f32 %v6191, 0.0
    %v6198 = vld [vmem:[#allocation9] sm:$0xff]
    %v6199 = vld [vmem:[#allocation9 + $0x8] sm:$0xff]
    %v6200 = vld [vmem:[#allocation9 + $0x10] sm:$0xff]
    %v6201 = vld [vmem:[#allocation9 + $0x18] sm:$0xff]
    %v6202 = vld [vmem:[#allocation9 + $0x20] sm:$0xff]
    %v6203 = vld [vmem:[#allocation9 + $0x28] sm:$0xff]
    %v6204 = vld [vmem:[#allocation9 + $0x30] sm:$0xff]
    %v6205 = vld [vmem:[#allocation9 + $0x38] sm:$0xff]
    %v6206 = vld [vmem:[#allocation9 + $0x40] sm:$0xff]
    %v6207 = vld [vmem:[#allocation9 + $0x48] sm:$0xff]
    %v6208 = vld [vmem:[#allocation9 + $0x50] sm:$0xff]
    %v6209 = vld [vmem:[#allocation9 + $0x58] sm:$0xff]
    %v6210 = vld [vmem:[#allocation9 + $0x60] sm:$0xff]
    %v6211 = vld [vmem:[#allocation9 + $0x68] sm:$0xff]
    %v6212 = vld [vmem:[#allocation9 + $0x70] sm:$0xff]
    %v6213 = vld [vmem:[#allocation9 + $0x78] sm:$0xff]
    %v6214 = vld [vmem:[#allocation9 + $0x80] sm:$0xff]
    %v6215 = vld [vmem:[#allocation9 + $0x88] sm:$0xff]
    %v6216 = vld [vmem:[#allocation9 + $0x90] sm:$0xff]
    %v6217 = vld [vmem:[#allocation9 + $0x98] sm:$0xff]
    %v6218 = vld [vmem:[#allocation9 + $0xa0] sm:$0xff]
    %v6219 = vld [vmem:[#allocation9 + $0xa8] sm:$0xff]
    %v6220 = vld [vmem:[#allocation9 + $0xb0] sm:$0xff]
    %v6221 = vld [vmem:[#allocation9 + $0xb8] sm:$0xff]
    %v6222 = vld [vmem:[#allocation9 + $0xc0] sm:$0xff]
    %v6223 = vld [vmem:[#allocation9 + $0xc8] sm:$0xff]
    %v6224 = vld [vmem:[#allocation9 + $0xd0] sm:$0xff]
    %v6225 = vld [vmem:[#allocation9 + $0xd8] sm:$0xff]
    %v6226 = vld [vmem:[#allocation9 + $0xe0] sm:$0xff]
    %v6227 = vld [vmem:[#allocation9 + $0xe8] sm:$0xff]
    %v6228 = vld [vmem:[#allocation9 + $0xf0] sm:$0xff]
    %v6229 = vld [vmem:[#allocation9 + $0xf8] sm:$0xff]
    %v6230 = vld [vmem:[#allocation9 + $0x100] sm:$0xff]
    %v6231 = vld [vmem:[#allocation9 + $0x108] sm:$0xff]
    %v6232 = vld [vmem:[#allocation9 + $0x110] sm:$0xff]
    %v6233 = vld [vmem:[#allocation9 + $0x118] sm:$0xff]
    %v6234 = vld [vmem:[#allocation9 + $0x120] sm:$0xff]
    %v6235 = vld [vmem:[#allocation9 + $0x128] sm:$0xff]
    %v6236 = vld [vmem:[#allocation9 + $0x130] sm:$0xff]
    %v6237 = vld [vmem:[#allocation9 + $0x138] sm:$0xff]
    %v6238 = vld [vmem:[#allocation9 + $0x140] sm:$0xff]
    %v6239 = vld [vmem:[#allocation9 + $0x148] sm:$0xff]
    %v6240 = vld [vmem:[#allocation9 + $0x150] sm:$0xff]
    %v6241 = vld [vmem:[#allocation9 + $0x158] sm:$0xff]
    %v6242 = vld [vmem:[#allocation9 + $0x160] sm:$0xff]
    %v6243 = vld [vmem:[#allocation9 + $0x168] sm:$0xff]
    %v6244 = vld [vmem:[#allocation9 + $0x170] sm:$0xff]
    %v6245 = vld [vmem:[#allocation9 + $0x178] sm:$0xff]
    %v6246 = vld [vmem:[#allocation9 + $0x180] sm:$0xff]
    %v6247 = vld [vmem:[#allocation9 + $0x188] sm:$0xff]
    %v6248 = vld [vmem:[#allocation9 + $0x190] sm:$0xff]
    %v6249 = vld [vmem:[#allocation9 + $0x198] sm:$0xff]
    %v6250 = vld [vmem:[#allocation9 + $0x1a0] sm:$0xff]
    %v6251 = vld [vmem:[#allocation9 + $0x1a8] sm:$0xff]
    %v6252 = vld [vmem:[#allocation9 + $0x1b0] sm:$0xff]
    %v6253 = vld [vmem:[#allocation9 + $0x1b8] sm:$0xff]
    %v6254 = vld [vmem:[#allocation9 + $0x1c0] sm:$0xff]
    %v6255 = vld [vmem:[#allocation9 + $0x1c8] sm:$0xff]
    %v6256 = vld [vmem:[#allocation9 + $0x1d0] sm:$0xff]
    %v6257 = vld [vmem:[#allocation9 + $0x1d8] sm:$0xff]
    %v6258 = vld [vmem:[#allocation9 + $0x1e0] sm:$0xff]
    %v6259 = vld [vmem:[#allocation9 + $0x1e8] sm:$0xff]
    %v6260 = vld [vmem:[#allocation9 + $0x1f0] sm:$0xff]
    %v6261 = vld [vmem:[#allocation9 + $0x1f8] sm:$0xff]
    %v6262 = vld [vmem:[#allocation9 + $0x200] sm:$0xff]
    %v6263 = vld [vmem:[#allocation9 + $0x208] sm:$0xff]
    %v6264 = vld [vmem:[#allocation9 + $0x210] sm:$0xff]
    %v6265 = vld [vmem:[#allocation9 + $0x218] sm:$0xff]
    %v6266 = vld [vmem:[#allocation9 + $0x220] sm:$0xff]
    %v6267 = vld [vmem:[#allocation9 + $0x228] sm:$0xff]
    %v6268 = vld [vmem:[#allocation9 + $0x230] sm:$0xff]
    %v6269 = vld [vmem:[#allocation9 + $0x238] sm:$0xff]
    %v6270 = vld [vmem:[#allocation9 + $0x240] sm:$0xff]
    %v6271 = vld [vmem:[#allocation9 + $0x248] sm:$0xff]
    %v6272 = vld [vmem:[#allocation9 + $0x250] sm:$0xff]
    %v6273 = vld [vmem:[#allocation9 + $0x258] sm:$0xff]
    %v6274 = vld [vmem:[#allocation9 + $0x260] sm:$0xff]
    %v6275 = vld [vmem:[#allocation9 + $0x268] sm:$0xff]
    %v6276 = vld [vmem:[#allocation9 + $0x270] sm:$0xff]
    %v6277 = vld [vmem:[#allocation9 + $0x278] sm:$0xff]
    %v6278 = vld [vmem:[#allocation9 + $0x280] sm:$0xff]
    %v6279 = vld [vmem:[#allocation9 + $0x288] sm:$0xff]
    %v6280 = vld [vmem:[#allocation9 + $0x290] sm:$0xff]
    %v6281 = vld [vmem:[#allocation9 + $0x298] sm:$0xff]
    %v6282 = vld [vmem:[#allocation9 + $0x2a0] sm:$0xff]
    %v6283 = vld [vmem:[#allocation9 + $0x2a8] sm:$0xff]
    %v6284 = vld [vmem:[#allocation9 + $0x2b0] sm:$0xff]
    %v6285 = vld [vmem:[#allocation9 + $0x2b8] sm:$0xff]
    %v6286 = vld [vmem:[#allocation9 + $0x2c0] sm:$0xff]
    %v6287 = vld [vmem:[#allocation9 + $0x2c8] sm:$0xff]
    %v6288 = vld [vmem:[#allocation9 + $0x2d0] sm:$0xff]
    %v6289 = vld [vmem:[#allocation9 + $0x2d8] sm:$0xff]
    %v6290 = vld [vmem:[#allocation9 + $0x2e0] sm:$0xff]
    %v6291 = vld [vmem:[#allocation9 + $0x2e8] sm:$0xff]
    %v6292 = vld [vmem:[#allocation9 + $0x2f0] sm:$0xff]
    %v6293 = vld [vmem:[#allocation9 + $0x2f8] sm:$0xff]
    %v6294 = vld [vmem:[#allocation9 + $0x300] sm:$0xff]
    %v6295 = vld [vmem:[#allocation9 + $0x308] sm:$0xff]
    %v6296 = vld [vmem:[#allocation9 + $0x310] sm:$0xff]
    %v6297 = vld [vmem:[#allocation9 + $0x318] sm:$0xff]
    %v6298 = vld [vmem:[#allocation9 + $0x320] sm:$0xff]
    %v6299 = vld [vmem:[#allocation9 + $0x328] sm:$0xff]
    %v6300 = vld [vmem:[#allocation9 + $0x330] sm:$0xff]
    %v6301 = vld [vmem:[#allocation9 + $0x338] sm:$0xff]
    %v6302 = vld [vmem:[#allocation9 + $0x340] sm:$0xff]
    %v6303 = vld [vmem:[#allocation9 + $0x348] sm:$0xff]
    %v6304 = vld [vmem:[#allocation9 + $0x350] sm:$0xff]
    %v6305 = vld [vmem:[#allocation9 + $0x358] sm:$0xff]
    %v6306 = vld [vmem:[#allocation9 + $0x360] sm:$0xff]
    %v6307 = vld [vmem:[#allocation9 + $0x368] sm:$0xff]
    %v6308 = vld [vmem:[#allocation9 + $0x370] sm:$0xff]
    %v6309 = vld [vmem:[#allocation9 + $0x378] sm:$0xff]
    %v6310 = vld [vmem:[#allocation9 + $0x380] sm:$0xff]
    %v6311 = vld [vmem:[#allocation9 + $0x388] sm:$0xff]
    %v6312 = vld [vmem:[#allocation9 + $0x390] sm:$0xff]
    %v6313 = vld [vmem:[#allocation9 + $0x398] sm:$0xff]
    %v6314 = vld [vmem:[#allocation9 + $0x3a0] sm:$0xff]
    %v6315 = vld [vmem:[#allocation9 + $0x3a8] sm:$0xff]
    %v6316 = vld [vmem:[#allocation9 + $0x3b0] sm:$0xff]
    %v6317 = vld [vmem:[#allocation9 + $0x3b8] sm:$0xff]
    %v6318 = vld [vmem:[#allocation9 + $0x3c0] sm:$0xff]
    %v6319 = vld [vmem:[#allocation9 + $0x3c8] sm:$0xff]
    %v6320 = vld [vmem:[#allocation9 + $0x3d0] sm:$0xff]
    %v6321 = vld [vmem:[#allocation9 + $0x3d8] sm:$0xff]
    %v6322 = vld [vmem:[#allocation9 + $0x3e0] sm:$0xff]
    %v6323 = vld [vmem:[#allocation9 + $0x3e8] sm:$0xff]
    %v6324 = vld [vmem:[#allocation9 + $0x3f0] sm:$0xff]
    %v6325 = vld [vmem:[#allocation9 + $0x3f8] sm:$0xff]
    %v6326 = vld [vmem:[#allocation19] sm:$0xf]
    %v6328 = vperm.slane %v6326, 0
    %v6329 = vperm.slane %v6326, 1
    %v6330 = vperm.slane %v6326, 2
    %v6331 = vperm.slane %v6326, 3
    %v6336 = vpack.c.bf16 %v6194, %v6194
    %v6337 = vpack.c.bf16 %v6195, %v6195
    %v6338 = vpack.c.bf16 %v6196, %v6196
    %v6339 = vpack.c.bf16 %v6197, %v6197
    %v6468 = vunpack.c.l.b16 %v6198
    %v6469 = vunpack.c.h.b16 %v6198
    %v6470 = vunpack.c.l.b16 %v6199
    %v6471 = vunpack.c.h.b16 %v6199
    %v6472 = vunpack.c.l.b16 %v6200
    %v6473 = vunpack.c.h.b16 %v6200
    %v6474 = vunpack.c.l.b16 %v6201
    %v6475 = vunpack.c.h.b16 %v6201
    %v6476 = vunpack.c.l.b16 %v6202
    %v6477 = vunpack.c.h.b16 %v6202
    %v6478 = vunpack.c.l.b16 %v6203
    %v6479 = vunpack.c.h.b16 %v6203
    %v6480 = vunpack.c.l.b16 %v6204
    %v6481 = vunpack.c.h.b16 %v6204
    %v6482 = vunpack.c.l.b16 %v6205
    %v6483 = vunpack.c.h.b16 %v6205
    %v6484 = vunpack.c.l.b16 %v6206
    %v6485 = vunpack.c.h.b16 %v6206
    %v6486 = vunpack.c.l.b16 %v6207
    %v6487 = vunpack.c.h.b16 %v6207
    %v6488 = vunpack.c.l.b16 %v6208
    %v6489 = vunpack.c.h.b16 %v6208
    %v6490 = vunpack.c.l.b16 %v6209
    %v6491 = vunpack.c.h.b16 %v6209
    %v6492 = vunpack.c.l.b16 %v6210
    %v6493 = vunpack.c.h.b16 %v6210
    %v6494 = vunpack.c.l.b16 %v6211
    %v6495 = vunpack.c.h.b16 %v6211
    %v6496 = vunpack.c.l.b16 %v6212
    %v6497 = vunpack.c.h.b16 %v6212
    %v6498 = vunpack.c.l.b16 %v6213
    %v6499 = vunpack.c.h.b16 %v6213
    %v6500 = vunpack.c.l.b16 %v6214
    %v6501 = vunpack.c.h.b16 %v6214
    %v6502 = vunpack.c.l.b16 %v6215
    %v6503 = vunpack.c.h.b16 %v6215
    %v6504 = vunpack.c.l.b16 %v6216
    %v6505 = vunpack.c.h.b16 %v6216
    %v6506 = vunpack.c.l.b16 %v6217
    %v6507 = vunpack.c.h.b16 %v6217
    %v6508 = vunpack.c.l.b16 %v6218
    %v6509 = vunpack.c.h.b16 %v6218
    %v6510 = vunpack.c.l.b16 %v6219
    %v6511 = vunpack.c.h.b16 %v6219
    %v6512 = vunpack.c.l.b16 %v6220
    %v6513 = vunpack.c.h.b16 %v6220
    %v6514 = vunpack.c.l.b16 %v6221
    %v6515 = vunpack.c.h.b16 %v6221
    %v6516 = vunpack.c.l.b16 %v6222
    %v6517 = vunpack.c.h.b16 %v6222
    %v6518 = vunpack.c.l.b16 %v6223
    %v6519 = vunpack.c.h.b16 %v6223
    %v6520 = vunpack.c.l.b16 %v6224
    %v6521 = vunpack.c.h.b16 %v6224
    %v6522 = vunpack.c.l.b16 %v6225
    %v6523 = vunpack.c.h.b16 %v6225
    %v6524 = vunpack.c.l.b16 %v6226
    %v6525 = vunpack.c.h.b16 %v6226
    %v6526 = vunpack.c.l.b16 %v6227
    %v6527 = vunpack.c.h.b16 %v6227
    %v6528 = vunpack.c.l.b16 %v6228
    %v6529 = vunpack.c.h.b16 %v6228
    %v6530 = vunpack.c.l.b16 %v6229
    %v6531 = vunpack.c.h.b16 %v6229
    %v6532 = vunpack.c.l.b16 %v6230
    %v6533 = vunpack.c.h.b16 %v6230
    %v6534 = vunpack.c.l.b16 %v6231
    %v6535 = vunpack.c.h.b16 %v6231
    %v6536 = vunpack.c.l.b16 %v6232
    %v6537 = vunpack.c.h.b16 %v6232
    %v6538 = vunpack.c.l.b16 %v6233
    %v6539 = vunpack.c.h.b16 %v6233
    %v6540 = vunpack.c.l.b16 %v6234
    %v6541 = vunpack.c.h.b16 %v6234
    %v6542 = vunpack.c.l.b16 %v6235
    %v6543 = vunpack.c.h.b16 %v6235
    %v6544 = vunpack.c.l.b16 %v6236
    %v6545 = vunpack.c.h.b16 %v6236
    %v6546 = vunpack.c.l.b16 %v6237
    %v6547 = vunpack.c.h.b16 %v6237
    %v6548 = vunpack.c.l.b16 %v6238
    %v6549 = vunpack.c.h.b16 %v6238
    %v6550 = vunpack.c.l.b16 %v6239
    %v6551 = vunpack.c.h.b16 %v6239
    %v6552 = vunpack.c.l.b16 %v6240
    %v6553 = vunpack.c.h.b16 %v6240
    %v6554 = vunpack.c.l.b16 %v6241
    %v6555 = vunpack.c.h.b16 %v6241
    %v6556 = vunpack.c.l.b16 %v6242
    %v6557 = vunpack.c.h.b16 %v6242
    %v6558 = vunpack.c.l.b16 %v6243
    %v6559 = vunpack.c.h.b16 %v6243
    %v6560 = vunpack.c.l.b16 %v6244
    %v6561 = vunpack.c.h.b16 %v6244
    %v6562 = vunpack.c.l.b16 %v6245
    %v6563 = vunpack.c.h.b16 %v6245
    %v6564 = vunpack.c.l.b16 %v6246
    %v6565 = vunpack.c.h.b16 %v6246
    %v6566 = vunpack.c.l.b16 %v6247
    %v6567 = vunpack.c.h.b16 %v6247
    %v6568 = vunpack.c.l.b16 %v6248
    %v6569 = vunpack.c.h.b16 %v6248
    %v6570 = vunpack.c.l.b16 %v6249
    %v6571 = vunpack.c.h.b16 %v6249
    %v6572 = vunpack.c.l.b16 %v6250
    %v6573 = vunpack.c.h.b16 %v6250
    %v6574 = vunpack.c.l.b16 %v6251
    %v6575 = vunpack.c.h.b16 %v6251
    %v6576 = vunpack.c.l.b16 %v6252
    %v6577 = vunpack.c.h.b16 %v6252
    %v6578 = vunpack.c.l.b16 %v6253
    %v6579 = vunpack.c.h.b16 %v6253
    %v6580 = vunpack.c.l.b16 %v6254
    %v6581 = vunpack.c.h.b16 %v6254
    %v6582 = vunpack.c.l.b16 %v6255
    %v6583 = vunpack.c.h.b16 %v6255
    %v6584 = vunpack.c.l.b16 %v6256
    %v6585 = vunpack.c.h.b16 %v6256
    %v6586 = vunpack.c.l.b16 %v6257
    %v6587 = vunpack.c.h.b16 %v6257
    %v6588 = vunpack.c.l.b16 %v6258
    %v6589 = vunpack.c.h.b16 %v6258
    %v6590 = vunpack.c.l.b16 %v6259
    %v6591 = vunpack.c.h.b16 %v6259
    %v6592 = vunpack.c.l.b16 %v6260
    %v6593 = vunpack.c.h.b16 %v6260
    %v6594 = vunpack.c.l.b16 %v6261
    %v6595 = vunpack.c.h.b16 %v6261
    %v6596 = vunpack.c.l.b16 %v6262
    %v6597 = vunpack.c.h.b16 %v6262
    %v6598 = vunpack.c.l.b16 %v6263
    %v6599 = vunpack.c.h.b16 %v6263
    %v6600 = vunpack.c.l.b16 %v6264
    %v6601 = vunpack.c.h.b16 %v6264
    %v6602 = vunpack.c.l.b16 %v6265
    %v6603 = vunpack.c.h.b16 %v6265
    %v6604 = vunpack.c.l.b16 %v6266
    %v6605 = vunpack.c.h.b16 %v6266
    %v6606 = vunpack.c.l.b16 %v6267
    %v6607 = vunpack.c.h.b16 %v6267
    %v6608 = vunpack.c.l.b16 %v6268
    %v6609 = vunpack.c.h.b16 %v6268
    %v6610 = vunpack.c.l.b16 %v6269
    %v6611 = vunpack.c.h.b16 %v6269
    %v6612 = vunpack.c.l.b16 %v6270
    %v6613 = vunpack.c.h.b16 %v6270
    %v6614 = vunpack.c.l.b16 %v6271
    %v6615 = vunpack.c.h.b16 %v6271
    %v6616 = vunpack.c.l.b16 %v6272
    %v6617 = vunpack.c.h.b16 %v6272
    %v6618 = vunpack.c.l.b16 %v6273
    %v6619 = vunpack.c.h.b16 %v6273
    %v6620 = vunpack.c.l.b16 %v6274
    %v6621 = vunpack.c.h.b16 %v6274
    %v6622 = vunpack.c.l.b16 %v6275
    %v6623 = vunpack.c.h.b16 %v6275
    %v6624 = vunpack.c.l.b16 %v6276
    %v6625 = vunpack.c.h.b16 %v6276
    %v6626 = vunpack.c.l.b16 %v6277
    %v6627 = vunpack.c.h.b16 %v6277
    %v6628 = vunpack.c.l.b16 %v6278
    %v6629 = vunpack.c.h.b16 %v6278
    %v6630 = vunpack.c.l.b16 %v6279
    %v6631 = vunpack.c.h.b16 %v6279
    %v6632 = vunpack.c.l.b16 %v6280
    %v6633 = vunpack.c.h.b16 %v6280
    %v6634 = vunpack.c.l.b16 %v6281
    %v6635 = vunpack.c.h.b16 %v6281
    %v6636 = vunpack.c.l.b16 %v6282
    %v6637 = vunpack.c.h.b16 %v6282
    %v6638 = vunpack.c.l.b16 %v6283
    %v6639 = vunpack.c.h.b16 %v6283
    %v6640 = vunpack.c.l.b16 %v6284
    %v6641 = vunpack.c.h.b16 %v6284
    %v6642 = vunpack.c.l.b16 %v6285
    %v6643 = vunpack.c.h.b16 %v6285
    %v6644 = vunpack.c.l.b16 %v6286
    %v6645 = vunpack.c.h.b16 %v6286
    %v6646 = vunpack.c.l.b16 %v6287
    %v6647 = vunpack.c.h.b16 %v6287
    %v6648 = vunpack.c.l.b16 %v6288
    %v6649 = vunpack.c.h.b16 %v6288
    %v6650 = vunpack.c.l.b16 %v6289
    %v6651 = vunpack.c.h.b16 %v6289
    %v6652 = vunpack.c.l.b16 %v6290
    %v6653 = vunpack.c.h.b16 %v6290
    %v6654 = vunpack.c.l.b16 %v6291
    %v6655 = vunpack.c.h.b16 %v6291
    %v6656 = vunpack.c.l.b16 %v6292
    %v6657 = vunpack.c.h.b16 %v6292
    %v6658 = vunpack.c.l.b16 %v6293
    %v6659 = vunpack.c.h.b16 %v6293
    %v6660 = vunpack.c.l.b16 %v6294
    %v6661 = vunpack.c.h.b16 %v6294
    %v6662 = vunpack.c.l.b16 %v6295
    %v6663 = vunpack.c.h.b16 %v6295
    %v6664 = vunpack.c.l.b16 %v6296
    %v6665 = vunpack.c.h.b16 %v6296
    %v6666 = vunpack.c.l.b16 %v6297
    %v6667 = vunpack.c.h.b16 %v6297
    %v6668 = vunpack.c.l.b16 %v6298
    %v6669 = vunpack.c.h.b16 %v6298
    %v6670 = vunpack.c.l.b16 %v6299
    %v6671 = vunpack.c.h.b16 %v6299
    %v6672 = vunpack.c.l.b16 %v6300
    %v6673 = vunpack.c.h.b16 %v6300
    %v6674 = vunpack.c.l.b16 %v6301
    %v6675 = vunpack.c.h.b16 %v6301
    %v6676 = vunpack.c.l.b16 %v6302
    %v6677 = vunpack.c.h.b16 %v6302
    %v6678 = vunpack.c.l.b16 %v6303
    %v6679 = vunpack.c.h.b16 %v6303
    %v6680 = vunpack.c.l.b16 %v6304
    %v6681 = vunpack.c.h.b16 %v6304
    %v6682 = vunpack.c.l.b16 %v6305
    %v6683 = vunpack.c.h.b16 %v6305
    %v6684 = vunpack.c.l.b16 %v6306
    %v6685 = vunpack.c.h.b16 %v6306
    %v6686 = vunpack.c.l.b16 %v6307
    %v6687 = vunpack.c.h.b16 %v6307
    %v6688 = vunpack.c.l.b16 %v6308
    %v6689 = vunpack.c.h.b16 %v6308
    %v6690 = vunpack.c.l.b16 %v6309
    %v6691 = vunpack.c.h.b16 %v6309
    %v6692 = vunpack.c.l.b16 %v6310
    %v6693 = vunpack.c.h.b16 %v6310
    %v6694 = vunpack.c.l.b16 %v6311
    %v6695 = vunpack.c.h.b16 %v6311
    %v6696 = vunpack.c.l.b16 %v6312
    %v6697 = vunpack.c.h.b16 %v6312
    %v6698 = vunpack.c.l.b16 %v6313
    %v6699 = vunpack.c.h.b16 %v6313
    %v6700 = vunpack.c.l.b16 %v6314
    %v6701 = vunpack.c.h.b16 %v6314
    %v6702 = vunpack.c.l.b16 %v6315
    %v6703 = vunpack.c.h.b16 %v6315
    %v6704 = vunpack.c.l.b16 %v6316
    %v6705 = vunpack.c.h.b16 %v6316
    %v6706 = vunpack.c.l.b16 %v6317
    %v6707 = vunpack.c.h.b16 %v6317
    %v6708 = vunpack.c.l.b16 %v6318
    %v6709 = vunpack.c.h.b16 %v6318
    %v6710 = vunpack.c.l.b16 %v6319
    %v6711 = vunpack.c.h.b16 %v6319
    %v6712 = vunpack.c.l.b16 %v6320
    %v6713 = vunpack.c.h.b16 %v6320
    %v6714 = vunpack.c.l.b16 %v6321
    %v6715 = vunpack.c.h.b16 %v6321
    %v6716 = vunpack.c.l.b16 %v6322
    %v6717 = vunpack.c.h.b16 %v6322
    %v6718 = vunpack.c.l.b16 %v6323
    %v6719 = vunpack.c.h.b16 %v6323
    %v6720 = vunpack.c.l.b16 %v6324
    %v6721 = vunpack.c.h.b16 %v6324
    %v6722 = vunpack.c.l.b16 %v6325
    %v6723 = vunpack.c.h.b16 %v6325
    %v6724 = vpack.c.b16 %v6472, %v6468
    %v6725 = vpack.c.b16 %v6473, %v6469
    %v6726 = vpack.c.b16 %v6474, %v6470
    %v6727 = vpack.c.b16 %v6475, %v6471
    %v6728 = vpack.c.b16 %v6480, %v6476
    %v6729 = vpack.c.b16 %v6481, %v6477
    %v6730 = vpack.c.b16 %v6482, %v6478
    %v6731 = vpack.c.b16 %v6483, %v6479
    %v6732 = vpack.c.b16 %v6488, %v6484
    %v6733 = vpack.c.b16 %v6489, %v6485
    %v6734 = vpack.c.b16 %v6490, %v6486
    %v6735 = vpack.c.b16 %v6491, %v6487
    %v6736 = vpack.c.b16 %v6496, %v6492
    %v6737 = vpack.c.b16 %v6497, %v6493
    %v6738 = vpack.c.b16 %v6498, %v6494
    %v6739 = vpack.c.b16 %v6499, %v6495
    %v6740 = vpack.c.b16 %v6504, %v6500
    %v6741 = vpack.c.b16 %v6505, %v6501
    %v6742 = vpack.c.b16 %v6506, %v6502
    %v6743 = vpack.c.b16 %v6507, %v6503
    %v6744 = vpack.c.b16 %v6512, %v6508
    %v6745 = vpack.c.b16 %v6513, %v6509
    %v6746 = vpack.c.b16 %v6514, %v6510
    %v6747 = vpack.c.b16 %v6515, %v6511
    %v6748 = vpack.c.b16 %v6520, %v6516
    %v6749 = vpack.c.b16 %v6521, %v6517
    %v6750 = vpack.c.b16 %v6522, %v6518
    %v6751 = vpack.c.b16 %v6523, %v6519
    %v6752 = vpack.c.b16 %v6528, %v6524
    %v6753 = vpack.c.b16 %v6529, %v6525
    %v6754 = vpack.c.b16 %v6530, %v6526
    %v6755 = vpack.c.b16 %v6531, %v6527
    %v6756 = vpack.c.b16 %v6536, %v6532
    %v6757 = vpack.c.b16 %v6537, %v6533
    %v6758 = vpack.c.b16 %v6538, %v6534
    %v6759 = vpack.c.b16 %v6539, %v6535
    %v6760 = vpack.c.b16 %v6544, %v6540
    %v6761 = vpack.c.b16 %v6545, %v6541
    %v6762 = vpack.c.b16 %v6546, %v6542
    %v6763 = vpack.c.b16 %v6547, %v6543
    %v6764 = vpack.c.b16 %v6552, %v6548
    %v6765 = vpack.c.b16 %v6553, %v6549
    %v6766 = vpack.c.b16 %v6554, %v6550
    %v6767 = vpack.c.b16 %v6555, %v6551
    %v6768 = vpack.c.b16 %v6560, %v6556
    %v6769 = vpack.c.b16 %v6561, %v6557
    %v6770 = vpack.c.b16 %v6562, %v6558
    %v6771 = vpack.c.b16 %v6563, %v6559
    %v6772 = vpack.c.b16 %v6568, %v6564
    %v6773 = vpack.c.b16 %v6569, %v6565
    %v6774 = vpack.c.b16 %v6570, %v6566
    %v6775 = vpack.c.b16 %v6571, %v6567
    %v6776 = vpack.c.b16 %v6576, %v6572
    %v6777 = vpack.c.b16 %v6577, %v6573
    %v6778 = vpack.c.b16 %v6578, %v6574
    %v6779 = vpack.c.b16 %v6579, %v6575
    %v6780 = vpack.c.b16 %v6584, %v6580
    %v6781 = vpack.c.b16 %v6585, %v6581
    %v6782 = vpack.c.b16 %v6586, %v6582
    %v6783 = vpack.c.b16 %v6587, %v6583
    %v6784 = vpack.c.b16 %v6592, %v6588
    %v6785 = vpack.c.b16 %v6593, %v6589
    %v6786 = vpack.c.b16 %v6594, %v6590
    %v6787 = vpack.c.b16 %v6595, %v6591
    %v6788 = vpack.c.b16 %v6600, %v6596
    %v6789 = vpack.c.b16 %v6601, %v6597
    %v6790 = vpack.c.b16 %v6602, %v6598
    %v6791 = vpack.c.b16 %v6603, %v6599
    %v6792 = vpack.c.b16 %v6608, %v6604
    %v6793 = vpack.c.b16 %v6609, %v6605
    %v6794 = vpack.c.b16 %v6610, %v6606
    %v6795 = vpack.c.b16 %v6611, %v6607
    %v6796 = vpack.c.b16 %v6616, %v6612
    %v6797 = vpack.c.b16 %v6617, %v6613
    %v6798 = vpack.c.b16 %v6618, %v6614
    %v6799 = vpack.c.b16 %v6619, %v6615
    %v6800 = vpack.c.b16 %v6624, %v6620
    %v6801 = vpack.c.b16 %v6625, %v6621
    %v6802 = vpack.c.b16 %v6626, %v6622
    %v6803 = vpack.c.b16 %v6627, %v6623
    %v6804 = vpack.c.b16 %v6632, %v6628
    %v6805 = vpack.c.b16 %v6633, %v6629
    %v6806 = vpack.c.b16 %v6634, %v6630
    %v6807 = vpack.c.b16 %v6635, %v6631
    %v6808 = vpack.c.b16 %v6640, %v6636
    %v6809 = vpack.c.b16 %v6641, %v6637
    %v6810 = vpack.c.b16 %v6642, %v6638
    %v6811 = vpack.c.b16 %v6643, %v6639
    %v6812 = vpack.c.b16 %v6648, %v6644
    %v6813 = vpack.c.b16 %v6649, %v6645
    %v6814 = vpack.c.b16 %v6650, %v6646
    %v6815 = vpack.c.b16 %v6651, %v6647
    %v6816 = vpack.c.b16 %v6656, %v6652
    %v6817 = vpack.c.b16 %v6657, %v6653
    %v6818 = vpack.c.b16 %v6658, %v6654
    %v6819 = vpack.c.b16 %v6659, %v6655
    %v6820 = vpack.c.b16 %v6664, %v6660
    %v6821 = vpack.c.b16 %v6665, %v6661
    %v6822 = vpack.c.b16 %v6666, %v6662
    %v6823 = vpack.c.b16 %v6667, %v6663
    %v6824 = vpack.c.b16 %v6672, %v6668
    %v6825 = vpack.c.b16 %v6673, %v6669
    %v6826 = vpack.c.b16 %v6674, %v6670
    %v6827 = vpack.c.b16 %v6675, %v6671
    %v6828 = vpack.c.b16 %v6680, %v6676
    %v6829 = vpack.c.b16 %v6681, %v6677
    %v6830 = vpack.c.b16 %v6682, %v6678
    %v6831 = vpack.c.b16 %v6683, %v6679
    %v6832 = vpack.c.b16 %v6688, %v6684
    %v6833 = vpack.c.b16 %v6689, %v6685
    %v6834 = vpack.c.b16 %v6690, %v6686
    %v6835 = vpack.c.b16 %v6691, %v6687
    %v6836 = vpack.c.b16 %v6696, %v6692
    %v6837 = vpack.c.b16 %v6697, %v6693
    %v6838 = vpack.c.b16 %v6698, %v6694
    %v6839 = vpack.c.b16 %v6699, %v6695
    %v6840 = vpack.c.b16 %v6704, %v6700
    %v6841 = vpack.c.b16 %v6705, %v6701
    %v6842 = vpack.c.b16 %v6706, %v6702
    %v6843 = vpack.c.b16 %v6707, %v6703
    %v6844 = vpack.c.b16 %v6712, %v6708
    %v6845 = vpack.c.b16 %v6713, %v6709
    %v6846 = vpack.c.b16 %v6714, %v6710
    %v6847 = vpack.c.b16 %v6715, %v6711
    %v6848 = vpack.c.b16 %v6720, %v6716
    %v6849 = vpack.c.b16 %v6721, %v6717
    %v6850 = vpack.c.b16 %v6722, %v6718
    %v6851 = vpack.c.b16 %v6723, %v6719
    %6980 = vmatpush.bf16.msra.mxu0 %v6752
    %6981 = vmatpush.bf16.msra.mxu0 %v6748
    %6982 = vmatpush.bf16.msra.mxu0 %v6744
    %6983 = vmatpush.bf16.msra.mxu0 %v6740
    %6984 = vmatpush.bf16.msra.mxu0 %v6736
    %6985 = vmatpush.bf16.msra.mxu0 %v6732
    %6986 = vmatpush.bf16.msra.mxu0 %v6728
    %6987 = vmatpush.bf16.msra.mxu0 %v6724
    %6988 = vmatmul.bf16.gmra.mxu0 %v6336
    %v6989 = vpop.f32.mrf.mxu0
    %v6990 = vadd.f32 %v6328, %v6989
    %v6991 = vpop.f32.mrf.mxu0
    %6992 = vdwg.mxu0
    %6993 = vmatpush.bf16.msra.mxu0 %v6784
    %6994 = vmatpush.bf16.msra.mxu0 %v6780
    %6995 = vmatpush.bf16.msra.mxu0 %v6776
    %6996 = vmatpush.bf16.msra.mxu0 %v6772
    %6997 = vmatpush.bf16.msra.mxu0 %v6768
    %6998 = vmatpush.bf16.msra.mxu0 %v6764
    %6999 = vmatpush.bf16.msra.mxu0 %v6760
    %7000 = vmatpush.bf16.msra.mxu0 %v6756
    %7001 = vmatmul.bf16.gmra.mxu0 %v6337
    %v7002 = vpop.f32.mrf.mxu0
    %v7003 = vadd.f32 %v6990, %v7002
    %v7004 = vpop.f32.mrf.mxu0
    %7005 = vdwg.mxu0
    %7006 = vmatpush.bf16.msra.mxu0 %v6816
    %7007 = vmatpush.bf16.msra.mxu0 %v6812
    %7008 = vmatpush.bf16.msra.mxu0 %v6808
    %7009 = vmatpush.bf16.msra.mxu0 %v6804
    %7010 = vmatpush.bf16.msra.mxu0 %v6800
    %7011 = vmatpush.bf16.msra.mxu0 %v6796
    %7012 = vmatpush.bf16.msra.mxu0 %v6792
    %7013 = vmatpush.bf16.msra.mxu0 %v6788
    %7014 = vmatmul.bf16.gmra.mxu0 %v6338
    %v7015 = vpop.f32.mrf.mxu0
    %v7016 = vadd.f32 %v7003, %v7015
    %v7017 = vpop.f32.mrf.mxu0
    %7018 = vdwg.mxu0
    %7019 = vmatpush.bf16.msra.mxu0 %v6848
    %7020 = vmatpush.bf16.msra.mxu0 %v6844
    %7021 = vmatpush.bf16.msra.mxu0 %v6840
    %7022 = vmatpush.bf16.msra.mxu0 %v6836
    %7023 = vmatpush.bf16.msra.mxu0 %v6832
    %7024 = vmatpush.bf16.msra.mxu0 %v6828
    %7025 = vmatpush.bf16.msra.mxu0 %v6824
    %7026 = vmatpush.bf16.msra.mxu0 %v6820
    %7027 = vmatmul.bf16.gmra.mxu0 %v6339
    %v7028 = vpop.f32.mrf.mxu0
    %v7029 = vadd.f32 %v7016, %v7028
    %v7030 = vpop.f32.mrf.mxu0
    %7031 = vdwg.mxu0
    %7032 = vmatpush.bf16.msra.mxu0 %v6753
    %7033 = vmatpush.bf16.msra.mxu0 %v6749
    %7034 = vmatpush.bf16.msra.mxu0 %v6745
    %7035 = vmatpush.bf16.msra.mxu0 %v6741
    %7036 = vmatpush.bf16.msra.mxu0 %v6737
    %7037 = vmatpush.bf16.msra.mxu0 %v6733
    %7038 = vmatpush.bf16.msra.mxu0 %v6729
    %7039 = vmatpush.bf16.msra.mxu0 %v6725
    %7040 = vmatmul.bf16.gmra.mxu0 %v6336
    %v7041 = vpop.f32.mrf.mxu0
    %v7042 = vadd.f32 %v6329, %v7041
    %v7043 = vpop.f32.mrf.mxu0
    %7044 = vdwg.mxu0
    %7045 = vmatpush.bf16.msra.mxu0 %v6785
    %7046 = vmatpush.bf16.msra.mxu0 %v6781
    %7047 = vmatpush.bf16.msra.mxu0 %v6777
    %7048 = vmatpush.bf16.msra.mxu0 %v6773
    %7049 = vmatpush.bf16.msra.mxu0 %v6769
    %7050 = vmatpush.bf16.msra.mxu0 %v6765
    %7051 = vmatpush.bf16.msra.mxu0 %v6761
    %7052 = vmatpush.bf16.msra.mxu0 %v6757
    %7053 = vmatmul.bf16.gmra.mxu0 %v6337
    %v7054 = vpop.f32.mrf.mxu0
    %v7055 = vadd.f32 %v7042, %v7054
    %v7056 = vpop.f32.mrf.mxu0
    %7057 = vdwg.mxu0
    %7058 = vmatpush.bf16.msra.mxu0 %v6817
    %7059 = vmatpush.bf16.msra.mxu0 %v6813
    %7060 = vmatpush.bf16.msra.mxu0 %v6809
    %7061 = vmatpush.bf16.msra.mxu0 %v6805
    %7062 = vmatpush.bf16.msra.mxu0 %v6801
    %7063 = vmatpush.bf16.msra.mxu0 %v6797
    %7064 = vmatpush.bf16.msra.mxu0 %v6793
    %7065 = vmatpush.bf16.msra.mxu0 %v6789
    %7066 = vmatmul.bf16.gmra.mxu0 %v6338
    %v7067 = vpop.f32.mrf.mxu0
    %v7068 = vadd.f32 %v7055, %v7067
    %v7069 = vpop.f32.mrf.mxu0
    %7070 = vdwg.mxu0
    %7071 = vmatpush.bf16.msra.mxu0 %v6849
    %7072 = vmatpush.bf16.msra.mxu0 %v6845
    %7073 = vmatpush.bf16.msra.mxu0 %v6841
    %7074 = vmatpush.bf16.msra.mxu0 %v6837
    %7075 = vmatpush.bf16.msra.mxu0 %v6833
    %7076 = vmatpush.bf16.msra.mxu0 %v6829
    %7077 = vmatpush.bf16.msra.mxu0 %v6825
    %7078 = vmatpush.bf16.msra.mxu0 %v6821
    %7079 = vmatmul.bf16.gmra.mxu0 %v6339
    %v7080 = vpop.f32.mrf.mxu0
    %v7081 = vadd.f32 %v7068, %v7080
    %v7082 = vpop.f32.mrf.mxu0
    %7083 = vdwg.mxu0
    %7084 = vmatpush.bf16.msra.mxu0 %v6754
    %7085 = vmatpush.bf16.msra.mxu0 %v6750
    %7086 = vmatpush.bf16.msra.mxu0 %v6746
    %7087 = vmatpush.bf16.msra.mxu0 %v6742
    %7088 = vmatpush.bf16.msra.mxu0 %v6738
    %7089 = vmatpush.bf16.msra.mxu0 %v6734
    %7090 = vmatpush.bf16.msra.mxu0 %v6730
    %7091 = vmatpush.bf16.msra.mxu0 %v6726
    %7092 = vmatmul.bf16.gmra.mxu0 %v6336
    %v7093 = vpop.f32.mrf.mxu0
    %v7094 = vadd.f32 %v6330, %v7093
    %v7095 = vpop.f32.mrf.mxu0
    %7096 = vdwg.mxu0
    %7097 = vmatpush.bf16.msra.mxu0 %v6786
    %7098 = vmatpush.bf16.msra.mxu0 %v6782
    %7099 = vmatpush.bf16.msra.mxu0 %v6778
    %7100 = vmatpush.bf16.msra.mxu0 %v6774
    %7101 = vmatpush.bf16.msra.mxu0 %v6770
    %7102 = vmatpush.bf16.msra.mxu0 %v6766
    %7103 = vmatpush.bf16.msra.mxu0 %v6762
    %7104 = vmatpush.bf16.msra.mxu0 %v6758
    %7105 = vmatmul.bf16.gmra.mxu0 %v6337
    %v7106 = vpop.f32.mrf.mxu0
    %v7107 = vadd.f32 %v7094, %v7106
    %v7108 = vpop.f32.mrf.mxu0
    %7109 = vdwg.mxu0
    %7110 = vmatpush.bf16.msra.mxu0 %v6818
    %7111 = vmatpush.bf16.msra.mxu0 %v6814
    %7112 = vmatpush.bf16.msra.mxu0 %v6810
    %7113 = vmatpush.bf16.msra.mxu0 %v6806
    %7114 = vmatpush.bf16.msra.mxu0 %v6802
    %7115 = vmatpush.bf16.msra.mxu0 %v6798
    %7116 = vmatpush.bf16.msra.mxu0 %v6794
    %7117 = vmatpush.bf16.msra.mxu0 %v6790
    %7118 = vmatmul.bf16.gmra.mxu0 %v6338
    %v7119 = vpop.f32.mrf.mxu0
    %v7120 = vadd.f32 %v7107, %v7119
    %v7121 = vpop.f32.mrf.mxu0
    %7122 = vdwg.mxu0
    %7123 = vmatpush.bf16.msra.mxu0 %v6850
    %7124 = vmatpush.bf16.msra.mxu0 %v6846
    %7125 = vmatpush.bf16.msra.mxu0 %v6842
    %7126 = vmatpush.bf16.msra.mxu0 %v6838
    %7127 = vmatpush.bf16.msra.mxu0 %v6834
    %7128 = vmatpush.bf16.msra.mxu0 %v6830
    %7129 = vmatpush.bf16.msra.mxu0 %v6826
    %7130 = vmatpush.bf16.msra.mxu0 %v6822
    %7131 = vmatmul.bf16.gmra.mxu0 %v6339
    %v7132 = vpop.f32.mrf.mxu0
    %v7133 = vadd.f32 %v7120, %v7132
    %v7134 = vpop.f32.mrf.mxu0
    %7135 = vdwg.mxu0
    %7136 = vmatpush.bf16.msra.mxu0 %v6755
    %7137 = vmatpush.bf16.msra.mxu0 %v6751
    %7138 = vmatpush.bf16.msra.mxu0 %v6747
    %7139 = vmatpush.bf16.msra.mxu0 %v6743
    %7140 = vmatpush.bf16.msra.mxu0 %v6739
    %7141 = vmatpush.bf16.msra.mxu0 %v6735
    %7142 = vmatpush.bf16.msra.mxu0 %v6731
    %7143 = vmatpush.bf16.msra.mxu0 %v6727
    %7144 = vmatmul.bf16.gmra.mxu0 %v6336
    %v7145 = vpop.f32.mrf.mxu0
    %v7146 = vadd.f32 %v6331, %v7145
    %v7147 = vpop.f32.mrf.mxu0
    %7148 = vdwg.mxu0
    %7149 = vmatpush.bf16.msra.mxu0 %v6787
    %7150 = vmatpush.bf16.msra.mxu0 %v6783
    %7151 = vmatpush.bf16.msra.mxu0 %v6779
    %7152 = vmatpush.bf16.msra.mxu0 %v6775
    %7153 = vmatpush.bf16.msra.mxu0 %v6771
    %7154 = vmatpush.bf16.msra.mxu0 %v6767
    %7155 = vmatpush.bf16.msra.mxu0 %v6763
    %7156 = vmatpush.bf16.msra.mxu0 %v6759
    %7157 = vmatmul.bf16.gmra.mxu0 %v6337
    %v7158 = vpop.f32.mrf.mxu0
    %v7159 = vadd.f32 %v7146, %v7158
    %v7160 = vpop.f32.mrf.mxu0
    %7161 = vdwg.mxu0
    %7162 = vmatpush.bf16.msra.mxu0 %v6819
    %7163 = vmatpush.bf16.msra.mxu0 %v6815
    %7164 = vmatpush.bf16.msra.mxu0 %v6811
    %7165 = vmatpush.bf16.msra.mxu0 %v6807
    %7166 = vmatpush.bf16.msra.mxu0 %v6803
    %7167 = vmatpush.bf16.msra.mxu0 %v6799
    %7168 = vmatpush.bf16.msra.mxu0 %v6795
    %7169 = vmatpush.bf16.msra.mxu0 %v6791
    %7170 = vmatmul.bf16.gmra.mxu0 %v6338
    %v7171 = vpop.f32.mrf.mxu0
    %v7172 = vadd.f32 %v7159, %v7171
    %v7173 = vpop.f32.mrf.mxu0
    %7174 = vdwg.mxu0
    %7175 = vmatpush.bf16.msra.mxu0 %v6851
    %7176 = vmatpush.bf16.msra.mxu0 %v6847
    %7177 = vmatpush.bf16.msra.mxu0 %v6843
    %7178 = vmatpush.bf16.msra.mxu0 %v6839
    %7179 = vmatpush.bf16.msra.mxu0 %v6835
    %7180 = vmatpush.bf16.msra.mxu0 %v6831
    %7181 = vmatpush.bf16.msra.mxu0 %v6827
    %7182 = vmatpush.bf16.msra.mxu0 %v6823
    %7183 = vmatmul.bf16.gmra.mxu0 %v6339
    %v7184 = vpop.f32.mrf.mxu0
    %v7185 = vadd.f32 %v7172, %v7184
    %v7186 = vpop.f32.mrf.mxu0
    %7187 = vdwg.mxu0
    %v7188 = vmax.f32 %v7029, 0.0
    %v7189 = vmax.f32 %v7081, 0.0
    %v7190 = vmax.f32 %v7133, 0.0
    %v7191 = vmax.f32 %v7185, 0.0
    %v7192 = vpack.c.bf16 %v7188, %v7188
    %v7193 = vpack.c.bf16 %v7189, %v7189
    %v7194 = vpack.c.bf16 %v7190, %v7190
    %v7195 = vpack.c.bf16 %v7191, %v7191
    %7196 = vmatpush.bf16.msra.mxu0 %v6752
    %7197 = vmatpush.bf16.msra.mxu0 %v6748
    %7198 = vmatpush.bf16.msra.mxu0 %v6744
    %7199 = vmatpush.bf16.msra.mxu0 %v6740
    %7200 = vmatpush.bf16.msra.mxu0 %v6736
    %7201 = vmatpush.bf16.msra.mxu0 %v6732
    %7202 = vmatpush.bf16.msra.mxu0 %v6728
    %7203 = vmatpush.bf16.msra.mxu0 %v6724
    %7204 = vmatmul.bf16.gmra.mxu0 %v7192
    %v7205 = vpop.f32.mrf.mxu0
    %v7206 = vadd.f32 %v6328, %v7205
    %v7207 = vpop.f32.mrf.mxu0
    %7208 = vdwg.mxu0
    %7209 = vmatpush.bf16.msra.mxu0 %v6784
    %7210 = vmatpush.bf16.msra.mxu0 %v6780
    %7211 = vmatpush.bf16.msra.mxu0 %v6776
    %7212 = vmatpush.bf16.msra.mxu0 %v6772
    %7213 = vmatpush.bf16.msra.mxu0 %v6768
    %7214 = vmatpush.bf16.msra.mxu0 %v6764
    %7215 = vmatpush.bf16.msra.mxu0 %v6760
    %7216 = vmatpush.bf16.msra.mxu0 %v6756
    %7217 = vmatmul.bf16.gmra.mxu0 %v7193
    %v7218 = vpop.f32.mrf.mxu0
    %v7219 = vadd.f32 %v7206, %v7218
    %v7220 = vpop.f32.mrf.mxu0
    %7221 = vdwg.mxu0
    %7222 = vmatpush.bf16.msra.mxu0 %v6816
    %7223 = vmatpush.bf16.msra.mxu0 %v6812
    %7224 = vmatpush.bf16.msra.mxu0 %v6808
    %7225 = vmatpush.bf16.msra.mxu0 %v6804
    %7226 = vmatpush.bf16.msra.mxu0 %v6800
    %7227 = vmatpush.bf16.msra.mxu0 %v6796
    %7228 = vmatpush.bf16.msra.mxu0 %v6792
    %7229 = vmatpush.bf16.msra.mxu0 %v6788
    %7230 = vmatmul.bf16.gmra.mxu0 %v7194
    %v7231 = vpop.f32.mrf.mxu0
    %v7232 = vadd.f32 %v7219, %v7231
    %v7233 = vpop.f32.mrf.mxu0
    %7234 = vdwg.mxu0
    %7235 = vmatpush.bf16.msra.mxu0 %v6848
    %7236 = vmatpush.bf16.msra.mxu0 %v6844
    %7237 = vmatpush.bf16.msra.mxu0 %v6840
    %7238 = vmatpush.bf16.msra.mxu0 %v6836
    %7239 = vmatpush.bf16.msra.mxu0 %v6832
    %7240 = vmatpush.bf16.msra.mxu0 %v6828
    %7241 = vmatpush.bf16.msra.mxu0 %v6824
    %7242 = vmatpush.bf16.msra.mxu0 %v6820
    %7243 = vmatmul.bf16.gmra.mxu0 %v7195
    %v7244 = vpop.f32.mrf.mxu0
    %v7245 = vadd.f32 %v7232, %v7244
    %v7246 = vpop.f32.mrf.mxu0
    %7247 = vdwg.mxu0
    %7248 = vmatpush.bf16.msra.mxu0 %v6753
    %7249 = vmatpush.bf16.msra.mxu0 %v6749
    %7250 = vmatpush.bf16.msra.mxu0 %v6745
    %7251 = vmatpush.bf16.msra.mxu0 %v6741
    %7252 = vmatpush.bf16.msra.mxu0 %v6737
    %7253 = vmatpush.bf16.msra.mxu0 %v6733
    %7254 = vmatpush.bf16.msra.mxu0 %v6729
    %7255 = vmatpush.bf16.msra.mxu0 %v6725
    %7256 = vmatmul.bf16.gmra.mxu0 %v7192
    %v7257 = vpop.f32.mrf.mxu0
    %v7258 = vadd.f32 %v6329, %v7257
    %v7259 = vpop.f32.mrf.mxu0
    %7260 = vdwg.mxu0
    %7261 = vmatpush.bf16.msra.mxu0 %v6785
    %7262 = vmatpush.bf16.msra.mxu0 %v6781
    %7263 = vmatpush.bf16.msra.mxu0 %v6777
    %7264 = vmatpush.bf16.msra.mxu0 %v6773
    %7265 = vmatpush.bf16.msra.mxu0 %v6769
    %7266 = vmatpush.bf16.msra.mxu0 %v6765
    %7267 = vmatpush.bf16.msra.mxu0 %v6761
    %7268 = vmatpush.bf16.msra.mxu0 %v6757
    %7269 = vmatmul.bf16.gmra.mxu0 %v7193
    %v7270 = vpop.f32.mrf.mxu0
    %v7271 = vadd.f32 %v7258, %v7270
    %v7272 = vpop.f32.mrf.mxu0
    %7273 = vdwg.mxu0
    %7274 = vmatpush.bf16.msra.mxu0 %v6817
    %7275 = vmatpush.bf16.msra.mxu0 %v6813
    %7276 = vmatpush.bf16.msra.mxu0 %v6809
    %7277 = vmatpush.bf16.msra.mxu0 %v6805
    %7278 = vmatpush.bf16.msra.mxu0 %v6801
    %7279 = vmatpush.bf16.msra.mxu0 %v6797
    %7280 = vmatpush.bf16.msra.mxu0 %v6793
    %7281 = vmatpush.bf16.msra.mxu0 %v6789
    %7282 = vmatmul.bf16.gmra.mxu0 %v7194
    %v7283 = vpop.f32.mrf.mxu0
    %v7284 = vadd.f32 %v7271, %v7283
    %v7285 = vpop.f32.mrf.mxu0
    %7286 = vdwg.mxu0
    %7287 = vmatpush.bf16.msra.mxu0 %v6849
    %7288 = vmatpush.bf16.msra.mxu0 %v6845
    %7289 = vmatpush.bf16.msra.mxu0 %v6841
    %7290 = vmatpush.bf16.msra.mxu0 %v6837
    %7291 = vmatpush.bf16.msra.mxu0 %v6833
    %7292 = vmatpush.bf16.msra.mxu0 %v6829
    %7293 = vmatpush.bf16.msra.mxu0 %v6825
    %7294 = vmatpush.bf16.msra.mxu0 %v6821
    %7295 = vmatmul.bf16.gmra.mxu0 %v7195
    %v7296 = vpop.f32.mrf.mxu0
    %v7297 = vadd.f32 %v7284, %v7296
    %v7298 = vpop.f32.mrf.mxu0
    %7299 = vdwg.mxu0
    %7300 = vmatpush.bf16.msra.mxu0 %v6754
    %7301 = vmatpush.bf16.msra.mxu0 %v6750
    %7302 = vmatpush.bf16.msra.mxu0 %v6746
    %7303 = vmatpush.bf16.msra.mxu0 %v6742
    %7304 = vmatpush.bf16.msra.mxu0 %v6738
    %7305 = vmatpush.bf16.msra.mxu0 %v6734
    %7306 = vmatpush.bf16.msra.mxu0 %v6730
    %7307 = vmatpush.bf16.msra.mxu0 %v6726
    %7308 = vmatmul.bf16.gmra.mxu0 %v7192
    %v7309 = vpop.f32.mrf.mxu0
    %v7310 = vadd.f32 %v6330, %v7309
    %v7311 = vpop.f32.mrf.mxu0
    %7312 = vdwg.mxu0
    %7313 = vmatpush.bf16.msra.mxu0 %v6786
    %7314 = vmatpush.bf16.msra.mxu0 %v6782
    %7315 = vmatpush.bf16.msra.mxu0 %v6778
    %7316 = vmatpush.bf16.msra.mxu0 %v6774
    %7317 = vmatpush.bf16.msra.mxu0 %v6770
    %7318 = vmatpush.bf16.msra.mxu0 %v6766
    %7319 = vmatpush.bf16.msra.mxu0 %v6762
    %7320 = vmatpush.bf16.msra.mxu0 %v6758
    %7321 = vmatmul.bf16.gmra.mxu0 %v7193
    %v7322 = vpop.f32.mrf.mxu0
    %v7323 = vadd.f32 %v7310, %v7322
    %v7324 = vpop.f32.mrf.mxu0
    %7325 = vdwg.mxu0
    %7326 = vmatpush.bf16.msra.mxu0 %v6818
    %7327 = vmatpush.bf16.msra.mxu0 %v6814
    %7328 = vmatpush.bf16.msra.mxu0 %v6810
    %7329 = vmatpush.bf16.msra.mxu0 %v6806
    %7330 = vmatpush.bf16.msra.mxu0 %v6802
    %7331 = vmatpush.bf16.msra.mxu0 %v6798
    %7332 = vmatpush.bf16.msra.mxu0 %v6794
    %7333 = vmatpush.bf16.msra.mxu0 %v6790
    %7334 = vmatmul.bf16.gmra.mxu0 %v7194
    %v7335 = vpop.f32.mrf.mxu0
    %v7336 = vadd.f32 %v7323, %v7335
    %v7337 = vpop.f32.mrf.mxu0
    %7338 = vdwg.mxu0
    %7339 = vmatpush.bf16.msra.mxu0 %v6850
    %7340 = vmatpush.bf16.msra.mxu0 %v6846
    %7341 = vmatpush.bf16.msra.mxu0 %v6842
    %7342 = vmatpush.bf16.msra.mxu0 %v6838
    %7343 = vmatpush.bf16.msra.mxu0 %v6834
    %7344 = vmatpush.bf16.msra.mxu0 %v6830
    %7345 = vmatpush.bf16.msra.mxu0 %v6826
    %7346 = vmatpush.bf16.msra.mxu0 %v6822
    %7347 = vmatmul.bf16.gmra.mxu0 %v7195
    %v7348 = vpop.f32.mrf.mxu0
    %v7349 = vadd.f32 %v7336, %v7348
    %v7350 = vpop.f32.mrf.mxu0
    %7351 = vdwg.mxu0
    %7352 = vmatpush.bf16.msra.mxu0 %v6755
    %7353 = vmatpush.bf16.msra.mxu0 %v6751
    %7354 = vmatpush.bf16.msra.mxu0 %v6747
    %7355 = vmatpush.bf16.msra.mxu0 %v6743
    %7356 = vmatpush.bf16.msra.mxu0 %v6739
    %7357 = vmatpush.bf16.msra.mxu0 %v6735
    %7358 = vmatpush.bf16.msra.mxu0 %v6731
    %7359 = vmatpush.bf16.msra.mxu0 %v6727
    %7360 = vmatmul.bf16.gmra.mxu0 %v7192
    %v7361 = vpop.f32.mrf.mxu0
    %v7362 = vadd.f32 %v6331, %v7361
    %v7363 = vpop.f32.mrf.mxu0
    %7364 = vdwg.mxu0
    %7365 = vmatpush.bf16.msra.mxu0 %v6787
    %7366 = vmatpush.bf16.msra.mxu0 %v6783
    %7367 = vmatpush.bf16.msra.mxu0 %v6779
    %7368 = vmatpush.bf16.msra.mxu0 %v6775
    %7369 = vmatpush.bf16.msra.mxu0 %v6771
    %7370 = vmatpush.bf16.msra.mxu0 %v6767
    %7371 = vmatpush.bf16.msra.mxu0 %v6763
    %7372 = vmatpush.bf16.msra.mxu0 %v6759
    %7373 = vmatmul.bf16.gmra.mxu0 %v7193
    %v7374 = vpop.f32.mrf.mxu0
    %v7375 = vadd.f32 %v7362, %v7374
    %v7376 = vpop.f32.mrf.mxu0
    %7377 = vdwg.mxu0
    %7378 = vmatpush.bf16.msra.mxu0 %v6819
    %7379 = vmatpush.bf16.msra.mxu0 %v6815
    %7380 = vmatpush.bf16.msra.mxu0 %v6811
    %7381 = vmatpush.bf16.msra.mxu0 %v6807
    %7382 = vmatpush.bf16.msra.mxu0 %v6803
    %7383 = vmatpush.bf16.msra.mxu0 %v6799
    %7384 = vmatpush.bf16.msra.mxu0 %v6795
    %7385 = vmatpush.bf16.msra.mxu0 %v6791
    %7386 = vmatmul.bf16.gmra.mxu0 %v7194
    %v7387 = vpop.f32.mrf.mxu0
    %v7388 = vadd.f32 %v7375, %v7387
    %v7389 = vpop.f32.mrf.mxu0
    %7390 = vdwg.mxu0
    %7391 = vmatpush.bf16.msra.mxu0 %v6851
    %7392 = vmatpush.bf16.msra.mxu0 %v6847
    %7393 = vmatpush.bf16.msra.mxu0 %v6843
    %7394 = vmatpush.bf16.msra.mxu0 %v6839
    %7395 = vmatpush.bf16.msra.mxu0 %v6835
    %7396 = vmatpush.bf16.msra.mxu0 %v6831
    %7397 = vmatpush.bf16.msra.mxu0 %v6827
    %7398 = vmatpush.bf16.msra.mxu0 %v6823
    %7399 = vmatmul.bf16.gmra.mxu0 %v7195
    %v7400 = vpop.f32.mrf.mxu0
    %v7401 = vadd.f32 %v7388, %v7400
    %v7402 = vpop.f32.mrf.mxu0
    %7403 = vdwg.mxu0
    %v7404 = vmax.f32 %v7245, 0.0
    %v7405 = vmax.f32 %v7297, 0.0
    %v7406 = vmax.f32 %v7349, 0.0
    %v7407 = vmax.f32 %v7401, 0.0
    %v7408 = vpack.c.bf16 %v7404, %v7404
    %v7409 = vpack.c.bf16 %v7405, %v7405
    %v7410 = vpack.c.bf16 %v7406, %v7406
    %v7411 = vpack.c.bf16 %v7407, %v7407
    %7412 = vmatpush.bf16.msra.mxu0 %v6752
    %7413 = vmatpush.bf16.msra.mxu0 %v6748
    %7414 = vmatpush.bf16.msra.mxu0 %v6744
    %7415 = vmatpush.bf16.msra.mxu0 %v6740
    %7416 = vmatpush.bf16.msra.mxu0 %v6736
    %7417 = vmatpush.bf16.msra.mxu0 %v6732
    %7418 = vmatpush.bf16.msra.mxu0 %v6728
    %7419 = vmatpush.bf16.msra.mxu0 %v6724
    %7420 = vmatmul.bf16.gmra.mxu0 %v7408
    %v7421 = vpop.f32.mrf.mxu0
    %v7422 = vadd.f32 %v6328, %v7421
    %v7423 = vpop.f32.mrf.mxu0
    %7424 = vdwg.mxu0
    %7425 = vmatpush.bf16.msra.mxu0 %v6784
    %7426 = vmatpush.bf16.msra.mxu0 %v6780
    %7427 = vmatpush.bf16.msra.mxu0 %v6776
    %7428 = vmatpush.bf16.msra.mxu0 %v6772
    %7429 = vmatpush.bf16.msra.mxu0 %v6768
    %7430 = vmatpush.bf16.msra.mxu0 %v6764
    %7431 = vmatpush.bf16.msra.mxu0 %v6760
    %7432 = vmatpush.bf16.msra.mxu0 %v6756
    %7433 = vmatmul.bf16.gmra.mxu0 %v7409
    %v7434 = vpop.f32.mrf.mxu0
    %v7435 = vadd.f32 %v7422, %v7434
    %v7436 = vpop.f32.mrf.mxu0
    %7437 = vdwg.mxu0
    %7438 = vmatpush.bf16.msra.mxu0 %v6816
    %7439 = vmatpush.bf16.msra.mxu0 %v6812
    %7440 = vmatpush.bf16.msra.mxu0 %v6808
    %7441 = vmatpush.bf16.msra.mxu0 %v6804
    %7442 = vmatpush.bf16.msra.mxu0 %v6800
    %7443 = vmatpush.bf16.msra.mxu0 %v6796
    %7444 = vmatpush.bf16.msra.mxu0 %v6792
    %7445 = vmatpush.bf16.msra.mxu0 %v6788
    %7446 = vmatmul.bf16.gmra.mxu0 %v7410
    %v7447 = vpop.f32.mrf.mxu0
    %v7448 = vadd.f32 %v7435, %v7447
    %v7449 = vpop.f32.mrf.mxu0
    %7450 = vdwg.mxu0
    %7451 = vmatpush.bf16.msra.mxu0 %v6848
    %7452 = vmatpush.bf16.msra.mxu0 %v6844
    %7453 = vmatpush.bf16.msra.mxu0 %v6840
    %7454 = vmatpush.bf16.msra.mxu0 %v6836
    %7455 = vmatpush.bf16.msra.mxu0 %v6832
    %7456 = vmatpush.bf16.msra.mxu0 %v6828
    %7457 = vmatpush.bf16.msra.mxu0 %v6824
    %7458 = vmatpush.bf16.msra.mxu0 %v6820
    %7459 = vmatmul.bf16.gmra.mxu0 %v7411
    %v7460 = vpop.f32.mrf.mxu0
    %v7461 = vadd.f32 %v7448, %v7460
    %v7462 = vpop.f32.mrf.mxu0
    %7463 = vdwg.mxu0
    %7464 = vmatpush.bf16.msra.mxu0 %v6753
    %7465 = vmatpush.bf16.msra.mxu0 %v6749
    %7466 = vmatpush.bf16.msra.mxu0 %v6745
    %7467 = vmatpush.bf16.msra.mxu0 %v6741
    %7468 = vmatpush.bf16.msra.mxu0 %v6737
    %7469 = vmatpush.bf16.msra.mxu0 %v6733
    %7470 = vmatpush.bf16.msra.mxu0 %v6729
    %7471 = vmatpush.bf16.msra.mxu0 %v6725
    %7472 = vmatmul.bf16.gmra.mxu0 %v7408
    %v7473 = vpop.f32.mrf.mxu0
    %v7474 = vadd.f32 %v6329, %v7473
    %v7475 = vpop.f32.mrf.mxu0
    %7476 = vdwg.mxu0
    %7477 = vmatpush.bf16.msra.mxu0 %v6785
    %7478 = vmatpush.bf16.msra.mxu0 %v6781
    %7479 = vmatpush.bf16.msra.mxu0 %v6777
    %7480 = vmatpush.bf16.msra.mxu0 %v6773
    %7481 = vmatpush.bf16.msra.mxu0 %v6769
    %7482 = vmatpush.bf16.msra.mxu0 %v6765
    %7483 = vmatpush.bf16.msra.mxu0 %v6761
    %7484 = vmatpush.bf16.msra.mxu0 %v6757
    %7485 = vmatmul.bf16.gmra.mxu0 %v7409
    %v7486 = vpop.f32.mrf.mxu0
    %v7487 = vadd.f32 %v7474, %v7486
    %v7488 = vpop.f32.mrf.mxu0
    %7489 = vdwg.mxu0
    %7490 = vmatpush.bf16.msra.mxu0 %v6817
    %7491 = vmatpush.bf16.msra.mxu0 %v6813
    %7492 = vmatpush.bf16.msra.mxu0 %v6809
    %7493 = vmatpush.bf16.msra.mxu0 %v6805
    %7494 = vmatpush.bf16.msra.mxu0 %v6801
    %7495 = vmatpush.bf16.msra.mxu0 %v6797
    %7496 = vmatpush.bf16.msra.mxu0 %v6793
    %7497 = vmatpush.bf16.msra.mxu0 %v6789
    %7498 = vmatmul.bf16.gmra.mxu0 %v7410
    %v7499 = vpop.f32.mrf.mxu0
    %v7500 = vadd.f32 %v7487, %v7499
    %v7501 = vpop.f32.mrf.mxu0
    %7502 = vdwg.mxu0
    %7503 = vmatpush.bf16.msra.mxu0 %v6849
    %7504 = vmatpush.bf16.msra.mxu0 %v6845
    %7505 = vmatpush.bf16.msra.mxu0 %v6841
    %7506 = vmatpush.bf16.msra.mxu0 %v6837
    %7507 = vmatpush.bf16.msra.mxu0 %v6833
    %7508 = vmatpush.bf16.msra.mxu0 %v6829
    %7509 = vmatpush.bf16.msra.mxu0 %v6825
    %7510 = vmatpush.bf16.msra.mxu0 %v6821
    %7511 = vmatmul.bf16.gmra.mxu0 %v7411
    %v7512 = vpop.f32.mrf.mxu0
    %v7513 = vadd.f32 %v7500, %v7512
    %v7514 = vpop.f32.mrf.mxu0
    %7515 = vdwg.mxu0
    %7516 = vmatpush.bf16.msra.mxu0 %v6754
    %7517 = vmatpush.bf16.msra.mxu0 %v6750
    %7518 = vmatpush.bf16.msra.mxu0 %v6746
    %7519 = vmatpush.bf16.msra.mxu0 %v6742
    %7520 = vmatpush.bf16.msra.mxu0 %v6738
    %7521 = vmatpush.bf16.msra.mxu0 %v6734
    %7522 = vmatpush.bf16.msra.mxu0 %v6730
    %7523 = vmatpush.bf16.msra.mxu0 %v6726
    %7524 = vmatmul.bf16.gmra.mxu0 %v7408
    %v7525 = vpop.f32.mrf.mxu0
    %v7526 = vadd.f32 %v6330, %v7525
    %v7527 = vpop.f32.mrf.mxu0
    %7528 = vdwg.mxu0
    %7529 = vmatpush.bf16.msra.mxu0 %v6786
    %7530 = vmatpush.bf16.msra.mxu0 %v6782
    %7531 = vmatpush.bf16.msra.mxu0 %v6778
    %7532 = vmatpush.bf16.msra.mxu0 %v6774
    %7533 = vmatpush.bf16.msra.mxu0 %v6770
    %7534 = vmatpush.bf16.msra.mxu0 %v6766
    %7535 = vmatpush.bf16.msra.mxu0 %v6762
    %7536 = vmatpush.bf16.msra.mxu0 %v6758
    %7537 = vmatmul.bf16.gmra.mxu0 %v7409
    %v7538 = vpop.f32.mrf.mxu0
    %v7539 = vadd.f32 %v7526, %v7538
    %v7540 = vpop.f32.mrf.mxu0
    %7541 = vdwg.mxu0
    %7542 = vmatpush.bf16.msra.mxu0 %v6818
    %7543 = vmatpush.bf16.msra.mxu0 %v6814
    %7544 = vmatpush.bf16.msra.mxu0 %v6810
    %7545 = vmatpush.bf16.msra.mxu0 %v6806
    %7546 = vmatpush.bf16.msra.mxu0 %v6802
    %7547 = vmatpush.bf16.msra.mxu0 %v6798
    %7548 = vmatpush.bf16.msra.mxu0 %v6794
    %7549 = vmatpush.bf16.msra.mxu0 %v6790
    %7550 = vmatmul.bf16.gmra.mxu0 %v7410
    %v7551 = vpop.f32.mrf.mxu0
    %v7552 = vadd.f32 %v7539, %v7551
    %v7553 = vpop.f32.mrf.mxu0
    %7554 = vdwg.mxu0
    %7555 = vmatpush.bf16.msra.mxu0 %v6850
    %7556 = vmatpush.bf16.msra.mxu0 %v6846
    %7557 = vmatpush.bf16.msra.mxu0 %v6842
    %7558 = vmatpush.bf16.msra.mxu0 %v6838
    %7559 = vmatpush.bf16.msra.mxu0 %v6834
    %7560 = vmatpush.bf16.msra.mxu0 %v6830
    %7561 = vmatpush.bf16.msra.mxu0 %v6826
    %7562 = vmatpush.bf16.msra.mxu0 %v6822
    %7563 = vmatmul.bf16.gmra.mxu0 %v7411
    %v7564 = vpop.f32.mrf.mxu0
    %v7565 = vadd.f32 %v7552, %v7564
    %v7566 = vpop.f32.mrf.mxu0
    %7567 = vdwg.mxu0
    %7568 = vmatpush.bf16.msra.mxu0 %v6755
    %7569 = vmatpush.bf16.msra.mxu0 %v6751
    %7570 = vmatpush.bf16.msra.mxu0 %v6747
    %7571 = vmatpush.bf16.msra.mxu0 %v6743
    %7572 = vmatpush.bf16.msra.mxu0 %v6739
    %7573 = vmatpush.bf16.msra.mxu0 %v6735
    %7574 = vmatpush.bf16.msra.mxu0 %v6731
    %7575 = vmatpush.bf16.msra.mxu0 %v6727
    %7576 = vmatmul.bf16.gmra.mxu0 %v7408
    %v7577 = vpop.f32.mrf.mxu0
    %v7578 = vadd.f32 %v6331, %v7577
    %v7579 = vpop.f32.mrf.mxu0
    %7580 = vdwg.mxu0
    %7581 = vmatpush.bf16.msra.mxu0 %v6787
    %7582 = vmatpush.bf16.msra.mxu0 %v6783
    %7583 = vmatpush.bf16.msra.mxu0 %v6779
    %7584 = vmatpush.bf16.msra.mxu0 %v6775
    %7585 = vmatpush.bf16.msra.mxu0 %v6771
    %7586 = vmatpush.bf16.msra.mxu0 %v6767
    %7587 = vmatpush.bf16.msra.mxu0 %v6763
    %7588 = vmatpush.bf16.msra.mxu0 %v6759
    %7589 = vmatmul.bf16.gmra.mxu0 %v7409
    %v7590 = vpop.f32.mrf.mxu0
    %v7591 = vadd.f32 %v7578, %v7590
    %v7592 = vpop.f32.mrf.mxu0
    %7593 = vdwg.mxu0
    %7594 = vmatpush.bf16.msra.mxu0 %v6819
    %7595 = vmatpush.bf16.msra.mxu0 %v6815
    %7596 = vmatpush.bf16.msra.mxu0 %v6811
    %7597 = vmatpush.bf16.msra.mxu0 %v6807
    %7598 = vmatpush.bf16.msra.mxu0 %v6803
    %7599 = vmatpush.bf16.msra.mxu0 %v6799
    %7600 = vmatpush.bf16.msra.mxu0 %v6795
    %7601 = vmatpush.bf16.msra.mxu0 %v6791
    %7602 = vmatmul.bf16.gmra.mxu0 %v7410
    %v7603 = vpop.f32.mrf.mxu0
    %v7604 = vadd.f32 %v7591, %v7603
    %v7605 = vpop.f32.mrf.mxu0
    %7606 = vdwg.mxu0
    %7607 = vmatpush.bf16.msra.mxu0 %v6851
    %7608 = vmatpush.bf16.msra.mxu0 %v6847
    %7609 = vmatpush.bf16.msra.mxu0 %v6843
    %7610 = vmatpush.bf16.msra.mxu0 %v6839
    %7611 = vmatpush.bf16.msra.mxu0 %v6835
    %7612 = vmatpush.bf16.msra.mxu0 %v6831
    %7613 = vmatpush.bf16.msra.mxu0 %v6827
    %7614 = vmatpush.bf16.msra.mxu0 %v6823
    %7615 = vmatmul.bf16.gmra.mxu0 %v7411
    %v7616 = vpop.f32.mrf.mxu0
    %v7617 = vadd.f32 %v7604, %v7616
    %v7618 = vpop.f32.mrf.mxu0
    %7619 = vdwg.mxu0
    %v7620 = vmax.f32 %v7461, 0.0
    %v7621 = vmax.f32 %v7513, 0.0
    %v7622 = vmax.f32 %v7565, 0.0
    %v7623 = vmax.f32 %v7617, 0.0
    %v7624 = vpack.c.bf16 %v7620, %v7620
    %v7625 = vpack.c.bf16 %v7621, %v7621
    %v7626 = vpack.c.bf16 %v7622, %v7622
    %v7627 = vpack.c.bf16 %v7623, %v7623
    %7628 = vmatpush.bf16.msra.mxu0 %v6752
    %7629 = vmatpush.bf16.msra.mxu0 %v6748
    %7630 = vmatpush.bf16.msra.mxu0 %v6744
    %7631 = vmatpush.bf16.msra.mxu0 %v6740
    %7632 = vmatpush.bf16.msra.mxu0 %v6736
    %7633 = vmatpush.bf16.msra.mxu0 %v6732
    %7634 = vmatpush.bf16.msra.mxu0 %v6728
    %7635 = vmatpush.bf16.msra.mxu0 %v6724
    %7636 = vmatmul.bf16.gmra.mxu0 %v7624
    %v7637 = vpop.f32.mrf.mxu0
    %v7638 = vadd.f32 %v6328, %v7637
    %v7639 = vpop.f32.mrf.mxu0
    %7640 = vdwg.mxu0
    %7641 = vmatpush.bf16.msra.mxu0 %v6784
    %7642 = vmatpush.bf16.msra.mxu0 %v6780
    %7643 = vmatpush.bf16.msra.mxu0 %v6776
    %7644 = vmatpush.bf16.msra.mxu0 %v6772
    %7645 = vmatpush.bf16.msra.mxu0 %v6768
    %7646 = vmatpush.bf16.msra.mxu0 %v6764
    %7647 = vmatpush.bf16.msra.mxu0 %v6760
    %7648 = vmatpush.bf16.msra.mxu0 %v6756
    %7649 = vmatmul.bf16.gmra.mxu0 %v7625
    %v7650 = vpop.f32.mrf.mxu0
    %v7651 = vadd.f32 %v7638, %v7650
    %v7652 = vpop.f32.mrf.mxu0
    %7653 = vdwg.mxu0
    %7654 = vmatpush.bf16.msra.mxu0 %v6816
    %7655 = vmatpush.bf16.msra.mxu0 %v6812
    %7656 = vmatpush.bf16.msra.mxu0 %v6808
    %7657 = vmatpush.bf16.msra.mxu0 %v6804
    %7658 = vmatpush.bf16.msra.mxu0 %v6800
    %7659 = vmatpush.bf16.msra.mxu0 %v6796
    %7660 = vmatpush.bf16.msra.mxu0 %v6792
    %7661 = vmatpush.bf16.msra.mxu0 %v6788
    %7662 = vmatmul.bf16.gmra.mxu0 %v7626
    %v7663 = vpop.f32.mrf.mxu0
    %v7664 = vadd.f32 %v7651, %v7663
    %v7665 = vpop.f32.mrf.mxu0
    %7666 = vdwg.mxu0
    %7667 = vmatpush.bf16.msra.mxu0 %v6848
    %7668 = vmatpush.bf16.msra.mxu0 %v6844
    %7669 = vmatpush.bf16.msra.mxu0 %v6840
    %7670 = vmatpush.bf16.msra.mxu0 %v6836
    %7671 = vmatpush.bf16.msra.mxu0 %v6832
    %7672 = vmatpush.bf16.msra.mxu0 %v6828
    %7673 = vmatpush.bf16.msra.mxu0 %v6824
    %7674 = vmatpush.bf16.msra.mxu0 %v6820
    %7675 = vmatmul.bf16.gmra.mxu0 %v7627
    %v7676 = vpop.f32.mrf.mxu0
    %v7677 = vadd.f32 %v7664, %v7676
    %v7678 = vpop.f32.mrf.mxu0
    %7679 = vdwg.mxu0
    %7680 = vmatpush.bf16.msra.mxu0 %v6753
    %7681 = vmatpush.bf16.msra.mxu0 %v6749
    %7682 = vmatpush.bf16.msra.mxu0 %v6745
    %7683 = vmatpush.bf16.msra.mxu0 %v6741
    %7684 = vmatpush.bf16.msra.mxu0 %v6737
    %7685 = vmatpush.bf16.msra.mxu0 %v6733
    %7686 = vmatpush.bf16.msra.mxu0 %v6729
    %7687 = vmatpush.bf16.msra.mxu0 %v6725
    %7688 = vmatmul.bf16.gmra.mxu0 %v7624
    %v7689 = vpop.f32.mrf.mxu0
    %v7690 = vadd.f32 %v6329, %v7689
    %v7691 = vpop.f32.mrf.mxu0
    %7692 = vdwg.mxu0
    %7693 = vmatpush.bf16.msra.mxu0 %v6785
    %7694 = vmatpush.bf16.msra.mxu0 %v6781
    %7695 = vmatpush.bf16.msra.mxu0 %v6777
    %7696 = vmatpush.bf16.msra.mxu0 %v6773
    %7697 = vmatpush.bf16.msra.mxu0 %v6769
    %7698 = vmatpush.bf16.msra.mxu0 %v6765
    %7699 = vmatpush.bf16.msra.mxu0 %v6761
    %7700 = vmatpush.bf16.msra.mxu0 %v6757
    %7701 = vmatmul.bf16.gmra.mxu0 %v7625
    %v7702 = vpop.f32.mrf.mxu0
    %v7703 = vadd.f32 %v7690, %v7702
    %v7704 = vpop.f32.mrf.mxu0
    %7705 = vdwg.mxu0
    %7706 = vmatpush.bf16.msra.mxu0 %v6817
    %7707 = vmatpush.bf16.msra.mxu0 %v6813
    %7708 = vmatpush.bf16.msra.mxu0 %v6809
    %7709 = vmatpush.bf16.msra.mxu0 %v6805
    %7710 = vmatpush.bf16.msra.mxu0 %v6801
    %7711 = vmatpush.bf16.msra.mxu0 %v6797
    %7712 = vmatpush.bf16.msra.mxu0 %v6793
    %7713 = vmatpush.bf16.msra.mxu0 %v6789
    %7714 = vmatmul.bf16.gmra.mxu0 %v7626
    %v7715 = vpop.f32.mrf.mxu0
    %v7716 = vadd.f32 %v7703, %v7715
    %v7717 = vpop.f32.mrf.mxu0
    %7718 = vdwg.mxu0
    %7719 = vmatpush.bf16.msra.mxu0 %v6849
    %7720 = vmatpush.bf16.msra.mxu0 %v6845
    %7721 = vmatpush.bf16.msra.mxu0 %v6841
    %7722 = vmatpush.bf16.msra.mxu0 %v6837
    %7723 = vmatpush.bf16.msra.mxu0 %v6833
    %7724 = vmatpush.bf16.msra.mxu0 %v6829
    %7725 = vmatpush.bf16.msra.mxu0 %v6825
    %7726 = vmatpush.bf16.msra.mxu0 %v6821
    %7727 = vmatmul.bf16.gmra.mxu0 %v7627
    %v7728 = vpop.f32.mrf.mxu0
    %v7729 = vadd.f32 %v7716, %v7728
    %v7730 = vpop.f32.mrf.mxu0
    %7731 = vdwg.mxu0
    %7732 = vmatpush.bf16.msra.mxu0 %v6754
    %7733 = vmatpush.bf16.msra.mxu0 %v6750
    %7734 = vmatpush.bf16.msra.mxu0 %v6746
    %7735 = vmatpush.bf16.msra.mxu0 %v6742
    %7736 = vmatpush.bf16.msra.mxu0 %v6738
    %7737 = vmatpush.bf16.msra.mxu0 %v6734
    %7738 = vmatpush.bf16.msra.mxu0 %v6730
    %7739 = vmatpush.bf16.msra.mxu0 %v6726
    %7740 = vmatmul.bf16.gmra.mxu0 %v7624
    %v7741 = vpop.f32.mrf.mxu0
    %v7742 = vadd.f32 %v6330, %v7741
    %v7743 = vpop.f32.mrf.mxu0
    %7744 = vdwg.mxu0
    %7745 = vmatpush.bf16.msra.mxu0 %v6786
    %7746 = vmatpush.bf16.msra.mxu0 %v6782
    %7747 = vmatpush.bf16.msra.mxu0 %v6778
    %7748 = vmatpush.bf16.msra.mxu0 %v6774
    %7749 = vmatpush.bf16.msra.mxu0 %v6770
    %7750 = vmatpush.bf16.msra.mxu0 %v6766
    %7751 = vmatpush.bf16.msra.mxu0 %v6762
    %7752 = vmatpush.bf16.msra.mxu0 %v6758
    %7753 = vmatmul.bf16.gmra.mxu0 %v7625
    %v7754 = vpop.f32.mrf.mxu0
    %v7755 = vadd.f32 %v7742, %v7754
    %v7756 = vpop.f32.mrf.mxu0
    %7757 = vdwg.mxu0
    %7758 = vmatpush.bf16.msra.mxu0 %v6818
    %7759 = vmatpush.bf16.msra.mxu0 %v6814
    %7760 = vmatpush.bf16.msra.mxu0 %v6810
    %7761 = vmatpush.bf16.msra.mxu0 %v6806
    %7762 = vmatpush.bf16.msra.mxu0 %v6802
    %7763 = vmatpush.bf16.msra.mxu0 %v6798
    %7764 = vmatpush.bf16.msra.mxu0 %v6794
    %7765 = vmatpush.bf16.msra.mxu0 %v6790
    %7766 = vmatmul.bf16.gmra.mxu0 %v7626
    %v7767 = vpop.f32.mrf.mxu0
    %v7768 = vadd.f32 %v7755, %v7767
    %v7769 = vpop.f32.mrf.mxu0
    %7770 = vdwg.mxu0
    %7771 = vmatpush.bf16.msra.mxu0 %v6850
    %7772 = vmatpush.bf16.msra.mxu0 %v6846
    %7773 = vmatpush.bf16.msra.mxu0 %v6842
    %7774 = vmatpush.bf16.msra.mxu0 %v6838
    %7775 = vmatpush.bf16.msra.mxu0 %v6834
    %7776 = vmatpush.bf16.msra.mxu0 %v6830
    %7777 = vmatpush.bf16.msra.mxu0 %v6826
    %7778 = vmatpush.bf16.msra.mxu0 %v6822
    %7779 = vmatmul.bf16.gmra.mxu0 %v7627
    %v7780 = vpop.f32.mrf.mxu0
    %v7781 = vadd.f32 %v7768, %v7780
    %v7782 = vpop.f32.mrf.mxu0
    %7783 = vdwg.mxu0
    %7784 = vmatpush.bf16.msra.mxu0 %v6755
    %7785 = vmatpush.bf16.msra.mxu0 %v6751
    %7786 = vmatpush.bf16.msra.mxu0 %v6747
    %7787 = vmatpush.bf16.msra.mxu0 %v6743
    %7788 = vmatpush.bf16.msra.mxu0 %v6739
    %7789 = vmatpush.bf16.msra.mxu0 %v6735
    %7790 = vmatpush.bf16.msra.mxu0 %v6731
    %7791 = vmatpush.bf16.msra.mxu0 %v6727
    %7792 = vmatmul.bf16.gmra.mxu0 %v7624
    %v7793 = vpop.f32.mrf.mxu0
    %v7794 = vadd.f32 %v6331, %v7793
    %v7795 = vpop.f32.mrf.mxu0
    %7796 = vdwg.mxu0
    %7797 = vmatpush.bf16.msra.mxu0 %v6787
    %7798 = vmatpush.bf16.msra.mxu0 %v6783
    %7799 = vmatpush.bf16.msra.mxu0 %v6779
    %7800 = vmatpush.bf16.msra.mxu0 %v6775
    %7801 = vmatpush.bf16.msra.mxu0 %v6771
    %7802 = vmatpush.bf16.msra.mxu0 %v6767
    %7803 = vmatpush.bf16.msra.mxu0 %v6763
    %7804 = vmatpush.bf16.msra.mxu0 %v6759
    %7805 = vmatmul.bf16.gmra.mxu0 %v7625
    %v7806 = vpop.f32.mrf.mxu0
    %v7807 = vadd.f32 %v7794, %v7806
    %v7808 = vpop.f32.mrf.mxu0
    %7809 = vdwg.mxu0
    %7810 = vmatpush.bf16.msra.mxu0 %v6819
    %7811 = vmatpush.bf16.msra.mxu0 %v6815
    %7812 = vmatpush.bf16.msra.mxu0 %v6811
    %7813 = vmatpush.bf16.msra.mxu0 %v6807
    %7814 = vmatpush.bf16.msra.mxu0 %v6803
    %7815 = vmatpush.bf16.msra.mxu0 %v6799
    %7816 = vmatpush.bf16.msra.mxu0 %v6795
    %7817 = vmatpush.bf16.msra.mxu0 %v6791
    %7818 = vmatmul.bf16.gmra.mxu0 %v7626
    %v7819 = vpop.f32.mrf.mxu0
    %v7820 = vadd.f32 %v7807, %v7819
    %v7821 = vpop.f32.mrf.mxu0
    %7822 = vdwg.mxu0
    %7823 = vmatpush.bf16.msra.mxu0 %v6851
    %7824 = vmatpush.bf16.msra.mxu0 %v6847
    %7825 = vmatpush.bf16.msra.mxu0 %v6843
    %7826 = vmatpush.bf16.msra.mxu0 %v6839
    %7827 = vmatpush.bf16.msra.mxu0 %v6835
    %7828 = vmatpush.bf16.msra.mxu0 %v6831
    %7829 = vmatpush.bf16.msra.mxu0 %v6827
    %7830 = vmatpush.bf16.msra.mxu0 %v6823
    %7831 = vmatmul.bf16.gmra.mxu0 %v7627
    %v7832 = vpop.f32.mrf.mxu0
    %v7833 = vadd.f32 %v7820, %v7832
    %v7834 = vpop.f32.mrf.mxu0
    %7835 = vdwg.mxu0
    %v7836 = vmax.f32 %v7677, 0.0
    %v7837 = vmax.f32 %v7729, 0.0
    %v7838 = vmax.f32 %v7781, 0.0
    %v7839 = vmax.f32 %v7833, 0.0
    %v7840 = vpack.c.bf16 %v7836, %v7836
    %v7841 = vpack.c.bf16 %v7837, %v7837
    %v7842 = vpack.c.bf16 %v7838, %v7838
    %v7843 = vpack.c.bf16 %v7839, %v7839
    %7844 = vmatpush.bf16.msra.mxu0 %v6752
    %7845 = vmatpush.bf16.msra.mxu0 %v6748
    %7846 = vmatpush.bf16.msra.mxu0 %v6744
    %7847 = vmatpush.bf16.msra.mxu0 %v6740
    %7848 = vmatpush.bf16.msra.mxu0 %v6736
    %7849 = vmatpush.bf16.msra.mxu0 %v6732
    %7850 = vmatpush.bf16.msra.mxu0 %v6728
    %7851 = vmatpush.bf16.msra.mxu0 %v6724
    %7852 = vmatmul.bf16.gmra.mxu0 %v7840
    %v7853 = vpop.f32.mrf.mxu0
    %v7854 = vadd.f32 %v6328, %v7853
    %v7855 = vpop.f32.mrf.mxu0
    %7856 = vdwg.mxu0
    %7857 = vmatpush.bf16.msra.mxu0 %v6784
    %7858 = vmatpush.bf16.msra.mxu0 %v6780
    %7859 = vmatpush.bf16.msra.mxu0 %v6776
    %7860 = vmatpush.bf16.msra.mxu0 %v6772
    %7861 = vmatpush.bf16.msra.mxu0 %v6768
    %7862 = vmatpush.bf16.msra.mxu0 %v6764
    %7863 = vmatpush.bf16.msra.mxu0 %v6760
    %7864 = vmatpush.bf16.msra.mxu0 %v6756
    %7865 = vmatmul.bf16.gmra.mxu0 %v7841
    %v7866 = vpop.f32.mrf.mxu0
    %v7867 = vadd.f32 %v7854, %v7866
    %v7868 = vpop.f32.mrf.mxu0
    %7869 = vdwg.mxu0
    %7870 = vmatpush.bf16.msra.mxu0 %v6816
    %7871 = vmatpush.bf16.msra.mxu0 %v6812
    %7872 = vmatpush.bf16.msra.mxu0 %v6808
    %7873 = vmatpush.bf16.msra.mxu0 %v6804
    %7874 = vmatpush.bf16.msra.mxu0 %v6800
    %7875 = vmatpush.bf16.msra.mxu0 %v6796
    %7876 = vmatpush.bf16.msra.mxu0 %v6792
    %7877 = vmatpush.bf16.msra.mxu0 %v6788
    %7878 = vmatmul.bf16.gmra.mxu0 %v7842
    %v7879 = vpop.f32.mrf.mxu0
    %v7880 = vadd.f32 %v7867, %v7879
    %v7881 = vpop.f32.mrf.mxu0
    %7882 = vdwg.mxu0
    %7883 = vmatpush.bf16.msra.mxu0 %v6848
    %7884 = vmatpush.bf16.msra.mxu0 %v6844
    %7885 = vmatpush.bf16.msra.mxu0 %v6840
    %7886 = vmatpush.bf16.msra.mxu0 %v6836
    %7887 = vmatpush.bf16.msra.mxu0 %v6832
    %7888 = vmatpush.bf16.msra.mxu0 %v6828
    %7889 = vmatpush.bf16.msra.mxu0 %v6824
    %7890 = vmatpush.bf16.msra.mxu0 %v6820
    %7891 = vmatmul.bf16.gmra.mxu0 %v7843
    %v7892 = vpop.f32.mrf.mxu0
    %v7893 = vadd.f32 %v7880, %v7892
    %v7894 = vpop.f32.mrf.mxu0
    %7895 = vdwg.mxu0
    %7896 = vmatpush.bf16.msra.mxu0 %v6753
    %7897 = vmatpush.bf16.msra.mxu0 %v6749
    %7898 = vmatpush.bf16.msra.mxu0 %v6745
    %7899 = vmatpush.bf16.msra.mxu0 %v6741
    %7900 = vmatpush.bf16.msra.mxu0 %v6737
    %7901 = vmatpush.bf16.msra.mxu0 %v6733
    %7902 = vmatpush.bf16.msra.mxu0 %v6729
    %7903 = vmatpush.bf16.msra.mxu0 %v6725
    %7904 = vmatmul.bf16.gmra.mxu0 %v7840
    %v7905 = vpop.f32.mrf.mxu0
    %v7906 = vadd.f32 %v6329, %v7905
    %v7907 = vpop.f32.mrf.mxu0
    %7908 = vdwg.mxu0
    %7909 = vmatpush.bf16.msra.mxu0 %v6785
    %7910 = vmatpush.bf16.msra.mxu0 %v6781
    %7911 = vmatpush.bf16.msra.mxu0 %v6777
    %7912 = vmatpush.bf16.msra.mxu0 %v6773
    %7913 = vmatpush.bf16.msra.mxu0 %v6769
    %7914 = vmatpush.bf16.msra.mxu0 %v6765
    %7915 = vmatpush.bf16.msra.mxu0 %v6761
    %7916 = vmatpush.bf16.msra.mxu0 %v6757
    %7917 = vmatmul.bf16.gmra.mxu0 %v7841
    %v7918 = vpop.f32.mrf.mxu0
    %v7919 = vadd.f32 %v7906, %v7918
    %v7920 = vpop.f32.mrf.mxu0
    %7921 = vdwg.mxu0
    %7922 = vmatpush.bf16.msra.mxu0 %v6817
    %7923 = vmatpush.bf16.msra.mxu0 %v6813
    %7924 = vmatpush.bf16.msra.mxu0 %v6809
    %7925 = vmatpush.bf16.msra.mxu0 %v6805
    %7926 = vmatpush.bf16.msra.mxu0 %v6801
    %7927 = vmatpush.bf16.msra.mxu0 %v6797
    %7928 = vmatpush.bf16.msra.mxu0 %v6793
    %7929 = vmatpush.bf16.msra.mxu0 %v6789
    %7930 = vmatmul.bf16.gmra.mxu0 %v7842
    %v7931 = vpop.f32.mrf.mxu0
    %v7932 = vadd.f32 %v7919, %v7931
    %v7933 = vpop.f32.mrf.mxu0
    %7934 = vdwg.mxu0
    %7935 = vmatpush.bf16.msra.mxu0 %v6849
    %7936 = vmatpush.bf16.msra.mxu0 %v6845
    %7937 = vmatpush.bf16.msra.mxu0 %v6841
    %7938 = vmatpush.bf16.msra.mxu0 %v6837
    %7939 = vmatpush.bf16.msra.mxu0 %v6833
    %7940 = vmatpush.bf16.msra.mxu0 %v6829
    %7941 = vmatpush.bf16.msra.mxu0 %v6825
    %7942 = vmatpush.bf16.msra.mxu0 %v6821
    %7943 = vmatmul.bf16.gmra.mxu0 %v7843
    %v7944 = vpop.f32.mrf.mxu0
    %v7945 = vadd.f32 %v7932, %v7944
    %v7946 = vpop.f32.mrf.mxu0
    %7947 = vdwg.mxu0
    %7948 = vmatpush.bf16.msra.mxu0 %v6754
    %7949 = vmatpush.bf16.msra.mxu0 %v6750
    %7950 = vmatpush.bf16.msra.mxu0 %v6746
    %7951 = vmatpush.bf16.msra.mxu0 %v6742
    %7952 = vmatpush.bf16.msra.mxu0 %v6738
    %7953 = vmatpush.bf16.msra.mxu0 %v6734
    %7954 = vmatpush.bf16.msra.mxu0 %v6730
    %7955 = vmatpush.bf16.msra.mxu0 %v6726
    %7956 = vmatmul.bf16.gmra.mxu0 %v7840
    %v7957 = vpop.f32.mrf.mxu0
    %v7958 = vadd.f32 %v6330, %v7957
    %v7959 = vpop.f32.mrf.mxu0
    %7960 = vdwg.mxu0
    %7961 = vmatpush.bf16.msra.mxu0 %v6786
    %7962 = vmatpush.bf16.msra.mxu0 %v6782
    %7963 = vmatpush.bf16.msra.mxu0 %v6778
    %7964 = vmatpush.bf16.msra.mxu0 %v6774
    %7965 = vmatpush.bf16.msra.mxu0 %v6770
    %7966 = vmatpush.bf16.msra.mxu0 %v6766
    %7967 = vmatpush.bf16.msra.mxu0 %v6762
    %7968 = vmatpush.bf16.msra.mxu0 %v6758
    %7969 = vmatmul.bf16.gmra.mxu0 %v7841
    %v7970 = vpop.f32.mrf.mxu0
    %v7971 = vadd.f32 %v7958, %v7970
    %v7972 = vpop.f32.mrf.mxu0
    %7973 = vdwg.mxu0
    %7974 = vmatpush.bf16.msra.mxu0 %v6818
    %7975 = vmatpush.bf16.msra.mxu0 %v6814
    %7976 = vmatpush.bf16.msra.mxu0 %v6810
    %7977 = vmatpush.bf16.msra.mxu0 %v6806
    %7978 = vmatpush.bf16.msra.mxu0 %v6802
    %7979 = vmatpush.bf16.msra.mxu0 %v6798
    %7980 = vmatpush.bf16.msra.mxu0 %v6794
    %7981 = vmatpush.bf16.msra.mxu0 %v6790
    %7982 = vmatmul.bf16.gmra.mxu0 %v7842
    %v7983 = vpop.f32.mrf.mxu0
    %v7984 = vadd.f32 %v7971, %v7983
    %v7985 = vpop.f32.mrf.mxu0
    %7986 = vdwg.mxu0
    %7987 = vmatpush.bf16.msra.mxu0 %v6850
    %7988 = vmatpush.bf16.msra.mxu0 %v6846
    %7989 = vmatpush.bf16.msra.mxu0 %v6842
    %7990 = vmatpush.bf16.msra.mxu0 %v6838
    %7991 = vmatpush.bf16.msra.mxu0 %v6834
    %7992 = vmatpush.bf16.msra.mxu0 %v6830
    %7993 = vmatpush.bf16.msra.mxu0 %v6826
    %7994 = vmatpush.bf16.msra.mxu0 %v6822
    %7995 = vmatmul.bf16.gmra.mxu0 %v7843
    %v7996 = vpop.f32.mrf.mxu0
    %v7997 = vadd.f32 %v7984, %v7996
    %v7998 = vpop.f32.mrf.mxu0
    %7999 = vdwg.mxu0
    %8000 = vmatpush.bf16.msra.mxu0 %v6755
    %8001 = vmatpush.bf16.msra.mxu0 %v6751
    %8002 = vmatpush.bf16.msra.mxu0 %v6747
    %8003 = vmatpush.bf16.msra.mxu0 %v6743
    %8004 = vmatpush.bf16.msra.mxu0 %v6739
    %8005 = vmatpush.bf16.msra.mxu0 %v6735
    %8006 = vmatpush.bf16.msra.mxu0 %v6731
    %8007 = vmatpush.bf16.msra.mxu0 %v6727
    %8008 = vmatmul.bf16.gmra.mxu0 %v7840
    %v8009 = vpop.f32.mrf.mxu0
    %v8010 = vadd.f32 %v6331, %v8009
    %v8011 = vpop.f32.mrf.mxu0
    %8012 = vdwg.mxu0
    %8013 = vmatpush.bf16.msra.mxu0 %v6787
    %8014 = vmatpush.bf16.msra.mxu0 %v6783
    %8015 = vmatpush.bf16.msra.mxu0 %v6779
    %8016 = vmatpush.bf16.msra.mxu0 %v6775
    %8017 = vmatpush.bf16.msra.mxu0 %v6771
    %8018 = vmatpush.bf16.msra.mxu0 %v6767
    %8019 = vmatpush.bf16.msra.mxu0 %v6763
    %8020 = vmatpush.bf16.msra.mxu0 %v6759
    %8021 = vmatmul.bf16.gmra.mxu0 %v7841
    %v8022 = vpop.f32.mrf.mxu0
    %v8023 = vadd.f32 %v8010, %v8022
    %v8024 = vpop.f32.mrf.mxu0
    %8025 = vdwg.mxu0
    %8026 = vmatpush.bf16.msra.mxu0 %v6819
    %8027 = vmatpush.bf16.msra.mxu0 %v6815
    %8028 = vmatpush.bf16.msra.mxu0 %v6811
    %8029 = vmatpush.bf16.msra.mxu0 %v6807
    %8030 = vmatpush.bf16.msra.mxu0 %v6803
    %8031 = vmatpush.bf16.msra.mxu0 %v6799
    %8032 = vmatpush.bf16.msra.mxu0 %v6795
    %8033 = vmatpush.bf16.msra.mxu0 %v6791
    %8034 = vmatmul.bf16.gmra.mxu0 %v7842
    %v8035 = vpop.f32.mrf.mxu0
    %v8036 = vadd.f32 %v8023, %v8035
    %v8037 = vpop.f32.mrf.mxu0
    %8038 = vdwg.mxu0
    %8039 = vmatpush.bf16.msra.mxu0 %v6851
    %8040 = vmatpush.bf16.msra.mxu0 %v6847
    %8041 = vmatpush.bf16.msra.mxu0 %v6843
    %8042 = vmatpush.bf16.msra.mxu0 %v6839
    %8043 = vmatpush.bf16.msra.mxu0 %v6835
    %8044 = vmatpush.bf16.msra.mxu0 %v6831
    %8045 = vmatpush.bf16.msra.mxu0 %v6827
    %8046 = vmatpush.bf16.msra.mxu0 %v6823
    %8047 = vmatmul.bf16.gmra.mxu0 %v7843
    %v8048 = vpop.f32.mrf.mxu0
    %v8049 = vadd.f32 %v8036, %v8048
    %v8050 = vpop.f32.mrf.mxu0
    %8051 = vdwg.mxu0
    %v8052 = vmax.f32 %v7893, 0.0
    %v8053 = vmax.f32 %v7945, 0.0
    %v8054 = vmax.f32 %v7997, 0.0
    %v8055 = vmax.f32 %v8049, 0.0
    %v8056 = vpack.c.bf16 %v8052, %v8052
    %v8057 = vpack.c.bf16 %v8053, %v8053
    %v8058 = vpack.c.bf16 %v8054, %v8054
    %v8059 = vpack.c.bf16 %v8055, %v8055
    %8060 = vmatpush.bf16.msra.mxu0 %v6752
    %8061 = vmatpush.bf16.msra.mxu0 %v6748
    %8062 = vmatpush.bf16.msra.mxu0 %v6744
    %8063 = vmatpush.bf16.msra.mxu0 %v6740
    %8064 = vmatpush.bf16.msra.mxu0 %v6736
    %8065 = vmatpush.bf16.msra.mxu0 %v6732
    %8066 = vmatpush.bf16.msra.mxu0 %v6728
    %8067 = vmatpush.bf16.msra.mxu0 %v6724
    %8068 = vmatmul.bf16.gmra.mxu0 %v8056
    %v8069 = vpop.f32.mrf.mxu0
    %v8070 = vadd.f32 %v6328, %v8069
    %v8071 = vpop.f32.mrf.mxu0
    %8072 = vdwg.mxu0
    %8073 = vmatpush.bf16.msra.mxu0 %v6784
    %8074 = vmatpush.bf16.msra.mxu0 %v6780
    %8075 = vmatpush.bf16.msra.mxu0 %v6776
    %8076 = vmatpush.bf16.msra.mxu0 %v6772
    %8077 = vmatpush.bf16.msra.mxu0 %v6768
    %8078 = vmatpush.bf16.msra.mxu0 %v6764
    %8079 = vmatpush.bf16.msra.mxu0 %v6760
    %8080 = vmatpush.bf16.msra.mxu0 %v6756
    %8081 = vmatmul.bf16.gmra.mxu0 %v8057
    %v8082 = vpop.f32.mrf.mxu0
    %v8083 = vadd.f32 %v8070, %v8082
    %v8084 = vpop.f32.mrf.mxu0
    %8085 = vdwg.mxu0
    %8086 = vmatpush.bf16.msra.mxu0 %v6816
    %8087 = vmatpush.bf16.msra.mxu0 %v6812
    %8088 = vmatpush.bf16.msra.mxu0 %v6808
    %8089 = vmatpush.bf16.msra.mxu0 %v6804
    %8090 = vmatpush.bf16.msra.mxu0 %v6800
    %8091 = vmatpush.bf16.msra.mxu0 %v6796
    %8092 = vmatpush.bf16.msra.mxu0 %v6792
    %8093 = vmatpush.bf16.msra.mxu0 %v6788
    %8094 = vmatmul.bf16.gmra.mxu0 %v8058
    %v8095 = vpop.f32.mrf.mxu0
    %v8096 = vadd.f32 %v8083, %v8095
    %v8097 = vpop.f32.mrf.mxu0
    %8098 = vdwg.mxu0
    %8099 = vmatpush.bf16.msra.mxu0 %v6848
    %8100 = vmatpush.bf16.msra.mxu0 %v6844
    %8101 = vmatpush.bf16.msra.mxu0 %v6840
    %8102 = vmatpush.bf16.msra.mxu0 %v6836
    %8103 = vmatpush.bf16.msra.mxu0 %v6832
    %8104 = vmatpush.bf16.msra.mxu0 %v6828
    %8105 = vmatpush.bf16.msra.mxu0 %v6824
    %8106 = vmatpush.bf16.msra.mxu0 %v6820
    %8107 = vmatmul.bf16.gmra.mxu0 %v8059
    %v8108 = vpop.f32.mrf.mxu0
    %v8109 = vadd.f32 %v8096, %v8108
    %v8110 = vpop.f32.mrf.mxu0
    %8111 = vdwg.mxu0
    %8112 = vmatpush.bf16.msra.mxu0 %v6753
    %8113 = vmatpush.bf16.msra.mxu0 %v6749
    %8114 = vmatpush.bf16.msra.mxu0 %v6745
    %8115 = vmatpush.bf16.msra.mxu0 %v6741
    %8116 = vmatpush.bf16.msra.mxu0 %v6737
    %8117 = vmatpush.bf16.msra.mxu0 %v6733
    %8118 = vmatpush.bf16.msra.mxu0 %v6729
    %8119 = vmatpush.bf16.msra.mxu0 %v6725
    %8120 = vmatmul.bf16.gmra.mxu0 %v8056
    %v8121 = vpop.f32.mrf.mxu0
    %v8122 = vadd.f32 %v6329, %v8121
    %v8123 = vpop.f32.mrf.mxu0
    %8124 = vdwg.mxu0
    %8125 = vmatpush.bf16.msra.mxu0 %v6785
    %8126 = vmatpush.bf16.msra.mxu0 %v6781
    %8127 = vmatpush.bf16.msra.mxu0 %v6777
    %8128 = vmatpush.bf16.msra.mxu0 %v6773
    %8129 = vmatpush.bf16.msra.mxu0 %v6769
    %8130 = vmatpush.bf16.msra.mxu0 %v6765
    %8131 = vmatpush.bf16.msra.mxu0 %v6761
    %8132 = vmatpush.bf16.msra.mxu0 %v6757
    %8133 = vmatmul.bf16.gmra.mxu0 %v8057
    %v8134 = vpop.f32.mrf.mxu0
    %v8135 = vadd.f32 %v8122, %v8134
    %v8136 = vpop.f32.mrf.mxu0
    %8137 = vdwg.mxu0
    %8138 = vmatpush.bf16.msra.mxu0 %v6817
    %8139 = vmatpush.bf16.msra.mxu0 %v6813
    %8140 = vmatpush.bf16.msra.mxu0 %v6809
    %8141 = vmatpush.bf16.msra.mxu0 %v6805
    %8142 = vmatpush.bf16.msra.mxu0 %v6801
    %8143 = vmatpush.bf16.msra.mxu0 %v6797
    %8144 = vmatpush.bf16.msra.mxu0 %v6793
    %8145 = vmatpush.bf16.msra.mxu0 %v6789
    %8146 = vmatmul.bf16.gmra.mxu0 %v8058
    %v8147 = vpop.f32.mrf.mxu0
    %v8148 = vadd.f32 %v8135, %v8147
    %v8149 = vpop.f32.mrf.mxu0
    %8150 = vdwg.mxu0
    %8151 = vmatpush.bf16.msra.mxu0 %v6849
    %8152 = vmatpush.bf16.msra.mxu0 %v6845
    %8153 = vmatpush.bf16.msra.mxu0 %v6841
    %8154 = vmatpush.bf16.msra.mxu0 %v6837
    %8155 = vmatpush.bf16.msra.mxu0 %v6833
    %8156 = vmatpush.bf16.msra.mxu0 %v6829
    %8157 = vmatpush.bf16.msra.mxu0 %v6825
    %8158 = vmatpush.bf16.msra.mxu0 %v6821
    %8159 = vmatmul.bf16.gmra.mxu0 %v8059
    %v8160 = vpop.f32.mrf.mxu0
    %v8161 = vadd.f32 %v8148, %v8160
    %v8162 = vpop.f32.mrf.mxu0
    %8163 = vdwg.mxu0
    %8164 = vmatpush.bf16.msra.mxu0 %v6754
    %8165 = vmatpush.bf16.msra.mxu0 %v6750
    %8166 = vmatpush.bf16.msra.mxu0 %v6746
    %8167 = vmatpush.bf16.msra.mxu0 %v6742
    %8168 = vmatpush.bf16.msra.mxu0 %v6738
    %8169 = vmatpush.bf16.msra.mxu0 %v6734
    %8170 = vmatpush.bf16.msra.mxu0 %v6730
    %8171 = vmatpush.bf16.msra.mxu0 %v6726
    %8172 = vmatmul.bf16.gmra.mxu0 %v8056
    %v8173 = vpop.f32.mrf.mxu0
    %v8174 = vadd.f32 %v6330, %v8173
    %v8175 = vpop.f32.mrf.mxu0
    %8176 = vdwg.mxu0
    %8177 = vmatpush.bf16.msra.mxu0 %v6786
    %8178 = vmatpush.bf16.msra.mxu0 %v6782
    %8179 = vmatpush.bf16.msra.mxu0 %v6778
    %8180 = vmatpush.bf16.msra.mxu0 %v6774
    %8181 = vmatpush.bf16.msra.mxu0 %v6770
    %8182 = vmatpush.bf16.msra.mxu0 %v6766
    %8183 = vmatpush.bf16.msra.mxu0 %v6762
    %8184 = vmatpush.bf16.msra.mxu0 %v6758
    %8185 = vmatmul.bf16.gmra.mxu0 %v8057
    %v8186 = vpop.f32.mrf.mxu0
    %v8187 = vadd.f32 %v8174, %v8186
    %v8188 = vpop.f32.mrf.mxu0
    %8189 = vdwg.mxu0
    %8190 = vmatpush.bf16.msra.mxu0 %v6818
    %8191 = vmatpush.bf16.msra.mxu0 %v6814
    %8192 = vmatpush.bf16.msra.mxu0 %v6810
    %8193 = vmatpush.bf16.msra.mxu0 %v6806
    %8194 = vmatpush.bf16.msra.mxu0 %v6802
    %8195 = vmatpush.bf16.msra.mxu0 %v6798
    %8196 = vmatpush.bf16.msra.mxu0 %v6794
    %8197 = vmatpush.bf16.msra.mxu0 %v6790
    %8198 = vmatmul.bf16.gmra.mxu0 %v8058
    %v8199 = vpop.f32.mrf.mxu0
    %v8200 = vadd.f32 %v8187, %v8199
    %v8201 = vpop.f32.mrf.mxu0
    %8202 = vdwg.mxu0
    %8203 = vmatpush.bf16.msra.mxu0 %v6850
    %8204 = vmatpush.bf16.msra.mxu0 %v6846
    %8205 = vmatpush.bf16.msra.mxu0 %v6842
    %8206 = vmatpush.bf16.msra.mxu0 %v6838
    %8207 = vmatpush.bf16.msra.mxu0 %v6834
    %8208 = vmatpush.bf16.msra.mxu0 %v6830
    %8209 = vmatpush.bf16.msra.mxu0 %v6826
    %8210 = vmatpush.bf16.msra.mxu0 %v6822
    %8211 = vmatmul.bf16.gmra.mxu0 %v8059
    %v8212 = vpop.f32.mrf.mxu0
    %v8213 = vadd.f32 %v8200, %v8212
    %v8214 = vpop.f32.mrf.mxu0
    %8215 = vdwg.mxu0
    %8216 = vmatpush.bf16.msra.mxu0 %v6755
    %8217 = vmatpush.bf16.msra.mxu0 %v6751
    %8218 = vmatpush.bf16.msra.mxu0 %v6747
    %8219 = vmatpush.bf16.msra.mxu0 %v6743
    %8220 = vmatpush.bf16.msra.mxu0 %v6739
    %8221 = vmatpush.bf16.msra.mxu0 %v6735
    %8222 = vmatpush.bf16.msra.mxu0 %v6731
    %8223 = vmatpush.bf16.msra.mxu0 %v6727
    %8224 = vmatmul.bf16.gmra.mxu0 %v8056
    %v8225 = vpop.f32.mrf.mxu0
    %v8226 = vadd.f32 %v6331, %v8225
    %v8227 = vpop.f32.mrf.mxu0
    %8228 = vdwg.mxu0
    %8229 = vmatpush.bf16.msra.mxu0 %v6787
    %8230 = vmatpush.bf16.msra.mxu0 %v6783
    %8231 = vmatpush.bf16.msra.mxu0 %v6779
    %8232 = vmatpush.bf16.msra.mxu0 %v6775
    %8233 = vmatpush.bf16.msra.mxu0 %v6771
    %8234 = vmatpush.bf16.msra.mxu0 %v6767
    %8235 = vmatpush.bf16.msra.mxu0 %v6763
    %8236 = vmatpush.bf16.msra.mxu0 %v6759
    %8237 = vmatmul.bf16.gmra.mxu0 %v8057
    %v8238 = vpop.f32.mrf.mxu0
    %v8239 = vadd.f32 %v8226, %v8238
    %v8240 = vpop.f32.mrf.mxu0
    %8241 = vdwg.mxu0
    %8242 = vmatpush.bf16.msra.mxu0 %v6819
    %8243 = vmatpush.bf16.msra.mxu0 %v6815
    %8244 = vmatpush.bf16.msra.mxu0 %v6811
    %8245 = vmatpush.bf16.msra.mxu0 %v6807
    %8246 = vmatpush.bf16.msra.mxu0 %v6803
    %8247 = vmatpush.bf16.msra.mxu0 %v6799
    %8248 = vmatpush.bf16.msra.mxu0 %v6795
    %8249 = vmatpush.bf16.msra.mxu0 %v6791
    %8250 = vmatmul.bf16.gmra.mxu0 %v8058
    %v8251 = vpop.f32.mrf.mxu0
    %v8252 = vadd.f32 %v8239, %v8251
    %v8253 = vpop.f32.mrf.mxu0
    %8254 = vdwg.mxu0
    %8255 = vmatpush.bf16.msra.mxu0 %v6851
    %8256 = vmatpush.bf16.msra.mxu0 %v6847
    %8257 = vmatpush.bf16.msra.mxu0 %v6843
    %8258 = vmatpush.bf16.msra.mxu0 %v6839
    %8259 = vmatpush.bf16.msra.mxu0 %v6835
    %8260 = vmatpush.bf16.msra.mxu0 %v6831
    %8261 = vmatpush.bf16.msra.mxu0 %v6827
    %8262 = vmatpush.bf16.msra.mxu0 %v6823
    %8263 = vmatmul.bf16.gmra.mxu0 %v8059
    %v8264 = vpop.f32.mrf.mxu0
    %v8265 = vadd.f32 %v8252, %v8264
    %v8266 = vpop.f32.mrf.mxu0
    %8267 = vdwg.mxu0
    %v8268 = vmax.f32 %v8109, 0.0
    %v8269 = vmax.f32 %v8161, 0.0
    %v8270 = vmax.f32 %v8213, 0.0
    %v8271 = vmax.f32 %v8265, 0.0
    %v8272 = vpack.c.bf16 %v8268, %v8268
    %v8273 = vpack.c.bf16 %v8269, %v8269
    %v8274 = vpack.c.bf16 %v8270, %v8270
    %v8275 = vpack.c.bf16 %v8271, %v8271
    %8276 = vmatpush.bf16.msra.mxu0 %v6752
    %8277 = vmatpush.bf16.msra.mxu0 %v6748
    %8278 = vmatpush.bf16.msra.mxu0 %v6744
    %8279 = vmatpush.bf16.msra.mxu0 %v6740
    %8280 = vmatpush.bf16.msra.mxu0 %v6736
    %8281 = vmatpush.bf16.msra.mxu0 %v6732
    %8282 = vmatpush.bf16.msra.mxu0 %v6728
    %8283 = vmatpush.bf16.msra.mxu0 %v6724
    %8284 = vmatmul.bf16.gmra.mxu0 %v8272
    %v8285 = vpop.f32.mrf.mxu0
    %v8286 = vadd.f32 %v6328, %v8285
    %v8287 = vpop.f32.mrf.mxu0
    %8288 = vdwg.mxu0
    %8289 = vmatpush.bf16.msra.mxu0 %v6784
    %8290 = vmatpush.bf16.msra.mxu0 %v6780
    %8291 = vmatpush.bf16.msra.mxu0 %v6776
    %8292 = vmatpush.bf16.msra.mxu0 %v6772
    %8293 = vmatpush.bf16.msra.mxu0 %v6768
    %8294 = vmatpush.bf16.msra.mxu0 %v6764
    %8295 = vmatpush.bf16.msra.mxu0 %v6760
    %8296 = vmatpush.bf16.msra.mxu0 %v6756
    %8297 = vmatmul.bf16.gmra.mxu0 %v8273
    %v8298 = vpop.f32.mrf.mxu0
    %v8299 = vadd.f32 %v8286, %v8298
    %v8300 = vpop.f32.mrf.mxu0
    %8301 = vdwg.mxu0
    %8302 = vmatpush.bf16.msra.mxu0 %v6816
    %8303 = vmatpush.bf16.msra.mxu0 %v6812
    %8304 = vmatpush.bf16.msra.mxu0 %v6808
    %8305 = vmatpush.bf16.msra.mxu0 %v6804
    %8306 = vmatpush.bf16.msra.mxu0 %v6800
    %8307 = vmatpush.bf16.msra.mxu0 %v6796
    %8308 = vmatpush.bf16.msra.mxu0 %v6792
    %8309 = vmatpush.bf16.msra.mxu0 %v6788
    %8310 = vmatmul.bf16.gmra.mxu0 %v8274
    %v8311 = vpop.f32.mrf.mxu0
    %v8312 = vadd.f32 %v8299, %v8311
    %v8313 = vpop.f32.mrf.mxu0
    %8314 = vdwg.mxu0
    %8315 = vmatpush.bf16.msra.mxu0 %v6848
    %8316 = vmatpush.bf16.msra.mxu0 %v6844
    %8317 = vmatpush.bf16.msra.mxu0 %v6840
    %8318 = vmatpush.bf16.msra.mxu0 %v6836
    %8319 = vmatpush.bf16.msra.mxu0 %v6832
    %8320 = vmatpush.bf16.msra.mxu0 %v6828
    %8321 = vmatpush.bf16.msra.mxu0 %v6824
    %8322 = vmatpush.bf16.msra.mxu0 %v6820
    %8323 = vmatmul.bf16.gmra.mxu0 %v8275
    %v8324 = vpop.f32.mrf.mxu0
    %v8325 = vadd.f32 %v8312, %v8324
    %v8326 = vpop.f32.mrf.mxu0
    %8327 = vdwg.mxu0
    %8328 = vmatpush.bf16.msra.mxu0 %v6753
    %8329 = vmatpush.bf16.msra.mxu0 %v6749
    %8330 = vmatpush.bf16.msra.mxu0 %v6745
    %8331 = vmatpush.bf16.msra.mxu0 %v6741
    %8332 = vmatpush.bf16.msra.mxu0 %v6737
    %8333 = vmatpush.bf16.msra.mxu0 %v6733
    %8334 = vmatpush.bf16.msra.mxu0 %v6729
    %8335 = vmatpush.bf16.msra.mxu0 %v6725
    %8336 = vmatmul.bf16.gmra.mxu0 %v8272
    %v8337 = vpop.f32.mrf.mxu0
    %v8338 = vadd.f32 %v6329, %v8337
    %v8339 = vpop.f32.mrf.mxu0
    %8340 = vdwg.mxu0
    %8341 = vmatpush.bf16.msra.mxu0 %v6785
    %8342 = vmatpush.bf16.msra.mxu0 %v6781
    %8343 = vmatpush.bf16.msra.mxu0 %v6777
    %8344 = vmatpush.bf16.msra.mxu0 %v6773
    %8345 = vmatpush.bf16.msra.mxu0 %v6769
    %8346 = vmatpush.bf16.msra.mxu0 %v6765
    %8347 = vmatpush.bf16.msra.mxu0 %v6761
    %8348 = vmatpush.bf16.msra.mxu0 %v6757
    %8349 = vmatmul.bf16.gmra.mxu0 %v8273
    %v8350 = vpop.f32.mrf.mxu0
    %v8351 = vadd.f32 %v8338, %v8350
    %v8352 = vpop.f32.mrf.mxu0
    %8353 = vdwg.mxu0
    %8354 = vmatpush.bf16.msra.mxu0 %v6817
    %8355 = vmatpush.bf16.msra.mxu0 %v6813
    %8356 = vmatpush.bf16.msra.mxu0 %v6809
    %8357 = vmatpush.bf16.msra.mxu0 %v6805
    %8358 = vmatpush.bf16.msra.mxu0 %v6801
    %8359 = vmatpush.bf16.msra.mxu0 %v6797
    %8360 = vmatpush.bf16.msra.mxu0 %v6793
    %8361 = vmatpush.bf16.msra.mxu0 %v6789
    %8362 = vmatmul.bf16.gmra.mxu0 %v8274
    %v8363 = vpop.f32.mrf.mxu0
    %v8364 = vadd.f32 %v8351, %v8363
    %v8365 = vpop.f32.mrf.mxu0
    %8366 = vdwg.mxu0
    %8367 = vmatpush.bf16.msra.mxu0 %v6849
    %8368 = vmatpush.bf16.msra.mxu0 %v6845
    %8369 = vmatpush.bf16.msra.mxu0 %v6841
    %8370 = vmatpush.bf16.msra.mxu0 %v6837
    %8371 = vmatpush.bf16.msra.mxu0 %v6833
    %8372 = vmatpush.bf16.msra.mxu0 %v6829
    %8373 = vmatpush.bf16.msra.mxu0 %v6825
    %8374 = vmatpush.bf16.msra.mxu0 %v6821
    %8375 = vmatmul.bf16.gmra.mxu0 %v8275
    %v8376 = vpop.f32.mrf.mxu0
    %v8377 = vadd.f32 %v8364, %v8376
    %v8378 = vpop.f32.mrf.mxu0
    %8379 = vdwg.mxu0
    %8380 = vmatpush.bf16.msra.mxu0 %v6754
    %8381 = vmatpush.bf16.msra.mxu0 %v6750
    %8382 = vmatpush.bf16.msra.mxu0 %v6746
    %8383 = vmatpush.bf16.msra.mxu0 %v6742
    %8384 = vmatpush.bf16.msra.mxu0 %v6738
    %8385 = vmatpush.bf16.msra.mxu0 %v6734
    %8386 = vmatpush.bf16.msra.mxu0 %v6730
    %8387 = vmatpush.bf16.msra.mxu0 %v6726
    %8388 = vmatmul.bf16.gmra.mxu0 %v8272
    %v8389 = vpop.f32.mrf.mxu0
    %v8390 = vadd.f32 %v6330, %v8389
    %v8391 = vpop.f32.mrf.mxu0
    %8392 = vdwg.mxu0
    %8393 = vmatpush.bf16.msra.mxu0 %v6786
    %8394 = vmatpush.bf16.msra.mxu0 %v6782
    %8395 = vmatpush.bf16.msra.mxu0 %v6778
    %8396 = vmatpush.bf16.msra.mxu0 %v6774
    %8397 = vmatpush.bf16.msra.mxu0 %v6770
    %8398 = vmatpush.bf16.msra.mxu0 %v6766
    %8399 = vmatpush.bf16.msra.mxu0 %v6762
    %8400 = vmatpush.bf16.msra.mxu0 %v6758
    %8401 = vmatmul.bf16.gmra.mxu0 %v8273
    %v8402 = vpop.f32.mrf.mxu0
    %v8403 = vadd.f32 %v8390, %v8402
    %v8404 = vpop.f32.mrf.mxu0
    %8405 = vdwg.mxu0
    %8406 = vmatpush.bf16.msra.mxu0 %v6818
    %8407 = vmatpush.bf16.msra.mxu0 %v6814
    %8408 = vmatpush.bf16.msra.mxu0 %v6810
    %8409 = vmatpush.bf16.msra.mxu0 %v6806
    %8410 = vmatpush.bf16.msra.mxu0 %v6802
    %8411 = vmatpush.bf16.msra.mxu0 %v6798
    %8412 = vmatpush.bf16.msra.mxu0 %v6794
    %8413 = vmatpush.bf16.msra.mxu0 %v6790
    %8414 = vmatmul.bf16.gmra.mxu0 %v8274
    %v8415 = vpop.f32.mrf.mxu0
    %v8416 = vadd.f32 %v8403, %v8415
    %v8417 = vpop.f32.mrf.mxu0
    %8418 = vdwg.mxu0
    %8419 = vmatpush.bf16.msra.mxu0 %v6850
    %8420 = vmatpush.bf16.msra.mxu0 %v6846
    %8421 = vmatpush.bf16.msra.mxu0 %v6842
    %8422 = vmatpush.bf16.msra.mxu0 %v6838
    %8423 = vmatpush.bf16.msra.mxu0 %v6834
    %8424 = vmatpush.bf16.msra.mxu0 %v6830
    %8425 = vmatpush.bf16.msra.mxu0 %v6826
    %8426 = vmatpush.bf16.msra.mxu0 %v6822
    %8427 = vmatmul.bf16.gmra.mxu0 %v8275
    %v8428 = vpop.f32.mrf.mxu0
    %v8429 = vadd.f32 %v8416, %v8428
    %v8430 = vpop.f32.mrf.mxu0
    %8431 = vdwg.mxu0
    %8432 = vmatpush.bf16.msra.mxu0 %v6755
    %8433 = vmatpush.bf16.msra.mxu0 %v6751
    %8434 = vmatpush.bf16.msra.mxu0 %v6747
    %8435 = vmatpush.bf16.msra.mxu0 %v6743
    %8436 = vmatpush.bf16.msra.mxu0 %v6739
    %8437 = vmatpush.bf16.msra.mxu0 %v6735
    %8438 = vmatpush.bf16.msra.mxu0 %v6731
    %8439 = vmatpush.bf16.msra.mxu0 %v6727
    %8440 = vmatmul.bf16.gmra.mxu0 %v8272
    %v8441 = vpop.f32.mrf.mxu0
    %v8442 = vadd.f32 %v6331, %v8441
    %v8443 = vpop.f32.mrf.mxu0
    %8444 = vdwg.mxu0
    %8445 = vmatpush.bf16.msra.mxu0 %v6787
    %8446 = vmatpush.bf16.msra.mxu0 %v6783
    %8447 = vmatpush.bf16.msra.mxu0 %v6779
    %8448 = vmatpush.bf16.msra.mxu0 %v6775
    %8449 = vmatpush.bf16.msra.mxu0 %v6771
    %8450 = vmatpush.bf16.msra.mxu0 %v6767
    %8451 = vmatpush.bf16.msra.mxu0 %v6763
    %8452 = vmatpush.bf16.msra.mxu0 %v6759
    %8453 = vmatmul.bf16.gmra.mxu0 %v8273
    %v8454 = vpop.f32.mrf.mxu0
    %v8455 = vadd.f32 %v8442, %v8454
    %v8456 = vpop.f32.mrf.mxu0
    %8457 = vdwg.mxu0
    %8458 = vmatpush.bf16.msra.mxu0 %v6819
    %8459 = vmatpush.bf16.msra.mxu0 %v6815
    %8460 = vmatpush.bf16.msra.mxu0 %v6811
    %8461 = vmatpush.bf16.msra.mxu0 %v6807
    %8462 = vmatpush.bf16.msra.mxu0 %v6803
    %8463 = vmatpush.bf16.msra.mxu0 %v6799
    %8464 = vmatpush.bf16.msra.mxu0 %v6795
    %8465 = vmatpush.bf16.msra.mxu0 %v6791
    %8466 = vmatmul.bf16.gmra.mxu0 %v8274
    %v8467 = vpop.f32.mrf.mxu0
    %v8468 = vadd.f32 %v8455, %v8467
    %v8469 = vpop.f32.mrf.mxu0
    %8470 = vdwg.mxu0
    %8471 = vmatpush.bf16.msra.mxu0 %v6851
    %8472 = vmatpush.bf16.msra.mxu0 %v6847
    %8473 = vmatpush.bf16.msra.mxu0 %v6843
    %8474 = vmatpush.bf16.msra.mxu0 %v6839
    %8475 = vmatpush.bf16.msra.mxu0 %v6835
    %8476 = vmatpush.bf16.msra.mxu0 %v6831
    %8477 = vmatpush.bf16.msra.mxu0 %v6827
    %8478 = vmatpush.bf16.msra.mxu0 %v6823
    %8479 = vmatmul.bf16.gmra.mxu0 %v8275
    %v8480 = vpop.f32.mrf.mxu0
    %v8481 = vadd.f32 %v8468, %v8480
    %v8482 = vpop.f32.mrf.mxu0
    %8483 = vdwg.mxu0
    %v8484 = vmax.f32 %v8325, 0.0
    %v8485 = vmax.f32 %v8377, 0.0
    %v8486 = vmax.f32 %v8429, 0.0
    %v8487 = vmax.f32 %v8481, 0.0
    %v8488 = vpack.c.bf16 %v8484, %v8484
    %v8489 = vpack.c.bf16 %v8485, %v8485
    %v8490 = vpack.c.bf16 %v8486, %v8486
    %v8491 = vpack.c.bf16 %v8487, %v8487
    %8492 = vmatpush.bf16.msra.mxu0 %v6752
    %8493 = vmatpush.bf16.msra.mxu0 %v6748
    %8494 = vmatpush.bf16.msra.mxu0 %v6744
    %8495 = vmatpush.bf16.msra.mxu0 %v6740
    %8496 = vmatpush.bf16.msra.mxu0 %v6736
    %8497 = vmatpush.bf16.msra.mxu0 %v6732
    %8498 = vmatpush.bf16.msra.mxu0 %v6728
    %8499 = vmatpush.bf16.msra.mxu0 %v6724
    %8500 = vmatmul.bf16.gmra.mxu0 %v8488
    %v8501 = vpop.f32.mrf.mxu0
    %v8502 = vadd.f32 %v6328, %v8501
    %v8503 = vpop.f32.mrf.mxu0
    %8504 = vdwg.mxu0
    %8505 = vmatpush.bf16.msra.mxu0 %v6784
    %8506 = vmatpush.bf16.msra.mxu0 %v6780
    %8507 = vmatpush.bf16.msra.mxu0 %v6776
    %8508 = vmatpush.bf16.msra.mxu0 %v6772
    %8509 = vmatpush.bf16.msra.mxu0 %v6768
    %8510 = vmatpush.bf16.msra.mxu0 %v6764
    %8511 = vmatpush.bf16.msra.mxu0 %v6760
    %8512 = vmatpush.bf16.msra.mxu0 %v6756
    %8513 = vmatmul.bf16.gmra.mxu0 %v8489
    %v8514 = vpop.f32.mrf.mxu0
    %v8515 = vadd.f32 %v8502, %v8514
    %v8516 = vpop.f32.mrf.mxu0
    %8517 = vdwg.mxu0
    %8518 = vmatpush.bf16.msra.mxu0 %v6816
    %8519 = vmatpush.bf16.msra.mxu0 %v6812
    %8520 = vmatpush.bf16.msra.mxu0 %v6808
    %8521 = vmatpush.bf16.msra.mxu0 %v6804
    %8522 = vmatpush.bf16.msra.mxu0 %v6800
    %8523 = vmatpush.bf16.msra.mxu0 %v6796
    %8524 = vmatpush.bf16.msra.mxu0 %v6792
    %8525 = vmatpush.bf16.msra.mxu0 %v6788
    %8526 = vmatmul.bf16.gmra.mxu0 %v8490
    %v8527 = vpop.f32.mrf.mxu0
    %v8528 = vadd.f32 %v8515, %v8527
    %v8529 = vpop.f32.mrf.mxu0
    %8530 = vdwg.mxu0
    %8531 = vmatpush.bf16.msra.mxu0 %v6848
    %8532 = vmatpush.bf16.msra.mxu0 %v6844
    %8533 = vmatpush.bf16.msra.mxu0 %v6840
    %8534 = vmatpush.bf16.msra.mxu0 %v6836
    %8535 = vmatpush.bf16.msra.mxu0 %v6832
    %8536 = vmatpush.bf16.msra.mxu0 %v6828
    %8537 = vmatpush.bf16.msra.mxu0 %v6824
    %8538 = vmatpush.bf16.msra.mxu0 %v6820
    %8539 = vmatmul.bf16.gmra.mxu0 %v8491
    %v8540 = vpop.f32.mrf.mxu0
    %v8541 = vadd.f32 %v8528, %v8540
    %v8542 = vpop.f32.mrf.mxu0
    %8543 = vdwg.mxu0
    %8544 = vmatpush.bf16.msra.mxu0 %v6753
    %8545 = vmatpush.bf16.msra.mxu0 %v6749
    %8546 = vmatpush.bf16.msra.mxu0 %v6745
    %8547 = vmatpush.bf16.msra.mxu0 %v6741
    %8548 = vmatpush.bf16.msra.mxu0 %v6737
    %8549 = vmatpush.bf16.msra.mxu0 %v6733
    %8550 = vmatpush.bf16.msra.mxu0 %v6729
    %8551 = vmatpush.bf16.msra.mxu0 %v6725
    %8552 = vmatmul.bf16.gmra.mxu0 %v8488
    %v8553 = vpop.f32.mrf.mxu0
    %v8554 = vadd.f32 %v6329, %v8553
    %v8555 = vpop.f32.mrf.mxu0
    %8556 = vdwg.mxu0
    %8557 = vmatpush.bf16.msra.mxu0 %v6785
    %8558 = vmatpush.bf16.msra.mxu0 %v6781
    %8559 = vmatpush.bf16.msra.mxu0 %v6777
    %8560 = vmatpush.bf16.msra.mxu0 %v6773
    %8561 = vmatpush.bf16.msra.mxu0 %v6769
    %8562 = vmatpush.bf16.msra.mxu0 %v6765
    %8563 = vmatpush.bf16.msra.mxu0 %v6761
    %8564 = vmatpush.bf16.msra.mxu0 %v6757
    %8565 = vmatmul.bf16.gmra.mxu0 %v8489
    %v8566 = vpop.f32.mrf.mxu0
    %v8567 = vadd.f32 %v8554, %v8566
    %v8568 = vpop.f32.mrf.mxu0
    %8569 = vdwg.mxu0
    %8570 = vmatpush.bf16.msra.mxu0 %v6817
    %8571 = vmatpush.bf16.msra.mxu0 %v6813
    %8572 = vmatpush.bf16.msra.mxu0 %v6809
    %8573 = vmatpush.bf16.msra.mxu0 %v6805
    %8574 = vmatpush.bf16.msra.mxu0 %v6801
    %8575 = vmatpush.bf16.msra.mxu0 %v6797
    %8576 = vmatpush.bf16.msra.mxu0 %v6793
    %8577 = vmatpush.bf16.msra.mxu0 %v6789
    %8578 = vmatmul.bf16.gmra.mxu0 %v8490
    %v8579 = vpop.f32.mrf.mxu0
    %v8580 = vadd.f32 %v8567, %v8579
    %v8581 = vpop.f32.mrf.mxu0
    %8582 = vdwg.mxu0
    %8583 = vmatpush.bf16.msra.mxu0 %v6849
    %8584 = vmatpush.bf16.msra.mxu0 %v6845
    %8585 = vmatpush.bf16.msra.mxu0 %v6841
    %8586 = vmatpush.bf16.msra.mxu0 %v6837
    %8587 = vmatpush.bf16.msra.mxu0 %v6833
    %8588 = vmatpush.bf16.msra.mxu0 %v6829
    %8589 = vmatpush.bf16.msra.mxu0 %v6825
    %8590 = vmatpush.bf16.msra.mxu0 %v6821
    %8591 = vmatmul.bf16.gmra.mxu0 %v8491
    %v8592 = vpop.f32.mrf.mxu0
    %v8593 = vadd.f32 %v8580, %v8592
    %v8594 = vpop.f32.mrf.mxu0
    %8595 = vdwg.mxu0
    %8596 = vmatpush.bf16.msra.mxu0 %v6754
    %8597 = vmatpush.bf16.msra.mxu0 %v6750
    %8598 = vmatpush.bf16.msra.mxu0 %v6746
    %8599 = vmatpush.bf16.msra.mxu0 %v6742
    %8600 = vmatpush.bf16.msra.mxu0 %v6738
    %8601 = vmatpush.bf16.msra.mxu0 %v6734
    %8602 = vmatpush.bf16.msra.mxu0 %v6730
    %8603 = vmatpush.bf16.msra.mxu0 %v6726
    %8604 = vmatmul.bf16.gmra.mxu0 %v8488
    %v8605 = vpop.f32.mrf.mxu0
    %v8606 = vadd.f32 %v6330, %v8605
    %v8607 = vpop.f32.mrf.mxu0
    %8608 = vdwg.mxu0
    %8609 = vmatpush.bf16.msra.mxu0 %v6786
    %8610 = vmatpush.bf16.msra.mxu0 %v6782
    %8611 = vmatpush.bf16.msra.mxu0 %v6778
    %8612 = vmatpush.bf16.msra.mxu0 %v6774
    %8613 = vmatpush.bf16.msra.mxu0 %v6770
    %8614 = vmatpush.bf16.msra.mxu0 %v6766
    %8615 = vmatpush.bf16.msra.mxu0 %v6762
    %8616 = vmatpush.bf16.msra.mxu0 %v6758
    %8617 = vmatmul.bf16.gmra.mxu0 %v8489
    %v8618 = vpop.f32.mrf.mxu0
    %v8619 = vadd.f32 %v8606, %v8618
    %v8620 = vpop.f32.mrf.mxu0
    %8621 = vdwg.mxu0
    %8622 = vmatpush.bf16.msra.mxu0 %v6818
    %8623 = vmatpush.bf16.msra.mxu0 %v6814
    %8624 = vmatpush.bf16.msra.mxu0 %v6810
    %8625 = vmatpush.bf16.msra.mxu0 %v6806
    %8626 = vmatpush.bf16.msra.mxu0 %v6802
    %8627 = vmatpush.bf16.msra.mxu0 %v6798
    %8628 = vmatpush.bf16.msra.mxu0 %v6794
    %8629 = vmatpush.bf16.msra.mxu0 %v6790
    %8630 = vmatmul.bf16.gmra.mxu0 %v8490
    %v8631 = vpop.f32.mrf.mxu0
    %v8632 = vadd.f32 %v8619, %v8631
    %v8633 = vpop.f32.mrf.mxu0
    %8634 = vdwg.mxu0
    %8635 = vmatpush.bf16.msra.mxu0 %v6850
    %8636 = vmatpush.bf16.msra.mxu0 %v6846
    %8637 = vmatpush.bf16.msra.mxu0 %v6842
    %8638 = vmatpush.bf16.msra.mxu0 %v6838
    %8639 = vmatpush.bf16.msra.mxu0 %v6834
    %8640 = vmatpush.bf16.msra.mxu0 %v6830
    %8641 = vmatpush.bf16.msra.mxu0 %v6826
    %8642 = vmatpush.bf16.msra.mxu0 %v6822
    %8643 = vmatmul.bf16.gmra.mxu0 %v8491
    %v8644 = vpop.f32.mrf.mxu0
    %v8645 = vadd.f32 %v8632, %v8644
    %v8646 = vpop.f32.mrf.mxu0
    %8647 = vdwg.mxu0
    %8648 = vmatpush.bf16.msra.mxu0 %v6755
    %8649 = vmatpush.bf16.msra.mxu0 %v6751
    %8650 = vmatpush.bf16.msra.mxu0 %v6747
    %8651 = vmatpush.bf16.msra.mxu0 %v6743
    %8652 = vmatpush.bf16.msra.mxu0 %v6739
    %8653 = vmatpush.bf16.msra.mxu0 %v6735
    %8654 = vmatpush.bf16.msra.mxu0 %v6731
    %8655 = vmatpush.bf16.msra.mxu0 %v6727
    %8656 = vmatmul.bf16.gmra.mxu0 %v8488
    %v8657 = vpop.f32.mrf.mxu0
    %v8658 = vadd.f32 %v6331, %v8657
    %v8659 = vpop.f32.mrf.mxu0
    %8660 = vdwg.mxu0
    %8661 = vmatpush.bf16.msra.mxu0 %v6787
    %8662 = vmatpush.bf16.msra.mxu0 %v6783
    %8663 = vmatpush.bf16.msra.mxu0 %v6779
    %8664 = vmatpush.bf16.msra.mxu0 %v6775
    %8665 = vmatpush.bf16.msra.mxu0 %v6771
    %8666 = vmatpush.bf16.msra.mxu0 %v6767
    %8667 = vmatpush.bf16.msra.mxu0 %v6763
    %8668 = vmatpush.bf16.msra.mxu0 %v6759
    %8669 = vmatmul.bf16.gmra.mxu0 %v8489
    %v8670 = vpop.f32.mrf.mxu0
    %v8671 = vadd.f32 %v8658, %v8670
    %v8672 = vpop.f32.mrf.mxu0
    %8673 = vdwg.mxu0
    %8674 = vmatpush.bf16.msra.mxu0 %v6819
    %8675 = vmatpush.bf16.msra.mxu0 %v6815
    %8676 = vmatpush.bf16.msra.mxu0 %v6811
    %8677 = vmatpush.bf16.msra.mxu0 %v6807
    %8678 = vmatpush.bf16.msra.mxu0 %v6803
    %8679 = vmatpush.bf16.msra.mxu0 %v6799
    %8680 = vmatpush.bf16.msra.mxu0 %v6795
    %8681 = vmatpush.bf16.msra.mxu0 %v6791
    %8682 = vmatmul.bf16.gmra.mxu0 %v8490
    %v8683 = vpop.f32.mrf.mxu0
    %v8684 = vadd.f32 %v8671, %v8683
    %v8685 = vpop.f32.mrf.mxu0
    %8686 = vdwg.mxu0
    %8687 = vmatpush.bf16.msra.mxu0 %v6851
    %8688 = vmatpush.bf16.msra.mxu0 %v6847
    %8689 = vmatpush.bf16.msra.mxu0 %v6843
    %8690 = vmatpush.bf16.msra.mxu0 %v6839
    %8691 = vmatpush.bf16.msra.mxu0 %v6835
    %8692 = vmatpush.bf16.msra.mxu0 %v6831
    %8693 = vmatpush.bf16.msra.mxu0 %v6827
    %8694 = vmatpush.bf16.msra.mxu0 %v6823
    %8695 = vmatmul.bf16.gmra.mxu0 %v8491
    %v8696 = vpop.f32.mrf.mxu0
    %v8697 = vadd.f32 %v8684, %v8696
    %v8698 = vpop.f32.mrf.mxu0
    %8699 = vdwg.mxu0
    %v8700 = vmax.f32 %v8541, 0.0
    %v8701 = vmax.f32 %v8593, 0.0
    %v8702 = vmax.f32 %v8645, 0.0
    %v8703 = vmax.f32 %v8697, 0.0
    %v8704 = vpack.c.bf16 %v8700, %v8700
    %v8705 = vpack.c.bf16 %v8701, %v8701
    %v8706 = vpack.c.bf16 %v8702, %v8702
    %v8707 = vpack.c.bf16 %v8703, %v8703
    %8708 = vmatpush.bf16.msra.mxu0 %v6752
    %8709 = vmatpush.bf16.msra.mxu0 %v6748
    %8710 = vmatpush.bf16.msra.mxu0 %v6744
    %8711 = vmatpush.bf16.msra.mxu0 %v6740
    %8712 = vmatpush.bf16.msra.mxu0 %v6736
    %8713 = vmatpush.bf16.msra.mxu0 %v6732
    %8714 = vmatpush.bf16.msra.mxu0 %v6728
    %8715 = vmatpush.bf16.msra.mxu0 %v6724
    %8716 = vmatmul.bf16.gmra.mxu0 %v8704
    %v8717 = vpop.f32.mrf.mxu0
    %v8718 = vadd.f32 %v6328, %v8717
    %v8719 = vpop.f32.mrf.mxu0
    %8720 = vdwg.mxu0
    %8721 = vmatpush.bf16.msra.mxu0 %v6784
    %8722 = vmatpush.bf16.msra.mxu0 %v6780
    %8723 = vmatpush.bf16.msra.mxu0 %v6776
    %8724 = vmatpush.bf16.msra.mxu0 %v6772
    %8725 = vmatpush.bf16.msra.mxu0 %v6768
    %8726 = vmatpush.bf16.msra.mxu0 %v6764
    %8727 = vmatpush.bf16.msra.mxu0 %v6760
    %8728 = vmatpush.bf16.msra.mxu0 %v6756
    %8729 = vmatmul.bf16.gmra.mxu0 %v8705
    %v8730 = vpop.f32.mrf.mxu0
    %v8731 = vadd.f32 %v8718, %v8730
    %v8732 = vpop.f32.mrf.mxu0
    %8733 = vdwg.mxu0
    %8734 = vmatpush.bf16.msra.mxu0 %v6816
    %8735 = vmatpush.bf16.msra.mxu0 %v6812
    %8736 = vmatpush.bf16.msra.mxu0 %v6808
    %8737 = vmatpush.bf16.msra.mxu0 %v6804
    %8738 = vmatpush.bf16.msra.mxu0 %v6800
    %8739 = vmatpush.bf16.msra.mxu0 %v6796
    %8740 = vmatpush.bf16.msra.mxu0 %v6792
    %8741 = vmatpush.bf16.msra.mxu0 %v6788
    %8742 = vmatmul.bf16.gmra.mxu0 %v8706
    %v8743 = vpop.f32.mrf.mxu0
    %v8744 = vadd.f32 %v8731, %v8743
    %v8745 = vpop.f32.mrf.mxu0
    %8746 = vdwg.mxu0
    %8747 = vmatpush.bf16.msra.mxu0 %v6848
    %8748 = vmatpush.bf16.msra.mxu0 %v6844
    %8749 = vmatpush.bf16.msra.mxu0 %v6840
    %8750 = vmatpush.bf16.msra.mxu0 %v6836
    %8751 = vmatpush.bf16.msra.mxu0 %v6832
    %8752 = vmatpush.bf16.msra.mxu0 %v6828
    %8753 = vmatpush.bf16.msra.mxu0 %v6824
    %8754 = vmatpush.bf16.msra.mxu0 %v6820
    %8755 = vmatmul.bf16.gmra.mxu0 %v8707
    %v8756 = vpop.f32.mrf.mxu0
    %v8757 = vadd.f32 %v8744, %v8756
    %v8758 = vpop.f32.mrf.mxu0
    %8759 = vdwg.mxu0
    %8760 = vmatpush.bf16.msra.mxu0 %v6753
    %8761 = vmatpush.bf16.msra.mxu0 %v6749
    %8762 = vmatpush.bf16.msra.mxu0 %v6745
    %8763 = vmatpush.bf16.msra.mxu0 %v6741
    %8764 = vmatpush.bf16.msra.mxu0 %v6737
    %8765 = vmatpush.bf16.msra.mxu0 %v6733
    %8766 = vmatpush.bf16.msra.mxu0 %v6729
    %8767 = vmatpush.bf16.msra.mxu0 %v6725
    %8768 = vmatmul.bf16.gmra.mxu0 %v8704
    %v8769 = vpop.f32.mrf.mxu0
    %v8770 = vadd.f32 %v6329, %v8769
    %v8771 = vpop.f32.mrf.mxu0
    %8772 = vdwg.mxu0
    %8773 = vmatpush.bf16.msra.mxu0 %v6785
    %8774 = vmatpush.bf16.msra.mxu0 %v6781
    %8775 = vmatpush.bf16.msra.mxu0 %v6777
    %8776 = vmatpush.bf16.msra.mxu0 %v6773
    %8777 = vmatpush.bf16.msra.mxu0 %v6769
    %8778 = vmatpush.bf16.msra.mxu0 %v6765
    %8779 = vmatpush.bf16.msra.mxu0 %v6761
    %8780 = vmatpush.bf16.msra.mxu0 %v6757
    %8781 = vmatmul.bf16.gmra.mxu0 %v8705
    %v8782 = vpop.f32.mrf.mxu0
    %v8783 = vadd.f32 %v8770, %v8782
    %v8784 = vpop.f32.mrf.mxu0
    %8785 = vdwg.mxu0
    %8786 = vmatpush.bf16.msra.mxu0 %v6817
    %8787 = vmatpush.bf16.msra.mxu0 %v6813
    %8788 = vmatpush.bf16.msra.mxu0 %v6809
    %8789 = vmatpush.bf16.msra.mxu0 %v6805
    %8790 = vmatpush.bf16.msra.mxu0 %v6801
    %8791 = vmatpush.bf16.msra.mxu0 %v6797
    %8792 = vmatpush.bf16.msra.mxu0 %v6793
    %8793 = vmatpush.bf16.msra.mxu0 %v6789
    %8794 = vmatmul.bf16.gmra.mxu0 %v8706
    %v8795 = vpop.f32.mrf.mxu0
    %v8796 = vadd.f32 %v8783, %v8795
    %v8797 = vpop.f32.mrf.mxu0
    %8798 = vdwg.mxu0
    %8799 = vmatpush.bf16.msra.mxu0 %v6849
    %8800 = vmatpush.bf16.msra.mxu0 %v6845
    %8801 = vmatpush.bf16.msra.mxu0 %v6841
    %8802 = vmatpush.bf16.msra.mxu0 %v6837
    %8803 = vmatpush.bf16.msra.mxu0 %v6833
    %8804 = vmatpush.bf16.msra.mxu0 %v6829
    %8805 = vmatpush.bf16.msra.mxu0 %v6825
    %8806 = vmatpush.bf16.msra.mxu0 %v6821
    %8807 = vmatmul.bf16.gmra.mxu0 %v8707
    %v8808 = vpop.f32.mrf.mxu0
    %v8809 = vadd.f32 %v8796, %v8808
    %v8810 = vpop.f32.mrf.mxu0
    %8811 = vdwg.mxu0
    %8812 = vmatpush.bf16.msra.mxu0 %v6754
    %8813 = vmatpush.bf16.msra.mxu0 %v6750
    %8814 = vmatpush.bf16.msra.mxu0 %v6746
    %8815 = vmatpush.bf16.msra.mxu0 %v6742
    %8816 = vmatpush.bf16.msra.mxu0 %v6738
    %8817 = vmatpush.bf16.msra.mxu0 %v6734
    %8818 = vmatpush.bf16.msra.mxu0 %v6730
    %8819 = vmatpush.bf16.msra.mxu0 %v6726
    %8820 = vmatmul.bf16.gmra.mxu0 %v8704
    %v8821 = vpop.f32.mrf.mxu0
    %v8822 = vadd.f32 %v6330, %v8821
    %v8823 = vpop.f32.mrf.mxu0
    %8824 = vdwg.mxu0
    %8825 = vmatpush.bf16.msra.mxu0 %v6786
    %8826 = vmatpush.bf16.msra.mxu0 %v6782
    %8827 = vmatpush.bf16.msra.mxu0 %v6778
    %8828 = vmatpush.bf16.msra.mxu0 %v6774
    %8829 = vmatpush.bf16.msra.mxu0 %v6770
    %8830 = vmatpush.bf16.msra.mxu0 %v6766
    %8831 = vmatpush.bf16.msra.mxu0 %v6762
    %8832 = vmatpush.bf16.msra.mxu0 %v6758
    %8833 = vmatmul.bf16.gmra.mxu0 %v8705
    %v8834 = vpop.f32.mrf.mxu0
    %v8835 = vadd.f32 %v8822, %v8834
    %v8836 = vpop.f32.mrf.mxu0
    %8837 = vdwg.mxu0
    %8838 = vmatpush.bf16.msra.mxu0 %v6818
    %8839 = vmatpush.bf16.msra.mxu0 %v6814
    %8840 = vmatpush.bf16.msra.mxu0 %v6810
    %8841 = vmatpush.bf16.msra.mxu0 %v6806
    %8842 = vmatpush.bf16.msra.mxu0 %v6802
    %8843 = vmatpush.bf16.msra.mxu0 %v6798
    %8844 = vmatpush.bf16.msra.mxu0 %v6794
    %8845 = vmatpush.bf16.msra.mxu0 %v6790
    %8846 = vmatmul.bf16.gmra.mxu0 %v8706
    %v8847 = vpop.f32.mrf.mxu0
    %v8848 = vadd.f32 %v8835, %v8847
    %v8849 = vpop.f32.mrf.mxu0
    %8850 = vdwg.mxu0
    %8851 = vmatpush.bf16.msra.mxu0 %v6850
    %8852 = vmatpush.bf16.msra.mxu0 %v6846
    %8853 = vmatpush.bf16.msra.mxu0 %v6842
    %8854 = vmatpush.bf16.msra.mxu0 %v6838
    %8855 = vmatpush.bf16.msra.mxu0 %v6834
    %8856 = vmatpush.bf16.msra.mxu0 %v6830
    %8857 = vmatpush.bf16.msra.mxu0 %v6826
    %8858 = vmatpush.bf16.msra.mxu0 %v6822
    %8859 = vmatmul.bf16.gmra.mxu0 %v8707
    %v8860 = vpop.f32.mrf.mxu0
    %v8861 = vadd.f32 %v8848, %v8860
    %v8862 = vpop.f32.mrf.mxu0
    %8863 = vdwg.mxu0
    %8864 = vmatpush.bf16.msra.mxu0 %v6755
    %8865 = vmatpush.bf16.msra.mxu0 %v6751
    %8866 = vmatpush.bf16.msra.mxu0 %v6747
    %8867 = vmatpush.bf16.msra.mxu0 %v6743
    %8868 = vmatpush.bf16.msra.mxu0 %v6739
    %8869 = vmatpush.bf16.msra.mxu0 %v6735
    %8870 = vmatpush.bf16.msra.mxu0 %v6731
    %8871 = vmatpush.bf16.msra.mxu0 %v6727
    %8872 = vmatmul.bf16.gmra.mxu0 %v8704
    %v8873 = vpop.f32.mrf.mxu0
    %v8874 = vadd.f32 %v6331, %v8873
    %v8875 = vpop.f32.mrf.mxu0
    %8876 = vdwg.mxu0
    %8877 = vmatpush.bf16.msra.mxu0 %v6787
    %8878 = vmatpush.bf16.msra.mxu0 %v6783
    %8879 = vmatpush.bf16.msra.mxu0 %v6779
    %8880 = vmatpush.bf16.msra.mxu0 %v6775
    %8881 = vmatpush.bf16.msra.mxu0 %v6771
    %8882 = vmatpush.bf16.msra.mxu0 %v6767
    %8883 = vmatpush.bf16.msra.mxu0 %v6763
    %8884 = vmatpush.bf16.msra.mxu0 %v6759
    %8885 = vmatmul.bf16.gmra.mxu0 %v8705
    %v8886 = vpop.f32.mrf.mxu0
    %v8887 = vadd.f32 %v8874, %v8886
    %v8888 = vpop.f32.mrf.mxu0
    %8889 = vdwg.mxu0
    %8890 = vmatpush.bf16.msra.mxu0 %v6819
    %8891 = vmatpush.bf16.msra.mxu0 %v6815
    %8892 = vmatpush.bf16.msra.mxu0 %v6811
    %8893 = vmatpush.bf16.msra.mxu0 %v6807
    %8894 = vmatpush.bf16.msra.mxu0 %v6803
    %8895 = vmatpush.bf16.msra.mxu0 %v6799
    %8896 = vmatpush.bf16.msra.mxu0 %v6795
    %8897 = vmatpush.bf16.msra.mxu0 %v6791
    %8898 = vmatmul.bf16.gmra.mxu0 %v8706
    %v8899 = vpop.f32.mrf.mxu0
    %v8900 = vadd.f32 %v8887, %v8899
    %v8901 = vpop.f32.mrf.mxu0
    %8902 = vdwg.mxu0
    %8903 = vmatpush.bf16.msra.mxu0 %v6851
    %8904 = vmatpush.bf16.msra.mxu0 %v6847
    %8905 = vmatpush.bf16.msra.mxu0 %v6843
    %8906 = vmatpush.bf16.msra.mxu0 %v6839
    %8907 = vmatpush.bf16.msra.mxu0 %v6835
    %8908 = vmatpush.bf16.msra.mxu0 %v6831
    %8909 = vmatpush.bf16.msra.mxu0 %v6827
    %8910 = vmatpush.bf16.msra.mxu0 %v6823
    %8911 = vmatmul.bf16.gmra.mxu0 %v8707
    %v8912 = vpop.f32.mrf.mxu0
    %v8913 = vadd.f32 %v8900, %v8912
    %v8914 = vpop.f32.mrf.mxu0
    %8915 = vdwg.mxu0
    %v8916 = vmax.f32 %v8757, 0.0
    %v8917 = vmax.f32 %v8809, 0.0
    %v8918 = vmax.f32 %v8861, 0.0
    %v8919 = vmax.f32 %v8913, 0.0
    %v8920 = vpack.c.bf16 %v8916, %v8916
    %v8921 = vpack.c.bf16 %v8917, %v8917
    %v8922 = vpack.c.bf16 %v8918, %v8918
    %v8923 = vpack.c.bf16 %v8919, %v8919
    %8924 = vmatpush.bf16.msra.mxu0 %v6752
    %8925 = vmatpush.bf16.msra.mxu0 %v6748
    %8926 = vmatpush.bf16.msra.mxu0 %v6744
    %8927 = vmatpush.bf16.msra.mxu0 %v6740
    %8928 = vmatpush.bf16.msra.mxu0 %v6736
    %8929 = vmatpush.bf16.msra.mxu0 %v6732
    %8930 = vmatpush.bf16.msra.mxu0 %v6728
    %8931 = vmatpush.bf16.msra.mxu0 %v6724
    %8932 = vmatmul.bf16.gmra.mxu0 %v8920
    %v8933 = vpop.f32.mrf.mxu0
    %v8934 = vadd.f32 %v6328, %v8933
    %v8935 = vpop.f32.mrf.mxu0
    %8936 = vdwg.mxu0
    %8937 = vmatpush.bf16.msra.mxu0 %v6784
    %8938 = vmatpush.bf16.msra.mxu0 %v6780
    %8939 = vmatpush.bf16.msra.mxu0 %v6776
    %8940 = vmatpush.bf16.msra.mxu0 %v6772
    %8941 = vmatpush.bf16.msra.mxu0 %v6768
    %8942 = vmatpush.bf16.msra.mxu0 %v6764
    %8943 = vmatpush.bf16.msra.mxu0 %v6760
    %8944 = vmatpush.bf16.msra.mxu0 %v6756
    %8945 = vmatmul.bf16.gmra.mxu0 %v8921
    %v8946 = vpop.f32.mrf.mxu0
    %v8947 = vadd.f32 %v8934, %v8946
    %v8948 = vpop.f32.mrf.mxu0
    %8949 = vdwg.mxu0
    %8950 = vmatpush.bf16.msra.mxu0 %v6816
    %8951 = vmatpush.bf16.msra.mxu0 %v6812
    %8952 = vmatpush.bf16.msra.mxu0 %v6808
    %8953 = vmatpush.bf16.msra.mxu0 %v6804
    %8954 = vmatpush.bf16.msra.mxu0 %v6800
    %8955 = vmatpush.bf16.msra.mxu0 %v6796
    %8956 = vmatpush.bf16.msra.mxu0 %v6792
    %8957 = vmatpush.bf16.msra.mxu0 %v6788
    %8958 = vmatmul.bf16.gmra.mxu0 %v8922
    %v8959 = vpop.f32.mrf.mxu0
    %v8960 = vadd.f32 %v8947, %v8959
    %v8961 = vpop.f32.mrf.mxu0
    %8962 = vdwg.mxu0
    %8963 = vmatpush.bf16.msra.mxu0 %v6848
    %8964 = vmatpush.bf16.msra.mxu0 %v6844
    %8965 = vmatpush.bf16.msra.mxu0 %v6840
    %8966 = vmatpush.bf16.msra.mxu0 %v6836
    %8967 = vmatpush.bf16.msra.mxu0 %v6832
    %8968 = vmatpush.bf16.msra.mxu0 %v6828
    %8969 = vmatpush.bf16.msra.mxu0 %v6824
    %8970 = vmatpush.bf16.msra.mxu0 %v6820
    %8971 = vmatmul.bf16.gmra.mxu0 %v8923
    %v8972 = vpop.f32.mrf.mxu0
    %v8973 = vadd.f32 %v8960, %v8972
    %v8974 = vpop.f32.mrf.mxu0
    %8975 = vdwg.mxu0
    %8976 = vmatpush.bf16.msra.mxu0 %v6753
    %8977 = vmatpush.bf16.msra.mxu0 %v6749
    %8978 = vmatpush.bf16.msra.mxu0 %v6745
    %8979 = vmatpush.bf16.msra.mxu0 %v6741
    %8980 = vmatpush.bf16.msra.mxu0 %v6737
    %8981 = vmatpush.bf16.msra.mxu0 %v6733
    %8982 = vmatpush.bf16.msra.mxu0 %v6729
    %8983 = vmatpush.bf16.msra.mxu0 %v6725
    %8984 = vmatmul.bf16.gmra.mxu0 %v8920
    %v8985 = vpop.f32.mrf.mxu0
    %v8986 = vadd.f32 %v6329, %v8985
    %v8987 = vpop.f32.mrf.mxu0
    %8988 = vdwg.mxu0
    %8989 = vmatpush.bf16.msra.mxu0 %v6785
    %8990 = vmatpush.bf16.msra.mxu0 %v6781
    %8991 = vmatpush.bf16.msra.mxu0 %v6777
    %8992 = vmatpush.bf16.msra.mxu0 %v6773
    %8993 = vmatpush.bf16.msra.mxu0 %v6769
    %8994 = vmatpush.bf16.msra.mxu0 %v6765
    %8995 = vmatpush.bf16.msra.mxu0 %v6761
    %8996 = vmatpush.bf16.msra.mxu0 %v6757
    %8997 = vmatmul.bf16.gmra.mxu0 %v8921
    %v8998 = vpop.f32.mrf.mxu0
    %v8999 = vadd.f32 %v8986, %v8998
    %v9000 = vpop.f32.mrf.mxu0
    %9001 = vdwg.mxu0
    %9002 = vmatpush.bf16.msra.mxu0 %v6817
    %9003 = vmatpush.bf16.msra.mxu0 %v6813
    %9004 = vmatpush.bf16.msra.mxu0 %v6809
    %9005 = vmatpush.bf16.msra.mxu0 %v6805
    %9006 = vmatpush.bf16.msra.mxu0 %v6801
    %9007 = vmatpush.bf16.msra.mxu0 %v6797
    %9008 = vmatpush.bf16.msra.mxu0 %v6793
    %9009 = vmatpush.bf16.msra.mxu0 %v6789
    %9010 = vmatmul.bf16.gmra.mxu0 %v8922
    %v9011 = vpop.f32.mrf.mxu0
    %v9012 = vadd.f32 %v8999, %v9011
    %v9013 = vpop.f32.mrf.mxu0
    %9014 = vdwg.mxu0
    %9015 = vmatpush.bf16.msra.mxu0 %v6849
    %9016 = vmatpush.bf16.msra.mxu0 %v6845
    %9017 = vmatpush.bf16.msra.mxu0 %v6841
    %9018 = vmatpush.bf16.msra.mxu0 %v6837
    %9019 = vmatpush.bf16.msra.mxu0 %v6833
    %9020 = vmatpush.bf16.msra.mxu0 %v6829
    %9021 = vmatpush.bf16.msra.mxu0 %v6825
    %9022 = vmatpush.bf16.msra.mxu0 %v6821
    %9023 = vmatmul.bf16.gmra.mxu0 %v8923
    %v9024 = vpop.f32.mrf.mxu0
    %v9025 = vadd.f32 %v9012, %v9024
    %v9026 = vpop.f32.mrf.mxu0
    %9027 = vdwg.mxu0
    %9028 = vmatpush.bf16.msra.mxu0 %v6754
    %9029 = vmatpush.bf16.msra.mxu0 %v6750
    %9030 = vmatpush.bf16.msra.mxu0 %v6746
    %9031 = vmatpush.bf16.msra.mxu0 %v6742
    %9032 = vmatpush.bf16.msra.mxu0 %v6738
    %9033 = vmatpush.bf16.msra.mxu0 %v6734
    %9034 = vmatpush.bf16.msra.mxu0 %v6730
    %9035 = vmatpush.bf16.msra.mxu0 %v6726
    %9036 = vmatmul.bf16.gmra.mxu0 %v8920
    %v9037 = vpop.f32.mrf.mxu0
    %v9038 = vadd.f32 %v6330, %v9037
    %v9039 = vpop.f32.mrf.mxu0
    %9040 = vdwg.mxu0
    %9041 = vmatpush.bf16.msra.mxu0 %v6786
    %9042 = vmatpush.bf16.msra.mxu0 %v6782
    %9043 = vmatpush.bf16.msra.mxu0 %v6778
    %9044 = vmatpush.bf16.msra.mxu0 %v6774
    %9045 = vmatpush.bf16.msra.mxu0 %v6770
    %9046 = vmatpush.bf16.msra.mxu0 %v6766
    %9047 = vmatpush.bf16.msra.mxu0 %v6762
    %9048 = vmatpush.bf16.msra.mxu0 %v6758
    %9049 = vmatmul.bf16.gmra.mxu0 %v8921
    %v9050 = vpop.f32.mrf.mxu0
    %v9051 = vadd.f32 %v9038, %v9050
    %v9052 = vpop.f32.mrf.mxu0
    %9053 = vdwg.mxu0
    %9054 = vmatpush.bf16.msra.mxu0 %v6818
    %9055 = vmatpush.bf16.msra.mxu0 %v6814
    %9056 = vmatpush.bf16.msra.mxu0 %v6810
    %9057 = vmatpush.bf16.msra.mxu0 %v6806
    %9058 = vmatpush.bf16.msra.mxu0 %v6802
    %9059 = vmatpush.bf16.msra.mxu0 %v6798
    %9060 = vmatpush.bf16.msra.mxu0 %v6794
    %9061 = vmatpush.bf16.msra.mxu0 %v6790
    %9062 = vmatmul.bf16.gmra.mxu0 %v8922
    %v9063 = vpop.f32.mrf.mxu0
    %v9064 = vadd.f32 %v9051, %v9063
    %v9065 = vpop.f32.mrf.mxu0
    %9066 = vdwg.mxu0
    %9067 = vmatpush.bf16.msra.mxu0 %v6850
    %9068 = vmatpush.bf16.msra.mxu0 %v6846
    %9069 = vmatpush.bf16.msra.mxu0 %v6842
    %9070 = vmatpush.bf16.msra.mxu0 %v6838
    %9071 = vmatpush.bf16.msra.mxu0 %v6834
    %9072 = vmatpush.bf16.msra.mxu0 %v6830
    %9073 = vmatpush.bf16.msra.mxu0 %v6826
    %9074 = vmatpush.bf16.msra.mxu0 %v6822
    %9075 = vmatmul.bf16.gmra.mxu0 %v8923
    %v9076 = vpop.f32.mrf.mxu0
    %v9077 = vadd.f32 %v9064, %v9076
    %v9078 = vpop.f32.mrf.mxu0
    %9079 = vdwg.mxu0
    %9080 = vmatpush.bf16.msra.mxu0 %v6755
    %9081 = vmatpush.bf16.msra.mxu0 %v6751
    %9082 = vmatpush.bf16.msra.mxu0 %v6747
    %9083 = vmatpush.bf16.msra.mxu0 %v6743
    %9084 = vmatpush.bf16.msra.mxu0 %v6739
    %9085 = vmatpush.bf16.msra.mxu0 %v6735
    %9086 = vmatpush.bf16.msra.mxu0 %v6731
    %9087 = vmatpush.bf16.msra.mxu0 %v6727
    %9088 = vmatmul.bf16.gmra.mxu0 %v8920
    %v9089 = vpop.f32.mrf.mxu0
    %v9090 = vadd.f32 %v6331, %v9089
    %v9091 = vpop.f32.mrf.mxu0
    %9092 = vdwg.mxu0
    %9093 = vmatpush.bf16.msra.mxu0 %v6787
    %9094 = vmatpush.bf16.msra.mxu0 %v6783
    %9095 = vmatpush.bf16.msra.mxu0 %v6779
    %9096 = vmatpush.bf16.msra.mxu0 %v6775
    %9097 = vmatpush.bf16.msra.mxu0 %v6771
    %9098 = vmatpush.bf16.msra.mxu0 %v6767
    %9099 = vmatpush.bf16.msra.mxu0 %v6763
    %9100 = vmatpush.bf16.msra.mxu0 %v6759
    %9101 = vmatmul.bf16.gmra.mxu0 %v8921
    %v9102 = vpop.f32.mrf.mxu0
    %v9103 = vadd.f32 %v9090, %v9102
    %v9104 = vpop.f32.mrf.mxu0
    %9105 = vdwg.mxu0
    %9106 = vmatpush.bf16.msra.mxu0 %v6819
    %9107 = vmatpush.bf16.msra.mxu0 %v6815
    %9108 = vmatpush.bf16.msra.mxu0 %v6811
    %9109 = vmatpush.bf16.msra.mxu0 %v6807
    %9110 = vmatpush.bf16.msra.mxu0 %v6803
    %9111 = vmatpush.bf16.msra.mxu0 %v6799
    %9112 = vmatpush.bf16.msra.mxu0 %v6795
    %9113 = vmatpush.bf16.msra.mxu0 %v6791
    %9114 = vmatmul.bf16.gmra.mxu0 %v8922
    %v9115 = vpop.f32.mrf.mxu0
    %v9116 = vadd.f32 %v9103, %v9115
    %v9117 = vpop.f32.mrf.mxu0
    %9118 = vdwg.mxu0
    %9119 = vmatpush.bf16.msra.mxu0 %v6851
    %9120 = vmatpush.bf16.msra.mxu0 %v6847
    %9121 = vmatpush.bf16.msra.mxu0 %v6843
    %9122 = vmatpush.bf16.msra.mxu0 %v6839
    %9123 = vmatpush.bf16.msra.mxu0 %v6835
    %9124 = vmatpush.bf16.msra.mxu0 %v6831
    %9125 = vmatpush.bf16.msra.mxu0 %v6827
    %9126 = vmatpush.bf16.msra.mxu0 %v6823
    %9127 = vmatmul.bf16.gmra.mxu0 %v8923
    %v9128 = vpop.f32.mrf.mxu0
    %v9129 = vadd.f32 %v9116, %v9128
    %v9130 = vpop.f32.mrf.mxu0
    %9131 = vdwg.mxu0
    %v9132 = vmax.f32 %v8973, 0.0
    %v9133 = vmax.f32 %v9025, 0.0
    %v9134 = vmax.f32 %v9077, 0.0
    %v9135 = vmax.f32 %v9129, 0.0
    %v9136 = vpack.c.bf16 %v9132, %v9132
    %v9137 = vpack.c.bf16 %v9133, %v9133
    %v9138 = vpack.c.bf16 %v9134, %v9134
    %v9139 = vpack.c.bf16 %v9135, %v9135
    %v9140 = vld [vmem:[#allocation10] sm:$0xff]
    %v9141 = vld [vmem:[#allocation10 + $0x8] sm:$0xff]
    %v9142 = vld [vmem:[#allocation10 + $0x10] sm:$0xff]
    %v9143 = vld [vmem:[#allocation10 + $0x18] sm:$0xff]
    %v9144 = vld [vmem:[#allocation10 + $0x20] sm:$0xff]
    %v9145 = vld [vmem:[#allocation10 + $0x28] sm:$0xff]
    %v9146 = vld [vmem:[#allocation10 + $0x30] sm:$0xff]
    %v9147 = vld [vmem:[#allocation10 + $0x38] sm:$0xff]
    %v9148 = vld [vmem:[#allocation10 + $0x40] sm:$0xff]
    %v9149 = vld [vmem:[#allocation10 + $0x48] sm:$0xff]
    %v9150 = vld [vmem:[#allocation10 + $0x50] sm:$0xff]
    %v9151 = vld [vmem:[#allocation10 + $0x58] sm:$0xff]
    %v9152 = vld [vmem:[#allocation10 + $0x60] sm:$0xff]
    %v9153 = vld [vmem:[#allocation10 + $0x68] sm:$0xff]
    %v9154 = vld [vmem:[#allocation10 + $0x70] sm:$0xff]
    %v9155 = vld [vmem:[#allocation10 + $0x78] sm:$0xff]
    %v9156 = vld [vmem:[#allocation10 + $0x80] sm:$0xff]
    %v9157 = vld [vmem:[#allocation10 + $0x88] sm:$0xff]
    %v9158 = vld [vmem:[#allocation10 + $0x90] sm:$0xff]
    %v9159 = vld [vmem:[#allocation10 + $0x98] sm:$0xff]
    %v9160 = vld [vmem:[#allocation10 + $0xa0] sm:$0xff]
    %v9161 = vld [vmem:[#allocation10 + $0xa8] sm:$0xff]
    %v9162 = vld [vmem:[#allocation10 + $0xb0] sm:$0xff]
    %v9163 = vld [vmem:[#allocation10 + $0xb8] sm:$0xff]
    %v9164 = vld [vmem:[#allocation10 + $0xc0] sm:$0xff]
    %v9165 = vld [vmem:[#allocation10 + $0xc8] sm:$0xff]
    %v9166 = vld [vmem:[#allocation10 + $0xd0] sm:$0xff]
    %v9167 = vld [vmem:[#allocation10 + $0xd8] sm:$0xff]
    %v9168 = vld [vmem:[#allocation10 + $0xe0] sm:$0xff]
    %v9169 = vld [vmem:[#allocation10 + $0xe8] sm:$0xff]
    %v9170 = vld [vmem:[#allocation10 + $0xf0] sm:$0xff]
    %v9171 = vld [vmem:[#allocation10 + $0xf8] sm:$0xff]
    %v9172 = vld [vmem:[#allocation10 + $0x100] sm:$0xff]
    %v9173 = vld [vmem:[#allocation10 + $0x108] sm:$0xff]
    %v9174 = vld [vmem:[#allocation10 + $0x110] sm:$0xff]
    %v9175 = vld [vmem:[#allocation10 + $0x118] sm:$0xff]
    %v9176 = vld [vmem:[#allocation10 + $0x120] sm:$0xff]
    %v9177 = vld [vmem:[#allocation10 + $0x128] sm:$0xff]
    %v9178 = vld [vmem:[#allocation10 + $0x130] sm:$0xff]
    %v9179 = vld [vmem:[#allocation10 + $0x138] sm:$0xff]
    %v9180 = vld [vmem:[#allocation10 + $0x140] sm:$0xff]
    %v9181 = vld [vmem:[#allocation10 + $0x148] sm:$0xff]
    %v9182 = vld [vmem:[#allocation10 + $0x150] sm:$0xff]
    %v9183 = vld [vmem:[#allocation10 + $0x158] sm:$0xff]
    %v9184 = vld [vmem:[#allocation10 + $0x160] sm:$0xff]
    %v9185 = vld [vmem:[#allocation10 + $0x168] sm:$0xff]
    %v9186 = vld [vmem:[#allocation10 + $0x170] sm:$0xff]
    %v9187 = vld [vmem:[#allocation10 + $0x178] sm:$0xff]
    %v9188 = vld [vmem:[#allocation10 + $0x180] sm:$0xff]
    %v9189 = vld [vmem:[#allocation10 + $0x188] sm:$0xff]
    %v9190 = vld [vmem:[#allocation10 + $0x190] sm:$0xff]
    %v9191 = vld [vmem:[#allocation10 + $0x198] sm:$0xff]
    %v9192 = vld [vmem:[#allocation10 + $0x1a0] sm:$0xff]
    %v9193 = vld [vmem:[#allocation10 + $0x1a8] sm:$0xff]
    %v9194 = vld [vmem:[#allocation10 + $0x1b0] sm:$0xff]
    %v9195 = vld [vmem:[#allocation10 + $0x1b8] sm:$0xff]
    %v9196 = vld [vmem:[#allocation10 + $0x1c0] sm:$0xff]
    %v9197 = vld [vmem:[#allocation10 + $0x1c8] sm:$0xff]
    %v9198 = vld [vmem:[#allocation10 + $0x1d0] sm:$0xff]
    %v9199 = vld [vmem:[#allocation10 + $0x1d8] sm:$0xff]
    %v9200 = vld [vmem:[#allocation10 + $0x1e0] sm:$0xff]
    %v9201 = vld [vmem:[#allocation10 + $0x1e8] sm:$0xff]
    %v9202 = vld [vmem:[#allocation10 + $0x1f0] sm:$0xff]
    %v9203 = vld [vmem:[#allocation10 + $0x1f8] sm:$0xff]
    %v9204 = vld [vmem:[#allocation10 + $0x200] sm:$0xff]
    %v9205 = vld [vmem:[#allocation10 + $0x208] sm:$0xff]
    %v9206 = vld [vmem:[#allocation10 + $0x210] sm:$0xff]
    %v9207 = vld [vmem:[#allocation10 + $0x218] sm:$0xff]
    %v9208 = vld [vmem:[#allocation10 + $0x220] sm:$0xff]
    %v9209 = vld [vmem:[#allocation10 + $0x228] sm:$0xff]
    %v9210 = vld [vmem:[#allocation10 + $0x230] sm:$0xff]
    %v9211 = vld [vmem:[#allocation10 + $0x238] sm:$0xff]
    %v9212 = vld [vmem:[#allocation10 + $0x240] sm:$0xff]
    %v9213 = vld [vmem:[#allocation10 + $0x248] sm:$0xff]
    %v9214 = vld [vmem:[#allocation10 + $0x250] sm:$0xff]
    %v9215 = vld [vmem:[#allocation10 + $0x258] sm:$0xff]
    %v9216 = vld [vmem:[#allocation10 + $0x260] sm:$0xff]
    %v9217 = vld [vmem:[#allocation10 + $0x268] sm:$0xff]
    %v9218 = vld [vmem:[#allocation10 + $0x270] sm:$0xff]
    %v9219 = vld [vmem:[#allocation10 + $0x278] sm:$0xff]
    %v9220 = vld [vmem:[#allocation10 + $0x280] sm:$0xff]
    %v9221 = vld [vmem:[#allocation10 + $0x288] sm:$0xff]
    %v9222 = vld [vmem:[#allocation10 + $0x290] sm:$0xff]
    %v9223 = vld [vmem:[#allocation10 + $0x298] sm:$0xff]
    %v9224 = vld [vmem:[#allocation10 + $0x2a0] sm:$0xff]
    %v9225 = vld [vmem:[#allocation10 + $0x2a8] sm:$0xff]
    %v9226 = vld [vmem:[#allocation10 + $0x2b0] sm:$0xff]
    %v9227 = vld [vmem:[#allocation10 + $0x2b8] sm:$0xff]
    %v9228 = vld [vmem:[#allocation10 + $0x2c0] sm:$0xff]
    %v9229 = vld [vmem:[#allocation10 + $0x2c8] sm:$0xff]
    %v9230 = vld [vmem:[#allocation10 + $0x2d0] sm:$0xff]
    %v9231 = vld [vmem:[#allocation10 + $0x2d8] sm:$0xff]
    %v9232 = vld [vmem:[#allocation10 + $0x2e0] sm:$0xff]
    %v9233 = vld [vmem:[#allocation10 + $0x2e8] sm:$0xff]
    %v9234 = vld [vmem:[#allocation10 + $0x2f0] sm:$0xff]
    %v9235 = vld [vmem:[#allocation10 + $0x2f8] sm:$0xff]
    %v9236 = vld [vmem:[#allocation10 + $0x300] sm:$0xff]
    %v9237 = vld [vmem:[#allocation10 + $0x308] sm:$0xff]
    %v9238 = vld [vmem:[#allocation10 + $0x310] sm:$0xff]
    %v9239 = vld [vmem:[#allocation10 + $0x318] sm:$0xff]
    %v9240 = vld [vmem:[#allocation10 + $0x320] sm:$0xff]
    %v9241 = vld [vmem:[#allocation10 + $0x328] sm:$0xff]
    %v9242 = vld [vmem:[#allocation10 + $0x330] sm:$0xff]
    %v9243 = vld [vmem:[#allocation10 + $0x338] sm:$0xff]
    %v9244 = vld [vmem:[#allocation10 + $0x340] sm:$0xff]
    %v9245 = vld [vmem:[#allocation10 + $0x348] sm:$0xff]
    %v9246 = vld [vmem:[#allocation10 + $0x350] sm:$0xff]
    %v9247 = vld [vmem:[#allocation10 + $0x358] sm:$0xff]
    %v9248 = vld [vmem:[#allocation10 + $0x360] sm:$0xff]
    %v9249 = vld [vmem:[#allocation10 + $0x368] sm:$0xff]
    %v9250 = vld [vmem:[#allocation10 + $0x370] sm:$0xff]
    %v9251 = vld [vmem:[#allocation10 + $0x378] sm:$0xff]
    %v9252 = vld [vmem:[#allocation10 + $0x380] sm:$0xff]
    %v9253 = vld [vmem:[#allocation10 + $0x388] sm:$0xff]
    %v9254 = vld [vmem:[#allocation10 + $0x390] sm:$0xff]
    %v9255 = vld [vmem:[#allocation10 + $0x398] sm:$0xff]
    %v9256 = vld [vmem:[#allocation10 + $0x3a0] sm:$0xff]
    %v9257 = vld [vmem:[#allocation10 + $0x3a8] sm:$0xff]
    %v9258 = vld [vmem:[#allocation10 + $0x3b0] sm:$0xff]
    %v9259 = vld [vmem:[#allocation10 + $0x3b8] sm:$0xff]
    %v9260 = vld [vmem:[#allocation10 + $0x3c0] sm:$0xff]
    %v9261 = vld [vmem:[#allocation10 + $0x3c8] sm:$0xff]
    %v9262 = vld [vmem:[#allocation10 + $0x3d0] sm:$0xff]
    %v9263 = vld [vmem:[#allocation10 + $0x3d8] sm:$0xff]
    %v9264 = vld [vmem:[#allocation10 + $0x3e0] sm:$0xff]
    %v9265 = vld [vmem:[#allocation10 + $0x3e8] sm:$0xff]
    %v9266 = vld [vmem:[#allocation10 + $0x3f0] sm:$0xff]
    %v9267 = vld [vmem:[#allocation10 + $0x3f8] sm:$0xff]
    %v9268 = vld [vmem:[#allocation10 + $0x400] sm:$0xff]
    %v9269 = vld [vmem:[#allocation10 + $0x408] sm:$0xff]
    %v9270 = vld [vmem:[#allocation10 + $0x410] sm:$0xff]
    %v9271 = vld [vmem:[#allocation10 + $0x418] sm:$0xff]
    %v9272 = vld [vmem:[#allocation10 + $0x420] sm:$0xff]
    %v9273 = vld [vmem:[#allocation10 + $0x428] sm:$0xff]
    %v9274 = vld [vmem:[#allocation10 + $0x430] sm:$0xff]
    %v9275 = vld [vmem:[#allocation10 + $0x438] sm:$0xff]
    %v9276 = vld [vmem:[#allocation10 + $0x440] sm:$0xff]
    %v9277 = vld [vmem:[#allocation10 + $0x448] sm:$0xff]
    %v9278 = vld [vmem:[#allocation10 + $0x450] sm:$0xff]
    %v9279 = vld [vmem:[#allocation10 + $0x458] sm:$0xff]
    %v9280 = vld [vmem:[#allocation10 + $0x460] sm:$0xff]
    %v9281 = vld [vmem:[#allocation10 + $0x468] sm:$0xff]
    %v9282 = vld [vmem:[#allocation10 + $0x470] sm:$0xff]
    %v9283 = vld [vmem:[#allocation10 + $0x478] sm:$0xff]
    %v9284 = vld [vmem:[#allocation10 + $0x480] sm:$0xff]
    %v9285 = vld [vmem:[#allocation10 + $0x488] sm:$0xff]
    %v9286 = vld [vmem:[#allocation10 + $0x490] sm:$0xff]
    %v9287 = vld [vmem:[#allocation10 + $0x498] sm:$0xff]
    %v9288 = vld [vmem:[#allocation10 + $0x4a0] sm:$0xff]
    %v9289 = vld [vmem:[#allocation10 + $0x4a8] sm:$0xff]
    %v9290 = vld [vmem:[#allocation10 + $0x4b0] sm:$0xff]
    %v9291 = vld [vmem:[#allocation10 + $0x4b8] sm:$0xff]
    %v9292 = vld [vmem:[#allocation10 + $0x4c0] sm:$0xff]
    %v9293 = vld [vmem:[#allocation10 + $0x4c8] sm:$0xff]
    %v9294 = vld [vmem:[#allocation10 + $0x4d0] sm:$0xff]
    %v9295 = vld [vmem:[#allocation10 + $0x4d8] sm:$0xff]
    %v9296 = vld [vmem:[#allocation10 + $0x4e0] sm:$0xff]
    %v9297 = vld [vmem:[#allocation10 + $0x4e8] sm:$0xff]
    %v9298 = vld [vmem:[#allocation10 + $0x4f0] sm:$0xff]
    %v9299 = vld [vmem:[#allocation10 + $0x4f8] sm:$0xff]
    %v9300 = vld [vmem:[#allocation10 + $0x500] sm:$0xff]
    %v9301 = vld [vmem:[#allocation10 + $0x508] sm:$0xff]
    %v9302 = vld [vmem:[#allocation10 + $0x510] sm:$0xff]
    %v9303 = vld [vmem:[#allocation10 + $0x518] sm:$0xff]
    %v9304 = vld [vmem:[#allocation10 + $0x520] sm:$0xff]
    %v9305 = vld [vmem:[#allocation10 + $0x528] sm:$0xff]
    %v9306 = vld [vmem:[#allocation10 + $0x530] sm:$0xff]
    %v9307 = vld [vmem:[#allocation10 + $0x538] sm:$0xff]
    %v9308 = vld [vmem:[#allocation10 + $0x540] sm:$0xff]
    %v9309 = vld [vmem:[#allocation10 + $0x548] sm:$0xff]
    %v9310 = vld [vmem:[#allocation10 + $0x550] sm:$0xff]
    %v9311 = vld [vmem:[#allocation10 + $0x558] sm:$0xff]
    %v9312 = vld [vmem:[#allocation10 + $0x560] sm:$0xff]
    %v9313 = vld [vmem:[#allocation10 + $0x568] sm:$0xff]
    %v9314 = vld [vmem:[#allocation10 + $0x570] sm:$0xff]
    %v9315 = vld [vmem:[#allocation10 + $0x578] sm:$0xff]
    %v9316 = vld [vmem:[#allocation10 + $0x580] sm:$0xff]
    %v9317 = vld [vmem:[#allocation10 + $0x588] sm:$0xff]
    %v9318 = vld [vmem:[#allocation10 + $0x590] sm:$0xff]
    %v9319 = vld [vmem:[#allocation10 + $0x598] sm:$0xff]
    %v9320 = vld [vmem:[#allocation10 + $0x5a0] sm:$0xff]
    %v9321 = vld [vmem:[#allocation10 + $0x5a8] sm:$0xff]
    %v9322 = vld [vmem:[#allocation10 + $0x5b0] sm:$0xff]
    %v9323 = vld [vmem:[#allocation10 + $0x5b8] sm:$0xff]
    %v9324 = vld [vmem:[#allocation10 + $0x5c0] sm:$0xff]
    %v9325 = vld [vmem:[#allocation10 + $0x5c8] sm:$0xff]
    %v9326 = vld [vmem:[#allocation10 + $0x5d0] sm:$0xff]
    %v9327 = vld [vmem:[#allocation10 + $0x5d8] sm:$0xff]
    %v9328 = vld [vmem:[#allocation10 + $0x5e0] sm:$0xff]
    %v9329 = vld [vmem:[#allocation10 + $0x5e8] sm:$0xff]
    %v9330 = vld [vmem:[#allocation10 + $0x5f0] sm:$0xff]
    %v9331 = vld [vmem:[#allocation10 + $0x5f8] sm:$0xff]
    %v9332 = vld [vmem:[#allocation10 + $0x600] sm:$0xff]
    %v9333 = vld [vmem:[#allocation10 + $0x608] sm:$0xff]
    %v9334 = vld [vmem:[#allocation10 + $0x610] sm:$0xff]
    %v9335 = vld [vmem:[#allocation10 + $0x618] sm:$0xff]
    %v9336 = vld [vmem:[#allocation10 + $0x620] sm:$0xff]
    %v9337 = vld [vmem:[#allocation10 + $0x628] sm:$0xff]
    %v9338 = vld [vmem:[#allocation10 + $0x630] sm:$0xff]
    %v9339 = vld [vmem:[#allocation10 + $0x638] sm:$0xff]
    %v9340 = vld [vmem:[#allocation10 + $0x640] sm:$0xff]
    %v9341 = vld [vmem:[#allocation10 + $0x648] sm:$0xff]
    %v9342 = vld [vmem:[#allocation10 + $0x650] sm:$0xff]
    %v9343 = vld [vmem:[#allocation10 + $0x658] sm:$0xff]
    %v9344 = vld [vmem:[#allocation10 + $0x660] sm:$0xff]
    %v9345 = vld [vmem:[#allocation10 + $0x668] sm:$0xff]
    %v9346 = vld [vmem:[#allocation10 + $0x670] sm:$0xff]
    %v9347 = vld [vmem:[#allocation10 + $0x678] sm:$0xff]
    %v9348 = vld [vmem:[#allocation10 + $0x680] sm:$0xff]
    %v9349 = vld [vmem:[#allocation10 + $0x688] sm:$0xff]
    %v9350 = vld [vmem:[#allocation10 + $0x690] sm:$0xff]
    %v9351 = vld [vmem:[#allocation10 + $0x698] sm:$0xff]
    %v9352 = vld [vmem:[#allocation10 + $0x6a0] sm:$0xff]
    %v9353 = vld [vmem:[#allocation10 + $0x6a8] sm:$0xff]
    %v9354 = vld [vmem:[#allocation10 + $0x6b0] sm:$0xff]
    %v9355 = vld [vmem:[#allocation10 + $0x6b8] sm:$0xff]
    %v9356 = vld [vmem:[#allocation10 + $0x6c0] sm:$0xff]
    %v9357 = vld [vmem:[#allocation10 + $0x6c8] sm:$0xff]
    %v9358 = vld [vmem:[#allocation10 + $0x6d0] sm:$0xff]
    %v9359 = vld [vmem:[#allocation10 + $0x6d8] sm:$0xff]
    %v9360 = vld [vmem:[#allocation10 + $0x6e0] sm:$0xff]
    %v9361 = vld [vmem:[#allocation10 + $0x6e8] sm:$0xff]
    %v9362 = vld [vmem:[#allocation10 + $0x6f0] sm:$0xff]
    %v9363 = vld [vmem:[#allocation10 + $0x6f8] sm:$0xff]
    %v9364 = vld [vmem:[#allocation10 + $0x700] sm:$0xff]
    %v9365 = vld [vmem:[#allocation10 + $0x708] sm:$0xff]
    %v9366 = vld [vmem:[#allocation10 + $0x710] sm:$0xff]
    %v9367 = vld [vmem:[#allocation10 + $0x718] sm:$0xff]
    %v9368 = vld [vmem:[#allocation10 + $0x720] sm:$0xff]
    %v9369 = vld [vmem:[#allocation10 + $0x728] sm:$0xff]
    %v9370 = vld [vmem:[#allocation10 + $0x730] sm:$0xff]
    %v9371 = vld [vmem:[#allocation10 + $0x738] sm:$0xff]
    %v9372 = vld [vmem:[#allocation10 + $0x740] sm:$0xff]
    %v9373 = vld [vmem:[#allocation10 + $0x748] sm:$0xff]
    %v9374 = vld [vmem:[#allocation10 + $0x750] sm:$0xff]
    %v9375 = vld [vmem:[#allocation10 + $0x758] sm:$0xff]
    %v9376 = vld [vmem:[#allocation10 + $0x760] sm:$0xff]
    %v9377 = vld [vmem:[#allocation10 + $0x768] sm:$0xff]
    %v9378 = vld [vmem:[#allocation10 + $0x770] sm:$0xff]
    %v9379 = vld [vmem:[#allocation10 + $0x778] sm:$0xff]
    %v9380 = vld [vmem:[#allocation10 + $0x780] sm:$0xff]
    %v9381 = vld [vmem:[#allocation10 + $0x788] sm:$0xff]
    %v9382 = vld [vmem:[#allocation10 + $0x790] sm:$0xff]
    %v9383 = vld [vmem:[#allocation10 + $0x798] sm:$0xff]
    %v9384 = vld [vmem:[#allocation10 + $0x7a0] sm:$0xff]
    %v9385 = vld [vmem:[#allocation10 + $0x7a8] sm:$0xff]
    %v9386 = vld [vmem:[#allocation10 + $0x7b0] sm:$0xff]
    %v9387 = vld [vmem:[#allocation10 + $0x7b8] sm:$0xff]
    %v9388 = vld [vmem:[#allocation10 + $0x7c0] sm:$0xff]
    %v9389 = vld [vmem:[#allocation10 + $0x7c8] sm:$0xff]
    %v9390 = vld [vmem:[#allocation10 + $0x7d0] sm:$0xff]
    %v9391 = vld [vmem:[#allocation10 + $0x7d8] sm:$0xff]
    %v9392 = vld [vmem:[#allocation10 + $0x7e0] sm:$0xff]
    %v9393 = vld [vmem:[#allocation10 + $0x7e8] sm:$0xff]
    %v9394 = vld [vmem:[#allocation10 + $0x7f0] sm:$0xff]
    %v9395 = vld [vmem:[#allocation10 + $0x7f8] sm:$0xff]
    %v9396 = vld [vmem:[#allocation21] sm:$0xff]
    %v9398 = vperm.slane %v9396, 0
    %v9399 = vperm.slane %v9396, 1
    %v9400 = vperm.slane %v9396, 2
    %v9401 = vperm.slane %v9396, 3
    %v9402 = vperm.slane %v9396, 4
    %v9403 = vperm.slane %v9396, 5
    %v9404 = vperm.slane %v9396, 6
    %v9405 = vperm.slane %v9396, 7
    %v9670 = vunpack.c.l.b16 %v9140
    %v9671 = vunpack.c.h.b16 %v9140
    %v9672 = vunpack.c.l.b16 %v9141
    %v9673 = vunpack.c.h.b16 %v9141
    %v9674 = vunpack.c.l.b16 %v9142
    %v9675 = vunpack.c.h.b16 %v9142
    %v9676 = vunpack.c.l.b16 %v9143
    %v9677 = vunpack.c.h.b16 %v9143
    %v9678 = vunpack.c.l.b16 %v9144
    %v9679 = vunpack.c.h.b16 %v9144
    %v9680 = vunpack.c.l.b16 %v9145
    %v9681 = vunpack.c.h.b16 %v9145
    %v9682 = vunpack.c.l.b16 %v9146
    %v9683 = vunpack.c.h.b16 %v9146
    %v9684 = vunpack.c.l.b16 %v9147
    %v9685 = vunpack.c.h.b16 %v9147
    %v9686 = vunpack.c.l.b16 %v9148
    %v9687 = vunpack.c.h.b16 %v9148
    %v9688 = vunpack.c.l.b16 %v9149
    %v9689 = vunpack.c.h.b16 %v9149
    %v9690 = vunpack.c.l.b16 %v9150
    %v9691 = vunpack.c.h.b16 %v9150
    %v9692 = vunpack.c.l.b16 %v9151
    %v9693 = vunpack.c.h.b16 %v9151
    %v9694 = vunpack.c.l.b16 %v9152
    %v9695 = vunpack.c.h.b16 %v9152
    %v9696 = vunpack.c.l.b16 %v9153
    %v9697 = vunpack.c.h.b16 %v9153
    %v9698 = vunpack.c.l.b16 %v9154
    %v9699 = vunpack.c.h.b16 %v9154
    %v9700 = vunpack.c.l.b16 %v9155
    %v9701 = vunpack.c.h.b16 %v9155
    %v9702 = vunpack.c.l.b16 %v9156
    %v9703 = vunpack.c.h.b16 %v9156
    %v9704 = vunpack.c.l.b16 %v9157
    %v9705 = vunpack.c.h.b16 %v9157
    %v9706 = vunpack.c.l.b16 %v9158
    %v9707 = vunpack.c.h.b16 %v9158
    %v9708 = vunpack.c.l.b16 %v9159
    %v9709 = vunpack.c.h.b16 %v9159
    %v9710 = vunpack.c.l.b16 %v9160
    %v9711 = vunpack.c.h.b16 %v9160
    %v9712 = vunpack.c.l.b16 %v9161
    %v9713 = vunpack.c.h.b16 %v9161
    %v9714 = vunpack.c.l.b16 %v9162
    %v9715 = vunpack.c.h.b16 %v9162
    %v9716 = vunpack.c.l.b16 %v9163
    %v9717 = vunpack.c.h.b16 %v9163
    %v9718 = vunpack.c.l.b16 %v9164
    %v9719 = vunpack.c.h.b16 %v9164
    %v9720 = vunpack.c.l.b16 %v9165
    %v9721 = vunpack.c.h.b16 %v9165
    %v9722 = vunpack.c.l.b16 %v9166
    %v9723 = vunpack.c.h.b16 %v9166
    %v9724 = vunpack.c.l.b16 %v9167
    %v9725 = vunpack.c.h.b16 %v9167
    %v9726 = vunpack.c.l.b16 %v9168
    %v9727 = vunpack.c.h.b16 %v9168
    %v9728 = vunpack.c.l.b16 %v9169
    %v9729 = vunpack.c.h.b16 %v9169
    %v9730 = vunpack.c.l.b16 %v9170
    %v9731 = vunpack.c.h.b16 %v9170
    %v9732 = vunpack.c.l.b16 %v9171
    %v9733 = vunpack.c.h.b16 %v9171
    %v9734 = vunpack.c.l.b16 %v9172
    %v9735 = vunpack.c.h.b16 %v9172
    %v9736 = vunpack.c.l.b16 %v9173
    %v9737 = vunpack.c.h.b16 %v9173
    %v9738 = vunpack.c.l.b16 %v9174
    %v9739 = vunpack.c.h.b16 %v9174
    %v9740 = vunpack.c.l.b16 %v9175
    %v9741 = vunpack.c.h.b16 %v9175
    %v9742 = vunpack.c.l.b16 %v9176
    %v9743 = vunpack.c.h.b16 %v9176
    %v9744 = vunpack.c.l.b16 %v9177
    %v9745 = vunpack.c.h.b16 %v9177
    %v9746 = vunpack.c.l.b16 %v9178
    %v9747 = vunpack.c.h.b16 %v9178
    %v9748 = vunpack.c.l.b16 %v9179
    %v9749 = vunpack.c.h.b16 %v9179
    %v9750 = vunpack.c.l.b16 %v9180
    %v9751 = vunpack.c.h.b16 %v9180
    %v9752 = vunpack.c.l.b16 %v9181
    %v9753 = vunpack.c.h.b16 %v9181
    %v9754 = vunpack.c.l.b16 %v9182
    %v9755 = vunpack.c.h.b16 %v9182
    %v9756 = vunpack.c.l.b16 %v9183
    %v9757 = vunpack.c.h.b16 %v9183
    %v9758 = vunpack.c.l.b16 %v9184
    %v9759 = vunpack.c.h.b16 %v9184
    %v9760 = vunpack.c.l.b16 %v9185
    %v9761 = vunpack.c.h.b16 %v9185
    %v9762 = vunpack.c.l.b16 %v9186
    %v9763 = vunpack.c.h.b16 %v9186
    %v9764 = vunpack.c.l.b16 %v9187
    %v9765 = vunpack.c.h.b16 %v9187
    %v9766 = vunpack.c.l.b16 %v9188
    %v9767 = vunpack.c.h.b16 %v9188
    %v9768 = vunpack.c.l.b16 %v9189
    %v9769 = vunpack.c.h.b16 %v9189
    %v9770 = vunpack.c.l.b16 %v9190
    %v9771 = vunpack.c.h.b16 %v9190
    %v9772 = vunpack.c.l.b16 %v9191
    %v9773 = vunpack.c.h.b16 %v9191
    %v9774 = vunpack.c.l.b16 %v9192
    %v9775 = vunpack.c.h.b16 %v9192
    %v9776 = vunpack.c.l.b16 %v9193
    %v9777 = vunpack.c.h.b16 %v9193
    %v9778 = vunpack.c.l.b16 %v9194
    %v9779 = vunpack.c.h.b16 %v9194
    %v9780 = vunpack.c.l.b16 %v9195
    %v9781 = vunpack.c.h.b16 %v9195
    %v9782 = vunpack.c.l.b16 %v9196
    %v9783 = vunpack.c.h.b16 %v9196
    %v9784 = vunpack.c.l.b16 %v9197
    %v9785 = vunpack.c.h.b16 %v9197
    %v9786 = vunpack.c.l.b16 %v9198
    %v9787 = vunpack.c.h.b16 %v9198
    %v9788 = vunpack.c.l.b16 %v9199
    %v9789 = vunpack.c.h.b16 %v9199
    %v9790 = vunpack.c.l.b16 %v9200
    %v9791 = vunpack.c.h.b16 %v9200
    %v9792 = vunpack.c.l.b16 %v9201
    %v9793 = vunpack.c.h.b16 %v9201
    %v9794 = vunpack.c.l.b16 %v9202
    %v9795 = vunpack.c.h.b16 %v9202
    %v9796 = vunpack.c.l.b16 %v9203
    %v9797 = vunpack.c.h.b16 %v9203
    %v9798 = vunpack.c.l.b16 %v9204
    %v9799 = vunpack.c.h.b16 %v9204
    %v9800 = vunpack.c.l.b16 %v9205
    %v9801 = vunpack.c.h.b16 %v9205
    %v9802 = vunpack.c.l.b16 %v9206
    %v9803 = vunpack.c.h.b16 %v9206
    %v9804 = vunpack.c.l.b16 %v9207
    %v9805 = vunpack.c.h.b16 %v9207
    %v9806 = vunpack.c.l.b16 %v9208
    %v9807 = vunpack.c.h.b16 %v9208
    %v9808 = vunpack.c.l.b16 %v9209
    %v9809 = vunpack.c.h.b16 %v9209
    %v9810 = vunpack.c.l.b16 %v9210
    %v9811 = vunpack.c.h.b16 %v9210
    %v9812 = vunpack.c.l.b16 %v9211
    %v9813 = vunpack.c.h.b16 %v9211
    %v9814 = vunpack.c.l.b16 %v9212
    %v9815 = vunpack.c.h.b16 %v9212
    %v9816 = vunpack.c.l.b16 %v9213
    %v9817 = vunpack.c.h.b16 %v9213
    %v9818 = vunpack.c.l.b16 %v9214
    %v9819 = vunpack.c.h.b16 %v9214
    %v9820 = vunpack.c.l.b16 %v9215
    %v9821 = vunpack.c.h.b16 %v9215
    %v9822 = vunpack.c.l.b16 %v9216
    %v9823 = vunpack.c.h.b16 %v9216
    %v9824 = vunpack.c.l.b16 %v9217
    %v9825 = vunpack.c.h.b16 %v9217
    %v9826 = vunpack.c.l.b16 %v9218
    %v9827 = vunpack.c.h.b16 %v9218
    %v9828 = vunpack.c.l.b16 %v9219
    %v9829 = vunpack.c.h.b16 %v9219
    %v9830 = vunpack.c.l.b16 %v9220
    %v9831 = vunpack.c.h.b16 %v9220
    %v9832 = vunpack.c.l.b16 %v9221
    %v9833 = vunpack.c.h.b16 %v9221
    %v9834 = vunpack.c.l.b16 %v9222
    %v9835 = vunpack.c.h.b16 %v9222
    %v9836 = vunpack.c.l.b16 %v9223
    %v9837 = vunpack.c.h.b16 %v9223
    %v9838 = vunpack.c.l.b16 %v9224
    %v9839 = vunpack.c.h.b16 %v9224
    %v9840 = vunpack.c.l.b16 %v9225
    %v9841 = vunpack.c.h.b16 %v9225
    %v9842 = vunpack.c.l.b16 %v9226
    %v9843 = vunpack.c.h.b16 %v9226
    %v9844 = vunpack.c.l.b16 %v9227
    %v9845 = vunpack.c.h.b16 %v9227
    %v9846 = vunpack.c.l.b16 %v9228
    %v9847 = vunpack.c.h.b16 %v9228
    %v9848 = vunpack.c.l.b16 %v9229
    %v9849 = vunpack.c.h.b16 %v9229
    %v9850 = vunpack.c.l.b16 %v9230
    %v9851 = vunpack.c.h.b16 %v9230
    %v9852 = vunpack.c.l.b16 %v9231
    %v9853 = vunpack.c.h.b16 %v9231
    %v9854 = vunpack.c.l.b16 %v9232
    %v9855 = vunpack.c.h.b16 %v9232
    %v9856 = vunpack.c.l.b16 %v9233
    %v9857 = vunpack.c.h.b16 %v9233
    %v9858 = vunpack.c.l.b16 %v9234
    %v9859 = vunpack.c.h.b16 %v9234
    %v9860 = vunpack.c.l.b16 %v9235
    %v9861 = vunpack.c.h.b16 %v9235
    %v9862 = vunpack.c.l.b16 %v9236
    %v9863 = vunpack.c.h.b16 %v9236
    %v9864 = vunpack.c.l.b16 %v9237
    %v9865 = vunpack.c.h.b16 %v9237
    %v9866 = vunpack.c.l.b16 %v9238
    %v9867 = vunpack.c.h.b16 %v9238
    %v9868 = vunpack.c.l.b16 %v9239
    %v9869 = vunpack.c.h.b16 %v9239
    %v9870 = vunpack.c.l.b16 %v9240
    %v9871 = vunpack.c.h.b16 %v9240
    %v9872 = vunpack.c.l.b16 %v9241
    %v9873 = vunpack.c.h.b16 %v9241
    %v9874 = vunpack.c.l.b16 %v9242
    %v9875 = vunpack.c.h.b16 %v9242
    %v9876 = vunpack.c.l.b16 %v9243
    %v9877 = vunpack.c.h.b16 %v9243
    %v9878 = vunpack.c.l.b16 %v9244
    %v9879 = vunpack.c.h.b16 %v9244
    %v9880 = vunpack.c.l.b16 %v9245
    %v9881 = vunpack.c.h.b16 %v9245
    %v9882 = vunpack.c.l.b16 %v9246
    %v9883 = vunpack.c.h.b16 %v9246
    %v9884 = vunpack.c.l.b16 %v9247
    %v9885 = vunpack.c.h.b16 %v9247
    %v9886 = vunpack.c.l.b16 %v9248
    %v9887 = vunpack.c.h.b16 %v9248
    %v9888 = vunpack.c.l.b16 %v9249
    %v9889 = vunpack.c.h.b16 %v9249
    %v9890 = vunpack.c.l.b16 %v9250
    %v9891 = vunpack.c.h.b16 %v9250
    %v9892 = vunpack.c.l.b16 %v9251
    %v9893 = vunpack.c.h.b16 %v9251
    %v9894 = vunpack.c.l.b16 %v9252
    %v9895 = vunpack.c.h.b16 %v9252
    %v9896 = vunpack.c.l.b16 %v9253
    %v9897 = vunpack.c.h.b16 %v9253
    %v9898 = vunpack.c.l.b16 %v9254
    %v9899 = vunpack.c.h.b16 %v9254
    %v9900 = vunpack.c.l.b16 %v9255
    %v9901 = vunpack.c.h.b16 %v9255
    %v9902 = vunpack.c.l.b16 %v9256
    %v9903 = vunpack.c.h.b16 %v9256
    %v9904 = vunpack.c.l.b16 %v9257
    %v9905 = vunpack.c.h.b16 %v9257
    %v9906 = vunpack.c.l.b16 %v9258
    %v9907 = vunpack.c.h.b16 %v9258
    %v9908 = vunpack.c.l.b16 %v9259
    %v9909 = vunpack.c.h.b16 %v9259
    %v9910 = vunpack.c.l.b16 %v9260
    %v9911 = vunpack.c.h.b16 %v9260
    %v9912 = vunpack.c.l.b16 %v9261
    %v9913 = vunpack.c.h.b16 %v9261
    %v9914 = vunpack.c.l.b16 %v9262
    %v9915 = vunpack.c.h.b16 %v9262
    %v9916 = vunpack.c.l.b16 %v9263
    %v9917 = vunpack.c.h.b16 %v9263
    %v9918 = vunpack.c.l.b16 %v9264
    %v9919 = vunpack.c.h.b16 %v9264
    %v9920 = vunpack.c.l.b16 %v9265
    %v9921 = vunpack.c.h.b16 %v9265
    %v9922 = vunpack.c.l.b16 %v9266
    %v9923 = vunpack.c.h.b16 %v9266
    %v9924 = vunpack.c.l.b16 %v9267
    %v9925 = vunpack.c.h.b16 %v9267
    %v9926 = vunpack.c.l.b16 %v9268
    %v9927 = vunpack.c.h.b16 %v9268
    %v9928 = vunpack.c.l.b16 %v9269
    %v9929 = vunpack.c.h.b16 %v9269
    %v9930 = vunpack.c.l.b16 %v9270
    %v9931 = vunpack.c.h.b16 %v9270
    %v9932 = vunpack.c.l.b16 %v9271
    %v9933 = vunpack.c.h.b16 %v9271
    %v9934 = vunpack.c.l.b16 %v9272
    %v9935 = vunpack.c.h.b16 %v9272
    %v9936 = vunpack.c.l.b16 %v9273
    %v9937 = vunpack.c.h.b16 %v9273
    %v9938 = vunpack.c.l.b16 %v9274
    %v9939 = vunpack.c.h.b16 %v9274
    %v9940 = vunpack.c.l.b16 %v9275
    %v9941 = vunpack.c.h.b16 %v9275
    %v9942 = vunpack.c.l.b16 %v9276
    %v9943 = vunpack.c.h.b16 %v9276
    %v9944 = vunpack.c.l.b16 %v9277
    %v9945 = vunpack.c.h.b16 %v9277
    %v9946 = vunpack.c.l.b16 %v9278
    %v9947 = vunpack.c.h.b16 %v9278
    %v9948 = vunpack.c.l.b16 %v9279
    %v9949 = vunpack.c.h.b16 %v9279
    %v9950 = vunpack.c.l.b16 %v9280
    %v9951 = vunpack.c.h.b16 %v9280
    %v9952 = vunpack.c.l.b16 %v9281
    %v9953 = vunpack.c.h.b16 %v9281
    %v9954 = vunpack.c.l.b16 %v9282
    %v9955 = vunpack.c.h.b16 %v9282
    %v9956 = vunpack.c.l.b16 %v9283
    %v9957 = vunpack.c.h.b16 %v9283
    %v9958 = vunpack.c.l.b16 %v9284
    %v9959 = vunpack.c.h.b16 %v9284
    %v9960 = vunpack.c.l.b16 %v9285
    %v9961 = vunpack.c.h.b16 %v9285
    %v9962 = vunpack.c.l.b16 %v9286
    %v9963 = vunpack.c.h.b16 %v9286
    %v9964 = vunpack.c.l.b16 %v9287
    %v9965 = vunpack.c.h.b16 %v9287
    %v9966 = vunpack.c.l.b16 %v9288
    %v9967 = vunpack.c.h.b16 %v9288
    %v9968 = vunpack.c.l.b16 %v9289
    %v9969 = vunpack.c.h.b16 %v9289
    %v9970 = vunpack.c.l.b16 %v9290
    %v9971 = vunpack.c.h.b16 %v9290
    %v9972 = vunpack.c.l.b16 %v9291
    %v9973 = vunpack.c.h.b16 %v9291
    %v9974 = vunpack.c.l.b16 %v9292
    %v9975 = vunpack.c.h.b16 %v9292
    %v9976 = vunpack.c.l.b16 %v9293
    %v9977 = vunpack.c.h.b16 %v9293
    %v9978 = vunpack.c.l.b16 %v9294
    %v9979 = vunpack.c.h.b16 %v9294
    %v9980 = vunpack.c.l.b16 %v9295
    %v9981 = vunpack.c.h.b16 %v9295
    %v9982 = vunpack.c.l.b16 %v9296
    %v9983 = vunpack.c.h.b16 %v9296
    %v9984 = vunpack.c.l.b16 %v9297
    %v9985 = vunpack.c.h.b16 %v9297
    %v9986 = vunpack.c.l.b16 %v9298
    %v9987 = vunpack.c.h.b16 %v9298
    %v9988 = vunpack.c.l.b16 %v9299
    %v9989 = vunpack.c.h.b16 %v9299
    %v9990 = vunpack.c.l.b16 %v9300
    %v9991 = vunpack.c.h.b16 %v9300
    %v9992 = vunpack.c.l.b16 %v9301
    %v9993 = vunpack.c.h.b16 %v9301
    %v9994 = vunpack.c.l.b16 %v9302
    %v9995 = vunpack.c.h.b16 %v9302
    %v9996 = vunpack.c.l.b16 %v9303
    %v9997 = vunpack.c.h.b16 %v9303
    %v9998 = vunpack.c.l.b16 %v9304
    %v9999 = vunpack.c.h.b16 %v9304
    %v10000 = vunpack.c.l.b16 %v9305
    %v10001 = vunpack.c.h.b16 %v9305
    %v10002 = vunpack.c.l.b16 %v9306
    %v10003 = vunpack.c.h.b16 %v9306
    %v10004 = vunpack.c.l.b16 %v9307
    %v10005 = vunpack.c.h.b16 %v9307
    %v10006 = vunpack.c.l.b16 %v9308
    %v10007 = vunpack.c.h.b16 %v9308
    %v10008 = vunpack.c.l.b16 %v9309
    %v10009 = vunpack.c.h.b16 %v9309
    %v10010 = vunpack.c.l.b16 %v9310
    %v10011 = vunpack.c.h.b16 %v9310
    %v10012 = vunpack.c.l.b16 %v9311
    %v10013 = vunpack.c.h.b16 %v9311
    %v10014 = vunpack.c.l.b16 %v9312
    %v10015 = vunpack.c.h.b16 %v9312
    %v10016 = vunpack.c.l.b16 %v9313
    %v10017 = vunpack.c.h.b16 %v9313
    %v10018 = vunpack.c.l.b16 %v9314
    %v10019 = vunpack.c.h.b16 %v9314
    %v10020 = vunpack.c.l.b16 %v9315
    %v10021 = vunpack.c.h.b16 %v9315
    %v10022 = vunpack.c.l.b16 %v9316
    %v10023 = vunpack.c.h.b16 %v9316
    %v10024 = vunpack.c.l.b16 %v9317
    %v10025 = vunpack.c.h.b16 %v9317
    %v10026 = vunpack.c.l.b16 %v9318
    %v10027 = vunpack.c.h.b16 %v9318
    %v10028 = vunpack.c.l.b16 %v9319
    %v10029 = vunpack.c.h.b16 %v9319
    %v10030 = vunpack.c.l.b16 %v9320
    %v10031 = vunpack.c.h.b16 %v9320
    %v10032 = vunpack.c.l.b16 %v9321
    %v10033 = vunpack.c.h.b16 %v9321
    %v10034 = vunpack.c.l.b16 %v9322
    %v10035 = vunpack.c.h.b16 %v9322
    %v10036 = vunpack.c.l.b16 %v9323
    %v10037 = vunpack.c.h.b16 %v9323
    %v10038 = vunpack.c.l.b16 %v9324
    %v10039 = vunpack.c.h.b16 %v9324
    %v10040 = vunpack.c.l.b16 %v9325
    %v10041 = vunpack.c.h.b16 %v9325
    %v10042 = vunpack.c.l.b16 %v9326
    %v10043 = vunpack.c.h.b16 %v9326
    %v10044 = vunpack.c.l.b16 %v9327
    %v10045 = vunpack.c.h.b16 %v9327
    %v10046 = vunpack.c.l.b16 %v9328
    %v10047 = vunpack.c.h.b16 %v9328
    %v10048 = vunpack.c.l.b16 %v9329
    %v10049 = vunpack.c.h.b16 %v9329
    %v10050 = vunpack.c.l.b16 %v9330
    %v10051 = vunpack.c.h.b16 %v9330
    %v10052 = vunpack.c.l.b16 %v9331
    %v10053 = vunpack.c.h.b16 %v9331
    %v10054 = vunpack.c.l.b16 %v9332
    %v10055 = vunpack.c.h.b16 %v9332
    %v10056 = vunpack.c.l.b16 %v9333
    %v10057 = vunpack.c.h.b16 %v9333
    %v10058 = vunpack.c.l.b16 %v9334
    %v10059 = vunpack.c.h.b16 %v9334
    %v10060 = vunpack.c.l.b16 %v9335
    %v10061 = vunpack.c.h.b16 %v9335
    %v10062 = vunpack.c.l.b16 %v9336
    %v10063 = vunpack.c.h.b16 %v9336
    %v10064 = vunpack.c.l.b16 %v9337
    %v10065 = vunpack.c.h.b16 %v9337
    %v10066 = vunpack.c.l.b16 %v9338
    %v10067 = vunpack.c.h.b16 %v9338
    %v10068 = vunpack.c.l.b16 %v9339
    %v10069 = vunpack.c.h.b16 %v9339
    %v10070 = vunpack.c.l.b16 %v9340
    %v10071 = vunpack.c.h.b16 %v9340
    %v10072 = vunpack.c.l.b16 %v9341
    %v10073 = vunpack.c.h.b16 %v9341
    %v10074 = vunpack.c.l.b16 %v9342
    %v10075 = vunpack.c.h.b16 %v9342
    %v10076 = vunpack.c.l.b16 %v9343
    %v10077 = vunpack.c.h.b16 %v9343
    %v10078 = vunpack.c.l.b16 %v9344
    %v10079 = vunpack.c.h.b16 %v9344
    %v10080 = vunpack.c.l.b16 %v9345
    %v10081 = vunpack.c.h.b16 %v9345
    %v10082 = vunpack.c.l.b16 %v9346
    %v10083 = vunpack.c.h.b16 %v9346
    %v10084 = vunpack.c.l.b16 %v9347
    %v10085 = vunpack.c.h.b16 %v9347
    %v10086 = vunpack.c.l.b16 %v9348
    %v10087 = vunpack.c.h.b16 %v9348
    %v10088 = vunpack.c.l.b16 %v9349
    %v10089 = vunpack.c.h.b16 %v9349
    %v10090 = vunpack.c.l.b16 %v9350
    %v10091 = vunpack.c.h.b16 %v9350
    %v10092 = vunpack.c.l.b16 %v9351
    %v10093 = vunpack.c.h.b16 %v9351
    %v10094 = vunpack.c.l.b16 %v9352
    %v10095 = vunpack.c.h.b16 %v9352
    %v10096 = vunpack.c.l.b16 %v9353
    %v10097 = vunpack.c.h.b16 %v9353
    %v10098 = vunpack.c.l.b16 %v9354
    %v10099 = vunpack.c.h.b16 %v9354
    %v10100 = vunpack.c.l.b16 %v9355
    %v10101 = vunpack.c.h.b16 %v9355
    %v10102 = vunpack.c.l.b16 %v9356
    %v10103 = vunpack.c.h.b16 %v9356
    %v10104 = vunpack.c.l.b16 %v9357
    %v10105 = vunpack.c.h.b16 %v9357
    %v10106 = vunpack.c.l.b16 %v9358
    %v10107 = vunpack.c.h.b16 %v9358
    %v10108 = vunpack.c.l.b16 %v9359
    %v10109 = vunpack.c.h.b16 %v9359
    %v10110 = vunpack.c.l.b16 %v9360
    %v10111 = vunpack.c.h.b16 %v9360
    %v10112 = vunpack.c.l.b16 %v9361
    %v10113 = vunpack.c.h.b16 %v9361
    %v10114 = vunpack.c.l.b16 %v9362
    %v10115 = vunpack.c.h.b16 %v9362
    %v10116 = vunpack.c.l.b16 %v9363
    %v10117 = vunpack.c.h.b16 %v9363
    %v10118 = vunpack.c.l.b16 %v9364
    %v10119 = vunpack.c.h.b16 %v9364
    %v10120 = vunpack.c.l.b16 %v9365
    %v10121 = vunpack.c.h.b16 %v9365
    %v10122 = vunpack.c.l.b16 %v9366
    %v10123 = vunpack.c.h.b16 %v9366
    %v10124 = vunpack.c.l.b16 %v9367
    %v10125 = vunpack.c.h.b16 %v9367
    %v10126 = vunpack.c.l.b16 %v9368
    %v10127 = vunpack.c.h.b16 %v9368
    %v10128 = vunpack.c.l.b16 %v9369
    %v10129 = vunpack.c.h.b16 %v9369
    %v10130 = vunpack.c.l.b16 %v9370
    %v10131 = vunpack.c.h.b16 %v9370
    %v10132 = vunpack.c.l.b16 %v9371
    %v10133 = vunpack.c.h.b16 %v9371
    %v10134 = vunpack.c.l.b16 %v9372
    %v10135 = vunpack.c.h.b16 %v9372
    %v10136 = vunpack.c.l.b16 %v9373
    %v10137 = vunpack.c.h.b16 %v9373
    %v10138 = vunpack.c.l.b16 %v9374
    %v10139 = vunpack.c.h.b16 %v9374
    %v10140 = vunpack.c.l.b16 %v9375
    %v10141 = vunpack.c.h.b16 %v9375
    %v10142 = vunpack.c.l.b16 %v9376
    %v10143 = vunpack.c.h.b16 %v9376
    %v10144 = vunpack.c.l.b16 %v9377
    %v10145 = vunpack.c.h.b16 %v9377
    %v10146 = vunpack.c.l.b16 %v9378
    %v10147 = vunpack.c.h.b16 %v9378
    %v10148 = vunpack.c.l.b16 %v9379
    %v10149 = vunpack.c.h.b16 %v9379
    %v10150 = vunpack.c.l.b16 %v9380
    %v10151 = vunpack.c.h.b16 %v9380
    %v10152 = vunpack.c.l.b16 %v9381
    %v10153 = vunpack.c.h.b16 %v9381
    %v10154 = vunpack.c.l.b16 %v9382
    %v10155 = vunpack.c.h.b16 %v9382
    %v10156 = vunpack.c.l.b16 %v9383
    %v10157 = vunpack.c.h.b16 %v9383
    %v10158 = vunpack.c.l.b16 %v9384
    %v10159 = vunpack.c.h.b16 %v9384
    %v10160 = vunpack.c.l.b16 %v9385
    %v10161 = vunpack.c.h.b16 %v9385
    %v10162 = vunpack.c.l.b16 %v9386
    %v10163 = vunpack.c.h.b16 %v9386
    %v10164 = vunpack.c.l.b16 %v9387
    %v10165 = vunpack.c.h.b16 %v9387
    %v10166 = vunpack.c.l.b16 %v9388
    %v10167 = vunpack.c.h.b16 %v9388
    %v10168 = vunpack.c.l.b16 %v9389
    %v10169 = vunpack.c.h.b16 %v9389
    %v10170 = vunpack.c.l.b16 %v9390
    %v10171 = vunpack.c.h.b16 %v9390
    %v10172 = vunpack.c.l.b16 %v9391
    %v10173 = vunpack.c.h.b16 %v9391
    %v10174 = vunpack.c.l.b16 %v9392
    %v10175 = vunpack.c.h.b16 %v9392
    %v10176 = vunpack.c.l.b16 %v9393
    %v10177 = vunpack.c.h.b16 %v9393
    %v10178 = vunpack.c.l.b16 %v9394
    %v10179 = vunpack.c.h.b16 %v9394
    %v10180 = vunpack.c.l.b16 %v9395
    %v10181 = vunpack.c.h.b16 %v9395
    %v10182 = vpack.c.b16 %v9678, %v9670
    %v10183 = vpack.c.b16 %v9679, %v9671
    %v10184 = vpack.c.b16 %v9680, %v9672
    %v10185 = vpack.c.b16 %v9681, %v9673
    %v10186 = vpack.c.b16 %v9682, %v9674
    %v10187 = vpack.c.b16 %v9683, %v9675
    %v10188 = vpack.c.b16 %v9684, %v9676
    %v10189 = vpack.c.b16 %v9685, %v9677
    %v10190 = vpack.c.b16 %v9694, %v9686
    %v10191 = vpack.c.b16 %v9695, %v9687
    %v10192 = vpack.c.b16 %v9696, %v9688
    %v10193 = vpack.c.b16 %v9697, %v9689
    %v10194 = vpack.c.b16 %v9698, %v9690
    %v10195 = vpack.c.b16 %v9699, %v9691
    %v10196 = vpack.c.b16 %v9700, %v9692
    %v10197 = vpack.c.b16 %v9701, %v9693
    %v10198 = vpack.c.b16 %v9710, %v9702
    %v10199 = vpack.c.b16 %v9711, %v9703
    %v10200 = vpack.c.b16 %v9712, %v9704
    %v10201 = vpack.c.b16 %v9713, %v9705
    %v10202 = vpack.c.b16 %v9714, %v9706
    %v10203 = vpack.c.b16 %v9715, %v9707
    %v10204 = vpack.c.b16 %v9716, %v9708
    %v10205 = vpack.c.b16 %v9717, %v9709
    %v10206 = vpack.c.b16 %v9726, %v9718
    %v10207 = vpack.c.b16 %v9727, %v9719
    %v10208 = vpack.c.b16 %v9728, %v9720
    %v10209 = vpack.c.b16 %v9729, %v9721
    %v10210 = vpack.c.b16 %v9730, %v9722
    %v10211 = vpack.c.b16 %v9731, %v9723
    %v10212 = vpack.c.b16 %v9732, %v9724
    %v10213 = vpack.c.b16 %v9733, %v9725
    %v10214 = vpack.c.b16 %v9742, %v9734
    %v10215 = vpack.c.b16 %v9743, %v9735
    %v10216 = vpack.c.b16 %v9744, %v9736
    %v10217 = vpack.c.b16 %v9745, %v9737
    %v10218 = vpack.c.b16 %v9746, %v9738
    %v10219 = vpack.c.b16 %v9747, %v9739
    %v10220 = vpack.c.b16 %v9748, %v9740
    %v10221 = vpack.c.b16 %v9749, %v9741
    %v10222 = vpack.c.b16 %v9758, %v9750
    %v10223 = vpack.c.b16 %v9759, %v9751
    %v10224 = vpack.c.b16 %v9760, %v9752
    %v10225 = vpack.c.b16 %v9761, %v9753
    %v10226 = vpack.c.b16 %v9762, %v9754
    %v10227 = vpack.c.b16 %v9763, %v9755
    %v10228 = vpack.c.b16 %v9764, %v9756
    %v10229 = vpack.c.b16 %v9765, %v9757
    %v10230 = vpack.c.b16 %v9774, %v9766
    %v10231 = vpack.c.b16 %v9775, %v9767
    %v10232 = vpack.c.b16 %v9776, %v9768
    %v10233 = vpack.c.b16 %v9777, %v9769
    %v10234 = vpack.c.b16 %v9778, %v9770
    %v10235 = vpack.c.b16 %v9779, %v9771
    %v10236 = vpack.c.b16 %v9780, %v9772
    %v10237 = vpack.c.b16 %v9781, %v9773
    %v10238 = vpack.c.b16 %v9790, %v9782
    %v10239 = vpack.c.b16 %v9791, %v9783
    %v10240 = vpack.c.b16 %v9792, %v9784
    %v10241 = vpack.c.b16 %v9793, %v9785
    %v10242 = vpack.c.b16 %v9794, %v9786
    %v10243 = vpack.c.b16 %v9795, %v9787
    %v10244 = vpack.c.b16 %v9796, %v9788
    %v10245 = vpack.c.b16 %v9797, %v9789
    %v10246 = vpack.c.b16 %v9806, %v9798
    %v10247 = vpack.c.b16 %v9807, %v9799
    %v10248 = vpack.c.b16 %v9808, %v9800
    %v10249 = vpack.c.b16 %v9809, %v9801
    %v10250 = vpack.c.b16 %v9810, %v9802
    %v10251 = vpack.c.b16 %v9811, %v9803
    %v10252 = vpack.c.b16 %v9812, %v9804
    %v10253 = vpack.c.b16 %v9813, %v9805
    %v10254 = vpack.c.b16 %v9822, %v9814
    %v10255 = vpack.c.b16 %v9823, %v9815
    %v10256 = vpack.c.b16 %v9824, %v9816
    %v10257 = vpack.c.b16 %v9825, %v9817
    %v10258 = vpack.c.b16 %v9826, %v9818
    %v10259 = vpack.c.b16 %v9827, %v9819
    %v10260 = vpack.c.b16 %v9828, %v9820
    %v10261 = vpack.c.b16 %v9829, %v9821
    %v10262 = vpack.c.b16 %v9838, %v9830
    %v10263 = vpack.c.b16 %v9839, %v9831
    %v10264 = vpack.c.b16 %v9840, %v9832
    %v10265 = vpack.c.b16 %v9841, %v9833
    %v10266 = vpack.c.b16 %v9842, %v9834
    %v10267 = vpack.c.b16 %v9843, %v9835
    %v10268 = vpack.c.b16 %v9844, %v9836
    %v10269 = vpack.c.b16 %v9845, %v9837
    %v10270 = vpack.c.b16 %v9854, %v9846
    %v10271 = vpack.c.b16 %v9855, %v9847
    %v10272 = vpack.c.b16 %v9856, %v9848
    %v10273 = vpack.c.b16 %v9857, %v9849
    %v10274 = vpack.c.b16 %v9858, %v9850
    %v10275 = vpack.c.b16 %v9859, %v9851
    %v10276 = vpack.c.b16 %v9860, %v9852
    %v10277 = vpack.c.b16 %v9861, %v9853
    %v10278 = vpack.c.b16 %v9870, %v9862
    %v10279 = vpack.c.b16 %v9871, %v9863
    %v10280 = vpack.c.b16 %v9872, %v9864
    %v10281 = vpack.c.b16 %v9873, %v9865
    %v10282 = vpack.c.b16 %v9874, %v9866
    %v10283 = vpack.c.b16 %v9875, %v9867
    %v10284 = vpack.c.b16 %v9876, %v9868
    %v10285 = vpack.c.b16 %v9877, %v9869
    %v10286 = vpack.c.b16 %v9886, %v9878
    %v10287 = vpack.c.b16 %v9887, %v9879
    %v10288 = vpack.c.b16 %v9888, %v9880
    %v10289 = vpack.c.b16 %v9889, %v9881
    %v10290 = vpack.c.b16 %v9890, %v9882
    %v10291 = vpack.c.b16 %v9891, %v9883
    %v10292 = vpack.c.b16 %v9892, %v9884
    %v10293 = vpack.c.b16 %v9893, %v9885
    %v10294 = vpack.c.b16 %v9902, %v9894
    %v10295 = vpack.c.b16 %v9903, %v9895
    %v10296 = vpack.c.b16 %v9904, %v9896
    %v10297 = vpack.c.b16 %v9905, %v9897
    %v10298 = vpack.c.b16 %v9906, %v9898
    %v10299 = vpack.c.b16 %v9907, %v9899
    %v10300 = vpack.c.b16 %v9908, %v9900
    %v10301 = vpack.c.b16 %v9909, %v9901
    %v10302 = vpack.c.b16 %v9918, %v9910
    %v10303 = vpack.c.b16 %v9919, %v9911
    %v10304 = vpack.c.b16 %v9920, %v9912
    %v10305 = vpack.c.b16 %v9921, %v9913
    %v10306 = vpack.c.b16 %v9922, %v9914
    %v10307 = vpack.c.b16 %v9923, %v9915
    %v10308 = vpack.c.b16 %v9924, %v9916
    %v10309 = vpack.c.b16 %v9925, %v9917
    %v10310 = vpack.c.b16 %v9934, %v9926
    %v10311 = vpack.c.b16 %v9935, %v9927
    %v10312 = vpack.c.b16 %v9936, %v9928
    %v10313 = vpack.c.b16 %v9937, %v9929
    %v10314 = vpack.c.b16 %v9938, %v9930
    %v10315 = vpack.c.b16 %v9939, %v9931
    %v10316 = vpack.c.b16 %v9940, %v9932
    %v10317 = vpack.c.b16 %v9941, %v9933
    %v10318 = vpack.c.b16 %v9950, %v9942
    %v10319 = vpack.c.b16 %v9951, %v9943
    %v10320 = vpack.c.b16 %v9952, %v9944
    %v10321 = vpack.c.b16 %v9953, %v9945
    %v10322 = vpack.c.b16 %v9954, %v9946
    %v10323 = vpack.c.b16 %v9955, %v9947
    %v10324 = vpack.c.b16 %v9956, %v9948
    %v10325 = vpack.c.b16 %v9957, %v9949
    %v10326 = vpack.c.b16 %v9966, %v9958
    %v10327 = vpack.c.b16 %v9967, %v9959
    %v10328 = vpack.c.b16 %v9968, %v9960
    %v10329 = vpack.c.b16 %v9969, %v9961
    %v10330 = vpack.c.b16 %v9970, %v9962
    %v10331 = vpack.c.b16 %v9971, %v9963
    %v10332 = vpack.c.b16 %v9972, %v9964
    %v10333 = vpack.c.b16 %v9973, %v9965
    %v10334 = vpack.c.b16 %v9982, %v9974
    %v10335 = vpack.c.b16 %v9983, %v9975
    %v10336 = vpack.c.b16 %v9984, %v9976
    %v10337 = vpack.c.b16 %v9985, %v9977
    %v10338 = vpack.c.b16 %v9986, %v9978
    %v10339 = vpack.c.b16 %v9987, %v9979
    %v10340 = vpack.c.b16 %v9988, %v9980
    %v10341 = vpack.c.b16 %v9989, %v9981
    %v10342 = vpack.c.b16 %v9998, %v9990
    %v10343 = vpack.c.b16 %v9999, %v9991
    %v10344 = vpack.c.b16 %v10000, %v9992
    %v10345 = vpack.c.b16 %v10001, %v9993
    %v10346 = vpack.c.b16 %v10002, %v9994
    %v10347 = vpack.c.b16 %v10003, %v9995
    %v10348 = vpack.c.b16 %v10004, %v9996
    %v10349 = vpack.c.b16 %v10005, %v9997
    %v10350 = vpack.c.b16 %v10014, %v10006
    %v10351 = vpack.c.b16 %v10015, %v10007
    %v10352 = vpack.c.b16 %v10016, %v10008
    %v10353 = vpack.c.b16 %v10017, %v10009
    %v10354 = vpack.c.b16 %v10018, %v10010
    %v10355 = vpack.c.b16 %v10019, %v10011
    %v10356 = vpack.c.b16 %v10020, %v10012
    %v10357 = vpack.c.b16 %v10021, %v10013
    %v10358 = vpack.c.b16 %v10030, %v10022
    %v10359 = vpack.c.b16 %v10031, %v10023
    %v10360 = vpack.c.b16 %v10032, %v10024
    %v10361 = vpack.c.b16 %v10033, %v10025
    %v10362 = vpack.c.b16 %v10034, %v10026
    %v10363 = vpack.c.b16 %v10035, %v10027
    %v10364 = vpack.c.b16 %v10036, %v10028
    %v10365 = vpack.c.b16 %v10037, %v10029
    %v10366 = vpack.c.b16 %v10046, %v10038
    %v10367 = vpack.c.b16 %v10047, %v10039
    %v10368 = vpack.c.b16 %v10048, %v10040
    %v10369 = vpack.c.b16 %v10049, %v10041
    %v10370 = vpack.c.b16 %v10050, %v10042
    %v10371 = vpack.c.b16 %v10051, %v10043
    %v10372 = vpack.c.b16 %v10052, %v10044
    %v10373 = vpack.c.b16 %v10053, %v10045
    %v10374 = vpack.c.b16 %v10062, %v10054
    %v10375 = vpack.c.b16 %v10063, %v10055
    %v10376 = vpack.c.b16 %v10064, %v10056
    %v10377 = vpack.c.b16 %v10065, %v10057
    %v10378 = vpack.c.b16 %v10066, %v10058
    %v10379 = vpack.c.b16 %v10067, %v10059
    %v10380 = vpack.c.b16 %v10068, %v10060
    %v10381 = vpack.c.b16 %v10069, %v10061
    %v10382 = vpack.c.b16 %v10078, %v10070
    %v10383 = vpack.c.b16 %v10079, %v10071
    %v10384 = vpack.c.b16 %v10080, %v10072
    %v10385 = vpack.c.b16 %v10081, %v10073
    %v10386 = vpack.c.b16 %v10082, %v10074
    %v10387 = vpack.c.b16 %v10083, %v10075
    %v10388 = vpack.c.b16 %v10084, %v10076
    %v10389 = vpack.c.b16 %v10085, %v10077
    %v10390 = vpack.c.b16 %v10094, %v10086
    %v10391 = vpack.c.b16 %v10095, %v10087
    %v10392 = vpack.c.b16 %v10096, %v10088
    %v10393 = vpack.c.b16 %v10097, %v10089
    %v10394 = vpack.c.b16 %v10098, %v10090
    %v10395 = vpack.c.b16 %v10099, %v10091
    %v10396 = vpack.c.b16 %v10100, %v10092
    %v10397 = vpack.c.b16 %v10101, %v10093
    %v10398 = vpack.c.b16 %v10110, %v10102
    %v10399 = vpack.c.b16 %v10111, %v10103
    %v10400 = vpack.c.b16 %v10112, %v10104
    %v10401 = vpack.c.b16 %v10113, %v10105
    %v10402 = vpack.c.b16 %v10114, %v10106
    %v10403 = vpack.c.b16 %v10115, %v10107
    %v10404 = vpack.c.b16 %v10116, %v10108
    %v10405 = vpack.c.b16 %v10117, %v10109
    %v10406 = vpack.c.b16 %v10126, %v10118
    %v10407 = vpack.c.b16 %v10127, %v10119
    %v10408 = vpack.c.b16 %v10128, %v10120
    %v10409 = vpack.c.b16 %v10129, %v10121
    %v10410 = vpack.c.b16 %v10130, %v10122
    %v10411 = vpack.c.b16 %v10131, %v10123
    %v10412 = vpack.c.b16 %v10132, %v10124
    %v10413 = vpack.c.b16 %v10133, %v10125
    %v10414 = vpack.c.b16 %v10142, %v10134
    %v10415 = vpack.c.b16 %v10143, %v10135
    %v10416 = vpack.c.b16 %v10144, %v10136
    %v10417 = vpack.c.b16 %v10145, %v10137
    %v10418 = vpack.c.b16 %v10146, %v10138
    %v10419 = vpack.c.b16 %v10147, %v10139
    %v10420 = vpack.c.b16 %v10148, %v10140
    %v10421 = vpack.c.b16 %v10149, %v10141
    %v10422 = vpack.c.b16 %v10158, %v10150
    %v10423 = vpack.c.b16 %v10159, %v10151
    %v10424 = vpack.c.b16 %v10160, %v10152
    %v10425 = vpack.c.b16 %v10161, %v10153
    %v10426 = vpack.c.b16 %v10162, %v10154
    %v10427 = vpack.c.b16 %v10163, %v10155
    %v10428 = vpack.c.b16 %v10164, %v10156
    %v10429 = vpack.c.b16 %v10165, %v10157
    %v10430 = vpack.c.b16 %v10174, %v10166
    %v10431 = vpack.c.b16 %v10175, %v10167
    %v10432 = vpack.c.b16 %v10176, %v10168
    %v10433 = vpack.c.b16 %v10177, %v10169
    %v10434 = vpack.c.b16 %v10178, %v10170
    %v10435 = vpack.c.b16 %v10179, %v10171
    %v10436 = vpack.c.b16 %v10180, %v10172
    %v10437 = vpack.c.b16 %v10181, %v10173
    %10694 = vmatpush.bf16.msra.mxu0 %v10238
    %10695 = vmatpush.bf16.msra.mxu0 %v10230
    %10696 = vmatpush.bf16.msra.mxu0 %v10222
    %10697 = vmatpush.bf16.msra.mxu0 %v10214
    %10698 = vmatpush.bf16.msra.mxu0 %v10206
    %10699 = vmatpush.bf16.msra.mxu0 %v10198
    %10700 = vmatpush.bf16.msra.mxu0 %v10190
    %10701 = vmatpush.bf16.msra.mxu0 %v10182
    %10702 = vmatmul.bf16.gmra.mxu0 %v9136
    %v10703 = vpop.f32.mrf.mxu0
    %v10704 = vadd.f32 %v9398, %v10703
    %v10705 = vpop.f32.mrf.mxu0
    %10706 = vdwg.mxu0
    %10707 = vmatpush.bf16.msra.mxu0 %v10302
    %10708 = vmatpush.bf16.msra.mxu0 %v10294
    %10709 = vmatpush.bf16.msra.mxu0 %v10286
    %10710 = vmatpush.bf16.msra.mxu0 %v10278
    %10711 = vmatpush.bf16.msra.mxu0 %v10270
    %10712 = vmatpush.bf16.msra.mxu0 %v10262
    %10713 = vmatpush.bf16.msra.mxu0 %v10254
    %10714 = vmatpush.bf16.msra.mxu0 %v10246
    %10715 = vmatmul.bf16.gmra.mxu0 %v9137
    %v10716 = vpop.f32.mrf.mxu0
    %v10717 = vadd.f32 %v10704, %v10716
    %v10718 = vpop.f32.mrf.mxu0
    %10719 = vdwg.mxu0
    %10720 = vmatpush.bf16.msra.mxu0 %v10366
    %10721 = vmatpush.bf16.msra.mxu0 %v10358
    %10722 = vmatpush.bf16.msra.mxu0 %v10350
    %10723 = vmatpush.bf16.msra.mxu0 %v10342
    %10724 = vmatpush.bf16.msra.mxu0 %v10334
    %10725 = vmatpush.bf16.msra.mxu0 %v10326
    %10726 = vmatpush.bf16.msra.mxu0 %v10318
    %10727 = vmatpush.bf16.msra.mxu0 %v10310
    %10728 = vmatmul.bf16.gmra.mxu0 %v9138
    %v10729 = vpop.f32.mrf.mxu0
    %v10730 = vadd.f32 %v10717, %v10729
    %v10731 = vpop.f32.mrf.mxu0
    %10732 = vdwg.mxu0
    %10733 = vmatpush.bf16.msra.mxu0 %v10430
    %10734 = vmatpush.bf16.msra.mxu0 %v10422
    %10735 = vmatpush.bf16.msra.mxu0 %v10414
    %10736 = vmatpush.bf16.msra.mxu0 %v10406
    %10737 = vmatpush.bf16.msra.mxu0 %v10398
    %10738 = vmatpush.bf16.msra.mxu0 %v10390
    %10739 = vmatpush.bf16.msra.mxu0 %v10382
    %10740 = vmatpush.bf16.msra.mxu0 %v10374
    %10741 = vmatmul.bf16.gmra.mxu0 %v9139
    %v10742 = vpop.f32.mrf.mxu0
    %v10743 = vadd.f32 %v10730, %v10742
    %v10744 = vpop.f32.mrf.mxu0
    %10745 = vdwg.mxu0
    %10746 = vmatpush.bf16.msra.mxu0 %v10239
    %10747 = vmatpush.bf16.msra.mxu0 %v10231
    %10748 = vmatpush.bf16.msra.mxu0 %v10223
    %10749 = vmatpush.bf16.msra.mxu0 %v10215
    %10750 = vmatpush.bf16.msra.mxu0 %v10207
    %10751 = vmatpush.bf16.msra.mxu0 %v10199
    %10752 = vmatpush.bf16.msra.mxu0 %v10191
    %10753 = vmatpush.bf16.msra.mxu0 %v10183
    %10754 = vmatmul.bf16.gmra.mxu0 %v9136
    %v10755 = vpop.f32.mrf.mxu0
    %v10756 = vadd.f32 %v9399, %v10755
    %v10757 = vpop.f32.mrf.mxu0
    %10758 = vdwg.mxu0
    %10759 = vmatpush.bf16.msra.mxu0 %v10303
    %10760 = vmatpush.bf16.msra.mxu0 %v10295
    %10761 = vmatpush.bf16.msra.mxu0 %v10287
    %10762 = vmatpush.bf16.msra.mxu0 %v10279
    %10763 = vmatpush.bf16.msra.mxu0 %v10271
    %10764 = vmatpush.bf16.msra.mxu0 %v10263
    %10765 = vmatpush.bf16.msra.mxu0 %v10255
    %10766 = vmatpush.bf16.msra.mxu0 %v10247
    %10767 = vmatmul.bf16.gmra.mxu0 %v9137
    %v10768 = vpop.f32.mrf.mxu0
    %v10769 = vadd.f32 %v10756, %v10768
    %v10770 = vpop.f32.mrf.mxu0
    %10771 = vdwg.mxu0
    %10772 = vmatpush.bf16.msra.mxu0 %v10367
    %10773 = vmatpush.bf16.msra.mxu0 %v10359
    %10774 = vmatpush.bf16.msra.mxu0 %v10351
    %10775 = vmatpush.bf16.msra.mxu0 %v10343
    %10776 = vmatpush.bf16.msra.mxu0 %v10335
    %10777 = vmatpush.bf16.msra.mxu0 %v10327
    %10778 = vmatpush.bf16.msra.mxu0 %v10319
    %10779 = vmatpush.bf16.msra.mxu0 %v10311
    %10780 = vmatmul.bf16.gmra.mxu0 %v9138
    %v10781 = vpop.f32.mrf.mxu0
    %v10782 = vadd.f32 %v10769, %v10781
    %v10783 = vpop.f32.mrf.mxu0
    %10784 = vdwg.mxu0
    %10785 = vmatpush.bf16.msra.mxu0 %v10431
    %10786 = vmatpush.bf16.msra.mxu0 %v10423
    %10787 = vmatpush.bf16.msra.mxu0 %v10415
    %10788 = vmatpush.bf16.msra.mxu0 %v10407
    %10789 = vmatpush.bf16.msra.mxu0 %v10399
    %10790 = vmatpush.bf16.msra.mxu0 %v10391
    %10791 = vmatpush.bf16.msra.mxu0 %v10383
    %10792 = vmatpush.bf16.msra.mxu0 %v10375
    %10793 = vmatmul.bf16.gmra.mxu0 %v9139
    %v10794 = vpop.f32.mrf.mxu0
    %v10795 = vadd.f32 %v10782, %v10794
    %v10796 = vpop.f32.mrf.mxu0
    %10797 = vdwg.mxu0
    %10798 = vmatpush.bf16.msra.mxu0 %v10240
    %10799 = vmatpush.bf16.msra.mxu0 %v10232
    %10800 = vmatpush.bf16.msra.mxu0 %v10224
    %10801 = vmatpush.bf16.msra.mxu0 %v10216
    %10802 = vmatpush.bf16.msra.mxu0 %v10208
    %10803 = vmatpush.bf16.msra.mxu0 %v10200
    %10804 = vmatpush.bf16.msra.mxu0 %v10192
    %10805 = vmatpush.bf16.msra.mxu0 %v10184
    %10806 = vmatmul.bf16.gmra.mxu0 %v9136
    %v10807 = vpop.f32.mrf.mxu0
    %v10808 = vadd.f32 %v9400, %v10807
    %v10809 = vpop.f32.mrf.mxu0
    %10810 = vdwg.mxu0
    %10811 = vmatpush.bf16.msra.mxu0 %v10304
    %10812 = vmatpush.bf16.msra.mxu0 %v10296
    %10813 = vmatpush.bf16.msra.mxu0 %v10288
    %10814 = vmatpush.bf16.msra.mxu0 %v10280
    %10815 = vmatpush.bf16.msra.mxu0 %v10272
    %10816 = vmatpush.bf16.msra.mxu0 %v10264
    %10817 = vmatpush.bf16.msra.mxu0 %v10256
    %10818 = vmatpush.bf16.msra.mxu0 %v10248
    %10819 = vmatmul.bf16.gmra.mxu0 %v9137
    %v10820 = vpop.f32.mrf.mxu0
    %v10821 = vadd.f32 %v10808, %v10820
    %v10822 = vpop.f32.mrf.mxu0
    %10823 = vdwg.mxu0
    %10824 = vmatpush.bf16.msra.mxu0 %v10368
    %10825 = vmatpush.bf16.msra.mxu0 %v10360
    %10826 = vmatpush.bf16.msra.mxu0 %v10352
    %10827 = vmatpush.bf16.msra.mxu0 %v10344
    %10828 = vmatpush.bf16.msra.mxu0 %v10336
    %10829 = vmatpush.bf16.msra.mxu0 %v10328
    %10830 = vmatpush.bf16.msra.mxu0 %v10320
    %10831 = vmatpush.bf16.msra.mxu0 %v10312
    %10832 = vmatmul.bf16.gmra.mxu0 %v9138
    %v10833 = vpop.f32.mrf.mxu0
    %v10834 = vadd.f32 %v10821, %v10833
    %v10835 = vpop.f32.mrf.mxu0
    %10836 = vdwg.mxu0
    %10837 = vmatpush.bf16.msra.mxu0 %v10432
    %10838 = vmatpush.bf16.msra.mxu0 %v10424
    %10839 = vmatpush.bf16.msra.mxu0 %v10416
    %10840 = vmatpush.bf16.msra.mxu0 %v10408
    %10841 = vmatpush.bf16.msra.mxu0 %v10400
    %10842 = vmatpush.bf16.msra.mxu0 %v10392
    %10843 = vmatpush.bf16.msra.mxu0 %v10384
    %10844 = vmatpush.bf16.msra.mxu0 %v10376
    %10845 = vmatmul.bf16.gmra.mxu0 %v9139
    %v10846 = vpop.f32.mrf.mxu0
    %v10847 = vadd.f32 %v10834, %v10846
    %v10848 = vpop.f32.mrf.mxu0
    %10849 = vdwg.mxu0
    %10850 = vmatpush.bf16.msra.mxu0 %v10241
    %10851 = vmatpush.bf16.msra.mxu0 %v10233
    %10852 = vmatpush.bf16.msra.mxu0 %v10225
    %10853 = vmatpush.bf16.msra.mxu0 %v10217
    %10854 = vmatpush.bf16.msra.mxu0 %v10209
    %10855 = vmatpush.bf16.msra.mxu0 %v10201
    %10856 = vmatpush.bf16.msra.mxu0 %v10193
    %10857 = vmatpush.bf16.msra.mxu0 %v10185
    %10858 = vmatmul.bf16.gmra.mxu0 %v9136
    %v10859 = vpop.f32.mrf.mxu0
    %v10860 = vadd.f32 %v9401, %v10859
    %v10861 = vpop.f32.mrf.mxu0
    %10862 = vdwg.mxu0
    %10863 = vmatpush.bf16.msra.mxu0 %v10305
    %10864 = vmatpush.bf16.msra.mxu0 %v10297
    %10865 = vmatpush.bf16.msra.mxu0 %v10289
    %10866 = vmatpush.bf16.msra.mxu0 %v10281
    %10867 = vmatpush.bf16.msra.mxu0 %v10273
    %10868 = vmatpush.bf16.msra.mxu0 %v10265
    %10869 = vmatpush.bf16.msra.mxu0 %v10257
    %10870 = vmatpush.bf16.msra.mxu0 %v10249
    %10871 = vmatmul.bf16.gmra.mxu0 %v9137
    %v10872 = vpop.f32.mrf.mxu0
    %v10873 = vadd.f32 %v10860, %v10872
    %v10874 = vpop.f32.mrf.mxu0
    %10875 = vdwg.mxu0
    %10876 = vmatpush.bf16.msra.mxu0 %v10369
    %10877 = vmatpush.bf16.msra.mxu0 %v10361
    %10878 = vmatpush.bf16.msra.mxu0 %v10353
    %10879 = vmatpush.bf16.msra.mxu0 %v10345
    %10880 = vmatpush.bf16.msra.mxu0 %v10337
    %10881 = vmatpush.bf16.msra.mxu0 %v10329
    %10882 = vmatpush.bf16.msra.mxu0 %v10321
    %10883 = vmatpush.bf16.msra.mxu0 %v10313
    %10884 = vmatmul.bf16.gmra.mxu0 %v9138
    %v10885 = vpop.f32.mrf.mxu0
    %v10886 = vadd.f32 %v10873, %v10885
    %v10887 = vpop.f32.mrf.mxu0
    %10888 = vdwg.mxu0
    %10889 = vmatpush.bf16.msra.mxu0 %v10433
    %10890 = vmatpush.bf16.msra.mxu0 %v10425
    %10891 = vmatpush.bf16.msra.mxu0 %v10417
    %10892 = vmatpush.bf16.msra.mxu0 %v10409
    %10893 = vmatpush.bf16.msra.mxu0 %v10401
    %10894 = vmatpush.bf16.msra.mxu0 %v10393
    %10895 = vmatpush.bf16.msra.mxu0 %v10385
    %10896 = vmatpush.bf16.msra.mxu0 %v10377
    %10897 = vmatmul.bf16.gmra.mxu0 %v9139
    %v10898 = vpop.f32.mrf.mxu0
    %v10899 = vadd.f32 %v10886, %v10898
    %v10900 = vpop.f32.mrf.mxu0
    %10901 = vdwg.mxu0
    %10902 = vmatpush.bf16.msra.mxu0 %v10242
    %10903 = vmatpush.bf16.msra.mxu0 %v10234
    %10904 = vmatpush.bf16.msra.mxu0 %v10226
    %10905 = vmatpush.bf16.msra.mxu0 %v10218
    %10906 = vmatpush.bf16.msra.mxu0 %v10210
    %10907 = vmatpush.bf16.msra.mxu0 %v10202
    %10908 = vmatpush.bf16.msra.mxu0 %v10194
    %10909 = vmatpush.bf16.msra.mxu0 %v10186
    %10910 = vmatmul.bf16.gmra.mxu0 %v9136
    %v10911 = vpop.f32.mrf.mxu0
    %v10912 = vadd.f32 %v9402, %v10911
    %v10913 = vpop.f32.mrf.mxu0
    %10914 = vdwg.mxu0
    %10915 = vmatpush.bf16.msra.mxu0 %v10306
    %10916 = vmatpush.bf16.msra.mxu0 %v10298
    %10917 = vmatpush.bf16.msra.mxu0 %v10290
    %10918 = vmatpush.bf16.msra.mxu0 %v10282
    %10919 = vmatpush.bf16.msra.mxu0 %v10274
    %10920 = vmatpush.bf16.msra.mxu0 %v10266
    %10921 = vmatpush.bf16.msra.mxu0 %v10258
    %10922 = vmatpush.bf16.msra.mxu0 %v10250
    %10923 = vmatmul.bf16.gmra.mxu0 %v9137
    %v10924 = vpop.f32.mrf.mxu0
    %v10925 = vadd.f32 %v10912, %v10924
    %v10926 = vpop.f32.mrf.mxu0
    %10927 = vdwg.mxu0
    %10928 = vmatpush.bf16.msra.mxu0 %v10370
    %10929 = vmatpush.bf16.msra.mxu0 %v10362
    %10930 = vmatpush.bf16.msra.mxu0 %v10354
    %10931 = vmatpush.bf16.msra.mxu0 %v10346
    %10932 = vmatpush.bf16.msra.mxu0 %v10338
    %10933 = vmatpush.bf16.msra.mxu0 %v10330
    %10934 = vmatpush.bf16.msra.mxu0 %v10322
    %10935 = vmatpush.bf16.msra.mxu0 %v10314
    %10936 = vmatmul.bf16.gmra.mxu0 %v9138
    %v10937 = vpop.f32.mrf.mxu0
    %v10938 = vadd.f32 %v10925, %v10937
    %v10939 = vpop.f32.mrf.mxu0
    %10940 = vdwg.mxu0
    %10941 = vmatpush.bf16.msra.mxu0 %v10434
    %10942 = vmatpush.bf16.msra.mxu0 %v10426
    %10943 = vmatpush.bf16.msra.mxu0 %v10418
    %10944 = vmatpush.bf16.msra.mxu0 %v10410
    %10945 = vmatpush.bf16.msra.mxu0 %v10402
    %10946 = vmatpush.bf16.msra.mxu0 %v10394
    %10947 = vmatpush.bf16.msra.mxu0 %v10386
    %10948 = vmatpush.bf16.msra.mxu0 %v10378
    %10949 = vmatmul.bf16.gmra.mxu0 %v9139
    %v10950 = vpop.f32.mrf.mxu0
    %v10951 = vadd.f32 %v10938, %v10950
    %v10952 = vpop.f32.mrf.mxu0
    %10953 = vdwg.mxu0
    %10954 = vmatpush.bf16.msra.mxu0 %v10243
    %10955 = vmatpush.bf16.msra.mxu0 %v10235
    %10956 = vmatpush.bf16.msra.mxu0 %v10227
    %10957 = vmatpush.bf16.msra.mxu0 %v10219
    %10958 = vmatpush.bf16.msra.mxu0 %v10211
    %10959 = vmatpush.bf16.msra.mxu0 %v10203
    %10960 = vmatpush.bf16.msra.mxu0 %v10195
    %10961 = vmatpush.bf16.msra.mxu0 %v10187
    %10962 = vmatmul.bf16.gmra.mxu0 %v9136
    %v10963 = vpop.f32.mrf.mxu0
    %v10964 = vadd.f32 %v9403, %v10963
    %v10965 = vpop.f32.mrf.mxu0
    %10966 = vdwg.mxu0
    %10967 = vmatpush.bf16.msra.mxu0 %v10307
    %10968 = vmatpush.bf16.msra.mxu0 %v10299
    %10969 = vmatpush.bf16.msra.mxu0 %v10291
    %10970 = vmatpush.bf16.msra.mxu0 %v10283
    %10971 = vmatpush.bf16.msra.mxu0 %v10275
    %10972 = vmatpush.bf16.msra.mxu0 %v10267
    %10973 = vmatpush.bf16.msra.mxu0 %v10259
    %10974 = vmatpush.bf16.msra.mxu0 %v10251
    %10975 = vmatmul.bf16.gmra.mxu0 %v9137
    %v10976 = vpop.f32.mrf.mxu0
    %v10977 = vadd.f32 %v10964, %v10976
    %v10978 = vpop.f32.mrf.mxu0
    %10979 = vdwg.mxu0
    %10980 = vmatpush.bf16.msra.mxu0 %v10371
    %10981 = vmatpush.bf16.msra.mxu0 %v10363
    %10982 = vmatpush.bf16.msra.mxu0 %v10355
    %10983 = vmatpush.bf16.msra.mxu0 %v10347
    %10984 = vmatpush.bf16.msra.mxu0 %v10339
    %10985 = vmatpush.bf16.msra.mxu0 %v10331
    %10986 = vmatpush.bf16.msra.mxu0 %v10323
    %10987 = vmatpush.bf16.msra.mxu0 %v10315
    %10988 = vmatmul.bf16.gmra.mxu0 %v9138
    %v10989 = vpop.f32.mrf.mxu0
    %v10990 = vadd.f32 %v10977, %v10989
    %v10991 = vpop.f32.mrf.mxu0
    %10992 = vdwg.mxu0
    %10993 = vmatpush.bf16.msra.mxu0 %v10435
    %10994 = vmatpush.bf16.msra.mxu0 %v10427
    %10995 = vmatpush.bf16.msra.mxu0 %v10419
    %10996 = vmatpush.bf16.msra.mxu0 %v10411
    %10997 = vmatpush.bf16.msra.mxu0 %v10403
    %10998 = vmatpush.bf16.msra.mxu0 %v10395
    %10999 = vmatpush.bf16.msra.mxu0 %v10387
    %11000 = vmatpush.bf16.msra.mxu0 %v10379
    %11001 = vmatmul.bf16.gmra.mxu0 %v9139
    %v11002 = vpop.f32.mrf.mxu0
    %v11003 = vadd.f32 %v10990, %v11002
    %v11004 = vpop.f32.mrf.mxu0
    %11005 = vdwg.mxu0
    %11006 = vmatpush.bf16.msra.mxu0 %v10244
    %11007 = vmatpush.bf16.msra.mxu0 %v10236
    %11008 = vmatpush.bf16.msra.mxu0 %v10228
    %11009 = vmatpush.bf16.msra.mxu0 %v10220
    %11010 = vmatpush.bf16.msra.mxu0 %v10212
    %11011 = vmatpush.bf16.msra.mxu0 %v10204
    %11012 = vmatpush.bf16.msra.mxu0 %v10196
    %11013 = vmatpush.bf16.msra.mxu0 %v10188
    %11014 = vmatmul.bf16.gmra.mxu0 %v9136
    %v11015 = vpop.f32.mrf.mxu0
    %v11016 = vadd.f32 %v9404, %v11015
    %v11017 = vpop.f32.mrf.mxu0
    %11018 = vdwg.mxu0
    %11019 = vmatpush.bf16.msra.mxu0 %v10308
    %11020 = vmatpush.bf16.msra.mxu0 %v10300
    %11021 = vmatpush.bf16.msra.mxu0 %v10292
    %11022 = vmatpush.bf16.msra.mxu0 %v10284
    %11023 = vmatpush.bf16.msra.mxu0 %v10276
    %11024 = vmatpush.bf16.msra.mxu0 %v10268
    %11025 = vmatpush.bf16.msra.mxu0 %v10260
    %11026 = vmatpush.bf16.msra.mxu0 %v10252
    %11027 = vmatmul.bf16.gmra.mxu0 %v9137
    %v11028 = vpop.f32.mrf.mxu0
    %v11029 = vadd.f32 %v11016, %v11028
    %v11030 = vpop.f32.mrf.mxu0
    %11031 = vdwg.mxu0
    %11032 = vmatpush.bf16.msra.mxu0 %v10372
    %11033 = vmatpush.bf16.msra.mxu0 %v10364
    %11034 = vmatpush.bf16.msra.mxu0 %v10356
    %11035 = vmatpush.bf16.msra.mxu0 %v10348
    %11036 = vmatpush.bf16.msra.mxu0 %v10340
    %11037 = vmatpush.bf16.msra.mxu0 %v10332
    %11038 = vmatpush.bf16.msra.mxu0 %v10324
    %11039 = vmatpush.bf16.msra.mxu0 %v10316
    %11040 = vmatmul.bf16.gmra.mxu0 %v9138
    %v11041 = vpop.f32.mrf.mxu0
    %v11042 = vadd.f32 %v11029, %v11041
    %v11043 = vpop.f32.mrf.mxu0
    %11044 = vdwg.mxu0
    %11045 = vmatpush.bf16.msra.mxu0 %v10436
    %11046 = vmatpush.bf16.msra.mxu0 %v10428
    %11047 = vmatpush.bf16.msra.mxu0 %v10420
    %11048 = vmatpush.bf16.msra.mxu0 %v10412
    %11049 = vmatpush.bf16.msra.mxu0 %v10404
    %11050 = vmatpush.bf16.msra.mxu0 %v10396
    %11051 = vmatpush.bf16.msra.mxu0 %v10388
    %11052 = vmatpush.bf16.msra.mxu0 %v10380
    %11053 = vmatmul.bf16.gmra.mxu0 %v9139
    %v11054 = vpop.f32.mrf.mxu0
    %v11055 = vadd.f32 %v11042, %v11054
    %v11056 = vpop.f32.mrf.mxu0
    %11057 = vdwg.mxu0
    %11058 = vmatpush.bf16.msra.mxu0 %v10245
    %11059 = vmatpush.bf16.msra.mxu0 %v10237
    %11060 = vmatpush.bf16.msra.mxu0 %v10229
    %11061 = vmatpush.bf16.msra.mxu0 %v10221
    %11062 = vmatpush.bf16.msra.mxu0 %v10213
    %11063 = vmatpush.bf16.msra.mxu0 %v10205
    %11064 = vmatpush.bf16.msra.mxu0 %v10197
    %11065 = vmatpush.bf16.msra.mxu0 %v10189
    %11066 = vmatmul.bf16.gmra.mxu0 %v9136
    %v11067 = vpop.f32.mrf.mxu0
    %v11068 = vadd.f32 %v9405, %v11067
    %v11069 = vpop.f32.mrf.mxu0
    %11070 = vdwg.mxu0
    %11071 = vmatpush.bf16.msra.mxu0 %v10309
    %11072 = vmatpush.bf16.msra.mxu0 %v10301
    %11073 = vmatpush.bf16.msra.mxu0 %v10293
    %11074 = vmatpush.bf16.msra.mxu0 %v10285
    %11075 = vmatpush.bf16.msra.mxu0 %v10277
    %11076 = vmatpush.bf16.msra.mxu0 %v10269
    %11077 = vmatpush.bf16.msra.mxu0 %v10261
    %11078 = vmatpush.bf16.msra.mxu0 %v10253
    %11079 = vmatmul.bf16.gmra.mxu0 %v9137
    %v11080 = vpop.f32.mrf.mxu0
    %v11081 = vadd.f32 %v11068, %v11080
    %v11082 = vpop.f32.mrf.mxu0
    %11083 = vdwg.mxu0
    %11084 = vmatpush.bf16.msra.mxu0 %v10373
    %11085 = vmatpush.bf16.msra.mxu0 %v10365
    %11086 = vmatpush.bf16.msra.mxu0 %v10357
    %11087 = vmatpush.bf16.msra.mxu0 %v10349
    %11088 = vmatpush.bf16.msra.mxu0 %v10341
    %11089 = vmatpush.bf16.msra.mxu0 %v10333
    %11090 = vmatpush.bf16.msra.mxu0 %v10325
    %11091 = vmatpush.bf16.msra.mxu0 %v10317
    %11092 = vmatmul.bf16.gmra.mxu0 %v9138
    %v11093 = vpop.f32.mrf.mxu0
    %v11094 = vadd.f32 %v11081, %v11093
    %v11095 = vpop.f32.mrf.mxu0
    %11096 = vdwg.mxu0
    %11097 = vmatpush.bf16.msra.mxu0 %v10437
    %11098 = vmatpush.bf16.msra.mxu0 %v10429
    %11099 = vmatpush.bf16.msra.mxu0 %v10421
    %11100 = vmatpush.bf16.msra.mxu0 %v10413
    %11101 = vmatpush.bf16.msra.mxu0 %v10405
    %11102 = vmatpush.bf16.msra.mxu0 %v10397
    %11103 = vmatpush.bf16.msra.mxu0 %v10389
    %11104 = vmatpush.bf16.msra.mxu0 %v10381
    %11105 = vmatmul.bf16.gmra.mxu0 %v9139
    %v11106 = vpop.f32.mrf.mxu0
    %v11107 = vadd.f32 %v11094, %v11106
    %v11108 = vpop.f32.mrf.mxu0
    %11109 = vdwg.mxu0
    %v11110 = vmax.f32 %v10743, 0.0
    %v11111 = vmax.f32 %v10795, 0.0
    %v11112 = vmax.f32 %v10847, 0.0
    %v11113 = vmax.f32 %v10899, 0.0
    %v11114 = vmax.f32 %v10951, 0.0
    %v11115 = vmax.f32 %v11003, 0.0
    %v11116 = vmax.f32 %v11055, 0.0
    %v11117 = vmax.f32 %v11107, 0.0
    %v11118 = vpack.c.bf16 %v11110, %v11110
    %v11119 = vpack.c.bf16 %v11111, %v11111
    %v11120 = vpack.c.bf16 %v11112, %v11112
    %v11121 = vpack.c.bf16 %v11113, %v11113
    %v11122 = vpack.c.bf16 %v11114, %v11114
    %v11123 = vpack.c.bf16 %v11115, %v11115
    %v11124 = vpack.c.bf16 %v11116, %v11116
    %v11125 = vpack.c.bf16 %v11117, %v11117
    %v11126 = vld [vmem:[#allocation12] sm:$0xff]
    %v11127 = vld [vmem:[#allocation12 + $0x8] sm:$0xff]
    %v11128 = vld [vmem:[#allocation12 + $0x10] sm:$0xff]
    %v11129 = vld [vmem:[#allocation12 + $0x18] sm:$0xff]
    %v11130 = vld [vmem:[#allocation12 + $0x20] sm:$0xff]
    %v11131 = vld [vmem:[#allocation12 + $0x28] sm:$0xff]
    %v11132 = vld [vmem:[#allocation12 + $0x30] sm:$0xff]
    %v11133 = vld [vmem:[#allocation12 + $0x38] sm:$0xff]
    %v11134 = vld [vmem:[#allocation12 + $0x40] sm:$0xff]
    %v11135 = vld [vmem:[#allocation12 + $0x48] sm:$0xff]
    %v11136 = vld [vmem:[#allocation12 + $0x50] sm:$0xff]
    %v11137 = vld [vmem:[#allocation12 + $0x58] sm:$0xff]
    %v11138 = vld [vmem:[#allocation12 + $0x60] sm:$0xff]
    %v11139 = vld [vmem:[#allocation12 + $0x68] sm:$0xff]
    %v11140 = vld [vmem:[#allocation12 + $0x70] sm:$0xff]
    %v11141 = vld [vmem:[#allocation12 + $0x78] sm:$0xff]
    %v11142 = vld [vmem:[#allocation12 + $0x80] sm:$0xff]
    %v11143 = vld [vmem:[#allocation12 + $0x88] sm:$0xff]
    %v11144 = vld [vmem:[#allocation12 + $0x90] sm:$0xff]
    %v11145 = vld [vmem:[#allocation12 + $0x98] sm:$0xff]
    %v11146 = vld [vmem:[#allocation12 + $0xa0] sm:$0xff]
    %v11147 = vld [vmem:[#allocation12 + $0xa8] sm:$0xff]
    %v11148 = vld [vmem:[#allocation12 + $0xb0] sm:$0xff]
    %v11149 = vld [vmem:[#allocation12 + $0xb8] sm:$0xff]
    %v11150 = vld [vmem:[#allocation12 + $0xc0] sm:$0xff]
    %v11151 = vld [vmem:[#allocation12 + $0xc8] sm:$0xff]
    %v11152 = vld [vmem:[#allocation12 + $0xd0] sm:$0xff]
    %v11153 = vld [vmem:[#allocation12 + $0xd8] sm:$0xff]
    %v11154 = vld [vmem:[#allocation12 + $0xe0] sm:$0xff]
    %v11155 = vld [vmem:[#allocation12 + $0xe8] sm:$0xff]
    %v11156 = vld [vmem:[#allocation12 + $0xf0] sm:$0xff]
    %v11157 = vld [vmem:[#allocation12 + $0xf8] sm:$0xff]
    %v11158 = vld [vmem:[#allocation12 + $0x100] sm:$0xff]
    %v11159 = vld [vmem:[#allocation12 + $0x108] sm:$0xff]
    %v11160 = vld [vmem:[#allocation12 + $0x110] sm:$0xff]
    %v11161 = vld [vmem:[#allocation12 + $0x118] sm:$0xff]
    %v11162 = vld [vmem:[#allocation12 + $0x120] sm:$0xff]
    %v11163 = vld [vmem:[#allocation12 + $0x128] sm:$0xff]
    %v11164 = vld [vmem:[#allocation12 + $0x130] sm:$0xff]
    %v11165 = vld [vmem:[#allocation12 + $0x138] sm:$0xff]
    %v11166 = vld [vmem:[#allocation12 + $0x140] sm:$0xff]
    %v11167 = vld [vmem:[#allocation12 + $0x148] sm:$0xff]
    %v11168 = vld [vmem:[#allocation12 + $0x150] sm:$0xff]
    %v11169 = vld [vmem:[#allocation12 + $0x158] sm:$0xff]
    %v11170 = vld [vmem:[#allocation12 + $0x160] sm:$0xff]
    %v11171 = vld [vmem:[#allocation12 + $0x168] sm:$0xff]
    %v11172 = vld [vmem:[#allocation12 + $0x170] sm:$0xff]
    %v11173 = vld [vmem:[#allocation12 + $0x178] sm:$0xff]
    %v11174 = vld [vmem:[#allocation12 + $0x180] sm:$0xff]
    %v11175 = vld [vmem:[#allocation12 + $0x188] sm:$0xff]
    %v11176 = vld [vmem:[#allocation12 + $0x190] sm:$0xff]
    %v11177 = vld [vmem:[#allocation12 + $0x198] sm:$0xff]
    %v11178 = vld [vmem:[#allocation12 + $0x1a0] sm:$0xff]
    %v11179 = vld [vmem:[#allocation12 + $0x1a8] sm:$0xff]
    %v11180 = vld [vmem:[#allocation12 + $0x1b0] sm:$0xff]
    %v11181 = vld [vmem:[#allocation12 + $0x1b8] sm:$0xff]
    %v11182 = vld [vmem:[#allocation12 + $0x1c0] sm:$0xff]
    %v11183 = vld [vmem:[#allocation12 + $0x1c8] sm:$0xff]
    %v11184 = vld [vmem:[#allocation12 + $0x1d0] sm:$0xff]
    %v11185 = vld [vmem:[#allocation12 + $0x1d8] sm:$0xff]
    %v11186 = vld [vmem:[#allocation12 + $0x1e0] sm:$0xff]
    %v11187 = vld [vmem:[#allocation12 + $0x1e8] sm:$0xff]
    %v11188 = vld [vmem:[#allocation12 + $0x1f0] sm:$0xff]
    %v11189 = vld [vmem:[#allocation12 + $0x1f8] sm:$0xff]
    %v11190 = vld [vmem:[#allocation12 + $0x200] sm:$0xff]
    %v11191 = vld [vmem:[#allocation12 + $0x208] sm:$0xff]
    %v11192 = vld [vmem:[#allocation12 + $0x210] sm:$0xff]
    %v11193 = vld [vmem:[#allocation12 + $0x218] sm:$0xff]
    %v11194 = vld [vmem:[#allocation12 + $0x220] sm:$0xff]
    %v11195 = vld [vmem:[#allocation12 + $0x228] sm:$0xff]
    %v11196 = vld [vmem:[#allocation12 + $0x230] sm:$0xff]
    %v11197 = vld [vmem:[#allocation12 + $0x238] sm:$0xff]
    %v11198 = vld [vmem:[#allocation12 + $0x240] sm:$0xff]
    %v11199 = vld [vmem:[#allocation12 + $0x248] sm:$0xff]
    %v11200 = vld [vmem:[#allocation12 + $0x250] sm:$0xff]
    %v11201 = vld [vmem:[#allocation12 + $0x258] sm:$0xff]
    %v11202 = vld [vmem:[#allocation12 + $0x260] sm:$0xff]
    %v11203 = vld [vmem:[#allocation12 + $0x268] sm:$0xff]
    %v11204 = vld [vmem:[#allocation12 + $0x270] sm:$0xff]
    %v11205 = vld [vmem:[#allocation12 + $0x278] sm:$0xff]
    %v11206 = vld [vmem:[#allocation12 + $0x280] sm:$0xff]
    %v11207 = vld [vmem:[#allocation12 + $0x288] sm:$0xff]
    %v11208 = vld [vmem:[#allocation12 + $0x290] sm:$0xff]
    %v11209 = vld [vmem:[#allocation12 + $0x298] sm:$0xff]
    %v11210 = vld [vmem:[#allocation12 + $0x2a0] sm:$0xff]
    %v11211 = vld [vmem:[#allocation12 + $0x2a8] sm:$0xff]
    %v11212 = vld [vmem:[#allocation12 + $0x2b0] sm:$0xff]
    %v11213 = vld [vmem:[#allocation12 + $0x2b8] sm:$0xff]
    %v11214 = vld [vmem:[#allocation12 + $0x2c0] sm:$0xff]
    %v11215 = vld [vmem:[#allocation12 + $0x2c8] sm:$0xff]
    %v11216 = vld [vmem:[#allocation12 + $0x2d0] sm:$0xff]
    %v11217 = vld [vmem:[#allocation12 + $0x2d8] sm:$0xff]
    %v11218 = vld [vmem:[#allocation12 + $0x2e0] sm:$0xff]
    %v11219 = vld [vmem:[#allocation12 + $0x2e8] sm:$0xff]
    %v11220 = vld [vmem:[#allocation12 + $0x2f0] sm:$0xff]
    %v11221 = vld [vmem:[#allocation12 + $0x2f8] sm:$0xff]
    %v11222 = vld [vmem:[#allocation12 + $0x300] sm:$0xff]
    %v11223 = vld [vmem:[#allocation12 + $0x308] sm:$0xff]
    %v11224 = vld [vmem:[#allocation12 + $0x310] sm:$0xff]
    %v11225 = vld [vmem:[#allocation12 + $0x318] sm:$0xff]
    %v11226 = vld [vmem:[#allocation12 + $0x320] sm:$0xff]
    %v11227 = vld [vmem:[#allocation12 + $0x328] sm:$0xff]
    %v11228 = vld [vmem:[#allocation12 + $0x330] sm:$0xff]
    %v11229 = vld [vmem:[#allocation12 + $0x338] sm:$0xff]
    %v11230 = vld [vmem:[#allocation12 + $0x340] sm:$0xff]
    %v11231 = vld [vmem:[#allocation12 + $0x348] sm:$0xff]
    %v11232 = vld [vmem:[#allocation12 + $0x350] sm:$0xff]
    %v11233 = vld [vmem:[#allocation12 + $0x358] sm:$0xff]
    %v11234 = vld [vmem:[#allocation12 + $0x360] sm:$0xff]
    %v11235 = vld [vmem:[#allocation12 + $0x368] sm:$0xff]
    %v11236 = vld [vmem:[#allocation12 + $0x370] sm:$0xff]
    %v11237 = vld [vmem:[#allocation12 + $0x378] sm:$0xff]
    %v11238 = vld [vmem:[#allocation12 + $0x380] sm:$0xff]
    %v11239 = vld [vmem:[#allocation12 + $0x388] sm:$0xff]
    %v11240 = vld [vmem:[#allocation12 + $0x390] sm:$0xff]
    %v11241 = vld [vmem:[#allocation12 + $0x398] sm:$0xff]
    %v11242 = vld [vmem:[#allocation12 + $0x3a0] sm:$0xff]
    %v11243 = vld [vmem:[#allocation12 + $0x3a8] sm:$0xff]
    %v11244 = vld [vmem:[#allocation12 + $0x3b0] sm:$0xff]
    %v11245 = vld [vmem:[#allocation12 + $0x3b8] sm:$0xff]
    %v11246 = vld [vmem:[#allocation12 + $0x3c0] sm:$0xff]
    %v11247 = vld [vmem:[#allocation12 + $0x3c8] sm:$0xff]
    %v11248 = vld [vmem:[#allocation12 + $0x3d0] sm:$0xff]
    %v11249 = vld [vmem:[#allocation12 + $0x3d8] sm:$0xff]
    %v11250 = vld [vmem:[#allocation12 + $0x3e0] sm:$0xff]
    %v11251 = vld [vmem:[#allocation12 + $0x3e8] sm:$0xff]
    %v11252 = vld [vmem:[#allocation12 + $0x3f0] sm:$0xff]
    %v11253 = vld [vmem:[#allocation12 + $0x3f8] sm:$0xff]
    %v11254 = vld [vmem:[#allocation22] sm:$0x3]
    %v11256 = vperm.slane %v11254, 0
    %v11257 = vperm.slane %v11254, 1
    %v11388 = vunpack.c.l.b16 %v11126
    %v11389 = vunpack.c.h.b16 %v11126
    %v11390 = vunpack.c.l.b16 %v11127
    %v11391 = vunpack.c.h.b16 %v11127
    %v11392 = vunpack.c.l.b16 %v11128
    %v11393 = vunpack.c.h.b16 %v11128
    %v11394 = vunpack.c.l.b16 %v11129
    %v11395 = vunpack.c.h.b16 %v11129
    %v11396 = vunpack.c.l.b16 %v11130
    %v11397 = vunpack.c.h.b16 %v11130
    %v11398 = vunpack.c.l.b16 %v11131
    %v11399 = vunpack.c.h.b16 %v11131
    %v11400 = vunpack.c.l.b16 %v11132
    %v11401 = vunpack.c.h.b16 %v11132
    %v11402 = vunpack.c.l.b16 %v11133
    %v11403 = vunpack.c.h.b16 %v11133
    %v11404 = vunpack.c.l.b16 %v11134
    %v11405 = vunpack.c.h.b16 %v11134
    %v11406 = vunpack.c.l.b16 %v11135
    %v11407 = vunpack.c.h.b16 %v11135
    %v11408 = vunpack.c.l.b16 %v11136
    %v11409 = vunpack.c.h.b16 %v11136
    %v11410 = vunpack.c.l.b16 %v11137
    %v11411 = vunpack.c.h.b16 %v11137
    %v11412 = vunpack.c.l.b16 %v11138
    %v11413 = vunpack.c.h.b16 %v11138
    %v11414 = vunpack.c.l.b16 %v11139
    %v11415 = vunpack.c.h.b16 %v11139
    %v11416 = vunpack.c.l.b16 %v11140
    %v11417 = vunpack.c.h.b16 %v11140
    %v11418 = vunpack.c.l.b16 %v11141
    %v11419 = vunpack.c.h.b16 %v11141
    %v11420 = vunpack.c.l.b16 %v11142
    %v11421 = vunpack.c.h.b16 %v11142
    %v11422 = vunpack.c.l.b16 %v11143
    %v11423 = vunpack.c.h.b16 %v11143
    %v11424 = vunpack.c.l.b16 %v11144
    %v11425 = vunpack.c.h.b16 %v11144
    %v11426 = vunpack.c.l.b16 %v11145
    %v11427 = vunpack.c.h.b16 %v11145
    %v11428 = vunpack.c.l.b16 %v11146
    %v11429 = vunpack.c.h.b16 %v11146
    %v11430 = vunpack.c.l.b16 %v11147
    %v11431 = vunpack.c.h.b16 %v11147
    %v11432 = vunpack.c.l.b16 %v11148
    %v11433 = vunpack.c.h.b16 %v11148
    %v11434 = vunpack.c.l.b16 %v11149
    %v11435 = vunpack.c.h.b16 %v11149
    %v11436 = vunpack.c.l.b16 %v11150
    %v11437 = vunpack.c.h.b16 %v11150
    %v11438 = vunpack.c.l.b16 %v11151
    %v11439 = vunpack.c.h.b16 %v11151
    %v11440 = vunpack.c.l.b16 %v11152
    %v11441 = vunpack.c.h.b16 %v11152
    %v11442 = vunpack.c.l.b16 %v11153
    %v11443 = vunpack.c.h.b16 %v11153
    %v11444 = vunpack.c.l.b16 %v11154
    %v11445 = vunpack.c.h.b16 %v11154
    %v11446 = vunpack.c.l.b16 %v11155
    %v11447 = vunpack.c.h.b16 %v11155
    %v11448 = vunpack.c.l.b16 %v11156
    %v11449 = vunpack.c.h.b16 %v11156
    %v11450 = vunpack.c.l.b16 %v11157
    %v11451 = vunpack.c.h.b16 %v11157
    %v11452 = vunpack.c.l.b16 %v11158
    %v11453 = vunpack.c.h.b16 %v11158
    %v11454 = vunpack.c.l.b16 %v11159
    %v11455 = vunpack.c.h.b16 %v11159
    %v11456 = vunpack.c.l.b16 %v11160
    %v11457 = vunpack.c.h.b16 %v11160
    %v11458 = vunpack.c.l.b16 %v11161
    %v11459 = vunpack.c.h.b16 %v11161
    %v11460 = vunpack.c.l.b16 %v11162
    %v11461 = vunpack.c.h.b16 %v11162
    %v11462 = vunpack.c.l.b16 %v11163
    %v11463 = vunpack.c.h.b16 %v11163
    %v11464 = vunpack.c.l.b16 %v11164
    %v11465 = vunpack.c.h.b16 %v11164
    %v11466 = vunpack.c.l.b16 %v11165
    %v11467 = vunpack.c.h.b16 %v11165
    %v11468 = vunpack.c.l.b16 %v11166
    %v11469 = vunpack.c.h.b16 %v11166
    %v11470 = vunpack.c.l.b16 %v11167
    %v11471 = vunpack.c.h.b16 %v11167
    %v11472 = vunpack.c.l.b16 %v11168
    %v11473 = vunpack.c.h.b16 %v11168
    %v11474 = vunpack.c.l.b16 %v11169
    %v11475 = vunpack.c.h.b16 %v11169
    %v11476 = vunpack.c.l.b16 %v11170
    %v11477 = vunpack.c.h.b16 %v11170
    %v11478 = vunpack.c.l.b16 %v11171
    %v11479 = vunpack.c.h.b16 %v11171
    %v11480 = vunpack.c.l.b16 %v11172
    %v11481 = vunpack.c.h.b16 %v11172
    %v11482 = vunpack.c.l.b16 %v11173
    %v11483 = vunpack.c.h.b16 %v11173
    %v11484 = vunpack.c.l.b16 %v11174
    %v11485 = vunpack.c.h.b16 %v11174
    %v11486 = vunpack.c.l.b16 %v11175
    %v11487 = vunpack.c.h.b16 %v11175
    %v11488 = vunpack.c.l.b16 %v11176
    %v11489 = vunpack.c.h.b16 %v11176
    %v11490 = vunpack.c.l.b16 %v11177
    %v11491 = vunpack.c.h.b16 %v11177
    %v11492 = vunpack.c.l.b16 %v11178
    %v11493 = vunpack.c.h.b16 %v11178
    %v11494 = vunpack.c.l.b16 %v11179
    %v11495 = vunpack.c.h.b16 %v11179
    %v11496 = vunpack.c.l.b16 %v11180
    %v11497 = vunpack.c.h.b16 %v11180
    %v11498 = vunpack.c.l.b16 %v11181
    %v11499 = vunpack.c.h.b16 %v11181
    %v11500 = vunpack.c.l.b16 %v11182
    %v11501 = vunpack.c.h.b16 %v11182
    %v11502 = vunpack.c.l.b16 %v11183
    %v11503 = vunpack.c.h.b16 %v11183
    %v11504 = vunpack.c.l.b16 %v11184
    %v11505 = vunpack.c.h.b16 %v11184
    %v11506 = vunpack.c.l.b16 %v11185
    %v11507 = vunpack.c.h.b16 %v11185
    %v11508 = vunpack.c.l.b16 %v11186
    %v11509 = vunpack.c.h.b16 %v11186
    %v11510 = vunpack.c.l.b16 %v11187
    %v11511 = vunpack.c.h.b16 %v11187
    %v11512 = vunpack.c.l.b16 %v11188
    %v11513 = vunpack.c.h.b16 %v11188
    %v11514 = vunpack.c.l.b16 %v11189
    %v11515 = vunpack.c.h.b16 %v11189
    %v11516 = vunpack.c.l.b16 %v11190
    %v11517 = vunpack.c.h.b16 %v11190
    %v11518 = vunpack.c.l.b16 %v11191
    %v11519 = vunpack.c.h.b16 %v11191
    %v11520 = vunpack.c.l.b16 %v11192
    %v11521 = vunpack.c.h.b16 %v11192
    %v11522 = vunpack.c.l.b16 %v11193
    %v11523 = vunpack.c.h.b16 %v11193
    %v11524 = vunpack.c.l.b16 %v11194
    %v11525 = vunpack.c.h.b16 %v11194
    %v11526 = vunpack.c.l.b16 %v11195
    %v11527 = vunpack.c.h.b16 %v11195
    %v11528 = vunpack.c.l.b16 %v11196
    %v11529 = vunpack.c.h.b16 %v11196
    %v11530 = vunpack.c.l.b16 %v11197
    %v11531 = vunpack.c.h.b16 %v11197
    %v11532 = vunpack.c.l.b16 %v11198
    %v11533 = vunpack.c.h.b16 %v11198
    %v11534 = vunpack.c.l.b16 %v11199
    %v11535 = vunpack.c.h.b16 %v11199
    %v11536 = vunpack.c.l.b16 %v11200
    %v11537 = vunpack.c.h.b16 %v11200
    %v11538 = vunpack.c.l.b16 %v11201
    %v11539 = vunpack.c.h.b16 %v11201
    %v11540 = vunpack.c.l.b16 %v11202
    %v11541 = vunpack.c.h.b16 %v11202
    %v11542 = vunpack.c.l.b16 %v11203
    %v11543 = vunpack.c.h.b16 %v11203
    %v11544 = vunpack.c.l.b16 %v11204
    %v11545 = vunpack.c.h.b16 %v11204
    %v11546 = vunpack.c.l.b16 %v11205
    %v11547 = vunpack.c.h.b16 %v11205
    %v11548 = vunpack.c.l.b16 %v11206
    %v11549 = vunpack.c.h.b16 %v11206
    %v11550 = vunpack.c.l.b16 %v11207
    %v11551 = vunpack.c.h.b16 %v11207
    %v11552 = vunpack.c.l.b16 %v11208
    %v11553 = vunpack.c.h.b16 %v11208
    %v11554 = vunpack.c.l.b16 %v11209
    %v11555 = vunpack.c.h.b16 %v11209
    %v11556 = vunpack.c.l.b16 %v11210
    %v11557 = vunpack.c.h.b16 %v11210
    %v11558 = vunpack.c.l.b16 %v11211
    %v11559 = vunpack.c.h.b16 %v11211
    %v11560 = vunpack.c.l.b16 %v11212
    %v11561 = vunpack.c.h.b16 %v11212
    %v11562 = vunpack.c.l.b16 %v11213
    %v11563 = vunpack.c.h.b16 %v11213
    %v11564 = vunpack.c.l.b16 %v11214
    %v11565 = vunpack.c.h.b16 %v11214
    %v11566 = vunpack.c.l.b16 %v11215
    %v11567 = vunpack.c.h.b16 %v11215
    %v11568 = vunpack.c.l.b16 %v11216
    %v11569 = vunpack.c.h.b16 %v11216
    %v11570 = vunpack.c.l.b16 %v11217
    %v11571 = vunpack.c.h.b16 %v11217
    %v11572 = vunpack.c.l.b16 %v11218
    %v11573 = vunpack.c.h.b16 %v11218
    %v11574 = vunpack.c.l.b16 %v11219
    %v11575 = vunpack.c.h.b16 %v11219
    %v11576 = vunpack.c.l.b16 %v11220
    %v11577 = vunpack.c.h.b16 %v11220
    %v11578 = vunpack.c.l.b16 %v11221
    %v11579 = vunpack.c.h.b16 %v11221
    %v11580 = vunpack.c.l.b16 %v11222
    %v11581 = vunpack.c.h.b16 %v11222
    %v11582 = vunpack.c.l.b16 %v11223
    %v11583 = vunpack.c.h.b16 %v11223
    %v11584 = vunpack.c.l.b16 %v11224
    %v11585 = vunpack.c.h.b16 %v11224
    %v11586 = vunpack.c.l.b16 %v11225
    %v11587 = vunpack.c.h.b16 %v11225
    %v11588 = vunpack.c.l.b16 %v11226
    %v11589 = vunpack.c.h.b16 %v11226
    %v11590 = vunpack.c.l.b16 %v11227
    %v11591 = vunpack.c.h.b16 %v11227
    %v11592 = vunpack.c.l.b16 %v11228
    %v11593 = vunpack.c.h.b16 %v11228
    %v11594 = vunpack.c.l.b16 %v11229
    %v11595 = vunpack.c.h.b16 %v11229
    %v11596 = vunpack.c.l.b16 %v11230
    %v11597 = vunpack.c.h.b16 %v11230
    %v11598 = vunpack.c.l.b16 %v11231
    %v11599 = vunpack.c.h.b16 %v11231
    %v11600 = vunpack.c.l.b16 %v11232
    %v11601 = vunpack.c.h.b16 %v11232
    %v11602 = vunpack.c.l.b16 %v11233
    %v11603 = vunpack.c.h.b16 %v11233
    %v11604 = vunpack.c.l.b16 %v11234
    %v11605 = vunpack.c.h.b16 %v11234
    %v11606 = vunpack.c.l.b16 %v11235
    %v11607 = vunpack.c.h.b16 %v11235
    %v11608 = vunpack.c.l.b16 %v11236
    %v11609 = vunpack.c.h.b16 %v11236
    %v11610 = vunpack.c.l.b16 %v11237
    %v11611 = vunpack.c.h.b16 %v11237
    %v11612 = vunpack.c.l.b16 %v11238
    %v11613 = vunpack.c.h.b16 %v11238
    %v11614 = vunpack.c.l.b16 %v11239
    %v11615 = vunpack.c.h.b16 %v11239
    %v11616 = vunpack.c.l.b16 %v11240
    %v11617 = vunpack.c.h.b16 %v11240
    %v11618 = vunpack.c.l.b16 %v11241
    %v11619 = vunpack.c.h.b16 %v11241
    %v11620 = vunpack.c.l.b16 %v11242
    %v11621 = vunpack.c.h.b16 %v11242
    %v11622 = vunpack.c.l.b16 %v11243
    %v11623 = vunpack.c.h.b16 %v11243
    %v11624 = vunpack.c.l.b16 %v11244
    %v11625 = vunpack.c.h.b16 %v11244
    %v11626 = vunpack.c.l.b16 %v11245
    %v11627 = vunpack.c.h.b16 %v11245
    %v11628 = vunpack.c.l.b16 %v11246
    %v11629 = vunpack.c.h.b16 %v11246
    %v11630 = vunpack.c.l.b16 %v11247
    %v11631 = vunpack.c.h.b16 %v11247
    %v11632 = vunpack.c.l.b16 %v11248
    %v11633 = vunpack.c.h.b16 %v11248
    %v11634 = vunpack.c.l.b16 %v11249
    %v11635 = vunpack.c.h.b16 %v11249
    %v11636 = vunpack.c.l.b16 %v11250
    %v11637 = vunpack.c.h.b16 %v11250
    %v11638 = vunpack.c.l.b16 %v11251
    %v11639 = vunpack.c.h.b16 %v11251
    %v11640 = vunpack.c.l.b16 %v11252
    %v11641 = vunpack.c.h.b16 %v11252
    %v11642 = vunpack.c.l.b16 %v11253
    %v11643 = vunpack.c.h.b16 %v11253
    %v11644 = vpack.c.b16 %v11390, %v11388
    %v11645 = vpack.c.b16 %v11391, %v11389
    %v11646 = vpack.c.b16 %v11394, %v11392
    %v11647 = vpack.c.b16 %v11395, %v11393
    %v11648 = vpack.c.b16 %v11398, %v11396
    %v11649 = vpack.c.b16 %v11399, %v11397
    %v11650 = vpack.c.b16 %v11402, %v11400
    %v11651 = vpack.c.b16 %v11403, %v11401
    %v11652 = vpack.c.b16 %v11406, %v11404
    %v11653 = vpack.c.b16 %v11407, %v11405
    %v11654 = vpack.c.b16 %v11410, %v11408
    %v11655 = vpack.c.b16 %v11411, %v11409
    %v11656 = vpack.c.b16 %v11414, %v11412
    %v11657 = vpack.c.b16 %v11415, %v11413
    %v11658 = vpack.c.b16 %v11418, %v11416
    %v11659 = vpack.c.b16 %v11419, %v11417
    %v11660 = vpack.c.b16 %v11422, %v11420
    %v11661 = vpack.c.b16 %v11423, %v11421
    %v11662 = vpack.c.b16 %v11426, %v11424
    %v11663 = vpack.c.b16 %v11427, %v11425
    %v11664 = vpack.c.b16 %v11430, %v11428
    %v11665 = vpack.c.b16 %v11431, %v11429
    %v11666 = vpack.c.b16 %v11434, %v11432
    %v11667 = vpack.c.b16 %v11435, %v11433
    %v11668 = vpack.c.b16 %v11438, %v11436
    %v11669 = vpack.c.b16 %v11439, %v11437
    %v11670 = vpack.c.b16 %v11442, %v11440
    %v11671 = vpack.c.b16 %v11443, %v11441
    %v11672 = vpack.c.b16 %v11446, %v11444
    %v11673 = vpack.c.b16 %v11447, %v11445
    %v11674 = vpack.c.b16 %v11450, %v11448
    %v11675 = vpack.c.b16 %v11451, %v11449
    %v11676 = vpack.c.b16 %v11454, %v11452
    %v11677 = vpack.c.b16 %v11455, %v11453
    %v11678 = vpack.c.b16 %v11458, %v11456
    %v11679 = vpack.c.b16 %v11459, %v11457
    %v11680 = vpack.c.b16 %v11462, %v11460
    %v11681 = vpack.c.b16 %v11463, %v11461
    %v11682 = vpack.c.b16 %v11466, %v11464
    %v11683 = vpack.c.b16 %v11467, %v11465
    %v11684 = vpack.c.b16 %v11470, %v11468
    %v11685 = vpack.c.b16 %v11471, %v11469
    %v11686 = vpack.c.b16 %v11474, %v11472
    %v11687 = vpack.c.b16 %v11475, %v11473
    %v11688 = vpack.c.b16 %v11478, %v11476
    %v11689 = vpack.c.b16 %v11479, %v11477
    %v11690 = vpack.c.b16 %v11482, %v11480
    %v11691 = vpack.c.b16 %v11483, %v11481
    %v11692 = vpack.c.b16 %v11486, %v11484
    %v11693 = vpack.c.b16 %v11487, %v11485
    %v11694 = vpack.c.b16 %v11490, %v11488
    %v11695 = vpack.c.b16 %v11491, %v11489
    %v11696 = vpack.c.b16 %v11494, %v11492
    %v11697 = vpack.c.b16 %v11495, %v11493
    %v11698 = vpack.c.b16 %v11498, %v11496
    %v11699 = vpack.c.b16 %v11499, %v11497
    %v11700 = vpack.c.b16 %v11502, %v11500
    %v11701 = vpack.c.b16 %v11503, %v11501
    %v11702 = vpack.c.b16 %v11506, %v11504
    %v11703 = vpack.c.b16 %v11507, %v11505
    %v11704 = vpack.c.b16 %v11510, %v11508
    %v11705 = vpack.c.b16 %v11511, %v11509
    %v11706 = vpack.c.b16 %v11514, %v11512
    %v11707 = vpack.c.b16 %v11515, %v11513
    %v11708 = vpack.c.b16 %v11518, %v11516
    %v11709 = vpack.c.b16 %v11519, %v11517
    %v11710 = vpack.c.b16 %v11522, %v11520
    %v11711 = vpack.c.b16 %v11523, %v11521
    %v11712 = vpack.c.b16 %v11526, %v11524
    %v11713 = vpack.c.b16 %v11527, %v11525
    %v11714 = vpack.c.b16 %v11530, %v11528
    %v11715 = vpack.c.b16 %v11531, %v11529
    %v11716 = vpack.c.b16 %v11534, %v11532
    %v11717 = vpack.c.b16 %v11535, %v11533
    %v11718 = vpack.c.b16 %v11538, %v11536
    %v11719 = vpack.c.b16 %v11539, %v11537
    %v11720 = vpack.c.b16 %v11542, %v11540
    %v11721 = vpack.c.b16 %v11543, %v11541
    %v11722 = vpack.c.b16 %v11546, %v11544
    %v11723 = vpack.c.b16 %v11547, %v11545
    %v11724 = vpack.c.b16 %v11550, %v11548
    %v11725 = vpack.c.b16 %v11551, %v11549
    %v11726 = vpack.c.b16 %v11554, %v11552
    %v11727 = vpack.c.b16 %v11555, %v11553
    %v11728 = vpack.c.b16 %v11558, %v11556
    %v11729 = vpack.c.b16 %v11559, %v11557
    %v11730 = vpack.c.b16 %v11562, %v11560
    %v11731 = vpack.c.b16 %v11563, %v11561
    %v11732 = vpack.c.b16 %v11566, %v11564
    %v11733 = vpack.c.b16 %v11567, %v11565
    %v11734 = vpack.c.b16 %v11570, %v11568
    %v11735 = vpack.c.b16 %v11571, %v11569
    %v11736 = vpack.c.b16 %v11574, %v11572
    %v11737 = vpack.c.b16 %v11575, %v11573
    %v11738 = vpack.c.b16 %v11578, %v11576
    %v11739 = vpack.c.b16 %v11579, %v11577
    %v11740 = vpack.c.b16 %v11582, %v11580
    %v11741 = vpack.c.b16 %v11583, %v11581
    %v11742 = vpack.c.b16 %v11586, %v11584
    %v11743 = vpack.c.b16 %v11587, %v11585
    %v11744 = vpack.c.b16 %v11590, %v11588
    %v11745 = vpack.c.b16 %v11591, %v11589
    %v11746 = vpack.c.b16 %v11594, %v11592
    %v11747 = vpack.c.b16 %v11595, %v11593
    %v11748 = vpack.c.b16 %v11598, %v11596
    %v11749 = vpack.c.b16 %v11599, %v11597
    %v11750 = vpack.c.b16 %v11602, %v11600
    %v11751 = vpack.c.b16 %v11603, %v11601
    %v11752 = vpack.c.b16 %v11606, %v11604
    %v11753 = vpack.c.b16 %v11607, %v11605
    %v11754 = vpack.c.b16 %v11610, %v11608
    %v11755 = vpack.c.b16 %v11611, %v11609
    %v11756 = vpack.c.b16 %v11614, %v11612
    %v11757 = vpack.c.b16 %v11615, %v11613
    %v11758 = vpack.c.b16 %v11618, %v11616
    %v11759 = vpack.c.b16 %v11619, %v11617
    %v11760 = vpack.c.b16 %v11622, %v11620
    %v11761 = vpack.c.b16 %v11623, %v11621
    %v11762 = vpack.c.b16 %v11626, %v11624
    %v11763 = vpack.c.b16 %v11627, %v11625
    %v11764 = vpack.c.b16 %v11630, %v11628
    %v11765 = vpack.c.b16 %v11631, %v11629
    %v11766 = vpack.c.b16 %v11634, %v11632
    %v11767 = vpack.c.b16 %v11635, %v11633
    %v11768 = vpack.c.b16 %v11638, %v11636
    %v11769 = vpack.c.b16 %v11639, %v11637
    %v11770 = vpack.c.b16 %v11642, %v11640
    %v11771 = vpack.c.b16 %v11643, %v11641
    %11900 = vmatpush.bf16.msra.mxu0 %v11658
    %11901 = vmatpush.bf16.msra.mxu0 %v11656
    %11902 = vmatpush.bf16.msra.mxu0 %v11654
    %11903 = vmatpush.bf16.msra.mxu0 %v11652
    %11904 = vmatpush.bf16.msra.mxu0 %v11650
    %11905 = vmatpush.bf16.msra.mxu0 %v11648
    %11906 = vmatpush.bf16.msra.mxu0 %v11646
    %11907 = vmatpush.bf16.msra.mxu0 %v11644
    %11908 = vmatmul.bf16.gmra.mxu0 %v11118
    %v11909 = vpop.f32.mrf.mxu0
    %v11910 = vadd.f32 %v11256, %v11909
    %v11911 = vpop.f32.mrf.mxu0
    %11912 = vdwg.mxu0
    %11913 = vmatpush.bf16.msra.mxu0 %v11674
    %11914 = vmatpush.bf16.msra.mxu0 %v11672
    %11915 = vmatpush.bf16.msra.mxu0 %v11670
    %11916 = vmatpush.bf16.msra.mxu0 %v11668
    %11917 = vmatpush.bf16.msra.mxu0 %v11666
    %11918 = vmatpush.bf16.msra.mxu0 %v11664
    %11919 = vmatpush.bf16.msra.mxu0 %v11662
    %11920 = vmatpush.bf16.msra.mxu0 %v11660
    %11921 = vmatmul.bf16.gmra.mxu0 %v11119
    %v11922 = vpop.f32.mrf.mxu0
    %v11923 = vadd.f32 %v11910, %v11922
    %v11924 = vpop.f32.mrf.mxu0
    %11925 = vdwg.mxu0
    %11926 = vmatpush.bf16.msra.mxu0 %v11690
    %11927 = vmatpush.bf16.msra.mxu0 %v11688
    %11928 = vmatpush.bf16.msra.mxu0 %v11686
    %11929 = vmatpush.bf16.msra.mxu0 %v11684
    %11930 = vmatpush.bf16.msra.mxu0 %v11682
    %11931 = vmatpush.bf16.msra.mxu0 %v11680
    %11932 = vmatpush.bf16.msra.mxu0 %v11678
    %11933 = vmatpush.bf16.msra.mxu0 %v11676
    %11934 = vmatmul.bf16.gmra.mxu0 %v11120
    %v11935 = vpop.f32.mrf.mxu0
    %v11936 = vadd.f32 %v11923, %v11935
    %v11937 = vpop.f32.mrf.mxu0
    %11938 = vdwg.mxu0
    %11939 = vmatpush.bf16.msra.mxu0 %v11706
    %11940 = vmatpush.bf16.msra.mxu0 %v11704
    %11941 = vmatpush.bf16.msra.mxu0 %v11702
    %11942 = vmatpush.bf16.msra.mxu0 %v11700
    %11943 = vmatpush.bf16.msra.mxu0 %v11698
    %11944 = vmatpush.bf16.msra.mxu0 %v11696
    %11945 = vmatpush.bf16.msra.mxu0 %v11694
    %11946 = vmatpush.bf16.msra.mxu0 %v11692
    %11947 = vmatmul.bf16.gmra.mxu0 %v11121
    %v11948 = vpop.f32.mrf.mxu0
    %v11949 = vadd.f32 %v11936, %v11948
    %v11950 = vpop.f32.mrf.mxu0
    %11951 = vdwg.mxu0
    %11952 = vmatpush.bf16.msra.mxu0 %v11722
    %11953 = vmatpush.bf16.msra.mxu0 %v11720
    %11954 = vmatpush.bf16.msra.mxu0 %v11718
    %11955 = vmatpush.bf16.msra.mxu0 %v11716
    %11956 = vmatpush.bf16.msra.mxu0 %v11714
    %11957 = vmatpush.bf16.msra.mxu0 %v11712
    %11958 = vmatpush.bf16.msra.mxu0 %v11710
    %11959 = vmatpush.bf16.msra.mxu0 %v11708
    %11960 = vmatmul.bf16.gmra.mxu0 %v11122
    %v11961 = vpop.f32.mrf.mxu0
    %v11962 = vadd.f32 %v11949, %v11961
    %v11963 = vpop.f32.mrf.mxu0
    %11964 = vdwg.mxu0
    %11965 = vmatpush.bf16.msra.mxu0 %v11738
    %11966 = vmatpush.bf16.msra.mxu0 %v11736
    %11967 = vmatpush.bf16.msra.mxu0 %v11734
    %11968 = vmatpush.bf16.msra.mxu0 %v11732
    %11969 = vmatpush.bf16.msra.mxu0 %v11730
    %11970 = vmatpush.bf16.msra.mxu0 %v11728
    %11971 = vmatpush.bf16.msra.mxu0 %v11726
    %11972 = vmatpush.bf16.msra.mxu0 %v11724
    %11973 = vmatmul.bf16.gmra.mxu0 %v11123
    %v11974 = vpop.f32.mrf.mxu0
    %v11975 = vadd.f32 %v11962, %v11974
    %v11976 = vpop.f32.mrf.mxu0
    %11977 = vdwg.mxu0
    %11978 = vmatpush.bf16.msra.mxu0 %v11754
    %11979 = vmatpush.bf16.msra.mxu0 %v11752
    %11980 = vmatpush.bf16.msra.mxu0 %v11750
    %11981 = vmatpush.bf16.msra.mxu0 %v11748
    %11982 = vmatpush.bf16.msra.mxu0 %v11746
    %11983 = vmatpush.bf16.msra.mxu0 %v11744
    %11984 = vmatpush.bf16.msra.mxu0 %v11742
    %11985 = vmatpush.bf16.msra.mxu0 %v11740
    %11986 = vmatmul.bf16.gmra.mxu0 %v11124
    %v11987 = vpop.f32.mrf.mxu0
    %v11988 = vadd.f32 %v11975, %v11987
    %v11989 = vpop.f32.mrf.mxu0
    %11990 = vdwg.mxu0
    %11991 = vmatpush.bf16.msra.mxu0 %v11770
    %11992 = vmatpush.bf16.msra.mxu0 %v11768
    %11993 = vmatpush.bf16.msra.mxu0 %v11766
    %11994 = vmatpush.bf16.msra.mxu0 %v11764
    %11995 = vmatpush.bf16.msra.mxu0 %v11762
    %11996 = vmatpush.bf16.msra.mxu0 %v11760
    %11997 = vmatpush.bf16.msra.mxu0 %v11758
    %11998 = vmatpush.bf16.msra.mxu0 %v11756
    %11999 = vmatmul.bf16.gmra.mxu0 %v11125
    %v12000 = vpop.f32.mrf.mxu0
    %v12001 = vadd.f32 %v11988, %v12000
    %v12002 = vpop.f32.mrf.mxu0
    %12003 = vdwg.mxu0
    %12004 = vmatpush.bf16.msra.mxu0 %v11659
    %12005 = vmatpush.bf16.msra.mxu0 %v11657
    %12006 = vmatpush.bf16.msra.mxu0 %v11655
    %12007 = vmatpush.bf16.msra.mxu0 %v11653
    %12008 = vmatpush.bf16.msra.mxu0 %v11651
    %12009 = vmatpush.bf16.msra.mxu0 %v11649
    %12010 = vmatpush.bf16.msra.mxu0 %v11647
    %12011 = vmatpush.bf16.msra.mxu0 %v11645
    %12012 = vmatmul.bf16.gmra.mxu0 %v11118
    %v12013 = vpop.f32.mrf.mxu0
    %v12014 = vadd.f32 %v11257, %v12013
    %v12015 = vpop.f32.mrf.mxu0
    %12016 = vdwg.mxu0
    %12017 = vmatpush.bf16.msra.mxu0 %v11675
    %12018 = vmatpush.bf16.msra.mxu0 %v11673
    %12019 = vmatpush.bf16.msra.mxu0 %v11671
    %12020 = vmatpush.bf16.msra.mxu0 %v11669
    %12021 = vmatpush.bf16.msra.mxu0 %v11667
    %12022 = vmatpush.bf16.msra.mxu0 %v11665
    %12023 = vmatpush.bf16.msra.mxu0 %v11663
    %12024 = vmatpush.bf16.msra.mxu0 %v11661
    %12025 = vmatmul.bf16.gmra.mxu0 %v11119
    %v12026 = vpop.f32.mrf.mxu0
    %v12027 = vadd.f32 %v12014, %v12026
    %v12028 = vpop.f32.mrf.mxu0
    %12029 = vdwg.mxu0
    %12030 = vmatpush.bf16.msra.mxu0 %v11691
    %12031 = vmatpush.bf16.msra.mxu0 %v11689
    %12032 = vmatpush.bf16.msra.mxu0 %v11687
    %12033 = vmatpush.bf16.msra.mxu0 %v11685
    %12034 = vmatpush.bf16.msra.mxu0 %v11683
    %12035 = vmatpush.bf16.msra.mxu0 %v11681
    %12036 = vmatpush.bf16.msra.mxu0 %v11679
    %12037 = vmatpush.bf16.msra.mxu0 %v11677
    %12038 = vmatmul.bf16.gmra.mxu0 %v11120
    %v12039 = vpop.f32.mrf.mxu0
    %v12040 = vadd.f32 %v12027, %v12039
    %v12041 = vpop.f32.mrf.mxu0
    %12042 = vdwg.mxu0
    %12043 = vmatpush.bf16.msra.mxu0 %v11707
    %12044 = vmatpush.bf16.msra.mxu0 %v11705
    %12045 = vmatpush.bf16.msra.mxu0 %v11703
    %12046 = vmatpush.bf16.msra.mxu0 %v11701
    %12047 = vmatpush.bf16.msra.mxu0 %v11699
    %12048 = vmatpush.bf16.msra.mxu0 %v11697
    %12049 = vmatpush.bf16.msra.mxu0 %v11695
    %12050 = vmatpush.bf16.msra.mxu0 %v11693
    %12051 = vmatmul.bf16.gmra.mxu0 %v11121
    %v12052 = vpop.f32.mrf.mxu0
    %v12053 = vadd.f32 %v12040, %v12052
    %v12054 = vpop.f32.mrf.mxu0
    %12055 = vdwg.mxu0
    %12056 = vmatpush.bf16.msra.mxu0 %v11723
    %12057 = vmatpush.bf16.msra.mxu0 %v11721
    %12058 = vmatpush.bf16.msra.mxu0 %v11719
    %12059 = vmatpush.bf16.msra.mxu0 %v11717
    %12060 = vmatpush.bf16.msra.mxu0 %v11715
    %12061 = vmatpush.bf16.msra.mxu0 %v11713
    %12062 = vmatpush.bf16.msra.mxu0 %v11711
    %12063 = vmatpush.bf16.msra.mxu0 %v11709
    %12064 = vmatmul.bf16.gmra.mxu0 %v11122
    %v12065 = vpop.f32.mrf.mxu0
    %v12066 = vadd.f32 %v12053, %v12065
    %v12067 = vpop.f32.mrf.mxu0
    %12068 = vdwg.mxu0
    %12069 = vmatpush.bf16.msra.mxu0 %v11739
    %12070 = vmatpush.bf16.msra.mxu0 %v11737
    %12071 = vmatpush.bf16.msra.mxu0 %v11735
    %12072 = vmatpush.bf16.msra.mxu0 %v11733
    %12073 = vmatpush.bf16.msra.mxu0 %v11731
    %12074 = vmatpush.bf16.msra.mxu0 %v11729
    %12075 = vmatpush.bf16.msra.mxu0 %v11727
    %12076 = vmatpush.bf16.msra.mxu0 %v11725
    %12077 = vmatmul.bf16.gmra.mxu0 %v11123
    %v12078 = vpop.f32.mrf.mxu0
    %v12079 = vadd.f32 %v12066, %v12078
    %v12080 = vpop.f32.mrf.mxu0
    %12081 = vdwg.mxu0
    %12082 = vmatpush.bf16.msra.mxu0 %v11755
    %12083 = vmatpush.bf16.msra.mxu0 %v11753
    %12084 = vmatpush.bf16.msra.mxu0 %v11751
    %12085 = vmatpush.bf16.msra.mxu0 %v11749
    %12086 = vmatpush.bf16.msra.mxu0 %v11747
    %12087 = vmatpush.bf16.msra.mxu0 %v11745
    %12088 = vmatpush.bf16.msra.mxu0 %v11743
    %12089 = vmatpush.bf16.msra.mxu0 %v11741
    %12090 = vmatmul.bf16.gmra.mxu0 %v11124
    %v12091 = vpop.f32.mrf.mxu0
    %v12092 = vadd.f32 %v12079, %v12091
    %v12093 = vpop.f32.mrf.mxu0
    %12094 = vdwg.mxu0
    %12095 = vmatpush.bf16.msra.mxu0 %v11771
    %12096 = vmatpush.bf16.msra.mxu0 %v11769
    %12097 = vmatpush.bf16.msra.mxu0 %v11767
    %12098 = vmatpush.bf16.msra.mxu0 %v11765
    %12099 = vmatpush.bf16.msra.mxu0 %v11763
    %12100 = vmatpush.bf16.msra.mxu0 %v11761
    %12101 = vmatpush.bf16.msra.mxu0 %v11759
    %12102 = vmatpush.bf16.msra.mxu0 %v11757
    %12103 = vmatmul.bf16.gmra.mxu0 %v11125
    %v12104 = vpop.f32.mrf.mxu0
    %v12105 = vadd.f32 %v12092, %v12104
    %v12106 = vpop.f32.mrf.mxu0
    %12107 = vdwg.mxu0
    %v12108 = vxor.u32 %v12001, 2147483648
    %v12109 = vxor.u32 %v12105, 2147483648
    %v12110 = vmul.f32 %v12108, 1.442695
    %v12111 = vpow.pop %v12110
    %v12112 = vmul.f32 %v12109, 1.442695
    %v12113 = vpow.pop %v12112
    %v12114 = vadd.f32 %v12111, 1.0
    %v12115 = vadd.f32 %v12113, 1.0
    %v12116 = vrcp.pop %v12114
    %v12117 = vmul.f32 %v12114, %v12116
    %v12118 = vsub.f32 1.0, %v12117
    %v12119 = vmul.f32 %v12116, %v12118
    %v12120 = vadd.f32 %v12116, %v12119
    %vm12121 = vweird.f32 %v12114
    %vm12122 = vweird.f32 %v12116
    %vm12123 = vmor %vm12121, %vm12122
    %v12124 = vsel %vm12123, %v12116, %v12120
    %v12125 = vand.u32 2147483647, %v12114
    %vm12126 = vcmp.eq.f32.partialorder %v12125, 8.507059e+37
    %v12127 = vand.u32 %v12114, 2147483648
    %v12128 = vor.u32 1.1754944e-38, %v12127
    %v12129 = vsel %vm12126, %v12128, %v12124
    %v12130 = vmul.f32 1.0, %v12129
    %v12131 = vrcp.pop %v12115
    %v12132 = vmul.f32 %v12115, %v12131
    %v12133 = vsub.f32 1.0, %v12132
    %v12134 = vmul.f32 %v12131, %v12133
    %v12135 = vadd.f32 %v12131, %v12134
    %vm12136 = vweird.f32 %v12115
    %vm12137 = vweird.f32 %v12131
    %vm12138 = vmor %vm12136, %vm12137
    %v12139 = vsel %vm12138, %v12131, %v12135
    %v12140 = vand.u32 2147483647, %v12115
    %vm12141 = vcmp.eq.f32.partialorder %v12140, 8.507059e+37
    %v12142 = vand.u32 %v12115, 2147483648
    %v12143 = vor.u32 1.1754944e-38, %v12142
    %v12144 = vsel %vm12141, %v12143, %v12139
    %v12145 = vmul.f32 1.0, %v12144
    %12146 = vst [vmem:[%s15] sm:$0xff] %v12130
    %12147 = vst [vmem:[%s15 + $0x8] sm:$0xff] %v12145
    // Predicated region
    $region118: #{pathgen_forward.1} parent=1 // pred_check
      _
    $region119: #{pathgen_forward.1} parent=1 // pred_check_branch
      %12149 = sbr.rel (0) target = $region121
    $region120: #{pathgen_forward.1} parent=1 // pred_region
      _
    $region121: #{pathgen_forward.1} parent=1 // pred_fallthru
      _
    // Predicated region
    $region122: #{pathgen_forward.1} parent=1 // pred_check
      _
    $region123: #{pathgen_forward.1} parent=1 // pred_check_branch
      %12151 = sbr.rel (0) target = $region125
    $region124: #{pathgen_forward.1} parent=1 // pred_region
      _
    $region125: #{pathgen_forward.1} parent=1 // pred_fallthru
      _
    %12152 = vsyncpa [#allocation3], 1
    %12153 = vsyncpa [#allocation5], 1
    %12154 = vsyncpa [#allocation8], 1
    %12155 = vsyncpa [#allocation11], 1
    %12156 = vsyncpa [#allocation14], 1
    %12157 = vsyncpa [#allocation17], 1
    %12158 = vsyncpa [#allocation20], 1
    %12159 = vsyncpa [#allocation23], 1

</llo_original>
